<compile_context>
chip_gen: v7x
topology: tpu7x:2x2x1
jax: 0.10.0
libtpu: 0.0.40
codegen_flags: <defaults>
</compile_context>

<pallas_src>
from functools import partial

import jax
import jax.numpy as jnp
from jax import lax
from jax.experimental import pallas as pl
from jax.experimental.pallas import tpu as pltpu


# ----------------------------- Pallas kernel --------------------------------

def _block_body(s, Ho, Wo, Wm, row_tile,
                x_ref, w1_ref, b1_ref, w2_ref, b2_ref, o_ref, mid_ref,
                ws_ref=None, bs_ref=None):
    """Fused BasicBlock for one image (one grid step).

    Slab layout: spatial positions are flattened with row stride Wm = Wo + 2.
    Output slab row p = i*Wm + j holds output pixel (i, j) for j < Wo; columns
    j >= Wo are scratch columns that are masked (for the conv1->conv2 handoff)
    or discarded by the wrapper.  With this layout every 3x3 tap is a
    contiguous slice of a VMEM ref.

    x_ref  : (1, s*s, Lph, Cin) bf16   zero-padded, phase-split, flattened input
    w1_ref : (9, Cin, C1)  bf16        conv1 tap weights (bn1 scale folded)
    b1_ref : (1, C1)       f32         bn1 shift
    w2_ref : (9, C1, C2)   bf16        conv2 tap weights (bn2 scale folded)
    b2_ref : (1, C2)       f32         bn2 shift
    ws_ref : (Cin, C2)     bf16        1x1 projection weights (proj path only)
    bs_ref : (1, C2)       f32         projection bn shift    (proj path only)
    o_ref  : (1, Ho*Wm, C2) bf16       output slab (channels on lanes)
    mid_ref: ((Ho+3)*Wm, C1) bf16      conv1 output slab with zero halo
    """
    C1 = w1_ref.shape[2]
    M = Ho * Wm                       # rows of the output slab
    TM = row_tile * Wm                # rows per in-kernel row tile
    T = Ho // row_tile                # number of row tiles

    # Zero only the halo ring of the conv1 scratch; the interior (plus the
    # wrap-around halo columns) is fully overwritten below on every grid step,
    # so there is no cross-step state (megacore-parallel safe).
    mid_ref[0:Wm + 1, :] = jnp.zeros((Wm + 1, C1), mid_ref.dtype)
    mid_ref[Wm + 1 + M:(Ho + 3) * Wm, :] = jnp.zeros((2 * Wm - 1, C1),
                                                     mid_ref.dtype)

    # Valid-column mask (columns j >= Wo of each Wm-wide row are scratch).
    col = lax.broadcasted_iota(jnp.int32, (TM, 1), 0) % Wm
    valid = col < Wo

    def conv1_tile(base):
        # conv1 (3x3, stride s, pad 1) + bn1 (scale folded) + relu
        acc = jnp.zeros((TM, C1), jnp.float32)
        for kh in range(3):
            for kw in range(3):
                ph = (kh % s) * s + (kw % s)
                off = (kh // s) * Wm + (kw // s)
                tap = x_ref[0, ph, pl.ds(base + off, TM), :]
                acc = acc + jnp.dot(tap, w1_ref[kh * 3 + kw],
                                    preferred_element_type=jnp.float32)
        out1 = jnp.maximum(acc + b1_ref[...], 0.0)
        out1 = jnp.where(valid, out1, 0.0)        # keep `mid`'s halo zero
        mid_ref[pl.ds(base + Wm + 1, TM), :] = out1.astype(mid_ref.dtype)

    def conv2_tile(base):
        # shortcut (identity or 1x1 projection + bn), plus bn2 shift
        if ws_ref is not None:
            ph = (1 % s) * s + (1 % s)
            off = (1 // s) * Wm + (1 // s)
            xs = x_ref[0, ph, pl.ds(base + off, TM), :]
            acc = jnp.dot(xs, ws_ref[...], preferred_element_type=jnp.float32)
            acc = acc + (b2_ref[...] + bs_ref[...])
        else:
            xs = x_ref[0, 0, pl.ds(base + Wm + 1, TM), :]
            acc = xs.astype(jnp.float32) + b2_ref[...]
        # conv2 (3x3, stride 1, pad 1) + bn2 (scale folded)
        for kh in range(3):
            for kw in range(3):
                tap = mid_ref[pl.ds(base + kh * Wm + kw, TM), :]
                acc = acc + jnp.dot(tap, w2_ref[kh * 3 + kw],
                                    preferred_element_type=jnp.float32)
        o_ref[0, pl.ds(base, TM), :] = jnp.maximum(acc, 0.0).astype(o_ref.dtype)

    if T == 1:                        # fully static slices for small maps
        conv1_tile(0)
        conv2_tile(0)
    else:                             # two-pass row-tile loop for large maps
        @pl.loop(0, T)
        def _(t):
            conv1_tile(t * TM)

        @pl.loop(0, T)
        def _(t):
            conv2_tile(t * TM)


def _kernel_proj(s, Ho, Wo, Wm, rt,
                 x_ref, w1_ref, b1_ref, w2_ref, b2_ref, ws_ref, bs_ref,
                 o_ref, mid_ref):
    _block_body(s, Ho, Wo, Wm, rt, x_ref, w1_ref, b1_ref, w2_ref, b2_ref,
                o_ref, mid_ref, ws_ref=ws_ref, bs_ref=bs_ref)


def _kernel_identity(s, Ho, Wo, Wm, rt,
                     x_ref, w1_ref, b1_ref, w2_ref, b2_ref, o_ref, mid_ref):
    _block_body(s, Ho, Wo, Wm, rt, x_ref, w1_ref, b1_ref, w2_ref, b2_ref,
                o_ref, mid_ref)


# ------------------------------- JAX glue ------------------------------------

def _fold_bn(gamma, beta, mean, var, eps):
    scale = gamma / jnp.sqrt(var + eps)
    shift = beta - mean * scale
    return scale.astype(jnp.float32), shift.astype(jnp.float32)


def _conv_w_to_taps(w, scale):
    """Torch conv weight (Cout, Cin, 3, 3) + folded BN scale
       -> bf16 per-tap weights (9, Cin, Cout)."""
    cout, cin, kh, kw = w.shape
    wm = jnp.transpose(w, (2, 3, 1, 0)).reshape(kh * kw, cin, cout)
    return (wm * scale[None, None, :]).astype(jnp.bfloat16)


def _pick_row_tile(Ho, Wm, C):
    """Largest divisor of Ho whose per-tile f32 accumulator fits ~32 vregs."""
    budget = 128 * 1024
    for tr in range(Ho, 0, -1):
        if Ho % tr == 0 and tr * Wm * C * 4 <= budget:
            return tr
    return 1


def basic_block_forward(x_nchw, params, stride, eps=1e-5):
    s = int(stride)
    N, cin, H, W = x_nchw.shape
    planes = params["w1"].shape[0]
    Ho = (H - 1) // s + 1
    Wo = (W - 1) // s + 1
    Wm = Wo + 2                              # slab row stride (Wo + conv2 halo)
    M = Ho * Wm
    max_d = 2 // s                           # max tap offset within a phase
    Hph = Ho + max_d                         # data rows per phase
    Wd = Wo + max_d                          # data cols per phase
    Lph = (Hph + 1) * Wm                     # +1 zero slack row per phase

    # ---- input layout, all in bf16: NCHW->NHWC, pad, phase split, flatten ---
    x = jnp.transpose(x_nchw.astype(jnp.bfloat16), (0, 2, 3, 1))
    xp = jnp.pad(x, ((0, 0), (1, s * Hph - H - 1), (1, s * Wd - W - 1), (0, 0)))
    ph = xp.reshape(N, Hph, s, Wd, s, cin).transpose(0, 2, 4, 1, 3, 5)
    ph = jnp.pad(ph, ((0, 0), (0, 0), (0, 0), (0, 1), (0, Wm - Wd), (0, 0)))
    x_flat = ph.reshape(N, s * s, Lph, cin)

    # ---- fold BN (eval mode) into conv weights / per-channel shifts ---------
    sc1, sh1 = _fold_bn(params["g1"], params["b1"], params["rm1"], params["rv1"], eps)
    sc2, sh2 = _fold_bn(params["g2"], params["b2"], params["rm2"], params["rv2"], eps)
    w1 = _conv_w_to_taps(params["w1"], sc1)           # (9, cin, planes)   bf16
    w2 = _conv_w_to_taps(params["w2"], sc2)           # (9, planes, planes) bf16
    sh1 = sh1.reshape(1, planes)
    sh2 = sh2.reshape(1, planes)

    has_proj = (s != 1) or (cin != planes)
    row_tile = _pick_row_tile(Ho, Wm, planes)

    x_spec = pl.BlockSpec((1, s * s, Lph, cin), lambda n: (n, 0, 0, 0))
    out_spec = pl.BlockSpec((1, M, planes), lambda n: (n, 0, 0))

    flops = 2 * N * M * 9 * (cin * planes + planes * planes)
    if has_proj:
        sc_s, sh_s = _fold_bn(params["gs"], params["bs"], params["rms"],
                              params["rvs"], eps)
        ws = (jnp.transpose(params["ws"].reshape(planes, cin), (1, 0))
              * sc_s[None, :]).astype(jnp.bfloat16)   # (cin, planes)
        sh_s = sh_s.reshape(1, planes)
        kernel = partial(_kernel_proj, s, Ho, Wo, Wm, row_tile)
        args = (x_flat, w1, sh1, w2, sh2, ws, sh_s)
        flops += 2 * N * M * cin * planes
        w_bytes = (w1.size + w2.size + ws.size) * 2 + 3 * planes * 4
    else:
        kernel = partial(_kernel_identity, s, Ho, Wo, Wm, row_tile)
        args = (x_flat, w1, sh1, w2, sh2)
        w_bytes = (w1.size + w2.size) * 2 + 2 * planes * 4

    x_block_bytes = s * s * Lph * cin * 2
    out_block_bytes = M * planes * 2
    mid_bytes = (Ho + 3) * Wm * planes * 2
    vmem_est = 2 * x_block_bytes + 2 * out_block_bytes + mid_bytes + w_bytes
    vmem_limit = int(min(64 << 20, max(16 << 20, 2 * vmem_est)))
    bytes_accessed = int(x_flat.size * 2 + w_bytes + N * M * planes * 2)

    def run(weight_specs):
        return pl.pallas_call(
            kernel,
            out_shape=jax.ShapeDtypeStruct((N, M, planes), jnp.bfloat16),
            grid=(N,),
            in_specs=[x_spec] + weight_specs,
            out_specs=out_spec,
            scratch_shapes=[pltpu.VMEM(((Ho + 3) * Wm, planes), jnp.bfloat16)],
            compiler_params=pltpu.CompilerParams(
                dimension_semantics=("parallel",),
                vmem_limit_bytes=vmem_limit),
            cost_estimate=pl.CostEstimate(flops=int(flops), transcendentals=0,
                                          bytes_accessed=bytes_accessed),
        )(*args)

    try:
        # Preferred: weights/shifts as whole-array VMEM residents (loaded once,
        # single-buffered -> no per-step double-buffer VMEM cost).
        out_flat = run([pl.BlockSpec(memory_space=pltpu.MemorySpace.VMEM)]
                       * (len(args) - 1))
    except Exception:
        # Fallback: blocked specs with constant index maps (still DMA'd once,
        # but double-buffered by the pipeline).
        out_flat = run([pl.BlockSpec(a.shape, lambda n, _nd=a.ndim: (0,) * _nd)
                        for a in args[1:]])

    # Drop the scratch columns, back to NCHW.  Kept in bf16 (cast if the
    # consumer needs f32).
    out_nhwc = out_flat.reshape(N, Ho, Wm, planes)[:, :, :Wo, :]
    return jnp.transpose(out_nhwc, (0, 3, 1, 2))


# --------------------------- pure-JAX reference -------------------------------

def basic_block_reference(x, params, stride, eps=1e-5):
    def conv(x, w, s, pad):
        return lax.conv_general_dilated(
            x, w, (s, s), ((pad, pad), (pad, pad)),
            dimension_numbers=("NCHW", "OIHW", "NCHW"))

    def bn(x, g, b, m, v):
        return ((x - m[None, :, None, None]) / jnp.sqrt(v + eps)[None, :, None, None]
                * g[None, :, None, None] + b[None, :, None, None])

    planes = params["w1"].shape[0]
    cin = x.shape[1]
    out = jax.nn.relu(bn(conv(x, params["w1"], stride, 1),
                         params["g1"], params["b1"], params["rm1"], params["rv1"]))
    out = bn(conv(out, params["w2"], 1, 1),
             params["g2"], params["b2"], params["rm2"], params["rv2"])
    if stride != 1 or cin != planes:
        sc = bn(conv(x, params["ws"], stride, 0),
                params["gs"], params["bs"], params["rms"], params["rvs"])
    else:
        sc = x
    return jax.nn.relu(out + sc)


# ----------------------------------- main -------------------------------------

if __name__ == "__main__":
    eps = 1e-5
    key = jax.random.PRNGKey(0)

    def make_params(key, in_planes, planes, has_proj):
        ks = jax.random.split(key, 6)

        def bn_params(k):
            a, b, c, d = jax.random.split(k, 4)
            return (1.0 + 0.1 * jax.random.normal(a, (planes,), jnp.float32),
                    0.1 * jax.random.normal(b, (planes,), jnp.float32),
                    0.1 * jax.random.normal(c, (planes,), jnp.float32),
                    jnp.abs(1.0 + 0.1 * jax.random.normal(d, (planes,), jnp.float32)))

        g1, b1, rm1, rv1 = bn_params(ks[1])
        g2, b2, rm2, rv2 = bn_params(ks[3])
        p = dict(
            w1=0.1 * jax.random.normal(ks[0], (planes, in_planes, 3, 3), jnp.float32),
            g1=g1, b1=b1, rm1=rm1, rv1=rv1,
            w2=0.1 * jax.random.normal(ks[2], (planes, planes, 3, 3), jnp.float32),
            g2=g2, b2=b2, rm2=rm2, rv2=rv2)
        if has_proj:
            gs, bs_, rms, rvs = bn_params(ks[5])
            p.update(
                ws=0.1 * jax.random.normal(ks[4], (planes, in_planes, 1, 1), jnp.float32),
                gs=gs, bs=bs_, rms=rms, rvs=rvs)
        return p

    configs = [
        # (N, in_planes, planes, H, W, stride)
        (2, 16, 128, 16, 16, 2),   # projection-shortcut path (stride 2)
        (2, 128, 128, 8, 8, 1),    # identity-shortcut path
    ]
    for idx, (N, cin, planes, H, W, stride) in enumerate(configs):
        kx, kp, key = jax.random.split(key, 3)
        x = jax.random.normal(kx, (N, cin, H, W), jnp.float32)
        has_proj = stride != 1 or cin != planes
        params = make_params(kp, cin, planes, has_proj)

        out = jax.block_until_ready(basic_block_forward(x, params, stride, eps))
        ref = jax.block_until_ready(basic_block_reference(x, params, stride, eps))

        Ho = (H - 1) // stride + 1
        Wo = (W - 1) // stride + 1
        assert out.shape == ref.shape == (N, planes, Ho, Wo), (out.shape, ref.shape)
        # bf16 operands / bf16 output with f32 accumulation: relative-to-max error.
        err = float(jnp.max(jnp.abs(out.astype(jnp.float32) - ref)) /
                    jnp.maximum(jnp.max(jnp.abs(ref)), 1.0))
        assert err < 2e-2, f"config {idx}: relative error {err}"

    print("KERNEL_OK")
</pallas_src>

<mosaic_0001>
module attributes {stable_mosaic.version = 11 : i64} {
  func.func @_kernel_proj(%arg0: i32, %arg1: memref<1x4x100x16xbf16, #tpu.memory_space<vmem>>, %arg2: memref<9x16x128xbf16, #tpu.memory_space<vmem>>, %arg3: memref<1x128xf32, #tpu.memory_space<vmem>>, %arg4: memref<9x128x128xbf16, #tpu.memory_space<vmem>>, %arg5: memref<1x128xf32, #tpu.memory_space<vmem>>, %arg6: memref<16x128xbf16, #tpu.memory_space<vmem>>, %arg7: memref<1x128xf32, #tpu.memory_space<vmem>>, %arg8: memref<1x80x128xbf16, #tpu.memory_space<vmem>>, %arg9: memref<110x128xbf16, #tpu.memory_space<vmem>>) attributes {dimension_semantics = [#tpu.dimension_semantics<parallel>], iteration_bounds = array<i64: 2>, scalar_prefetch = 0 : i64, scratch_operands = 1 : i64, tpu.core_type = #tpu.core_type<tc>, window_params = [{transform_indices = @transform_0, window_bounds = array<i64: 1, 4, 100, 16>}, {pipeline_mode = #tpu.pipeline_mode<synchronous>, transform_indices = @transform_1, window_bounds = array<i64: 9, 16, 128>}, {pipeline_mode = #tpu.pipeline_mode<synchronous>, transform_indices = @transform_2, window_bounds = array<i64: 1, 128>}, {pipeline_mode = #tpu.pipeline_mode<synchronous>, transform_indices = @transform_3, window_bounds = array<i64: 9, 128, 128>}, {pipeline_mode = #tpu.pipeline_mode<synchronous>, transform_indices = @transform_4, window_bounds = array<i64: 1, 128>}, {pipeline_mode = #tpu.pipeline_mode<synchronous>, transform_indices = @transform_5, window_bounds = array<i64: 16, 128>}, {pipeline_mode = #tpu.pipeline_mode<synchronous>, transform_indices = @transform_6, window_bounds = array<i64: 1, 128>}, {transform_indices = @transform_7, window_bounds = array<i64: 1, 80, 128>}]} {
    %cst = arith.constant 0.000000e+00 : bf16
    %0 = vector.broadcast %cst : bf16 to vector<11x128xbf16>
    %c0 = arith.constant 0 : index
    %c0_0 = arith.constant 0 : index
    %1 = vector.load %arg9[%c0, %c0_0] : memref<110x128xbf16, #tpu.memory_space<vmem>>, vector<11x128xbf16>
    tpu.vector_store %arg9[%c0, %c0_0], %0 {strides = array<i32>} : memref<110x128xbf16, #tpu.memory_space<vmem>>, vector<11x128xbf16>,
    %cst_1 = arith.constant 0.000000e+00 : bf16
    %2 = vector.broadcast %cst_1 : bf16 to vector<19x128xbf16>
    %c91 = arith.constant 91 : index
    %c0_2 = arith.constant 0 : index
    %3 = vector.load %arg9[%c91, %c0_2] : memref<110x128xbf16, #tpu.memory_space<vmem>>, vector<19x128xbf16>
    tpu.vector_store %arg9[%c91, %c0_2], %2 {strides = array<i32>} : memref<110x128xbf16, #tpu.memory_space<vmem>>, vector<19x128xbf16>,
    %4 = tpu.iota {dimensions = array<i32: 0>} : vector<80x1xi32>
    %c10_i32 = arith.constant 10 : i32
    %c0_i32 = arith.constant 0 : i32
    %5 = arith.cmpi eq, %c10_i32, %c0_i32 : i32
    %c1_i32 = arith.constant 1 : i32
    %6 = arith.select %5, %c1_i32, %c10_i32 : i32
    %7 = vector.broadcast %6 : i32 to vector<80x1xi32>
    %8 = arith.remsi %4, %7 : vector<80x1xi32>
    %c0_i32_3 = arith.constant 0 : i32
    %9 = vector.broadcast %c0_i32_3 : i32 to vector<80x1xi32>
    %10 = arith.cmpi ne, %8, %9 : vector<80x1xi32>
    %c0_i32_4 = arith.constant 0 : i32
    %11 = vector.broadcast %c0_i32_4 : i32 to vector<80x1xi32>
    %12 = arith.cmpi slt, %8, %11 : vector<80x1xi32>
    %c0_i32_5 = arith.constant 0 : i32
    %13 = arith.cmpi slt, %6, %c0_i32_5 : i32
    %14 = vector.broadcast %13 : i1 to vector<80x1xi1>
    %15 = vector.broadcast %14 : vector<80x1xi1> to vector<80x1xi1>
    %16 = arith.xori %12, %15 : vector<80x1xi1>
    %17 = arith.andi %16, %10 : vector<80x1xi1>
    %18 = vector.broadcast %6 : i32 to vector<80x1xi32>
    %19 = arith.addi %8, %18 : vector<80x1xi32>
    %20 = arith.select %17, %19, %8 : vector<80x1xi1>, vector<80x1xi32>
    %c8_i32 = arith.constant 8 : i32
    %21 = vector.broadcast %c8_i32 : i32 to vector<80x1xi32>
    %22 = arith.cmpi slt, %20, %21 : vector<80x1xi32>
    %cst_6 = arith.constant 0.000000e+00 : f32
    %23 = vector.broadcast %cst_6 : f32 to vector<80x128xf32>
    %c0_7 = arith.constant 0 : index
    %c0_8 = arith.constant 0 : index
    %c0_9 = arith.constant 0 : index
    %c0_10 = arith.constant 0 : index
    %24 = vector.load %arg1[%c0_7, %c0_8, %c0_9, %c0_10] : memref<1x4x100x16xbf16, #tpu.memory_space<vmem>>, vector<1x1x80x16xbf16>
    %25 = vector.shape_cast %24 : vector<1x1x80x16xbf16> to vector<80x16xbf16>
    %c0_11 = arith.constant 0 : index
    %c0_12 = arith.constant 0 : index
    %c0_13 = arith.constant 0 : index
    %26 = vector.load %arg2[%c0_11, %c0_12, %c0_13] : memref<9x16x128xbf16, #tpu.memory_space<vmem>>, vector<1x16x128xbf16>
    %27 = vector.shape_cast %26 : vector<1x16x128xbf16> to vector<16x128xbf16>
    %cst_14 = arith.constant dense<0.000000e+00> : vector<80x128xf32>
    %28 = tpu.matmul %25, %27, %cst_14 {dimension_numbers = #tpu.dot_dimension_numbers<[1], [0], [0], [1], [0, 0, 1, 1], [], []>} : vector<80x16xbf16>, vector<16x128xbf16>, vector<80x128xf32> -> vector<80x128xf32>
    %29 = arith.addf %23, %28 : vector<80x128xf32>
    %c0_15 = arith.constant 0 : index
    %c1 = arith.constant 1 : index
    %c0_16 = arith.constant 0 : index
    %c0_17 = arith.constant 0 : index
    %30 = vector.load %arg1[%c0_15, %c1, %c0_16, %c0_17] : memref<1x4x100x16xbf16, #tpu.memory_space<vmem>>, vector<1x1x80x16xbf16>
    %31 = vector.shape_cast %30 : vector<1x1x80x16xbf16> to vector<80x16xbf16>
    %c1_18 = arith.constant 1 : index
    %c0_19 = arith.constant 0 : index
    %c0_20 = arith.constant 0 : index
    %32 = vector.load %arg2[%c1_18, %c0_19, %c0_20] : memref<9x16x128xbf16, #tpu.memory_space<vmem>>, vector<1x16x128xbf16>
    %33 = vector.shape_cast %32 : vector<1x16x128xbf16> to vector<16x128xbf16>
    %cst_21 = arith.constant dense<0.000000e+00> : vector<80x128xf32>
    %34 = tpu.matmul %31, %33, %cst_21 {dimension_numbers = #tpu.dot_dimension_numbers<[1], [0], [0], [1], [0, 0, 1, 1], [], []>} : vector<80x16xbf16>, vector<16x128xbf16>, vector<80x128xf32> -> vector<80x128xf32>
    %35 = arith.addf %29, %34 : vector<80x128xf32>
    %c0_22 = arith.constant 0 : index
    %c0_23 = arith.constant 0 : index
    %c1_24 = arith.constant 1 : index
    %c0_25 = arith.constant 0 : index
    %36 = vector.load %arg1[%c0_22, %c0_23, %c1_24, %c0_25] : memref<1x4x100x16xbf16, #tpu.memory_space<vmem>>, vector<1x1x80x16xbf16>
    %37 = vector.shape_cast %36 : vector<1x1x80x16xbf16> to vector<80x16xbf16>
    %c2 = arith.constant 2 : index
    %c0_26 = arith.constant 0 : index
    %c0_27 = arith.constant 0 : index
    %38 = vector.load %arg2[%c2, %c0_26, %c0_27] : memref<9x16x128xbf16, #tpu.memory_space<vmem>>, vector<1x16x128xbf16>
    %39 = vector.shape_cast %38 : vector<1x16x128xbf16> to vector<16x128xbf16>
    %cst_28 = arith.constant dense<0.000000e+00> : vector<80x128xf32>
    %40 = tpu.matmul %37, %39, %cst_28 {dimension_numbers = #tpu.dot_dimension_numbers<[1], [0], [0], [1], [0, 0, 1, 1], [], []>} : vector<80x16xbf16>, vector<16x128xbf16>, vector<80x128xf32> -> vector<80x128xf32>
    %41 = arith.addf %35, %40 : vector<80x128xf32>
    %c0_29 = arith.constant 0 : index
    %c2_30 = arith.constant 2 : index
    %c0_31 = arith.constant 0 : index
    %c0_32 = arith.constant 0 : index
    %42 = vector.load %arg1[%c0_29, %c2_30, %c0_31, %c0_32] : memref<1x4x100x16xbf16, #tpu.memory_space<vmem>>, vector<1x1x80x16xbf16>
    %43 = vector.shape_cast %42 : vector<1x1x80x16xbf16> to vector<80x16xbf16>
    %c3 = arith.constant 3 : index
    %c0_33 = arith.constant 0 : index
    %c0_34 = arith.constant 0 : index
    %44 = vector.load %arg2[%c3, %c0_33, %c0_34] : memref<9x16x128xbf16, #tpu.memory_space<vmem>>, vector<1x16x128xbf16>
    %45 = vector.shape_cast %44 : vector<1x16x128xbf16> to vector<16x128xbf16>
    %cst_35 = arith.constant dense<0.000000e+00> : vector<80x128xf32>
    %46 = tpu.matmul %43, %45, %cst_35 {dimension_numbers = #tpu.dot_dimension_numbers<[1], [0], [0], [1], [0, 0, 1, 1], [], []>} : vector<80x16xbf16>, vector<16x128xbf16>, vector<80x128xf32> -> vector<80x128xf32>
    %47 = arith.addf %41, %46 : vector<80x128xf32>
    %c0_36 = arith.constant 0 : index
    %c3_37 = arith.constant 3 : index
    %c0_38 = arith.constant 0 : index
    %c0_39 = arith.constant 0 : index
    %48 = vector.load %arg1[%c0_36, %c3_37, %c0_38, %c0_39] : memref<1x4x100x16xbf16, #tpu.memory_space<vmem>>, vector<1x1x80x16xbf16>
    %49 = vector.shape_cast %48 : vector<1x1x80x16xbf16> to vector<80x16xbf16>
    %c4 = arith.constant 4 : index
    %c0_40 = arith.constant 0 : index
    %c0_41 = arith.constant 0 : index
    %50 = vector.load %arg2[%c4, %c0_40, %c0_41] : memref<9x16x128xbf16, #tpu.memory_space<vmem>>, vector<1x16x128xbf16>
    %51 = vector.shape_cast %50 : vector<1x16x128xbf16> to vector<16x128xbf16>
    %cst_42 = arith.constant dense<0.000000e+00> : vector<80x128xf32>
    %52 = tpu.matmul %49, %51, %cst_42 {dimension_numbers = #tpu.dot_dimension_numbers<[1], [0], [0], [1], [0, 0, 1, 1], [], []>} : vector<80x16xbf16>, vector<16x128xbf16>, vector<80x128xf32> -> vector<80x128xf32>
    %53 = arith.addf %47, %52 : vector<80x128xf32>
    %c0_43 = arith.constant 0 : index
    %c2_44 = arith.constant 2 : index
    %c1_45 = arith.constant 1 : index
    %c0_46 = arith.constant 0 : index
    %54 = vector.load %arg1[%c0_43, %c2_44, %c1_45, %c0_46] : memref<1x4x100x16xbf16, #tpu.memory_space<vmem>>, vector<1x1x80x16xbf16>
    %55 = vector.shape_cast %54 : vector<1x1x80x16xbf16> to vector<80x16xbf16>
    %c5 = arith.constant 5 : index
    %c0_47 = arith.constant 0 : index
    %c0_48 = arith.constant 0 : index
    %56 = vector.load %arg2[%c5, %c0_47, %c0_48] : memref<9x16x128xbf16, #tpu.memory_space<vmem>>, vector<1x16x128xbf16>
    %57 = vector.shape_cast %56 : vector<1x16x128xbf16> to vector<16x128xbf16>
    %cst_49 = arith.constant dense<0.000000e+00> : vector<80x128xf32>
    %58 = tpu.matmul %55, %57, %cst_49 {dimension_numbers = #tpu.dot_dimension_numbers<[1], [0], [0], [1], [0, 0, 1, 1], [], []>} : vector<80x16xbf16>, vector<16x128xbf16>, vector<80x128xf32> -> vector<80x128xf32>
    %59 = arith.addf %53, %58 : vector<80x128xf32>
    %c0_50 = arith.constant 0 : index
    %c0_51 = arith.constant 0 : index
    %c10 = arith.constant 10 : index
    %c0_52 = arith.constant 0 : index
    %60 = vector.load %arg1[%c0_50, %c0_51, %c10, %c0_52] : memref<1x4x100x16xbf16, #tpu.memory_space<vmem>>, vector<1x1x80x16xbf16>
    %61 = vector.shape_cast %60 : vector<1x1x80x16xbf16> to vector<80x16xbf16>
    %c6 = arith.constant 6 : index
    %c0_53 = arith.constant 0 : index
    %c0_54 = arith.constant 0 : index
    %62 = vector.load %arg2[%c6, %c0_53, %c0_54] : memref<9x16x128xbf16, #tpu.memory_space<vmem>>, vector<1x16x128xbf16>
    %63 = vector.shape_cast %62 : vector<1x16x128xbf16> to vector<16x128xbf16>
    %cst_55 = arith.constant dense<0.000000e+00> : vector<80x128xf32>
    %64 = tpu.matmul %61, %63, %cst_55 {dimension_numbers = #tpu.dot_dimension_numbers<[1], [0], [0], [1], [0, 0, 1, 1], [], []>} : vector<80x16xbf16>, vector<16x128xbf16>, vector<80x128xf32> -> vector<80x128xf32>
    %65 = arith.addf %59, %64 : vector<80x128xf32>
    %c0_56 = arith.constant 0 : index
    %c1_57 = arith.constant 1 : index
    %c10_58 = arith.constant 10 : index
    %c0_59 = arith.constant 0 : index
    %66 = vector.load %arg1[%c0_56, %c1_57, %c10_58, %c0_59] : memref<1x4x100x16xbf16, #tpu.memory_space<vmem>>, vector<1x1x80x16xbf16>
    %67 = vector.shape_cast %66 : vector<1x1x80x16xbf16> to vector<80x16xbf16>
    %c7 = arith.constant 7 : index
    %c0_60 = arith.constant 0 : index
    %c0_61 = arith.constant 0 : index
    %68 = vector.load %arg2[%c7, %c0_60, %c0_61] : memref<9x16x128xbf16, #tpu.memory_space<vmem>>, vector<1x16x128xbf16>
    %69 = vector.shape_cast %68 : vector<1x16x128xbf16> to vector<16x128xbf16>
    %cst_62 = arith.constant dense<0.000000e+00> : vector<80x128xf32>
    %70 = tpu.matmul %67, %69, %cst_62 {dimension_numbers = #tpu.dot_dimension_numbers<[1], [0], [0], [1], [0, 0, 1, 1], [], []>} : vector<80x16xbf16>, vector<16x128xbf16>, vector<80x128xf32> -> vector<80x128xf32>
    %71 = arith.addf %65, %70 : vector<80x128xf32>
    %c0_63 = arith.constant 0 : index
    %c0_64 = arith.constant 0 : index
    %c11 = arith.constant 11 : index
    %c0_65 = arith.constant 0 : index
    %72 = vector.load %arg1[%c0_63, %c0_64, %c11, %c0_65] : memref<1x4x100x16xbf16, #tpu.memory_space<vmem>>, vector<1x1x80x16xbf16>
    %73 = vector.shape_cast %72 : vector<1x1x80x16xbf16> to vector<80x16xbf16>
    %c8 = arith.constant 8 : index
    %c0_66 = arith.constant 0 : index
    %c0_67 = arith.constant 0 : index
    %74 = vector.load %arg2[%c8, %c0_66, %c0_67] : memref<9x16x128xbf16, #tpu.memory_space<vmem>>, vector<1x16x128xbf16>
    %75 = vector.shape_cast %74 : vector<1x16x128xbf16> to vector<16x128xbf16>
    %cst_68 = arith.constant dense<0.000000e+00> : vector<80x128xf32>
    %76 = tpu.matmul %73, %75, %cst_68 {dimension_numbers = #tpu.dot_dimension_numbers<[1], [0], [0], [1], [0, 0, 1, 1], [], []>} : vector<80x16xbf16>, vector<16x128xbf16>, vector<80x128xf32> -> vector<80x128xf32>
    %77 = arith.addf %71, %76 : vector<80x128xf32>
    %c0_69 = arith.constant 0 : index
    %c0_70 = arith.constant 0 : index
    %78 = vector.load %arg3[%c0_69, %c0_70] : memref<1x128xf32, #tpu.memory_space<vmem>>, vector<1x128xf32>
    %79 = vector.broadcast %78 : vector<1x128xf32> to vector<80x128xf32>
    %80 = arith.addf %77, %79 : vector<80x128xf32>
    %cst_71 = arith.constant 0.000000e+00 : f32
    %81 = vector.broadcast %cst_71 : f32 to vector<80x128xf32>
    %82 = arith.maximumf %80, %81 : vector<80x128xf32>
    %cst_72 = arith.constant 0.000000e+00 : f32
    %83 = vector.shape_cast %22 : vector<80x1xi1> to vector<80x1xi1>
    %84 = vector.broadcast %83 : vector<80x1xi1> to vector<80x128xi1>
    %85 = vector.broadcast %cst_72 : f32 to vector<80x128xf32>
    %86 = arith.select %84, %82, %85 : vector<80x128xi1>, vector<80x128xf32>
    %87 = arith.truncf %86 : vector<80x128xf32> to vector<80x128xbf16>
    %c11_73 = arith.constant 11 : index
    %c0_74 = arith.constant 0 : index
    %88 = vector.load %arg9[%c11_73, %c0_74] : memref<110x128xbf16, #tpu.memory_space<vmem>>, vector<80x128xbf16>
    tpu.vector_store %arg9[%c11_73, %c0_74], %87 {strides = array<i32>} : memref<110x128xbf16, #tpu.memory_space<vmem>>, vector<80x128xbf16>,
    %c0_75 = arith.constant 0 : index
    %c3_76 = arith.constant 3 : index
    %c0_77 = arith.constant 0 : index
    %c0_78 = arith.constant 0 : index
    %89 = vector.load %arg1[%c0_75, %c3_76, %c0_77, %c0_78] : memref<1x4x100x16xbf16, #tpu.memory_space<vmem>>, vector<1x1x80x16xbf16>
    %90 = vector.shape_cast %89 : vector<1x1x80x16xbf16> to vector<80x16xbf16>
    %c0_79 = arith.constant 0 : index
    %c0_80 = arith.constant 0 : index
    %91 = vector.load %arg6[%c0_79, %c0_80] : memref<16x128xbf16, #tpu.memory_space<vmem>>, vector<16x128xbf16>
    %cst_81 = arith.constant dense<0.000000e+00> : vector<80x128xf32>
    %92 = tpu.matmul %90, %91, %cst_81 {dimension_numbers = #tpu.dot_dimension_numbers<[1], [0], [0], [1], [0, 0, 1, 1], [], []>} : vector<80x16xbf16>, vector<16x128xbf16>, vector<80x128xf32> -> vector<80x128xf32>
    %c0_82 = arith.constant 0 : index
    %c0_83 = arith.constant 0 : index
    %93 = vector.load %arg5[%c0_82, %c0_83] : memref<1x128xf32, #tpu.memory_space<vmem>>, vector<1x128xf32>
    %c0_84 = arith.constant 0 : index
    %c0_85 = arith.constant 0 : index
    %94 = vector.load %arg7[%c0_84, %c0_85] : memref<1x128xf32, #tpu.memory_space<vmem>>, vector<1x128xf32>
    %95 = arith.addf %93, %94 : vector<1x128xf32>
    %96 = vector.broadcast %95 : vector<1x128xf32> to vector<80x128xf32>
    %97 = arith.addf %92, %96 : vector<80x128xf32>
    %c0_86 = arith.constant 0 : index
    %c0_87 = arith.constant 0 : index
    %98 = vector.load %arg9[%c0_86, %c0_87] : memref<110x128xbf16, #tpu.memory_space<vmem>>, vector<80x128xbf16>
    %c0_88 = arith.constant 0 : index
    %c0_89 = arith.constant 0 : index
    %c0_90 = arith.constant 0 : index
    %99 = vector.load %arg4[%c0_88, %c0_89, %c0_90] : memref<9x128x128xbf16, #tpu.memory_space<vmem>>, vector<1x128x128xbf16>
    %100 = vector.shape_cast %99 : vector<1x128x128xbf16> to vector<128x128xbf16>
    %cst_91 = arith.constant dense<0.000000e+00> : vector<80x128xf32>
    %101 = tpu.matmul %98, %100, %cst_91 {dimension_numbers = #tpu.dot_dimension_numbers<[1], [0], [0], [1], [0, 0, 1, 1], [], []>} : vector<80x128xbf16>, vector<128x128xbf16>, vector<80x128xf32> -> vector<80x128xf32>
    %102 = arith.addf %97, %101 : vector<80x128xf32>
    %c1_92 = arith.constant 1 : index
    %c0_93 = arith.constant 0 : index
    %103 = vector.load %arg9[%c1_92, %c0_93] : memref<110x128xbf16, #tpu.memory_space<vmem>>, vector<80x128xbf16>
    %c1_94 = arith.constant 1 : index
    %c0_95 = arith.constant 0 : index
    %c0_96 = arith.constant 0 : index
    %104 = vector.load %arg4[%c1_94, %c0_95, %c0_96] : memref<9x128x128xbf16, #tpu.memory_space<vmem>>, vector<1x128x128xbf16>
    %105 = vector.shape_cast %104 : vector<1x128x128xbf16> to vector<128x128xbf16>
    %cst_97 = arith.constant dense<0.000000e+00> : vector<80x128xf32>
    %106 = tpu.matmul %103, %105, %cst_97 {dimension_numbers = #tpu.dot_dimension_numbers<[1], [0], [0], [1], [0, 0, 1, 1], [], []>} : vector<80x128xbf16>, vector<128x128xbf16>, vector<80x128xf32> -> vector<80x128xf32>
    %107 = arith.addf %102, %106 : vector<80x128xf32>
    %c2_98 = arith.constant 2 : index
    %c0_99 = arith.constant 0 : index
    %108 = vector.load %arg9[%c2_98, %c0_99] : memref<110x128xbf16, #tpu.memory_space<vmem>>, vector<80x128xbf16>
    %c2_100 = arith.constant 2 : index
    %c0_101 = arith.constant 0 : index
    %c0_102 = arith.constant 0 : index
    %109 = vector.load %arg4[%c2_100, %c0_101, %c0_102] : memref<9x128x128xbf16, #tpu.memory_space<vmem>>, vector<1x128x128xbf16>
    %110 = vector.shape_cast %109 : vector<1x128x128xbf16> to vector<128x128xbf16>
    %cst_103 = arith.constant dense<0.000000e+00> : vector<80x128xf32>
    %111 = tpu.matmul %108, %110, %cst_103 {dimension_numbers = #tpu.dot_dimension_numbers<[1], [0], [0], [1], [0, 0, 1, 1], [], []>} : vector<80x128xbf16>, vector<128x128xbf16>, vector<80x128xf32> -> vector<80x128xf32>
    %112 = arith.addf %107, %111 : vector<80x128xf32>
    %c10_104 = arith.constant 10 : index
    %c0_105 = arith.constant 0 : index
    %113 = vector.load %arg9[%c10_104, %c0_105] : memref<110x128xbf16, #tpu.memory_space<vmem>>, vector<80x128xbf16>
    %c3_106 = arith.constant 3 : index
    %c0_107 = arith.constant 0 : index
    %c0_108 = arith.constant 0 : index
    %114 = vector.load %arg4[%c3_106, %c0_107, %c0_108] : memref<9x128x128xbf16, #tpu.memory_space<vmem>>, vector<1x128x128xbf16>
    %115 = vector.shape_cast %114 : vector<1x128x128xbf16> to vector<128x128xbf16>
    %cst_109 = arith.constant dense<0.000000e+00> : vector<80x128xf32>
    %116 = tpu.matmul %113, %115, %cst_109 {dimension_numbers = #tpu.dot_dimension_numbers<[1], [0], [0], [1], [0, 0, 1, 1], [], []>} : vector<80x128xbf16>, vector<128x128xbf16>, vector<80x128xf32> -> vector<80x128xf32>
    %117 = arith.addf %112, %116 : vector<80x128xf32>
    %c11_110 = arith.constant 11 : index
    %c0_111 = arith.constant 0 : index
    %118 = vector.load %arg9[%c11_110, %c0_111] : memref<110x128xbf16, #tpu.memory_space<vmem>>, vector<80x128xbf16>
    %c4_112 = arith.constant 4 : index
    %c0_113 = arith.constant 0 : index
    %c0_114 = arith.constant 0 : index
    %119 = vector.load %arg4[%c4_112, %c0_113, %c0_114] : memref<9x128x128xbf16, #tpu.memory_space<vmem>>, vector<1x128x128xbf16>
    %120 = vector.shape_cast %119 : vector<1x128x128xbf16> to vector<128x128xbf16>
    %cst_115 = arith.constant dense<0.000000e+00> : vector<80x128xf32>
    %121 = tpu.matmul %118, %120, %cst_115 {dimension_numbers = #tpu.dot_dimension_numbers<[1], [0], [0], [1], [0, 0, 1, 1], [], []>} : vector<80x128xbf16>, vector<128x128xbf16>, vector<80x128xf32> -> vector<80x128xf32>
    %122 = arith.addf %117, %121 : vector<80x128xf32>
    %c12 = arith.constant 12 : index
    %c0_116 = arith.constant 0 : index
    %123 = vector.load %arg9[%c12, %c0_116] : memref<110x128xbf16, #tpu.memory_space<vmem>>, vector<80x128xbf16>
    %c5_117 = arith.constant 5 : index
    %c0_118 = arith.constant 0 : index
    %c0_119 = arith.constant 0 : index
    %124 = vector.load %arg4[%c5_117, %c0_118, %c0_119] : memref<9x128x128xbf16, #tpu.memory_space<vmem>>, vector<1x128x128xbf16>
    %125 = vector.shape_cast %124 : vector<1x128x128xbf16> to vector<128x128xbf16>
    %cst_120 = arith.constant dense<0.000000e+00> : vector<80x128xf32>
    %126 = tpu.matmul %123, %125, %cst_120 {dimension_numbers = #tpu.dot_dimension_numbers<[1], [0], [0], [1], [0, 0, 1, 1], [], []>} : vector<80x128xbf16>, vector<128x128xbf16>, vector<80x128xf32> -> vector<80x128xf32>
    %127 = arith.addf %122, %126 : vector<80x128xf32>
    %c20 = arith.constant 20 : index
    %c0_121 = arith.constant 0 : index
    %128 = vector.load %arg9[%c20, %c0_121] : memref<110x128xbf16, #tpu.memory_space<vmem>>, vector<80x128xbf16>
    %c6_122 = arith.constant 6 : index
    %c0_123 = arith.constant 0 : index
    %c0_124 = arith.constant 0 : index
    %129 = vector.load %arg4[%c6_122, %c0_123, %c0_124] : memref<9x128x128xbf16, #tpu.memory_space<vmem>>, vector<1x128x128xbf16>
    %130 = vector.shape_cast %129 : vector<1x128x128xbf16> to vector<128x128xbf16>
    %cst_125 = arith.constant dense<0.000000e+00> : vector<80x128xf32>
    %131 = tpu.matmul %128, %130, %cst_125 {dimension_numbers = #tpu.dot_dimension_numbers<[1], [0], [0], [1], [0, 0, 1, 1], [], []>} : vector<80x128xbf16>, vector<128x128xbf16>, vector<80x128xf32> -> vector<80x128xf32>
    %132 = arith.addf %127, %131 : vector<80x128xf32>
    %c21 = arith.constant 21 : index
    %c0_126 = arith.constant 0 : index
    %133 = vector.load %arg9[%c21, %c0_126] : memref<110x128xbf16, #tpu.memory_space<vmem>>, vector<80x128xbf16>
    %c7_127 = arith.constant 7 : index
    %c0_128 = arith.constant 0 : index
    %c0_129 = arith.constant 0 : index
    %134 = vector.load %arg4[%c7_127, %c0_128, %c0_129] : memref<9x128x128xbf16, #tpu.memory_space<vmem>>, vector<1x128x128xbf16>
    %135 = vector.shape_cast %134 : vector<1x128x128xbf16> to vector<128x128xbf16>
    %cst_130 = arith.constant dense<0.000000e+00> : vector<80x128xf32>
    %136 = tpu.matmul %133, %135, %cst_130 {dimension_numbers = #tpu.dot_dimension_numbers<[1], [0], [0], [1], [0, 0, 1, 1], [], []>} : vector<80x128xbf16>, vector<128x128xbf16>, vector<80x128xf32> -> vector<80x128xf32>
    %137 = arith.addf %132, %136 : vector<80x128xf32>
    %c22 = arith.constant 22 : index
    %c0_131 = arith.constant 0 : index
    %138 = vector.load %arg9[%c22, %c0_131] : memref<110x128xbf16, #tpu.memory_space<vmem>>, vector<80x128xbf16>
    %c8_132 = arith.constant 8 : index
    %c0_133 = arith.constant 0 : index
    %c0_134 = arith.constant 0 : index
    %139 = vector.load %arg4[%c8_132, %c0_133, %c0_134] : memref<9x128x128xbf16, #tpu.memory_space<vmem>>, vector<1x128x128xbf16>
    %140 = vector.shape_cast %139 : vector<1x128x128xbf16> to vector<128x128xbf16>
    %cst_135 = arith.constant dense<0.000000e+00> : vector<80x128xf32>
    %141 = tpu.matmul %138, %140, %cst_135 {dimension_numbers = #tpu.dot_dimension_numbers<[1], [0], [0], [1], [0, 0, 1, 1], [], []>} : vector<80x128xbf16>, vector<128x128xbf16>, vector<80x128xf32> -> vector<80x128xf32>
    %142 = arith.addf %137, %141 : vector<80x128xf32>
    %cst_136 = arith.constant 0.000000e+00 : f32
    %143 = vector.broadcast %cst_136 : f32 to vector<80x128xf32>
    %144 = arith.maximumf %142, %143 : vector<80x128xf32>
    %145 = arith.truncf %144 : vector<80x128xf32> to vector<80x128xbf16>
    %c0_137 = arith.constant 0 : index
    %c0_138 = arith.constant 0 : index
    %c0_139 = arith.constant 0 : index
    %146 = vector.load %arg8[%c0_137, %c0_138, %c0_139] : memref<1x80x128xbf16, #tpu.memory_space<vmem>>, vector<1x80x128xbf16>
    %147 = vector.shape_cast %146 : vector<1x80x128xbf16> to vector<80x128xbf16>
    %148 = vector.shape_cast %145 : vector<80x128xbf16> to vector<1x80x128xbf16>
    tpu.vector_store %arg8[%c0_137, %c0_138, %c0_139], %148 {strides = array<i32>} : memref<1x80x128xbf16, #tpu.memory_space<vmem>>, vector<1x80x128xbf16>,
    return
  }
  func.func @transform_0(%arg0: i32) -> (i32, i32, i32, i32) {
    %c0_i32 = arith.constant 0 : i32
    %c0_i32_0 = arith.constant 0 : i32
    %c0_i32_1 = arith.constant 0 : i32
    %c0_i32_2 = arith.constant 0 : i32
    return %arg0, %c0_i32, %c0_i32_0, %c0_i32_1 : i32, i32, i32, i32
  }
  func.func @transform_1(%arg0: i32) -> (i32, i32, i32) {
    %c0_i32 = arith.constant 0 : i32
    %c0_i32_0 = arith.constant 0 : i32
    %c0_i32_1 = arith.constant 0 : i32
    %c0_i32_2 = arith.constant 0 : i32
    return %c0_i32, %c0_i32_0, %c0_i32_1 : i32, i32, i32
  }
  func.func @transform_2(%arg0: i32) -> (i32, i32) {
    %c0_i32 = arith.constant 0 : i32
    %c0_i32_0 = arith.constant 0 : i32
    %c0_i32_1 = arith.constant 0 : i32
    return %c0_i32, %c0_i32_0 : i32, i32
  }
  func.func @transform_3(%arg0: i32) -> (i32, i32, i32) {
    %c0_i32 = arith.constant 0 : i32
    %c0_i32_0 = arith.constant 0 : i32
    %c0_i32_1 = arith.constant 0 : i32
    %c0_i32_2 = arith.constant 0 : i32
    return %c0_i32, %c0_i32_0, %c0_i32_1 : i32, i32, i32
  }
  func.func @transform_4(%arg0: i32) -> (i32, i32) {
    %c0_i32 = arith.constant 0 : i32
    %c0_i32_0 = arith.constant 0 : i32
    %c0_i32_1 = arith.constant 0 : i32
    return %c0_i32, %c0_i32_0 : i32, i32
  }
  func.func @transform_5(%arg0: i32) -> (i32, i32) {
    %c0_i32 = arith.constant 0 : i32
    %c0_i32_0 = arith.constant 0 : i32
    %c0_i32_1 = arith.constant 0 : i32
    return %c0_i32, %c0_i32_0 : i32, i32
  }
  func.func @transform_6(%arg0: i32) -> (i32, i32) {
    %c0_i32 = arith.constant 0 : i32
    %c0_i32_0 = arith.constant 0 : i32
    %c0_i32_1 = arith.constant 0 : i32
    return %c0_i32, %c0_i32_0 : i32, i32
  }
  func.func @transform_7(%arg0: i32) -> (i32, i32, i32) {
    %c0_i32 = arith.constant 0 : i32
    %c0_i32_0 = arith.constant 0 : i32
    %c0_i32_1 = arith.constant 0 : i32
    return %arg0, %c0_i32, %c0_i32_0 : i32, i32, i32
  }
}

module attributes {stable_mosaic.version = 11 : i64} {
  func.func @_kernel_proj(%arg0: i32, %arg1: memref<1x4x100x16xbf16, #tpu.memory_space<vmem>>, %arg2: memref<9x16x128xbf16, #tpu.memory_space<vmem>>, %arg3: memref<1x128xf32, #tpu.memory_space<vmem>>, %arg4: memref<9x128x128xbf16, #tpu.memory_space<vmem>>, %arg5: memref<1x128xf32, #tpu.memory_space<vmem>>, %arg6: memref<16x128xbf16, #tpu.memory_space<vmem>>, %arg7: memref<1x128xf32, #tpu.memory_space<vmem>>, %arg8: memref<1x80x128xbf16, #tpu.memory_space<vmem>>, %arg9: memref<110x128xbf16, #tpu.memory_space<vmem>>) attributes {dimension_semantics = [#tpu.dimension_semantics<parallel>], iteration_bounds = array<i64: 2>, scalar_prefetch = 0 : i64, scratch_operands = 1 : i64, tpu.core_type = #tpu.core_type<tc>, window_params = [{transform_indices = @transform_0, window_bounds = array<i64: 1, 4, 100, 16>}, {pipeline_mode = #tpu.pipeline_mode<synchronous>, transform_indices = @transform_1, window_bounds = array<i64: 9, 16, 128>}, {pipeline_mode = #tpu.pipeline_mode<synchronous>, transform_indices = @transform_2, window_bounds = array<i64: 1, 128>}, {pipeline_mode = #tpu.pipeline_mode<synchronous>, transform_indices = @transform_3, window_bounds = array<i64: 9, 128, 128>}, {pipeline_mode = #tpu.pipeline_mode<synchronous>, transform_indices = @transform_4, window_bounds = array<i64: 1, 128>}, {pipeline_mode = #tpu.pipeline_mode<synchronous>, transform_indices = @transform_5, window_bounds = array<i64: 16, 128>}, {pipeline_mode = #tpu.pipeline_mode<synchronous>, transform_indices = @transform_6, window_bounds = array<i64: 1, 128>}, {transform_indices = @transform_7, window_bounds = array<i64: 1, 80, 128>}]} {
    %cst = arith.constant 0.000000e+00 : bf16
    %0 = vector.broadcast %cst : bf16 to vector<11x128xbf16>
    %c0 = arith.constant 0 : index
    %c0_0 = arith.constant 0 : index
    %1 = vector.load %arg9[%c0, %c0_0] : memref<110x128xbf16, #tpu.memory_space<vmem>>, vector<11x128xbf16>
    tpu.vector_store %arg9[%c0, %c0_0], %0 {strides = array<i32>} : memref<110x128xbf16, #tpu.memory_space<vmem>>, vector<11x128xbf16>,
    %cst_1 = arith.constant 0.000000e+00 : bf16
    %2 = vector.broadcast %cst_1 : bf16 to vector<19x128xbf16>
    %c91 = arith.constant 91 : index
    %c0_2 = arith.constant 0 : index
    %3 = vector.load %arg9[%c91, %c0_2] : memref<110x128xbf16, #tpu.memory_space<vmem>>, vector<19x128xbf16>
    tpu.vector_store %arg9[%c91, %c0_2], %2 {strides = array<i32>} : memref<110x128xbf16, #tpu.memory_space<vmem>>, vector<19x128xbf16>,
    %4 = tpu.iota {dimensions = array<i32: 0>} : vector<80x1xi32>
    %c10_i32 = arith.constant 10 : i32
    %c0_i32 = arith.constant 0 : i32
    %5 = arith.cmpi eq, %c10_i32, %c0_i32 : i32
    %c1_i32 = arith.constant 1 : i32
    %6 = arith.select %5, %c1_i32, %c10_i32 : i32
    %7 = vector.broadcast %6 : i32 to vector<80x1xi32>
    %8 = arith.remsi %4, %7 : vector<80x1xi32>
    %c0_i32_3 = arith.constant 0 : i32
    %9 = vector.broadcast %c0_i32_3 : i32 to vector<80x1xi32>
    %10 = arith.cmpi ne, %8, %9 : vector<80x1xi32>
    %c0_i32_4 = arith.constant 0 : i32
    %11 = vector.broadcast %c0_i32_4 : i32 to vector<80x1xi32>
    %12 = arith.cmpi slt, %8, %11 : vector<80x1xi32>
    %c0_i32_5 = arith.constant 0 : i32
    %13 = arith.cmpi slt, %6, %c0_i32_5 : i32
    %14 = vector.broadcast %13 : i1 to vector<80x1xi1>
    %15 = vector.broadcast %14 : vector<80x1xi1> to vector<80x1xi1>
    %16 = arith.xori %12, %15 : vector<80x1xi1>
    %17 = arith.andi %16, %10 : vector<80x1xi1>
    %18 = vector.broadcast %6 : i32 to vector<80x1xi32>
    %19 = arith.addi %8, %18 : vector<80x1xi32>
    %20 = arith.select %17, %19, %8 : vector<80x1xi1>, vector<80x1xi32>
    %c8_i32 = arith.constant 8 : i32
    %21 = vector.broadcast %c8_i32 : i32 to vector<80x1xi32>
    %22 = arith.cmpi slt, %20, %21 : vector<80x1xi32>
    %cst_6 = arith.constant 0.000000e+00 : f32
    %23 = vector.broadcast %cst_6 : f32 to vector<80x128xf32>
    %c0_7 = arith.constant 0 : index
    %c0_8 = arith.constant 0 : index
    %c0_9 = arith.constant 0 : index
    %c0_10 = arith.constant 0 : index
    %24 = vector.load %arg1[%c0_7, %c0_8, %c0_9, %c0_10] : memref<1x4x100x16xbf16, #tpu.memory_space<vmem>>, vector<1x1x80x16xbf16>
    %25 = vector.shape_cast %24 : vector<1x1x80x16xbf16> to vector<80x16xbf16>
    %c0_11 = arith.constant 0 : index
    %c0_12 = arith.constant 0 : index
    %c0_13 = arith.constant 0 : index
    %26 = vector.load %arg2[%c0_11, %c0_12, %c0_13] : memref<9x16x128xbf16, #tpu.memory_space<vmem>>, vector<1x16x128xbf16>
    %27 = vector.shape_cast %26 : vector<1x16x128xbf16> to vector<16x128xbf16>
    %cst_14 = arith.constant dense<0.000000e+00> : vector<80x128xf32>
    %28 = tpu.matmul %25, %27, %cst_14 {dimension_numbers = #tpu.dot_dimension_numbers<[1], [0], [0], [1], [0, 0, 1, 1], [], []>} : vector<80x16xbf16>, vector<16x128xbf16>, vector<80x128xf32> -> vector<80x128xf32>
    %29 = arith.addf %23, %28 : vector<80x128xf32>
    %c0_15 = arith.constant 0 : index
    %c1 = arith.constant 1 : index
    %c0_16 = arith.constant 0 : index
    %c0_17 = arith.constant 0 : index
    %30 = vector.load %arg1[%c0_15, %c1, %c0_16, %c0_17] : memref<1x4x100x16xbf16, #tpu.memory_space<vmem>>, vector<1x1x80x16xbf16>
    %31 = vector.shape_cast %30 : vector<1x1x80x16xbf16> to vector<80x16xbf16>
    %c1_18 = arith.constant 1 : index
    %c0_19 = arith.constant 0 : index
    %c0_20 = arith.constant 0 : index
    %32 = vector.load %arg2[%c1_18, %c0_19, %c0_20] : memref<9x16x128xbf16, #tpu.memory_space<vmem>>, vector<1x16x128xbf16>
    %33 = vector.shape_cast %32 : vector<1x16x128xbf16> to vector<16x128xbf16>
    %cst_21 = arith.constant dense<0.000000e+00> : vector<80x128xf32>
    %34 = tpu.matmul %31, %33, %cst_21 {dimension_numbers = #tpu.dot_dimension_numbers<[1], [0], [0], [1], [0, 0, 1, 1], [], []>} : vector<80x16xbf16>, vector<16x128xbf16>, vector<80x128xf32> -> vector<80x128xf32>
    %35 = arith.addf %29, %34 : vector<80x128xf32>
    %c0_22 = arith.constant 0 : index
    %c0_23 = arith.constant 0 : index
    %c1_24 = arith.constant 1 : index
    %c0_25 = arith.constant 0 : index
    %36 = vector.load %arg1[%c0_22, %c0_23, %c1_24, %c0_25] : memref<1x4x100x16xbf16, #tpu.memory_space<vmem>>, vector<1x1x80x16xbf16>
    %37 = vector.shape_cast %36 : vector<1x1x80x16xbf16> to vector<80x16xbf16>
    %c2 = arith.constant 2 : index
    %c0_26 = arith.constant 0 : index
    %c0_27 = arith.constant 0 : index
    %38 = vector.load %arg2[%c2, %c0_26, %c0_27] : memref<9x16x128xbf16, #tpu.memory_space<vmem>>, vector<1x16x128xbf16>
    %39 = vector.shape_cast %38 : vector<1x16x128xbf16> to vector<16x128xbf16>
    %cst_28 = arith.constant dense<0.000000e+00> : vector<80x128xf32>
    %40 = tpu.matmul %37, %39, %cst_28 {dimension_numbers = #tpu.dot_dimension_numbers<[1], [0], [0], [1], [0, 0, 1, 1], [], []>} : vector<80x16xbf16>, vector<16x128xbf16>, vector<80x128xf32> -> vector<80x128xf32>
    %41 = arith.addf %35, %40 : vector<80x128xf32>
    %c0_29 = arith.constant 0 : index
    %c2_30 = arith.constant 2 : index
    %c0_31 = arith.constant 0 : index
    %c0_32 = arith.constant 0 : index
    %42 = vector.load %arg1[%c0_29, %c2_30, %c0_31, %c0_32] : memref<1x4x100x16xbf16, #tpu.memory_space<vmem>>, vector<1x1x80x16xbf16>
    %43 = vector.shape_cast %42 : vector<1x1x80x16xbf16> to vector<80x16xbf16>
    %c3 = arith.constant 3 : index
    %c0_33 = arith.constant 0 : index
    %c0_34 = arith.constant 0 : index
    %44 = vector.load %arg2[%c3, %c0_33, %c0_34] : memref<9x16x128xbf16, #tpu.memory_space<vmem>>, vector<1x16x128xbf16>
    %45 = vector.shape_cast %44 : vector<1x16x128xbf16> to vector<16x128xbf16>
    %cst_35 = arith.constant dense<0.000000e+00> : vector<80x128xf32>
    %46 = tpu.matmul %43, %45, %cst_35 {dimension_numbers = #tpu.dot_dimension_numbers<[1], [0], [0], [1], [0, 0, 1, 1], [], []>} : vector<80x16xbf16>, vector<16x128xbf16>, vector<80x128xf32> -> vector<80x128xf32>
    %47 = arith.addf %41, %46 : vector<80x128xf32>
    %c0_36 = arith.constant 0 : index
    %c3_37 = arith.constant 3 : index
    %c0_38 = arith.constant 0 : index
    %c0_39 = arith.constant 0 : index
    %48 = vector.load %arg1[%c0_36, %c3_37, %c0_38, %c0_39] : memref<1x4x100x16xbf16, #tpu.memory_space<vmem>>, vector<1x1x80x16xbf16>
    %49 = vector.shape_cast %48 : vector<1x1x80x16xbf16> to vector<80x16xbf16>
    %c4 = arith.constant 4 : index
    %c0_40 = arith.constant 0 : index
    %c0_41 = arith.constant 0 : index
    %50 = vector.load %arg2[%c4, %c0_40, %c0_41] : memref<9x16x128xbf16, #tpu.memory_space<vmem>>, vector<1x16x128xbf16>
    %51 = vector.shape_cast %50 : vector<1x16x128xbf16> to vector<16x128xbf16>
    %cst_42 = arith.constant dense<0.000000e+00> : vector<80x128xf32>
    %52 = tpu.matmul %49, %51, %cst_42 {dimension_numbers = #tpu.dot_dimension_numbers<[1], [0], [0], [1], [0, 0, 1, 1], [], []>} : vector<80x16xbf16>, vector<16x128xbf16>, vector<80x128xf32> -> vector<80x128xf32>
    %53 = arith.addf %47, %52 : vector<80x128xf32>
    %c0_43 = arith.constant 0 : index
    %c2_44 = arith.constant 2 : index
    %c1_45 = arith.constant 1 : index
    %c0_46 = arith.constant 0 : index
    %54 = vector.load %arg1[%c0_43, %c2_44, %c1_45, %c0_46] : memref<1x4x100x16xbf16, #tpu.memory_space<vmem>>, vector<1x1x80x16xbf16>
    %55 = vector.shape_cast %54 : vector<1x1x80x16xbf16> to vector<80x16xbf16>
    %c5 = arith.constant 5 : index
    %c0_47 = arith.constant 0 : index
    %c0_48 = arith.constant 0 : index
    %56 = vector.load %arg2[%c5, %c0_47, %c0_48] : memref<9x16x128xbf16, #tpu.memory_space<vmem>>, vector<1x16x128xbf16>
    %57 = vector.shape_cast %56 : vector<1x16x128xbf16> to vector<16x128xbf16>
    %cst_49 = arith.constant dense<0.000000e+00> : vector<80x128xf32>
    %58 = tpu.matmul %55, %57, %cst_49 {dimension_numbers = #tpu.dot_dimension_numbers<[1], [0], [0], [1], [0, 0, 1, 1], [], []>} : vector<80x16xbf16>, vector<16x128xbf16>, vector<80x128xf32> -> vector<80x128xf32>
    %59 = arith.addf %53, %58 : vector<80x128xf32>
    %c0_50 = arith.constant 0 : index
    %c0_51 = arith.constant 0 : index
    %c10 = arith.constant 10 : index
    %c0_52 = arith.constant 0 : index
    %60 = vector.load %arg1[%c0_50, %c0_51, %c10, %c0_52] : memref<1x4x100x16xbf16, #tpu.memory_space<vmem>>, vector<1x1x80x16xbf16>
    %61 = vector.shape_cast %60 : vector<1x1x80x16xbf16> to vector<80x16xbf16>
    %c6 = arith.constant 6 : index
    %c0_53 = arith.constant 0 : index
    %c0_54 = arith.constant 0 : index
    %62 = vector.load %arg2[%c6, %c0_53, %c0_54] : memref<9x16x128xbf16, #tpu.memory_space<vmem>>, vector<1x16x128xbf16>
    %63 = vector.shape_cast %62 : vector<1x16x128xbf16> to vector<16x128xbf16>
    %cst_55 = arith.constant dense<0.000000e+00> : vector<80x128xf32>
    %64 = tpu.matmul %61, %63, %cst_55 {dimension_numbers = #tpu.dot_dimension_numbers<[1], [0], [0], [1], [0, 0, 1, 1], [], []>} : vector<80x16xbf16>, vector<16x128xbf16>, vector<80x128xf32> -> vector<80x128xf32>
    %65 = arith.addf %59, %64 : vector<80x128xf32>
    %c0_56 = arith.constant 0 : index
    %c1_57 = arith.constant 1 : index
    %c10_58 = arith.constant 10 : index
    %c0_59 = arith.constant 0 : index
    %66 = vector.load %arg1[%c0_56, %c1_57, %c10_58, %c0_59] : memref<1x4x100x16xbf16, #tpu.memory_space<vmem>>, vector<1x1x80x16xbf16>
    %67 = vector.shape_cast %66 : vector<1x1x80x16xbf16> to vector<80x16xbf16>
    %c7 = arith.constant 7 : index
    %c0_60 = arith.constant 0 : index
    %c0_61 = arith.constant 0 : index
    %68 = vector.load %arg2[%c7, %c0_60, %c0_61] : memref<9x16x128xbf16, #tpu.memory_space<vmem>>, vector<1x16x128xbf16>
    %69 = vector.shape_cast %68 : vector<1x16x128xbf16> to vector<16x128xbf16>
    %cst_62 = arith.constant dense<0.000000e+00> : vector<80x128xf32>
    %70 = tpu.matmul %67, %69, %cst_62 {dimension_numbers = #tpu.dot_dimension_numbers<[1], [0], [0], [1], [0, 0, 1, 1], [], []>} : vector<80x16xbf16>, vector<16x128xbf16>, vector<80x128xf32> -> vector<80x128xf32>
    %71 = arith.addf %65, %70 : vector<80x128xf32>
    %c0_63 = arith.constant 0 : index
    %c0_64 = arith.constant 0 : index
    %c11 = arith.constant 11 : index
    %c0_65 = arith.constant 0 : index
    %72 = vector.load %arg1[%c0_63, %c0_64, %c11, %c0_65] : memref<1x4x100x16xbf16, #tpu.memory_space<vmem>>, vector<1x1x80x16xbf16>
    %73 = vector.shape_cast %72 : vector<1x1x80x16xbf16> to vector<80x16xbf16>
    %c8 = arith.constant 8 : index
    %c0_66 = arith.constant 0 : index
    %c0_67 = arith.constant 0 : index
    %74 = vector.load %arg2[%c8, %c0_66, %c0_67] : memref<9x16x128xbf16, #tpu.memory_space<vmem>>, vector<1x16x128xbf16>
    %75 = vector.shape_cast %74 : vector<1x16x128xbf16> to vector<16x128xbf16>
    %cst_68 = arith.constant dense<0.000000e+00> : vector<80x128xf32>
    %76 = tpu.matmul %73, %75, %cst_68 {dimension_numbers = #tpu.dot_dimension_numbers<[1], [0], [0], [1], [0, 0, 1, 1], [], []>} : vector<80x16xbf16>, vector<16x128xbf16>, vector<80x128xf32> -> vector<80x128xf32>
    %77 = arith.addf %71, %76 : vector<80x128xf32>
    %c0_69 = arith.constant 0 : index
    %c0_70 = arith.constant 0 : index
    %78 = vector.load %arg3[%c0_69, %c0_70] : memref<1x128xf32, #tpu.memory_space<vmem>>, vector<1x128xf32>
    %79 = vector.broadcast %78 : vector<1x128xf32> to vector<80x128xf32>
    %80 = arith.addf %77, %79 : vector<80x128xf32>
    %cst_71 = arith.constant 0.000000e+00 : f32
    %81 = vector.broadcast %cst_71 : f32 to vector<80x128xf32>
    %82 = arith.maximumf %80, %81 : vector<80x128xf32>
    %cst_72 = arith.constant 0.000000e+00 : f32
    %83 = vector.shape_cast %22 : vector<80x1xi1> to vector<80x1xi1>
    %84 = vector.broadcast %83 : vector<80x1xi1> to vector<80x128xi1>
    %85 = vector.broadcast %cst_72 : f32 to vector<80x128xf32>
    %86 = arith.select %84, %82, %85 : vector<80x128xi1>, vector<80x128xf32>
    %87 = arith.truncf %86 : vector<80x128xf32> to vector<80x128xbf16>
    %c11_73 = arith.constant 11 : index
    %c0_74 = arith.constant 0 : index
    %88 = vector.load %arg9[%c11_73, %c0_74] : memref<110x128xbf16, #tpu.memory_space<vmem>>, vector<80x128xbf16>
    tpu.vector_store %arg9[%c11_73, %c0_74], %87 {strides = array<i32>} : memref<110x128xbf16, #tpu.memory_space<vmem>>, vector<80x128xbf16>,
    %c0_75 = arith.constant 0 : index
    %c3_76 = arith.constant 3 : index
    %c0_77 = arith.constant 0 : index
    %c0_78 = arith.constant 0 : index
    %89 = vector.load %arg1[%c0_75, %c3_76, %c0_77, %c0_78] : memref<1x4x100x16xbf16, #tpu.memory_space<vmem>>, vector<1x1x80x16xbf16>
    %90 = vector.shape_cast %89 : vector<1x1x80x16xbf16> to vector<80x16xbf16>
    %c0_79 = arith.constant 0 : index
    %c0_80 = arith.constant 0 : index
    %91 = vector.load %arg6[%c0_79, %c0_80] : memref<16x128xbf16, #tpu.memory_space<vmem>>, vector<16x128xbf16>
    %cst_81 = arith.constant dense<0.000000e+00> : vector<80x128xf32>
    %92 = tpu.matmul %90, %91, %cst_81 {dimension_numbers = #tpu.dot_dimension_numbers<[1], [0], [0], [1], [0, 0, 1, 1], [], []>} : vector<80x16xbf16>, vector<16x128xbf16>, vector<80x128xf32> -> vector<80x128xf32>
    %c0_82 = arith.constant 0 : index
    %c0_83 = arith.constant 0 : index
    %93 = vector.load %arg5[%c0_82, %c0_83] : memref<1x128xf32, #tpu.memory_space<vmem>>, vector<1x128xf32>
    %c0_84 = arith.constant 0 : index
    %c0_85 = arith.constant 0 : index
    %94 = vector.load %arg7[%c0_84, %c0_85] : memref<1x128xf32, #tpu.memory_space<vmem>>, vector<1x128xf32>
    %95 = arith.addf %93, %94 : vector<1x128xf32>
    %96 = vector.broadcast %95 : vector<1x128xf32> to vector<80x128xf32>
    %97 = arith.addf %92, %96 : vector<80x128xf32>
    %c0_86 = arith.constant 0 : index
    %c0_87 = arith.constant 0 : index
    %98 = vector.load %arg9[%c0_86, %c0_87] : memref<110x128xbf16, #tpu.memory_space<vmem>>, vector<80x128xbf16>
    %c0_88 = arith.constant 0 : index
    %c0_89 = arith.constant 0 : index
    %c0_90 = arith.constant 0 : index
    %99 = vector.load %arg4[%c0_88, %c0_89, %c0_90] : memref<9x128x128xbf16, #tpu.memory_space<vmem>>, vector<1x128x128xbf16>
    %100 = vector.shape_cast %99 : vector<1x128x128xbf16> to vector<128x128xbf16>
    %cst_91 = arith.constant dense<0.000000e+00> : vector<80x128xf32>
    %101 = tpu.matmul %98, %100, %cst_91 {dimension_numbers = #tpu.dot_dimension_numbers<[1], [0], [0], [1], [0, 0, 1, 1], [], []>} : vector<80x128xbf16>, vector<128x128xbf16>, vector<80x128xf32> -> vector<80x128xf32>
    %102 = arith.addf %97, %101 : vector<80x128xf32>
    %c1_92 = arith.constant 1 : index
    %c0_93 = arith.constant 0 : index
    %103 = vector.load %arg9[%c1_92, %c0_93] : memref<110x128xbf16, #tpu.memory_space<vmem>>, vector<80x128xbf16>
    %c1_94 = arith.constant 1 : index
    %c0_95 = arith.constant 0 : index
    %c0_96 = arith.constant 0 : index
    %104 = vector.load %arg4[%c1_94, %c0_95, %c0_96] : memref<9x128x128xbf16, #tpu.memory_space<vmem>>, vector<1x128x128xbf16>
    %105 = vector.shape_cast %104 : vector<1x128x128xbf16> to vector<128x128xbf16>
    %cst_97 = arith.constant dense<0.000000e+00> : vector<80x128xf32>
    %106 = tpu.matmul %103, %105, %cst_97 {dimension_numbers = #tpu.dot_dimension_numbers<[1], [0], [0], [1], [0, 0, 1, 1], [], []>} : vector<80x128xbf16>, vector<128x128xbf16>, vector<80x128xf32> -> vector<80x128xf32>
    %107 = arith.addf %102, %106 : vector<80x128xf32>
    %c2_98 = arith.constant 2 : index
    %c0_99 = arith.constant 0 : index
    %108 = vector.load %arg9[%c2_98, %c0_99] : memref<110x128xbf16, #tpu.memory_space<vmem>>, vector<80x128xbf16>
    %c2_100 = arith.constant 2 : index
    %c0_101 = arith.constant 0 : index
    %c0_102 = arith.constant 0 : index
    %109 = vector.load %arg4[%c2_100, %c0_101, %c0_102] : memref<9x128x128xbf16, #tpu.memory_space<vmem>>, vector<1x128x128xbf16>
    %110 = vector.shape_cast %109 : vector<1x128x128xbf16> to vector<128x128xbf16>
    %cst_103 = arith.constant dense<0.000000e+00> : vector<80x128xf32>
    %111 = tpu.matmul %108, %110, %cst_103 {dimension_numbers = #tpu.dot_dimension_numbers<[1], [0], [0], [1], [0, 0, 1, 1], [], []>} : vector<80x128xbf16>, vector<128x128xbf16>, vector<80x128xf32> -> vector<80x128xf32>
    %112 = arith.addf %107, %111 : vector<80x128xf32>
    %c10_104 = arith.constant 10 : index
    %c0_105 = arith.constant 0 : index
    %113 = vector.load %arg9[%c10_104, %c0_105] : memref<110x128xbf16, #tpu.memory_space<vmem>>, vector<80x128xbf16>
    %c3_106 = arith.constant 3 : index
    %c0_107 = arith.constant 0 : index
    %c0_108 = arith.constant 0 : index
    %114 = vector.load %arg4[%c3_106, %c0_107, %c0_108] : memref<9x128x128xbf16, #tpu.memory_space<vmem>>, vector<1x128x128xbf16>
    %115 = vector.shape_cast %114 : vector<1x128x128xbf16> to vector<128x128xbf16>
    %cst_109 = arith.constant dense<0.000000e+00> : vector<80x128xf32>
    %116 = tpu.matmul %113, %115, %cst_109 {dimension_numbers = #tpu.dot_dimension_numbers<[1], [0], [0], [1], [0, 0, 1, 1], [], []>} : vector<80x128xbf16>, vector<128x128xbf16>, vector<80x128xf32> -> vector<80x128xf32>
    %117 = arith.addf %112, %116 : vector<80x128xf32>
    %c11_110 = arith.constant 11 : index
    %c0_111 = arith.constant 0 : index
    %118 = vector.load %arg9[%c11_110, %c0_111] : memref<110x128xbf16, #tpu.memory_space<vmem>>, vector<80x128xbf16>
    %c4_112 = arith.constant 4 : index
    %c0_113 = arith.constant 0 : index
    %c0_114 = arith.constant 0 : index
    %119 = vector.load %arg4[%c4_112, %c0_113, %c0_114] : memref<9x128x128xbf16, #tpu.memory_space<vmem>>, vector<1x128x128xbf16>
    %120 = vector.shape_cast %119 : vector<1x128x128xbf16> to vector<128x128xbf16>
    %cst_115 = arith.constant dense<0.000000e+00> : vector<80x128xf32>
    %121 = tpu.matmul %118, %120, %cst_115 {dimension_numbers = #tpu.dot_dimension_numbers<[1], [0], [0], [1], [0, 0, 1, 1], [], []>} : vector<80x128xbf16>, vector<128x128xbf16>, vector<80x128xf32> -> vector<80x128xf32>
    %122 = arith.addf %117, %121 : vector<80x128xf32>
    %c12 = arith.constant 12 : index
    %c0_116 = arith.constant 0 : index
    %123 = vector.load %arg9[%c12, %c0_116] : memref<110x128xbf16, #tpu.memory_space<vmem>>, vector<80x128xbf16>
    %c5_117 = arith.constant 5 : index
    %c0_118 = arith.constant 0 : index
    %c0_119 = arith.constant 0 : index
    %124 = vector.load %arg4[%c5_117, %c0_118, %c0_119] : memref<9x128x128xbf16, #tpu.memory_space<vmem>>, vector<1x128x128xbf16>
    %125 = vector.shape_cast %124 : vector<1x128x128xbf16> to vector<128x128xbf16>
    %cst_120 = arith.constant dense<0.000000e+00> : vector<80x128xf32>
    %126 = tpu.matmul %123, %125, %cst_120 {dimension_numbers = #tpu.dot_dimension_numbers<[1], [0], [0], [1], [0, 0, 1, 1], [], []>} : vector<80x128xbf16>, vector<128x128xbf16>, vector<80x128xf32> -> vector<80x128xf32>
    %127 = arith.addf %122, %126 : vector<80x128xf32>
    %c20 = arith.constant 20 : index
    %c0_121 = arith.constant 0 : index
    %128 = vector.load %arg9[%c20, %c0_121] : memref<110x128xbf16, #tpu.memory_space<vmem>>, vector<80x128xbf16>
    %c6_122 = arith.constant 6 : index
    %c0_123 = arith.constant 0 : index
    %c0_124 = arith.constant 0 : index
    %129 = vector.load %arg4[%c6_122, %c0_123, %c0_124] : memref<9x128x128xbf16, #tpu.memory_space<vmem>>, vector<1x128x128xbf16>
    %130 = vector.shape_cast %129 : vector<1x128x128xbf16> to vector<128x128xbf16>
    %cst_125 = arith.constant dense<0.000000e+00> : vector<80x128xf32>
    %131 = tpu.matmul %128, %130, %cst_125 {dimension_numbers = #tpu.dot_dimension_numbers<[1], [0], [0], [1], [0, 0, 1, 1], [], []>} : vector<80x128xbf16>, vector<128x128xbf16>, vector<80x128xf32> -> vector<80x128xf32>
    %132 = arith.addf %127, %131 : vector<80x128xf32>
    %c21 = arith.constant 21 : index
    %c0_126 = arith.constant 0 : index
    %133 = vector.load %arg9[%c21, %c0_126] : memref<110x128xbf16, #tpu.memory_space<vmem>>, vector<80x128xbf16>
    %c7_127 = arith.constant 7 : index
    %c0_128 = arith.constant 0 : index
    %c0_129 = arith.constant 0 : index
    %134 = vector.load %arg4[%c7_127, %c0_128, %c0_129] : memref<9x128x128xbf16, #tpu.memory_space<vmem>>, vector<1x128x128xbf16>
    %135 = vector.shape_cast %134 : vector<1x128x128xbf16> to vector<128x128xbf16>
    %cst_130 = arith.constant dense<0.000000e+00> : vector<80x128xf32>
    %136 = tpu.matmul %133, %135, %cst_130 {dimension_numbers = #tpu.dot_dimension_numbers<[1], [0], [0], [1], [0, 0, 1, 1], [], []>} : vector<80x128xbf16>, vector<128x128xbf16>, vector<80x128xf32> -> vector<80x128xf32>
    %137 = arith.addf %132, %136 : vector<80x128xf32>
    %c22 = arith.constant 22 : index
    %c0_131 = arith.constant 0 : index
    %138 = vector.load %arg9[%c22, %c0_131] : memref<110x128xbf16, #tpu.memory_space<vmem>>, vector<80x128xbf16>
    %c8_132 = arith.constant 8 : index
    %c0_133 = arith.constant 0 : index
    %c0_134 = arith.constant 0 : index
    %139 = vector.load %arg4[%c8_132, %c0_133, %c0_134] : memref<9x128x128xbf16, #tpu.memory_space<vmem>>, vector<1x128x128xbf16>
    %140 = vector.shape_cast %139 : vector<1x128x128xbf16> to vector<128x128xbf16>
    %cst_135 = arith.constant dense<0.000000e+00> : vector<80x128xf32>
    %141 = tpu.matmul %138, %140, %cst_135 {dimension_numbers = #tpu.dot_dimension_numbers<[1], [0], [0], [1], [0, 0, 1, 1], [], []>} : vector<80x128xbf16>, vector<128x128xbf16>, vector<80x128xf32> -> vector<80x128xf32>
    %142 = arith.addf %137, %141 : vector<80x128xf32>
    %cst_136 = arith.constant 0.000000e+00 : f32
    %143 = vector.broadcast %cst_136 : f32 to vector<80x128xf32>
    %144 = arith.maximumf %142, %143 : vector<80x128xf32>
    %145 = arith.truncf %144 : vector<80x128xf32> to vector<80x128xbf16>
    %c0_137 = arith.constant 0 : index
    %c0_138 = arith.constant 0 : index
    %c0_139 = arith.constant 0 : index
    %146 = vector.load %arg8[%c0_137, %c0_138, %c0_139] : memref<1x80x128xbf16, #tpu.memory_space<vmem>>, vector<1x80x128xbf16>
    %147 = vector.shape_cast %146 : vector<1x80x128xbf16> to vector<80x128xbf16>
    %148 = vector.shape_cast %145 : vector<80x128xbf16> to vector<1x80x128xbf16>
    tpu.vector_store %arg8[%c0_137, %c0_138, %c0_139], %148 {strides = array<i32>} : memref<1x80x128xbf16, #tpu.memory_space<vmem>>, vector<1x80x128xbf16>,
    return
  }
  func.func @transform_0(%arg0: i32) -> (i32, i32, i32, i32) {
    %c0_i32 = arith.constant 0 : i32
    %c0_i32_0 = arith.constant 0 : i32
    %c0_i32_1 = arith.constant 0 : i32
    %c0_i32_2 = arith.constant 0 : i32
    return %arg0, %c0_i32, %c0_i32_0, %c0_i32_1 : i32, i32, i32, i32
  }
  func.func @transform_1(%arg0: i32) -> (i32, i32, i32) {
    %c0_i32 = arith.constant 0 : i32
    %c0_i32_0 = arith.constant 0 : i32
    %c0_i32_1 = arith.constant 0 : i32
    %c0_i32_2 = arith.constant 0 : i32
    return %c0_i32, %c0_i32_0, %c0_i32_1 : i32, i32, i32
  }
  func.func @transform_2(%arg0: i32) -> (i32, i32) {
    %c0_i32 = arith.constant 0 : i32
    %c0_i32_0 = arith.constant 0 : i32
    %c0_i32_1 = arith.constant 0 : i32
    return %c0_i32, %c0_i32_0 : i32, i32
  }
  func.func @transform_3(%arg0: i32) -> (i32, i32, i32) {
    %c0_i32 = arith.constant 0 : i32
    %c0_i32_0 = arith.constant 0 : i32
    %c0_i32_1 = arith.constant 0 : i32
    %c0_i32_2 = arith.constant 0 : i32
    return %c0_i32, %c0_i32_0, %c0_i32_1 : i32, i32, i32
  }
  func.func @transform_4(%arg0: i32) -> (i32, i32) {
    %c0_i32 = arith.constant 0 : i32
    %c0_i32_0 = arith.constant 0 : i32
    %c0_i32_1 = arith.constant 0 : i32
    return %c0_i32, %c0_i32_0 : i32, i32
  }
  func.func @transform_5(%arg0: i32) -> (i32, i32) {
    %c0_i32 = arith.constant 0 : i32
    %c0_i32_0 = arith.constant 0 : i32
    %c0_i32_1 = arith.constant 0 : i32
    return %c0_i32, %c0_i32_0 : i32, i32
  }
  func.func @transform_6(%arg0: i32) -> (i32, i32) {
    %c0_i32 = arith.constant 0 : i32
    %c0_i32_0 = arith.constant 0 : i32
    %c0_i32_1 = arith.constant 0 : i32
    return %c0_i32, %c0_i32_0 : i32, i32
  }
  func.func @transform_7(%arg0: i32) -> (i32, i32, i32) {
    %c0_i32 = arith.constant 0 : i32
    %c0_i32_0 = arith.constant 0 : i32
    %c0_i32_1 = arith.constant 0 : i32
    return %arg0, %c0_i32, %c0_i32_0 : i32, i32, i32
  }
}

</mosaic_0001>

<llo_original>
// kernel: tpu_custom_call.1
$region0: #{tpu_custom_call.1}
  #allocation0 [shape = 'u32[]', space=smem, size = 0x4, offset = 0x4, fixed_abs, tag = 'smem constant byte address 0x4 - core index']
  #allocation1 [shape = 'u32[144,128]{1,0:T(1,128)}', space=vmem, size = 0x12000, scoped, tag = 'internal scratch']
  #allocation2 [shape = 'bf16[110,128]{1,0:T(8,128)(2,1)}', space=vmem, size = 0x7000, scoped, tag = 'scratch operand']
  %s0 = inlined_call_operand.vmem [shape: bf16[2,4,100,16], index: 0, kind: input, shape index: {}]
  %s1 = inlined_call_operand.vmem [shape: bf16[9,16,128], index: 1, kind: input, shape index: {}]
  %s2 = inlined_call_operand.vmem [shape: f32[1,128], index: 2, kind: input, shape index: {}]
  %s3 = inlined_call_operand.hbm [shape: bf16[9,128,128], index: 3, kind: input, shape index: {}]
  %s4 = inlined_call_operand.vmem [shape: f32[1,128], index: 4, kind: input, shape index: {}]
  %s5 = inlined_call_operand.vmem [shape: bf16[16,128], index: 5, kind: input, shape index: {}]
  %s6 = inlined_call_operand.vmem [shape: f32[1,128], index: 6, kind: input, shape index: {}]
  %s7 = inlined_call_operand.hbm [shape: bf16[2,80,128], index: 7, kind: output, shape index: {}]
  %s8 = sld [smem:[#allocation0]]
  $region65: #{tpu_custom_call.1} parent=0
    _
  %s10 = ssub.s32 1, %s8
  %s11 = scalar_select 0, %s10, %s8
  $region1: #{tpu_custom_call.1} parent=0
    #allocation3 [shape = 'u8[294912]{0}', space=vmem, size = 0x48000, scoped, tag = 'input window, operand 3, single buffered']
    #allocation4 [shape = 's32[2]{0}', space=sflag, size = 0x8, scoped, tag = 'scoped memory for tpu_custom_call.1']
    #allocation5 [shape = 's32[2]{0}', space=sflag, size = 0x8, scoped, tag = 'scoped memory for tpu_custom_call.1']
    #allocation6 [shape = 'u8[40960]{0}', space=vmem, size = 0xa000, scoped, tag = 'output window, operand 0']
    %12 = vsyncpa [#allocation4], 0
    %13 = vsyncpa [#allocation5], 0
    %s14 = scalar_lea.sflag [#allocation5], 1
    %15 = vsyncpa %s14, 0
    loop: start=0, step=1, limit=4
    $region2: #{tpu_custom_call.1} parent=1 // loop_pre_header
      _
    $region3: #{tpu_custom_call.1} parent=1 // loop_header
      %s17 = sphi 0, %s21
      %p18 = scmp.ge.s32.totalorder %s17, 4
      %s27 = sphi 0, %s29
      %s30 = sphi 0, %s27
      %s31 = sphi 0, %s30
      %s47 = sphi 0, %s31
      %s51 = sphi 0, %s51
      %s53 = sphi 0, %s51
      %s54 = sphi 0, %s53
      %s68 = sphi 0, %s54
      %s72 = sphi 0, %s72
      %s74 = sphi 0, %s72
      %s75 = sphi 0, %s74
      %s89 = sphi 0, %s75
      %s93 = sphi 0, %s93
      %s95 = sphi 0, %s93
      %s96 = sphi 0, %s95
      %s110 = sphi 0, %s96
      %s114 = sphi 0, %s114
      %s116 = sphi 0, %s114
      %s117 = sphi 0, %s116
      %s131 = sphi 0, %s117
      %s135 = sphi 0, %s135
      %s137 = sphi 0, %s135
      %s138 = sphi 0, %s137
      %s152 = sphi 0, %s138
      %s156 = sphi 0, %s156
      %s158 = sphi 0, %s156
      %s159 = sphi 0, %s158
      %s173 = sphi 0, %s159
      %s179 = sphi 0, %s181
      %s182 = sphi 0, %s179
      %s183 = sphi 0, %s182
      %s199 = sphi 0, %s183
    $region4: #{tpu_custom_call.1} parent=1 // loop_header_branch
      %20 = sbr.rel (%p18) target = $region8
    $region5: #{tpu_custom_call.1} parent=1 // loop_body
      %s22 = ssub.s32 %s17, 1
      %s23 = ssub.s32 %s17, 2
      %s24 = sadd.s32 %s17, 1
      %s25 = ssub.s32 %s17, %s24
      %p26 = scmp.eq.s32.totalorder %s25, 0
      %s28 = sadd.s32 %s27, 1
      %s29 = scalar_select %p26, %s27, %s28
      %p32 = pneg %p26
      %p33 = scmp.eq.s32.totalorder %s17, 1
      %p34 = por %p32, %p33
      %p35 = scmp.ne.s32.totalorder %s27, %s30
      %p36 = scmp.eq.s32.totalorder %s17, 0
      %p37 = por %p35, %p36
      %p38 = scmp.ne.s32.totalorder %s27, %s30
      %p39 = scmp.eq.s32.totalorder %s22, 1
      %p40 = por %p38, %p39
      %p41 = scmp.ne.s32.totalorder %s30, %s31
      %p42 = scmp.eq.s32.totalorder %s22, 0
      %p43 = por %p41, %p42
      %p44 = scmp.ne.s32.totalorder %s30, %s31
      %p45 = scmp.eq.s32.totalorder %s23, 1
      %p46 = por %p44, %p45
      %p48 = scmp.ne.s32.totalorder %s31, %s47
      %p49 = scmp.eq.s32.totalorder %s23, 0
      %p50 = por %p48, %p49
      %s52 = sadd.s32 %s51, 1
      %p55 = scmp.eq.s32.totalorder %s17, 1
      %p56 = scmp.ne.s32.totalorder %s51, %s53
      %p57 = scmp.eq.s32.totalorder %s17, 0
      %p58 = por %p56, %p57
      %p59 = scmp.ne.s32.totalorder %s51, %s53
      %p60 = scmp.eq.s32.totalorder %s22, 1
      %p61 = por %p59, %p60
      %p62 = scmp.ne.s32.totalorder %s53, %s54
      %p63 = scmp.eq.s32.totalorder %s22, 0
      %p64 = por %p62, %p63
      %p65 = scmp.ne.s32.totalorder %s53, %s54
      %p66 = scmp.eq.s32.totalorder %s23, 1
      %p67 = por %p65, %p66
      %p69 = scmp.ne.s32.totalorder %s54, %s68
      %p70 = scmp.eq.s32.totalorder %s23, 0
      %p71 = por %p69, %p70
      %s73 = sadd.s32 %s72, 1
      %p76 = scmp.eq.s32.totalorder %s17, 1
      %p77 = scmp.ne.s32.totalorder %s72, %s74
      %p78 = scmp.eq.s32.totalorder %s17, 0
      %p79 = por %p77, %p78
      %p80 = scmp.ne.s32.totalorder %s72, %s74
      %p81 = scmp.eq.s32.totalorder %s22, 1
      %p82 = por %p80, %p81
      %p83 = scmp.ne.s32.totalorder %s74, %s75
      %p84 = scmp.eq.s32.totalorder %s22, 0
      %p85 = por %p83, %p84
      %p86 = scmp.ne.s32.totalorder %s74, %s75
      %p87 = scmp.eq.s32.totalorder %s23, 1
      %p88 = por %p86, %p87
      %p90 = scmp.ne.s32.totalorder %s75, %s89
      %p91 = scmp.eq.s32.totalorder %s23, 0
      %p92 = por %p90, %p91
      %s94 = sadd.s32 %s93, 1
      %p97 = scmp.eq.s32.totalorder %s17, 1
      %p98 = scmp.ne.s32.totalorder %s93, %s95
      %p99 = scmp.eq.s32.totalorder %s17, 0
      %p100 = por %p98, %p99
      %p101 = scmp.ne.s32.totalorder %s93, %s95
      %p102 = scmp.eq.s32.totalorder %s22, 1
      %p103 = por %p101, %p102
      %p104 = scmp.ne.s32.totalorder %s95, %s96
      %p105 = scmp.eq.s32.totalorder %s22, 0
      %p106 = por %p104, %p105
      %p107 = scmp.ne.s32.totalorder %s95, %s96
      %p108 = scmp.eq.s32.totalorder %s23, 1
      %p109 = por %p107, %p108
      %p111 = scmp.ne.s32.totalorder %s96, %s110
      %p112 = scmp.eq.s32.totalorder %s23, 0
      %p113 = por %p111, %p112
      %s115 = sadd.s32 %s114, 1
      %p118 = scmp.eq.s32.totalorder %s17, 1
      %p119 = scmp.ne.s32.totalorder %s114, %s116
      %p120 = scmp.eq.s32.totalorder %s17, 0
      %p121 = por %p119, %p120
      %p122 = scmp.ne.s32.totalorder %s114, %s116
      %p123 = scmp.eq.s32.totalorder %s22, 1
      %p124 = por %p122, %p123
      %p125 = scmp.ne.s32.totalorder %s116, %s117
      %p126 = scmp.eq.s32.totalorder %s22, 0
      %p127 = por %p125, %p126
      %p128 = scmp.ne.s32.totalorder %s116, %s117
      %p129 = scmp.eq.s32.totalorder %s23, 1
      %p130 = por %p128, %p129
      %p132 = scmp.ne.s32.totalorder %s117, %s131
      %p133 = scmp.eq.s32.totalorder %s23, 0
      %p134 = por %p132, %p133
      %s136 = sadd.s32 %s135, 1
      %p139 = scmp.eq.s32.totalorder %s17, 1
      %p140 = scmp.ne.s32.totalorder %s135, %s137
      %p141 = scmp.eq.s32.totalorder %s17, 0
      %p142 = por %p140, %p141
      %p143 = scmp.ne.s32.totalorder %s135, %s137
      %p144 = scmp.eq.s32.totalorder %s22, 1
      %p145 = por %p143, %p144
      %p146 = scmp.ne.s32.totalorder %s137, %s138
      %p147 = scmp.eq.s32.totalorder %s22, 0
      %p148 = por %p146, %p147
      %p149 = scmp.ne.s32.totalorder %s137, %s138
      %p150 = scmp.eq.s32.totalorder %s23, 1
      %p151 = por %p149, %p150
      %p153 = scmp.ne.s32.totalorder %s138, %s152
      %p154 = scmp.eq.s32.totalorder %s23, 0
      %p155 = por %p153, %p154
      %s157 = sadd.s32 %s156, 1
      %p160 = scmp.eq.s32.totalorder %s17, 1
      %p161 = scmp.ne.s32.totalorder %s156, %s158
      %p162 = scmp.eq.s32.totalorder %s17, 0
      %p163 = por %p161, %p162
      %p164 = scmp.ne.s32.totalorder %s156, %s158
      %p165 = scmp.eq.s32.totalorder %s22, 1
      %p166 = por %p164, %p165
      %p167 = scmp.ne.s32.totalorder %s158, %s159
      %p168 = scmp.eq.s32.totalorder %s22, 0
      %p169 = por %p167, %p168
      %p170 = scmp.ne.s32.totalorder %s158, %s159
      %p171 = scmp.eq.s32.totalorder %s23, 1
      %p172 = por %p170, %p171
      %p174 = scmp.ne.s32.totalorder %s159, %s173
      %p175 = scmp.eq.s32.totalorder %s23, 0
      %p176 = por %p174, %p175
      %s177 = ssub.s32 %s17, %s24
      %p178 = scmp.eq.s32.totalorder %s177, 0
      %s180 = sadd.s32 %s179, 1
      %s181 = scalar_select %p178, %s179, %s180
      %p184 = pneg %p178
      %p185 = scmp.eq.s32.totalorder %s17, 1
      %p186 = por %p184, %p185
      %p187 = scmp.ne.s32.totalorder %s179, %s182
      %p188 = scmp.eq.s32.totalorder %s17, 0
      %p189 = por %p187, %p188
      %p190 = scmp.ne.s32.totalorder %s179, %s182
      %p191 = scmp.eq.s32.totalorder %s22, 1
      %p192 = por %p190, %p191
      %p193 = scmp.ne.s32.totalorder %s182, %s183
      %p194 = scmp.eq.s32.totalorder %s22, 0
      %p195 = por %p193, %p194
      %p196 = scmp.ne.s32.totalorder %s182, %s183
      %p197 = scmp.eq.s32.totalorder %s23, 1
      %p198 = por %p196, %p197
      %p200 = scmp.ne.s32.totalorder %s183, %s199
      %p201 = scmp.eq.s32.totalorder %s23, 0
      %p202 = por %p200, %p201
      %p203 = scmp.le.s32.totalorder 1, %s17
      %p204 = scmp.lt.s32.totalorder %s17, 3
      %p205 = pnand %p203, %p204
      %p206 = pneg %p205
      // Predicated region
      $region9: #{tpu_custom_call.1} parent=5 // pred_check
        _
      $region10: #{tpu_custom_call.1} parent=5 // pred_check_branch
        %208 = sbr.rel (%p205) target = $region12
      $region11: #{tpu_custom_call.1} parent=5 // pred_region
        %s209 = ssub.s32 %s17, 1
        // Predicated region
        $region13: #{tpu_custom_call.1} parent=11 // pred_check
          %p210 = pneg %p64
        $region14: #{tpu_custom_call.1} parent=11 // pred_check_branch
          %212 = sbr.rel (%p210) target = $region16
        $region15: #{tpu_custom_call.1} parent=11 // pred_region
          _
        $region16: #{tpu_custom_call.1} parent=11 // pred_fallthru
          _
        // Predicated region
        $region17: #{tpu_custom_call.1} parent=11 // pred_check
          %p213 = pneg %p85
        $region18: #{tpu_custom_call.1} parent=11 // pred_check_branch
          %215 = sbr.rel (%p213) target = $region20
        $region19: #{tpu_custom_call.1} parent=11 // pred_region
          _
        $region20: #{tpu_custom_call.1} parent=11 // pred_fallthru
          _
        // Predicated region
        $region21: #{tpu_custom_call.1} parent=11 // pred_check
          %p216 = pneg %p106
        $region22: #{tpu_custom_call.1} parent=11 // pred_check_branch
          %218 = sbr.rel (%p216) target = $region24
        $region23: #{tpu_custom_call.1} parent=11 // pred_region
          %s220 = ssub.s32 9216, 9216
          %221 = vsyncadd [#allocation4], %s220
          %s222 = sshll.u32 [#allocation3], 4
          %s223 = int_to_ptr.vmem [resolvable:$true] %s222
          %228 = dma.hbm_to_vmem [thread:$0]  %s3, 9216, %s223, [#allocation4], 64, 64, 4
        $region24: #{tpu_custom_call.1} parent=11 // pred_fallthru
          _
        // Predicated region
        $region25: #{tpu_custom_call.1} parent=11 // pred_check
          %p229 = pneg %p127
        $region26: #{tpu_custom_call.1} parent=11 // pred_check_branch
          %231 = sbr.rel (%p229) target = $region28
        $region27: #{tpu_custom_call.1} parent=11 // pred_region
          _
        $region28: #{tpu_custom_call.1} parent=11 // pred_fallthru
          _
        // Predicated region
        $region29: #{tpu_custom_call.1} parent=11 // pred_check
          %p232 = pneg %p148
        $region30: #{tpu_custom_call.1} parent=11 // pred_check_branch
          %234 = sbr.rel (%p232) target = $region32
        $region31: #{tpu_custom_call.1} parent=11 // pred_region
          _
        $region32: #{tpu_custom_call.1} parent=11 // pred_fallthru
          _
        // Predicated region
        $region33: #{tpu_custom_call.1} parent=11 // pred_check
          %p235 = pneg %p169
        $region34: #{tpu_custom_call.1} parent=11 // pred_check_branch
          %237 = sbr.rel (%p235) target = $region36
        $region35: #{tpu_custom_call.1} parent=11 // pred_region
          _
        $region36: #{tpu_custom_call.1} parent=11 // pred_fallthru
          _
      $region12: #{tpu_custom_call.1} parent=5 // pred_fallthru
        _
      %p238 = scmp.lt.s32.totalorder %s17, 2
      // Predicated region
      $region37: #{tpu_custom_call.1} parent=5 // pred_check
        %p239 = pneg %p238
      $region38: #{tpu_custom_call.1} parent=5 // pred_check_branch
        %241 = sbr.rel (%p239) target = $region40
      $region39: #{tpu_custom_call.1} parent=5 // pred_region
        // Predicated region
        $region41: #{tpu_custom_call.1} parent=39 // pred_check
          %p242 = pneg %p37
        $region42: #{tpu_custom_call.1} parent=39 // pred_check_branch
          %244 = sbr.rel (%p242) target = $region44
        $region43: #{tpu_custom_call.1} parent=39 // pred_region
          %p245 = scmp.lt.s32.totalorder %s17, 1
          %s246 = scalar_select %p245, %s17, 1
          %s247 = smul.addr %s246, 52
          %s248 = smul.addr %s247, 4
          %s249 = scalar_lea.vmem %s0, %s248
        $region44: #{tpu_custom_call.1} parent=39 // pred_fallthru
          _
      $region40: #{tpu_custom_call.1} parent=5 // pred_fallthru
        _
      %p250 = scmp.le.s32.totalorder 1, %s17
      %p251 = scmp.lt.s32.totalorder %s17, 3
      %p252 = pnand %p250, %p251
      %p253 = pneg %p252
      // Predicated region
      $region45: #{tpu_custom_call.1} parent=5 // pred_check
        _
      $region46: #{tpu_custom_call.1} parent=5 // pred_check_branch
        %255 = sbr.rel (%p252) target = $region48
      $region47: #{tpu_custom_call.1} parent=5 // pred_region
        %s256 = ssub.s32 %s17, 1
        // Predicated region
        $region49: #{tpu_custom_call.1} parent=47 // pred_check
          %p257 = pneg %p106
        $region50: #{tpu_custom_call.1} parent=47 // pred_check_branch
          %259 = sbr.rel (%p257) target = $region52
        $region51: #{tpu_custom_call.1} parent=47 // pred_region
          %260 = dma.done [#allocation4], 9216
        $region52: #{tpu_custom_call.1} parent=47 // pred_fallthru
          _
        %p261 = scmp.lt.s32.totalorder %s22, 1
        %s262 = scalar_select %p261, %s22, 1
        %s263 = smul.addr %s262, 52
        %s264 = smul.addr %s263, 4
        %s265 = scalar_lea.vmem %s0, %s264
        %p266 = pneg %p43
        %p267 = pneg %p40
        %p268 = pneg %p64
        %p269 = pneg %p61
        %p270 = pneg %p85
        %p271 = pneg %p82
        %p272 = pneg %p106
        %p273 = pneg %p103
        %p274 = pneg %p127
        %p275 = pneg %p124
        %p276 = pneg %p148
        %p277 = pneg %p145
        %p278 = pneg %p169
        %p279 = pneg %p166
        %p280 = pneg %p195
        %p281 = pneg %p192
        %s282 = sand.u32 %s182, 1
        %s283 = scalar_lea.sflag [#allocation5], %s282
        %s284 = sand.u32 %s182, 1
        %s285 = smul.addr %s284, 40
        %s286 = scalar_lea.vmem [#allocation6], %s285
        %p287 = scmp.lt.s32.totalorder %s22, 1
        %s288 = scalar_select %p287, %s22, 1
        %s289 = smul.addr %s288, 52
        %s290 = smul.addr %s289, 4
        %s291 = scalar_lea.vmem %s0, %s290
        %293 = vst [vmem:[#allocation2] sm:$0xf] 0
        %vm294 = vcmask 1041408
        %vm295 = vsmask.f32 1280
        %vm296 = vmand %vm294, %vm295
        %v297 = vld [vmem:[#allocation2 + $0x4] sm:$0x3]
        %v298 = vsel %vm296, 0, %v297
        %299 = vst [vmem:[#allocation2 + $0x4] sm:$0x3] %v298
        %vm300 = vcmask 1043457
        %vm301 = vsmask.f32 7942
        %vm302 = vmand %vm300, %vm301
        %v303 = vld [vmem:[#allocation2 + $0x2c] sm:$0xe]
        %v304 = vsel %vm302, 0, %v303
        %305 = vst [vmem:[#allocation2 + $0x2c] sm:$0xe] %v304
        %306 = vst [vmem:[#allocation2 + $0x30] sm:$0xf] 0
        %307 = vst [vmem:[#allocation2 + $0x34] sm:$0x7] 0
        %v308 = vlaneseq
        %v309 = vshrl.u32 %v308, 7
        %v310 = vadd.s32 %v309, 8
        %v311 = vadd.s32 %v309, 16
        %v312 = vadd.s32 %v309, 24
        %v313 = vadd.s32 %v309, 32
        %v314 = vadd.s32 %v309, 40
        %v315 = vadd.s32 %v309, 48
        %v316 = vadd.s32 %v309, 56
        %v317 = vadd.s32 %v309, 64
        %v318 = vadd.s32 %v309, 72
        %vm319 = vcmp.lt.s32.totalorder %v309, 0
        %v320 = vsub.s32 0, %v309
        %v321 = vsel %vm319, %v320, %v309
        %v322 = vmul.u32.u64.compose %v321, 3435973837
        %v323 = vextract.low.u32 %v322
        %v324 = vextract.high.u32 %v322
        %v325 = vshrl.u32 %v324, 3
        %v326 = vmul.u32 %v325, 10
        %v327 = vsub.s32 %v321, %v326
        %v328 = vsub.s32 0, %v327
        %v329 = vsel %vm319, %v328, %v327
        %vm330 = vcmp.lt.s32.totalorder %v310, 0
        %v331 = vsub.s32 0, %v310
        %v332 = vsel %vm330, %v331, %v310
        %v333 = vmul.u32.u64.compose %v332, 3435973837
        %v334 = vextract.low.u32 %v333
        %v335 = vextract.high.u32 %v333
        %v336 = vshrl.u32 %v335, 3
        %v337 = vmul.u32 %v336, 10
        %v338 = vsub.s32 %v332, %v337
        %v339 = vsub.s32 0, %v338
        %v340 = vsel %vm330, %v339, %v338
        %vm341 = vcmp.lt.s32.totalorder %v311, 0
        %v342 = vsub.s32 0, %v311
        %v343 = vsel %vm341, %v342, %v311
        %v344 = vmul.u32.u64.compose %v343, 3435973837
        %v345 = vextract.low.u32 %v344
        %v346 = vextract.high.u32 %v344
        %v347 = vshrl.u32 %v346, 3
        %v348 = vmul.u32 %v347, 10
        %v349 = vsub.s32 %v343, %v348
        %v350 = vsub.s32 0, %v349
        %v351 = vsel %vm341, %v350, %v349
        %vm352 = vcmp.lt.s32.totalorder %v312, 0
        %v353 = vsub.s32 0, %v312
        %v354 = vsel %vm352, %v353, %v312
        %v355 = vmul.u32.u64.compose %v354, 3435973837
        %v356 = vextract.low.u32 %v355
        %v357 = vextract.high.u32 %v355
        %v358 = vshrl.u32 %v357, 3
        %v359 = vmul.u32 %v358, 10
        %v360 = vsub.s32 %v354, %v359
        %v361 = vsub.s32 0, %v360
        %v362 = vsel %vm352, %v361, %v360
        %vm363 = vcmp.lt.s32.totalorder %v313, 0
        %v364 = vsub.s32 0, %v313
        %v365 = vsel %vm363, %v364, %v313
        %v366 = vmul.u32.u64.compose %v365, 3435973837
        %v367 = vextract.low.u32 %v366
        %v368 = vextract.high.u32 %v366
        %v369 = vshrl.u32 %v368, 3
        %v370 = vmul.u32 %v369, 10
        %v371 = vsub.s32 %v365, %v370
        %v372 = vsub.s32 0, %v371
        %v373 = vsel %vm363, %v372, %v371
        %vm374 = vcmp.lt.s32.totalorder %v314, 0
        %v375 = vsub.s32 0, %v314
        %v376 = vsel %vm374, %v375, %v314
        %v377 = vmul.u32.u64.compose %v376, 3435973837
        %v378 = vextract.low.u32 %v377
        %v379 = vextract.high.u32 %v377
        %v380 = vshrl.u32 %v379, 3
        %v381 = vmul.u32 %v380, 10
        %v382 = vsub.s32 %v376, %v381
        %v383 = vsub.s32 0, %v382
        %v384 = vsel %vm374, %v383, %v382
        %vm385 = vcmp.lt.s32.totalorder %v315, 0
        %v386 = vsub.s32 0, %v315
        %v387 = vsel %vm385, %v386, %v315
        %v388 = vmul.u32.u64.compose %v387, 3435973837
        %v389 = vextract.low.u32 %v388
        %v390 = vextract.high.u32 %v388
        %v391 = vshrl.u32 %v390, 3
        %v392 = vmul.u32 %v391, 10
        %v393 = vsub.s32 %v387, %v392
        %v394 = vsub.s32 0, %v393
        %v395 = vsel %vm385, %v394, %v393
        %vm396 = vcmp.lt.s32.totalorder %v316, 0
        %v397 = vsub.s32 0, %v316
        %v398 = vsel %vm396, %v397, %v316
        %v399 = vmul.u32.u64.compose %v398, 3435973837
        %v400 = vextract.low.u32 %v399
        %v401 = vextract.high.u32 %v399
        %v402 = vshrl.u32 %v401, 3
        %v403 = vmul.u32 %v402, 10
        %v404 = vsub.s32 %v398, %v403
        %v405 = vsub.s32 0, %v404
        %v406 = vsel %vm396, %v405, %v404
        %vm407 = vcmp.lt.s32.totalorder %v317, 0
        %v408 = vsub.s32 0, %v317
        %v409 = vsel %vm407, %v408, %v317
        %v410 = vmul.u32.u64.compose %v409, 3435973837
        %v411 = vextract.low.u32 %v410
        %v412 = vextract.high.u32 %v410
        %v413 = vshrl.u32 %v412, 3
        %v414 = vmul.u32 %v413, 10
        %v415 = vsub.s32 %v409, %v414
        %v416 = vsub.s32 0, %v415
        %v417 = vsel %vm407, %v416, %v415
        %vm418 = vcmp.lt.s32.totalorder %v318, 0
        %v419 = vsub.s32 0, %v318
        %v420 = vsel %vm418, %v419, %v318
        %v421 = vmul.u32.u64.compose %v420, 3435973837
        %v422 = vextract.low.u32 %v421
        %v423 = vextract.high.u32 %v421
        %v424 = vshrl.u32 %v423, 3
        %v425 = vmul.u32 %v424, 10
        %v426 = vsub.s32 %v420, %v425
        %v427 = vsub.s32 0, %v426
        %v428 = vsel %vm418, %v427, %v426
        %vm429 = vcmp.ne.s32.totalorder %v329, 0
        %vm430 = vcmp.ne.s32.totalorder %v340, 0
        %vm431 = vcmp.ne.s32.totalorder %v351, 0
        %vm432 = vcmp.ne.s32.totalorder %v362, 0
        %vm433 = vcmp.ne.s32.totalorder %v373, 0
        %vm434 = vcmp.ne.s32.totalorder %v384, 0
        %vm435 = vcmp.ne.s32.totalorder %v395, 0
        %vm436 = vcmp.ne.s32.totalorder %v406, 0
        %vm437 = vcmp.ne.s32.totalorder %v417, 0
        %vm438 = vcmp.ne.s32.totalorder %v428, 0
        %vm439 = vcmp.lt.s32.totalorder %v329, 0
        %vm440 = vcmp.lt.s32.totalorder %v340, 0
        %vm441 = vcmp.lt.s32.totalorder %v351, 0
        %vm442 = vcmp.lt.s32.totalorder %v362, 0
        %vm443 = vcmp.lt.s32.totalorder %v373, 0
        %vm444 = vcmp.lt.s32.totalorder %v384, 0
        %vm445 = vcmp.lt.s32.totalorder %v395, 0
        %vm446 = vcmp.lt.s32.totalorder %v406, 0
        %vm447 = vcmp.lt.s32.totalorder %v417, 0
        %vm448 = vcmp.lt.s32.totalorder %v428, 0
        %vm449 = vmand %vm439, %vm429
        %vm450 = vmand %vm440, %vm430
        %vm451 = vmand %vm441, %vm431
        %vm452 = vmand %vm442, %vm432
        %vm453 = vmand %vm443, %vm433
        %vm454 = vmand %vm444, %vm434
        %vm455 = vmand %vm445, %vm435
        %vm456 = vmand %vm446, %vm436
        %vm457 = vmand %vm447, %vm437
        %vm458 = vmand %vm448, %vm438
        %v459 = vadd.s32 %v329, 10
        %v460 = vadd.s32 %v340, 10
        %v461 = vadd.s32 %v351, 10
        %v462 = vadd.s32 %v362, 10
        %v463 = vadd.s32 %v373, 10
        %v464 = vadd.s32 %v384, 10
        %v465 = vadd.s32 %v395, 10
        %v466 = vadd.s32 %v406, 10
        %v467 = vadd.s32 %v417, 10
        %v468 = vadd.s32 %v428, 10
        %v469 = vsel %vm449, %v459, %v329
        %v470 = vsel %vm450, %v460, %v340
        %v471 = vsel %vm451, %v461, %v351
        %v472 = vsel %vm452, %v462, %v362
        %v473 = vsel %vm453, %v463, %v373
        %v474 = vsel %vm454, %v464, %v384
        %v475 = vsel %vm455, %v465, %v395
        %v476 = vsel %vm456, %v466, %v406
        %v477 = vsel %vm457, %v467, %v417
        %v478 = vsel %vm458, %v468, %v428
        %vm479 = vcmp.lt.s32.totalorder %v469, 8
        %vm480 = vcmp.lt.s32.totalorder %v470, 8
        %vm481 = vcmp.lt.s32.totalorder %v471, 8
        %vm482 = vcmp.lt.s32.totalorder %v472, 8
        %vm483 = vcmp.lt.s32.totalorder %v473, 8
        %vm484 = vcmp.lt.s32.totalorder %v474, 8
        %vm485 = vcmp.lt.s32.totalorder %v475, 8
        %vm486 = vcmp.lt.s32.totalorder %v476, 8
        %vm487 = vcmp.lt.s32.totalorder %v477, 8
        %vm488 = vcmp.lt.s32.totalorder %v478, 8
        %v489 = vld [vmem:[%s291] sm:$0xf]
        %v490 = vld [vmem:[%s291 + $0x4] sm:$0xf]
        %v491 = vld [vmem:[%s291 + $0x8] sm:$0xf]
        %v492 = vld [vmem:[%s291 + $0xc] sm:$0xf]
        %v493 = vld [vmem:[%s291 + $0x10] sm:$0xf]
        %v494 = vld [vmem:[%s291 + $0x14] sm:$0xf]
        %v495 = vld [vmem:[%s291 + $0x18] sm:$0xf]
        %v496 = vld [vmem:[%s291 + $0x1c] sm:$0xf]
        %v497 = vld [vmem:[%s291 + $0x20] sm:$0xf]
        %v498 = vld [vmem:[%s291 + $0x24] sm:$0xf]
        %v499 = vld [vmem:[%s1] sm:$0xf]
        %v500 = vld [vmem:[%s1 + $0x4] sm:$0xf]
        %s501 = scalar_lea.vmem %s291, 52
        %v502 = vld [vmem:[%s501] sm:$0xf]
        %v503 = vld [vmem:[%s501 + $0x4] sm:$0xf]
        %v504 = vld [vmem:[%s501 + $0x8] sm:$0xf]
        %v505 = vld [vmem:[%s501 + $0xc] sm:$0xf]
        %v506 = vld [vmem:[%s501 + $0x10] sm:$0xf]
        %v507 = vld [vmem:[%s501 + $0x14] sm:$0xf]
        %v508 = vld [vmem:[%s501 + $0x18] sm:$0xf]
        %v509 = vld [vmem:[%s501 + $0x1c] sm:$0xf]
        %v510 = vld [vmem:[%s501 + $0x20] sm:$0xf]
        %v511 = vld [vmem:[%s501 + $0x24] sm:$0xf]
        %s512 = scalar_lea.vmem %s1, 8
        %v513 = vld [vmem:[%s512] sm:$0xf]
        %v514 = vld [vmem:[%s512 + $0x4] sm:$0xf]
        %v525 = vunpack.c.l.b16 %v502
        %v526 = vunpack.c.l.b16 %v503
        %v527 = vunpack.c.l.b16 %v504
        %v528 = vunpack.c.l.b16 %v505
        %v529 = vunpack.c.l.b16 %v506
        %v530 = vunpack.c.l.b16 %v507
        %v531 = vunpack.c.l.b16 %v508
        %v532 = vunpack.c.l.b16 %v509
        %v533 = vunpack.c.l.b16 %v510
        %v534 = vunpack.c.l.b16 %v511
        %v535 = vpack.c.b16 %v526, %v525
        %v536 = vpack.c.b16 %v528, %v527
        %v537 = vpack.c.b16 %v530, %v529
        %v538 = vpack.c.b16 %v532, %v531
        %v539 = vpack.c.b16 %v534, %v533
        %v542 = vunpack.c.l.b16 %v513
        %v543 = vunpack.c.l.b16 %v514
        %v544 = vpack.c.b16 %v543, %v542
        %vm546 = vcmask 130048
        %v548 = vsel %vm546, %v535, 0
        %v551 = vsel %vm546, %v536, 0
        %v554 = vsel %vm546, %v537, 0
        %v557 = vsel %vm546, %v538, 0
        %v560 = vsel %vm546, %v539, 0
        %562 = vmatprep.subr.bf16.mxu0 0
        %563 = vmatpush1.bf16.msra.mxu0 %v544
        %564 = vmatprep.subr.bf16.mxu0 0
        %565 = vmatpush1.bf16.msra.mxu0 0
        %566 = vmatprep.subr.bf16.mxu0 0
        %567 = vmatpush1.bf16.msra.mxu0 0
        %568 = vmatprep.subr.bf16.mxu0 0
        %569 = vmatpush1.bf16.msra.mxu0 0
        %570 = vmatprep.subr.bf16.mxu0 0
        %571 = vmatpush1.bf16.msra.mxu0 0
        %572 = vmatprep.subr.bf16.mxu0 0
        %573 = vmatpush1.bf16.msra.mxu0 0
        %574 = vmatprep.subr.bf16.mxu0 0
        %575 = vmatpush1.bf16.msra.mxu0 0
        %576 = vmatprep.subr.bf16.mxu0 0
        %577 = vmatpush1.bf16.msra.mxu0 0
        %578 = vmatprep.subr.bf16.mxu0 0
        %579 = vmatpush1.bf16.msra.mxu0 0
        %580 = vmatprep.subr.bf16.mxu0 0
        %581 = vmatpush1.bf16.msra.mxu0 0
        %582 = vmatprep.subr.bf16.mxu0 0
        %583 = vmatpush1.bf16.msra.mxu0 0
        %584 = vmatprep.subr.bf16.mxu0 0
        %585 = vmatpush1.bf16.msra.mxu0 0
        %586 = vmatprep.subr.bf16.mxu0 0
        %587 = vmatpush1.bf16.msra.mxu0 0
        %588 = vmatprep.subr.bf16.mxu0 0
        %589 = vmatpush1.bf16.msra.mxu0 0
        %590 = vmatprep.subr.bf16.mxu0 0
        %591 = vmatpush1.bf16.msra.mxu0 0
        %592 = vmatprep.subr.bf16.mxu0 0
        %593 = vmatpush1.bf16.msra.mxu0 0
        %594 = vmatprep.mubr.bf16.mxu0 0
        %595 = vmatmul.mubr.bf16.gmra.mrb[0].mxu0 %v548
        %v596 = vpop.f32.mrb[0].mxu0
        %v597 = vadd.f32 0.0, %v596
        %v598 = vpop.f32.mrb[0].mxu0
        %v599 = vpop.f32.mrb[0].mxu0
        %v600 = vadd.f32 0.0, %v599
        %v601 = vpop.f32.mrb[0].mxu0
        %602 = vmatprep.mubr.bf16.mxu0 0
        %603 = vmatmul.mubr.bf16.gmra.mrb[0].mxu0 %v551
        %v604 = vpop.f32.mrb[0].mxu0
        %v605 = vadd.f32 0.0, %v604
        %v606 = vpop.f32.mrb[0].mxu0
        %v607 = vpop.f32.mrb[0].mxu0
        %v608 = vadd.f32 0.0, %v607
        %v609 = vpop.f32.mrb[0].mxu0
        %610 = vmatprep.mubr.bf16.mxu0 0
        %611 = vmatmul.mubr.bf16.gmra.mrb[0].mxu0 %v554
        %v612 = vpop.f32.mrb[0].mxu0
        %v613 = vadd.f32 0.0, %v612
        %v614 = vpop.f32.mrb[0].mxu0
        %v615 = vpop.f32.mrb[0].mxu0
        %v616 = vadd.f32 0.0, %v615
        %v617 = vpop.f32.mrb[0].mxu0
        %618 = vmatprep.mubr.bf16.mxu0 0
        %619 = vmatmul.mubr.bf16.gmra.mrb[0].mxu0 %v557
        %v620 = vpop.f32.mrb[0].mxu0
        %v621 = vadd.f32 0.0, %v620
        %v622 = vpop.f32.mrb[0].mxu0
        %v623 = vpop.f32.mrb[0].mxu0
        %v624 = vadd.f32 0.0, %v623
        %v625 = vpop.f32.mrb[0].mxu0
        %626 = vmatprep.mubr.bf16.mxu0 0
        %627 = vmatmul.mubr.bf16.gmra.mrb[0].mxu0 %v560
        %v628 = vpop.f32.mrb[0].mxu0
        %v629 = vadd.f32 0.0, %v628
        %v630 = vpop.f32.mrb[0].mxu0
        %v631 = vpop.f32.mrb[0].mxu0
        %v632 = vadd.f32 0.0, %v631
        %v633 = vpop.f32.mrb[0].mxu0
        %634 = vdwg.mxu0
        %v645 = vunpack.c.l.b16 %v489
        %v646 = vunpack.c.l.b16 %v490
        %v647 = vunpack.c.l.b16 %v491
        %v648 = vunpack.c.l.b16 %v492
        %v649 = vunpack.c.l.b16 %v493
        %v650 = vunpack.c.l.b16 %v494
        %v651 = vunpack.c.l.b16 %v495
        %v652 = vunpack.c.l.b16 %v496
        %v653 = vunpack.c.l.b16 %v497
        %v654 = vunpack.c.l.b16 %v498
        %v655 = vpack.c.b16 %v646, %v645
        %v656 = vpack.c.b16 %v648, %v647
        %v657 = vpack.c.b16 %v650, %v649
        %v658 = vpack.c.b16 %v652, %v651
        %v659 = vpack.c.b16 %v654, %v653
        %v662 = vunpack.c.l.b16 %v499
        %v663 = vunpack.c.l.b16 %v500
        %v664 = vpack.c.b16 %v663, %v662
        %v667 = vsel %vm546, %v655, 0
        %v670 = vsel %vm546, %v656, 0
        %v673 = vsel %vm546, %v657, 0
        %v676 = vsel %vm546, %v658, 0
        %v679 = vsel %vm546, %v659, 0
        %681 = vmatprep.subr.bf16.mxu0 0
        %682 = vmatpush1.bf16.msra.mxu0 %v664
        %683 = vmatprep.subr.bf16.mxu0 0
        %684 = vmatpush1.bf16.msra.mxu0 0
        %685 = vmatprep.subr.bf16.mxu0 0
        %686 = vmatpush1.bf16.msra.mxu0 0
        %687 = vmatprep.subr.bf16.mxu0 0
        %688 = vmatpush1.bf16.msra.mxu0 0
        %689 = vmatprep.subr.bf16.mxu0 0
        %690 = vmatpush1.bf16.msra.mxu0 0
        %691 = vmatprep.subr.bf16.mxu0 0
        %692 = vmatpush1.bf16.msra.mxu0 0
        %693 = vmatprep.subr.bf16.mxu0 0
        %694 = vmatpush1.bf16.msra.mxu0 0
        %695 = vmatprep.subr.bf16.mxu0 0
        %696 = vmatpush1.bf16.msra.mxu0 0
        %697 = vmatprep.subr.bf16.mxu0 0
        %698 = vmatpush1.bf16.msra.mxu0 0
        %699 = vmatprep.subr.bf16.mxu0 0
        %700 = vmatpush1.bf16.msra.mxu0 0
        %701 = vmatprep.subr.bf16.mxu0 0
        %702 = vmatpush1.bf16.msra.mxu0 0
        %703 = vmatprep.subr.bf16.mxu0 0
        %704 = vmatpush1.bf16.msra.mxu0 0
        %705 = vmatprep.subr.bf16.mxu0 0
        %706 = vmatpush1.bf16.msra.mxu0 0
        %707 = vmatprep.subr.bf16.mxu0 0
        %708 = vmatpush1.bf16.msra.mxu0 0
        %709 = vmatprep.subr.bf16.mxu0 0
        %710 = vmatpush1.bf16.msra.mxu0 0
        %711 = vmatprep.subr.bf16.mxu0 0
        %712 = vmatpush1.bf16.msra.mxu0 0
        %713 = vmatprep.mubr.bf16.mxu0 0
        %714 = vmatmul.mubr.bf16.gmra.mrb[0].mxu0 %v667
        %v715 = vpop.f32.mrb[0].mxu0
        %v716 = vadd.f32 %v597, %v715
        %v717 = vpop.f32.mrb[0].mxu0
        %v718 = vpop.f32.mrb[0].mxu0
        %v719 = vadd.f32 %v600, %v718
        %v720 = vpop.f32.mrb[0].mxu0
        %721 = vmatprep.mubr.bf16.mxu0 0
        %722 = vmatmul.mubr.bf16.gmra.mrb[0].mxu0 %v670
        %v723 = vpop.f32.mrb[0].mxu0
        %v724 = vadd.f32 %v605, %v723
        %v725 = vpop.f32.mrb[0].mxu0
        %v726 = vpop.f32.mrb[0].mxu0
        %v727 = vadd.f32 %v608, %v726
        %v728 = vpop.f32.mrb[0].mxu0
        %729 = vmatprep.mubr.bf16.mxu0 0
        %730 = vmatmul.mubr.bf16.gmra.mrb[0].mxu0 %v673
        %v731 = vpop.f32.mrb[0].mxu0
        %v732 = vadd.f32 %v613, %v731
        %v733 = vpop.f32.mrb[0].mxu0
        %v734 = vpop.f32.mrb[0].mxu0
        %v735 = vadd.f32 %v616, %v734
        %v736 = vpop.f32.mrb[0].mxu0
        %737 = vmatprep.mubr.bf16.mxu0 0
        %738 = vmatmul.mubr.bf16.gmra.mrb[0].mxu0 %v676
        %v739 = vpop.f32.mrb[0].mxu0
        %v740 = vadd.f32 %v621, %v739
        %v741 = vpop.f32.mrb[0].mxu0
        %v742 = vpop.f32.mrb[0].mxu0
        %v743 = vadd.f32 %v624, %v742
        %v744 = vpop.f32.mrb[0].mxu0
        %745 = vmatprep.mubr.bf16.mxu0 0
        %746 = vmatmul.mubr.bf16.gmra.mrb[0].mxu0 %v679
        %v747 = vpop.f32.mrb[0].mxu0
        %v748 = vadd.f32 %v629, %v747
        %v749 = vpop.f32.mrb[0].mxu0
        %v750 = vpop.f32.mrb[0].mxu0
        %v751 = vadd.f32 %v632, %v750
        %v752 = vpop.f32.mrb[0].mxu0
        %753 = vdwg.mxu0
        %v754 = vld [vmem:[%s291] sm:$0xf]
        %v755 = vld [vmem:[%s291 + $0x4] sm:$0xf]
        %v756 = vld [vmem:[%s291 + $0x8] sm:$0xf]
        %v757 = vld [vmem:[%s291 + $0xc] sm:$0xf]
        %v758 = vld [vmem:[%s291 + $0x10] sm:$0xf]
        %v759 = vld [vmem:[%s291 + $0x14] sm:$0xf]
        %v760 = vld [vmem:[%s291 + $0x18] sm:$0xf]
        %v761 = vld [vmem:[%s291 + $0x1c] sm:$0xf]
        %v762 = vld [vmem:[%s291 + $0x20] sm:$0xf]
        %v763 = vld [vmem:[%s291 + $0x24] sm:$0xf]
        %v764 = vld [vmem:[%s291 + $0x28] sm:$0x1]
        %s765 = scalar_lea.vmem %s1, 16
        %v766 = vld [vmem:[%s765] sm:$0xf]
        %v767 = vld [vmem:[%s765 + $0x4] sm:$0xf]
        %v779 = vunpack.c.l.b16 %v754
        %v780 = vunpack.c.l.b16 %v755
        %v781 = vunpack.c.l.b16 %v756
        %v782 = vunpack.c.l.b16 %v757
        %v783 = vunpack.c.l.b16 %v758
        %v784 = vunpack.c.l.b16 %v759
        %v785 = vunpack.c.l.b16 %v760
        %v786 = vunpack.c.l.b16 %v761
        %v787 = vunpack.c.l.b16 %v762
        %v788 = vunpack.c.l.b16 %v763
        %v789 = vunpack.c.l.b16 %v764
        %v790 = vpack.c.b16 %v780, %v779
        %v791 = vpack.c.b16 %v782, %v781
        %v792 = vpack.c.b16 %v784, %v783
        %v793 = vpack.c.b16 %v786, %v785
        %v794 = vpack.c.b16 %v788, %v787
        %v795 = vpack.c.b16 %v789, %v789
        %vm796 = vsmask.f32 7424
        %v798 = vshrl.u32 %v790, 16
        %v800 = vshll.u32 %v790, 16
        %v802 = vrot.slane %v800, 1
        %v803 = vor.u32 %v798, %v802
        %v805 = vshll.u32 %v791, 16
        %v807 = vrot.slane %v805, 1
        %v808 = vsel %vm796, %v803, %v807
        %v809 = vshrl.u32 %v791, 16
        %v811 = vor.u32 %v809, %v807
        %v813 = vshll.u32 %v792, 16
        %v815 = vrot.slane %v813, 1
        %v816 = vsel %vm796, %v811, %v815
        %v817 = vshrl.u32 %v792, 16
        %v819 = vor.u32 %v817, %v815
        %v821 = vshll.u32 %v793, 16
        %v823 = vrot.slane %v821, 1
        %v824 = vsel %vm796, %v819, %v823
        %v825 = vshrl.u32 %v793, 16
        %v827 = vor.u32 %v825, %v823
        %v829 = vshll.u32 %v794, 16
        %v831 = vrot.slane %v829, 1
        %v832 = vsel %vm796, %v827, %v831
        %v833 = vshrl.u32 %v794, 16
        %v835 = vor.u32 %v833, %v831
        %v837 = vshll.u32 %v795, 16
        %v839 = vrot.slane %v837, 1
        %v840 = vsel %vm796, %v835, %v839
        %v843 = vunpack.c.l.b16 %v766
        %v844 = vunpack.c.l.b16 %v767
        %v845 = vpack.c.b16 %v844, %v843
        %v848 = vsel %vm546, %v808, 0
        %v851 = vsel %vm546, %v816, 0
        %v854 = vsel %vm546, %v824, 0
        %v857 = vsel %vm546, %v832, 0
        %v860 = vsel %vm546, %v840, 0
        %862 = vmatprep.subr.bf16.mxu0 0
        %863 = vmatpush1.bf16.msra.mxu0 %v845
        %864 = vmatprep.subr.bf16.mxu0 0
        %865 = vmatpush1.bf16.msra.mxu0 0
        %866 = vmatprep.subr.bf16.mxu0 0
        %867 = vmatpush1.bf16.msra.mxu0 0
        %868 = vmatprep.subr.bf16.mxu0 0
        %869 = vmatpush1.bf16.msra.mxu0 0
        %870 = vmatprep.subr.bf16.mxu0 0
        %871 = vmatpush1.bf16.msra.mxu0 0
        %872 = vmatprep.subr.bf16.mxu0 0
        %873 = vmatpush1.bf16.msra.mxu0 0
        %874 = vmatprep.subr.bf16.mxu0 0
        %875 = vmatpush1.bf16.msra.mxu0 0
        %876 = vmatprep.subr.bf16.mxu0 0
        %877 = vmatpush1.bf16.msra.mxu0 0
        %878 = vmatprep.subr.bf16.mxu0 0
        %879 = vmatpush1.bf16.msra.mxu0 0
        %880 = vmatprep.subr.bf16.mxu0 0
        %881 = vmatpush1.bf16.msra.mxu0 0
        %882 = vmatprep.subr.bf16.mxu0 0
        %883 = vmatpush1.bf16.msra.mxu0 0
        %884 = vmatprep.subr.bf16.mxu0 0
        %885 = vmatpush1.bf16.msra.mxu0 0
        %886 = vmatprep.subr.bf16.mxu0 0
        %887 = vmatpush1.bf16.msra.mxu0 0
        %888 = vmatprep.subr.bf16.mxu0 0
        %889 = vmatpush1.bf16.msra.mxu0 0
        %890 = vmatprep.subr.bf16.mxu0 0
        %891 = vmatpush1.bf16.msra.mxu0 0
        %892 = vmatprep.subr.bf16.mxu0 0
        %893 = vmatpush1.bf16.msra.mxu0 0
        %894 = vmatprep.mubr.bf16.mxu0 0
        %895 = vmatmul.mubr.bf16.gmra.mrb[0].mxu0 %v848
        %v896 = vpop.f32.mrb[0].mxu0
        %v897 = vadd.f32 0.0, %v896
        %v898 = vpop.f32.mrb[0].mxu0
        %v899 = vpop.f32.mrb[0].mxu0
        %v900 = vadd.f32 0.0, %v899
        %v901 = vpop.f32.mrb[0].mxu0
        %902 = vmatprep.mubr.bf16.mxu0 0
        %903 = vmatmul.mubr.bf16.gmra.mrb[0].mxu0 %v851
        %v904 = vpop.f32.mrb[0].mxu0
        %v905 = vadd.f32 0.0, %v904
        %v906 = vpop.f32.mrb[0].mxu0
        %v907 = vpop.f32.mrb[0].mxu0
        %v908 = vadd.f32 0.0, %v907
        %v909 = vpop.f32.mrb[0].mxu0
        %910 = vmatprep.mubr.bf16.mxu0 0
        %911 = vmatmul.mubr.bf16.gmra.mrb[0].mxu0 %v854
        %v912 = vpop.f32.mrb[0].mxu0
        %v913 = vadd.f32 0.0, %v912
        %v914 = vpop.f32.mrb[0].mxu0
        %v915 = vpop.f32.mrb[0].mxu0
        %v916 = vadd.f32 0.0, %v915
        %v917 = vpop.f32.mrb[0].mxu0
        %918 = vmatprep.mubr.bf16.mxu0 0
        %919 = vmatmul.mubr.bf16.gmra.mrb[0].mxu0 %v857
        %v920 = vpop.f32.mrb[0].mxu0
        %v921 = vadd.f32 0.0, %v920
        %v922 = vpop.f32.mrb[0].mxu0
        %v923 = vpop.f32.mrb[0].mxu0
        %v924 = vadd.f32 0.0, %v923
        %v925 = vpop.f32.mrb[0].mxu0
        %926 = vmatprep.mubr.bf16.mxu0 0
        %927 = vmatmul.mubr.bf16.gmra.mrb[0].mxu0 %v860
        %v928 = vpop.f32.mrb[0].mxu0
        %v929 = vadd.f32 0.0, %v928
        %v930 = vpop.f32.mrb[0].mxu0
        %v931 = vpop.f32.mrb[0].mxu0
        %v932 = vadd.f32 0.0, %v931
        %v933 = vpop.f32.mrb[0].mxu0
        %934 = vdwg.mxu0
        %v935 = vadd.f32 %v716, %v897
        %v936 = vadd.f32 %v719, %v900
        %v937 = vadd.f32 %v724, %v905
        %v938 = vadd.f32 %v727, %v908
        %v939 = vadd.f32 %v732, %v913
        %v940 = vadd.f32 %v735, %v916
        %v941 = vadd.f32 %v740, %v921
        %v942 = vadd.f32 %v743, %v924
        %v943 = vadd.f32 %v748, %v929
        %v944 = vadd.f32 %v751, %v932
        %s945 = scalar_lea.vmem %s291, 104
        %v946 = vld [vmem:[%s945] sm:$0xf]
        %v947 = vld [vmem:[%s945 + $0x4] sm:$0xf]
        %v948 = vld [vmem:[%s945 + $0x8] sm:$0xf]
        %v949 = vld [vmem:[%s945 + $0xc] sm:$0xf]
        %v950 = vld [vmem:[%s945 + $0x10] sm:$0xf]
        %v951 = vld [vmem:[%s945 + $0x14] sm:$0xf]
        %v952 = vld [vmem:[%s945 + $0x18] sm:$0xf]
        %v953 = vld [vmem:[%s945 + $0x1c] sm:$0xf]
        %v954 = vld [vmem:[%s945 + $0x20] sm:$0xf]
        %v955 = vld [vmem:[%s945 + $0x24] sm:$0xf]
        %s956 = scalar_lea.vmem %s1, 24
        %v957 = vld [vmem:[%s956] sm:$0xf]
        %v958 = vld [vmem:[%s956 + $0x4] sm:$0xf]
        %v969 = vunpack.c.l.b16 %v946
        %v970 = vunpack.c.l.b16 %v947
        %v971 = vunpack.c.l.b16 %v948
        %v972 = vunpack.c.l.b16 %v949
        %v973 = vunpack.c.l.b16 %v950
        %v974 = vunpack.c.l.b16 %v951
        %v975 = vunpack.c.l.b16 %v952
        %v976 = vunpack.c.l.b16 %v953
        %v977 = vunpack.c.l.b16 %v954
        %v978 = vunpack.c.l.b16 %v955
        %v979 = vpack.c.b16 %v970, %v969
        %v980 = vpack.c.b16 %v972, %v971
        %v981 = vpack.c.b16 %v974, %v973
        %v982 = vpack.c.b16 %v976, %v975
        %v983 = vpack.c.b16 %v978, %v977
        %v986 = vunpack.c.l.b16 %v957
        %v987 = vunpack.c.l.b16 %v958
        %v988 = vpack.c.b16 %v987, %v986
        %v991 = vsel %vm546, %v979, 0
        %v994 = vsel %vm546, %v980, 0
        %v997 = vsel %vm546, %v981, 0
        %v1000 = vsel %vm546, %v982, 0
        %v1003 = vsel %vm546, %v983, 0
        %1005 = vmatprep.subr.bf16.mxu0 0
        %1006 = vmatpush1.bf16.msra.mxu0 %v988
        %1007 = vmatprep.subr.bf16.mxu0 0
        %1008 = vmatpush1.bf16.msra.mxu0 0
        %1009 = vmatprep.subr.bf16.mxu0 0
        %1010 = vmatpush1.bf16.msra.mxu0 0
        %1011 = vmatprep.subr.bf16.mxu0 0
        %1012 = vmatpush1.bf16.msra.mxu0 0
        %1013 = vmatprep.subr.bf16.mxu0 0
        %1014 = vmatpush1.bf16.msra.mxu0 0
        %1015 = vmatprep.subr.bf16.mxu0 0
        %1016 = vmatpush1.bf16.msra.mxu0 0
        %1017 = vmatprep.subr.bf16.mxu0 0
        %1018 = vmatpush1.bf16.msra.mxu0 0
        %1019 = vmatprep.subr.bf16.mxu0 0
        %1020 = vmatpush1.bf16.msra.mxu0 0
        %1021 = vmatprep.subr.bf16.mxu0 0
        %1022 = vmatpush1.bf16.msra.mxu0 0
        %1023 = vmatprep.subr.bf16.mxu0 0
        %1024 = vmatpush1.bf16.msra.mxu0 0
        %1025 = vmatprep.subr.bf16.mxu0 0
        %1026 = vmatpush1.bf16.msra.mxu0 0
        %1027 = vmatprep.subr.bf16.mxu0 0
        %1028 = vmatpush1.bf16.msra.mxu0 0
        %1029 = vmatprep.subr.bf16.mxu0 0
        %1030 = vmatpush1.bf16.msra.mxu0 0
        %1031 = vmatprep.subr.bf16.mxu0 0
        %1032 = vmatpush1.bf16.msra.mxu0 0
        %1033 = vmatprep.subr.bf16.mxu0 0
        %1034 = vmatpush1.bf16.msra.mxu0 0
        %1035 = vmatprep.subr.bf16.mxu0 0
        %1036 = vmatpush1.bf16.msra.mxu0 0
        %1037 = vmatprep.mubr.bf16.mxu0 0
        %1038 = vmatmul.mubr.bf16.gmra.mrb[0].mxu0 %v991
        %v1039 = vpop.f32.mrb[0].mxu0
        %v1040 = vadd.f32 0.0, %v1039
        %v1041 = vpop.f32.mrb[0].mxu0
        %v1042 = vpop.f32.mrb[0].mxu0
        %v1043 = vadd.f32 0.0, %v1042
        %v1044 = vpop.f32.mrb[0].mxu0
        %1045 = vmatprep.mubr.bf16.mxu0 0
        %1046 = vmatmul.mubr.bf16.gmra.mrb[0].mxu0 %v994
        %v1047 = vpop.f32.mrb[0].mxu0
        %v1048 = vadd.f32 0.0, %v1047
        %v1049 = vpop.f32.mrb[0].mxu0
        %v1050 = vpop.f32.mrb[0].mxu0
        %v1051 = vadd.f32 0.0, %v1050
        %v1052 = vpop.f32.mrb[0].mxu0
        %1053 = vmatprep.mubr.bf16.mxu0 0
        %1054 = vmatmul.mubr.bf16.gmra.mrb[0].mxu0 %v997
        %v1055 = vpop.f32.mrb[0].mxu0
        %v1056 = vadd.f32 0.0, %v1055
        %v1057 = vpop.f32.mrb[0].mxu0
        %v1058 = vpop.f32.mrb[0].mxu0
        %v1059 = vadd.f32 0.0, %v1058
        %v1060 = vpop.f32.mrb[0].mxu0
        %1061 = vmatprep.mubr.bf16.mxu0 0
        %1062 = vmatmul.mubr.bf16.gmra.mrb[0].mxu0 %v1000
        %v1063 = vpop.f32.mrb[0].mxu0
        %v1064 = vadd.f32 0.0, %v1063
        %v1065 = vpop.f32.mrb[0].mxu0
        %v1066 = vpop.f32.mrb[0].mxu0
        %v1067 = vadd.f32 0.0, %v1066
        %v1068 = vpop.f32.mrb[0].mxu0
        %1069 = vmatprep.mubr.bf16.mxu0 0
        %1070 = vmatmul.mubr.bf16.gmra.mrb[0].mxu0 %v1003
        %v1071 = vpop.f32.mrb[0].mxu0
        %v1072 = vadd.f32 0.0, %v1071
        %v1073 = vpop.f32.mrb[0].mxu0
        %v1074 = vpop.f32.mrb[0].mxu0
        %v1075 = vadd.f32 0.0, %v1074
        %v1076 = vpop.f32.mrb[0].mxu0
        %1077 = vdwg.mxu0
        %v1078 = vadd.f32 %v935, %v1040
        %v1079 = vadd.f32 %v936, %v1043
        %v1080 = vadd.f32 %v937, %v1048
        %v1081 = vadd.f32 %v938, %v1051
        %v1082 = vadd.f32 %v939, %v1056
        %v1083 = vadd.f32 %v940, %v1059
        %v1084 = vadd.f32 %v941, %v1064
        %v1085 = vadd.f32 %v942, %v1067
        %v1086 = vadd.f32 %v943, %v1072
        %v1087 = vadd.f32 %v944, %v1075
        %s1088 = scalar_lea.vmem %s291, 156
        %v1089 = vld [vmem:[%s1088] sm:$0xf]
        %v1090 = vld [vmem:[%s1088 + $0x4] sm:$0xf]
        %v1091 = vld [vmem:[%s1088 + $0x8] sm:$0xf]
        %v1092 = vld [vmem:[%s1088 + $0xc] sm:$0xf]
        %v1093 = vld [vmem:[%s1088 + $0x10] sm:$0xf]
        %v1094 = vld [vmem:[%s1088 + $0x14] sm:$0xf]
        %v1095 = vld [vmem:[%s1088 + $0x18] sm:$0xf]
        %v1096 = vld [vmem:[%s1088 + $0x1c] sm:$0xf]
        %v1097 = vld [vmem:[%s1088 + $0x20] sm:$0xf]
        %v1098 = vld [vmem:[%s1088 + $0x24] sm:$0xf]
        %s1099 = scalar_lea.vmem %s1, 32
        %v1100 = vld [vmem:[%s1099] sm:$0xf]
        %v1101 = vld [vmem:[%s1099 + $0x4] sm:$0xf]
        %v1112 = vunpack.c.l.b16 %v1089
        %v1113 = vunpack.c.l.b16 %v1090
        %v1114 = vunpack.c.l.b16 %v1091
        %v1115 = vunpack.c.l.b16 %v1092
        %v1116 = vunpack.c.l.b16 %v1093
        %v1117 = vunpack.c.l.b16 %v1094
        %v1118 = vunpack.c.l.b16 %v1095
        %v1119 = vunpack.c.l.b16 %v1096
        %v1120 = vunpack.c.l.b16 %v1097
        %v1121 = vunpack.c.l.b16 %v1098
        %v1122 = vpack.c.b16 %v1113, %v1112
        %v1123 = vpack.c.b16 %v1115, %v1114
        %v1124 = vpack.c.b16 %v1117, %v1116
        %v1125 = vpack.c.b16 %v1119, %v1118
        %v1126 = vpack.c.b16 %v1121, %v1120
        %v1129 = vunpack.c.l.b16 %v1100
        %v1130 = vunpack.c.l.b16 %v1101
        %v1131 = vpack.c.b16 %v1130, %v1129
        %v1134 = vsel %vm546, %v1122, 0
        %v1137 = vsel %vm546, %v1123, 0
        %v1140 = vsel %vm546, %v1124, 0
        %v1143 = vsel %vm546, %v1125, 0
        %v1146 = vsel %vm546, %v1126, 0
        %1148 = vmatprep.subr.bf16.mxu0 0
        %1149 = vmatpush1.bf16.msra.mxu0 %v1131
        %1150 = vmatprep.subr.bf16.mxu0 0
        %1151 = vmatpush1.bf16.msra.mxu0 0
        %1152 = vmatprep.subr.bf16.mxu0 0
        %1153 = vmatpush1.bf16.msra.mxu0 0
        %1154 = vmatprep.subr.bf16.mxu0 0
        %1155 = vmatpush1.bf16.msra.mxu0 0
        %1156 = vmatprep.subr.bf16.mxu0 0
        %1157 = vmatpush1.bf16.msra.mxu0 0
        %1158 = vmatprep.subr.bf16.mxu0 0
        %1159 = vmatpush1.bf16.msra.mxu0 0
        %1160 = vmatprep.subr.bf16.mxu0 0
        %1161 = vmatpush1.bf16.msra.mxu0 0
        %1162 = vmatprep.subr.bf16.mxu0 0
        %1163 = vmatpush1.bf16.msra.mxu0 0
        %1164 = vmatprep.subr.bf16.mxu0 0
        %1165 = vmatpush1.bf16.msra.mxu0 0
        %1166 = vmatprep.subr.bf16.mxu0 0
        %1167 = vmatpush1.bf16.msra.mxu0 0
        %1168 = vmatprep.subr.bf16.mxu0 0
        %1169 = vmatpush1.bf16.msra.mxu0 0
        %1170 = vmatprep.subr.bf16.mxu0 0
        %1171 = vmatpush1.bf16.msra.mxu0 0
        %1172 = vmatprep.subr.bf16.mxu0 0
        %1173 = vmatpush1.bf16.msra.mxu0 0
        %1174 = vmatprep.subr.bf16.mxu0 0
        %1175 = vmatpush1.bf16.msra.mxu0 0
        %1176 = vmatprep.subr.bf16.mxu0 0
        %1177 = vmatpush1.bf16.msra.mxu0 0
        %1178 = vmatprep.subr.bf16.mxu0 0
        %1179 = vmatpush1.bf16.msra.mxu0 0
        %1180 = vmatprep.mubr.bf16.mxu0 0
        %1181 = vmatmul.mubr.bf16.gmra.mrb[0].mxu0 %v1134
        %v1182 = vpop.f32.mrb[0].mxu0
        %v1183 = vadd.f32 0.0, %v1182
        %v1184 = vpop.f32.mrb[0].mxu0
        %v1185 = vpop.f32.mrb[0].mxu0
        %v1186 = vadd.f32 0.0, %v1185
        %v1187 = vpop.f32.mrb[0].mxu0
        %1188 = vmatprep.mubr.bf16.mxu0 0
        %1189 = vmatmul.mubr.bf16.gmra.mrb[0].mxu0 %v1137
        %v1190 = vpop.f32.mrb[0].mxu0
        %v1191 = vadd.f32 0.0, %v1190
        %v1192 = vpop.f32.mrb[0].mxu0
        %v1193 = vpop.f32.mrb[0].mxu0
        %v1194 = vadd.f32 0.0, %v1193
        %v1195 = vpop.f32.mrb[0].mxu0
        %1196 = vmatprep.mubr.bf16.mxu0 0
        %1197 = vmatmul.mubr.bf16.gmra.mrb[0].mxu0 %v1140
        %v1198 = vpop.f32.mrb[0].mxu0
        %v1199 = vadd.f32 0.0, %v1198
        %v1200 = vpop.f32.mrb[0].mxu0
        %v1201 = vpop.f32.mrb[0].mxu0
        %v1202 = vadd.f32 0.0, %v1201
        %v1203 = vpop.f32.mrb[0].mxu0
        %1204 = vmatprep.mubr.bf16.mxu0 0
        %1205 = vmatmul.mubr.bf16.gmra.mrb[0].mxu0 %v1143
        %v1206 = vpop.f32.mrb[0].mxu0
        %v1207 = vadd.f32 0.0, %v1206
        %v1208 = vpop.f32.mrb[0].mxu0
        %v1209 = vpop.f32.mrb[0].mxu0
        %v1210 = vadd.f32 0.0, %v1209
        %v1211 = vpop.f32.mrb[0].mxu0
        %1212 = vmatprep.mubr.bf16.mxu0 0
        %1213 = vmatmul.mubr.bf16.gmra.mrb[0].mxu0 %v1146
        %v1214 = vpop.f32.mrb[0].mxu0
        %v1215 = vadd.f32 0.0, %v1214
        %v1216 = vpop.f32.mrb[0].mxu0
        %v1217 = vpop.f32.mrb[0].mxu0
        %v1218 = vadd.f32 0.0, %v1217
        %v1219 = vpop.f32.mrb[0].mxu0
        %1220 = vdwg.mxu0
        %v1221 = vadd.f32 %v1078, %v1183
        %v1222 = vadd.f32 %v1079, %v1186
        %v1223 = vadd.f32 %v1080, %v1191
        %v1224 = vadd.f32 %v1081, %v1194
        %v1225 = vadd.f32 %v1082, %v1199
        %v1226 = vadd.f32 %v1083, %v1202
        %v1227 = vadd.f32 %v1084, %v1207
        %v1228 = vadd.f32 %v1085, %v1210
        %v1229 = vadd.f32 %v1086, %v1215
        %v1230 = vadd.f32 %v1087, %v1218
        %v1231 = vld [vmem:[%s945] sm:$0xf]
        %v1232 = vld [vmem:[%s945 + $0x4] sm:$0xf]
        %v1233 = vld [vmem:[%s945 + $0x8] sm:$0xf]
        %v1234 = vld [vmem:[%s945 + $0xc] sm:$0xf]
        %v1235 = vld [vmem:[%s945 + $0x10] sm:$0xf]
        %v1236 = vld [vmem:[%s945 + $0x14] sm:$0xf]
        %v1237 = vld [vmem:[%s945 + $0x18] sm:$0xf]
        %v1238 = vld [vmem:[%s945 + $0x1c] sm:$0xf]
        %v1239 = vld [vmem:[%s945 + $0x20] sm:$0xf]
        %v1240 = vld [vmem:[%s945 + $0x24] sm:$0xf]
        %v1241 = vld [vmem:[%s945 + $0x28] sm:$0x1]
        %s1242 = scalar_lea.vmem %s1, 40
        %v1243 = vld [vmem:[%s1242] sm:$0xf]
        %v1244 = vld [vmem:[%s1242 + $0x4] sm:$0xf]
        %v1256 = vunpack.c.l.b16 %v1231
        %v1257 = vunpack.c.l.b16 %v1232
        %v1258 = vunpack.c.l.b16 %v1233
        %v1259 = vunpack.c.l.b16 %v1234
        %v1260 = vunpack.c.l.b16 %v1235
        %v1261 = vunpack.c.l.b16 %v1236
        %v1262 = vunpack.c.l.b16 %v1237
        %v1263 = vunpack.c.l.b16 %v1238
        %v1264 = vunpack.c.l.b16 %v1239
        %v1265 = vunpack.c.l.b16 %v1240
        %v1266 = vunpack.c.l.b16 %v1241
        %v1267 = vpack.c.b16 %v1257, %v1256
        %v1268 = vpack.c.b16 %v1259, %v1258
        %v1269 = vpack.c.b16 %v1261, %v1260
        %v1270 = vpack.c.b16 %v1263, %v1262
        %v1271 = vpack.c.b16 %v1265, %v1264
        %v1272 = vpack.c.b16 %v1266, %v1266
        %v1274 = vshrl.u32 %v1267, 16
        %v1276 = vshll.u32 %v1267, 16
        %v1278 = vrot.slane %v1276, 1
        %v1279 = vor.u32 %v1274, %v1278
        %v1281 = vshll.u32 %v1268, 16
        %v1283 = vrot.slane %v1281, 1
        %v1284 = vsel %vm796, %v1279, %v1283
        %v1285 = vshrl.u32 %v1268, 16
        %v1287 = vor.u32 %v1285, %v1283
        %v1289 = vshll.u32 %v1269, 16
        %v1291 = vrot.slane %v1289, 1
        %v1292 = vsel %vm796, %v1287, %v1291
        %v1293 = vshrl.u32 %v1269, 16
        %v1295 = vor.u32 %v1293, %v1291
        %v1297 = vshll.u32 %v1270, 16
        %v1299 = vrot.slane %v1297, 1
        %v1300 = vsel %vm796, %v1295, %v1299
        %v1301 = vshrl.u32 %v1270, 16
        %v1303 = vor.u32 %v1301, %v1299
        %v1305 = vshll.u32 %v1271, 16
        %v1307 = vrot.slane %v1305, 1
        %v1308 = vsel %vm796, %v1303, %v1307
        %v1309 = vshrl.u32 %v1271, 16
        %v1311 = vor.u32 %v1309, %v1307
        %v1313 = vshll.u32 %v1272, 16
        %v1315 = vrot.slane %v1313, 1
        %v1316 = vsel %vm796, %v1311, %v1315
        %v1319 = vunpack.c.l.b16 %v1243
        %v1320 = vunpack.c.l.b16 %v1244
        %v1321 = vpack.c.b16 %v1320, %v1319
        %v1324 = vsel %vm546, %v1284, 0
        %v1327 = vsel %vm546, %v1292, 0
        %v1330 = vsel %vm546, %v1300, 0
        %v1333 = vsel %vm546, %v1308, 0
        %v1336 = vsel %vm546, %v1316, 0
        %1338 = vmatprep.subr.bf16.mxu0 0
        %1339 = vmatpush1.bf16.msra.mxu0 %v1321
        %1340 = vmatprep.subr.bf16.mxu0 0
        %1341 = vmatpush1.bf16.msra.mxu0 0
        %1342 = vmatprep.subr.bf16.mxu0 0
        %1343 = vmatpush1.bf16.msra.mxu0 0
        %1344 = vmatprep.subr.bf16.mxu0 0
        %1345 = vmatpush1.bf16.msra.mxu0 0
        %1346 = vmatprep.subr.bf16.mxu0 0
        %1347 = vmatpush1.bf16.msra.mxu0 0
        %1348 = vmatprep.subr.bf16.mxu0 0
        %1349 = vmatpush1.bf16.msra.mxu0 0
        %1350 = vmatprep.subr.bf16.mxu0 0
        %1351 = vmatpush1.bf16.msra.mxu0 0
        %1352 = vmatprep.subr.bf16.mxu0 0
        %1353 = vmatpush1.bf16.msra.mxu0 0
        %1354 = vmatprep.subr.bf16.mxu0 0
        %1355 = vmatpush1.bf16.msra.mxu0 0
        %1356 = vmatprep.subr.bf16.mxu0 0
        %1357 = vmatpush1.bf16.msra.mxu0 0
        %1358 = vmatprep.subr.bf16.mxu0 0
        %1359 = vmatpush1.bf16.msra.mxu0 0
        %1360 = vmatprep.subr.bf16.mxu0 0
        %1361 = vmatpush1.bf16.msra.mxu0 0
        %1362 = vmatprep.subr.bf16.mxu0 0
        %1363 = vmatpush1.bf16.msra.mxu0 0
        %1364 = vmatprep.subr.bf16.mxu0 0
        %1365 = vmatpush1.bf16.msra.mxu0 0
        %1366 = vmatprep.subr.bf16.mxu0 0
        %1367 = vmatpush1.bf16.msra.mxu0 0
        %1368 = vmatprep.subr.bf16.mxu0 0
        %1369 = vmatpush1.bf16.msra.mxu0 0
        %1370 = vmatprep.mubr.bf16.mxu0 0
        %1371 = vmatmul.mubr.bf16.gmra.mrb[0].mxu0 %v1324
        %v1372 = vpop.f32.mrb[0].mxu0
        %v1373 = vadd.f32 0.0, %v1372
        %v1374 = vpop.f32.mrb[0].mxu0
        %v1375 = vpop.f32.mrb[0].mxu0
        %v1376 = vadd.f32 0.0, %v1375
        %v1377 = vpop.f32.mrb[0].mxu0
        %1378 = vmatprep.mubr.bf16.mxu0 0
        %1379 = vmatmul.mubr.bf16.gmra.mrb[0].mxu0 %v1327
        %v1380 = vpop.f32.mrb[0].mxu0
        %v1381 = vadd.f32 0.0, %v1380
        %v1382 = vpop.f32.mrb[0].mxu0
        %v1383 = vpop.f32.mrb[0].mxu0
        %v1384 = vadd.f32 0.0, %v1383
        %v1385 = vpop.f32.mrb[0].mxu0
        %1386 = vmatprep.mubr.bf16.mxu0 0
        %1387 = vmatmul.mubr.bf16.gmra.mrb[0].mxu0 %v1330
        %v1388 = vpop.f32.mrb[0].mxu0
        %v1389 = vadd.f32 0.0, %v1388
        %v1390 = vpop.f32.mrb[0].mxu0
        %v1391 = vpop.f32.mrb[0].mxu0
        %v1392 = vadd.f32 0.0, %v1391
        %v1393 = vpop.f32.mrb[0].mxu0
        %1394 = vmatprep.mubr.bf16.mxu0 0
        %1395 = vmatmul.mubr.bf16.gmra.mrb[0].mxu0 %v1333
        %v1396 = vpop.f32.mrb[0].mxu0
        %v1397 = vadd.f32 0.0, %v1396
        %v1398 = vpop.f32.mrb[0].mxu0
        %v1399 = vpop.f32.mrb[0].mxu0
        %v1400 = vadd.f32 0.0, %v1399
        %v1401 = vpop.f32.mrb[0].mxu0
        %1402 = vmatprep.mubr.bf16.mxu0 0
        %1403 = vmatmul.mubr.bf16.gmra.mrb[0].mxu0 %v1336
        %v1404 = vpop.f32.mrb[0].mxu0
        %v1405 = vadd.f32 0.0, %v1404
        %v1406 = vpop.f32.mrb[0].mxu0
        %v1407 = vpop.f32.mrb[0].mxu0
        %v1408 = vadd.f32 0.0, %v1407
        %v1409 = vpop.f32.mrb[0].mxu0
        %1410 = vdwg.mxu0
        %v1411 = vadd.f32 %v1221, %v1373
        %v1412 = vadd.f32 %v1222, %v1376
        %v1413 = vadd.f32 %v1223, %v1381
        %v1414 = vadd.f32 %v1224, %v1384
        %v1415 = vadd.f32 %v1225, %v1389
        %v1416 = vadd.f32 %v1226, %v1392
        %v1417 = vadd.f32 %v1227, %v1397
        %v1418 = vadd.f32 %v1228, %v1400
        %v1419 = vadd.f32 %v1229, %v1405
        %v1420 = vadd.f32 %v1230, %v1408
        %v1421 = vld [vmem:[%s291 + $0x4] sm:$0xe]
        %v1422 = vld [vmem:[%s291 + $0x8] sm:$0xf]
        %v1423 = vld [vmem:[%s291 + $0xc] sm:$0xf]
        %v1424 = vld [vmem:[%s291 + $0x10] sm:$0xf]
        %v1425 = vld [vmem:[%s291 + $0x14] sm:$0xf]
        %v1426 = vld [vmem:[%s291 + $0x18] sm:$0xf]
        %v1427 = vld [vmem:[%s291 + $0x1c] sm:$0xf]
        %v1428 = vld [vmem:[%s291 + $0x20] sm:$0xf]
        %v1429 = vld [vmem:[%s291 + $0x24] sm:$0xf]
        %v1430 = vld [vmem:[%s291 + $0x28] sm:$0xf]
        %v1431 = vld [vmem:[%s291 + $0x2c] sm:$0x1]
        %s1432 = scalar_lea.vmem %s1, 48
        %v1433 = vld [vmem:[%s1432] sm:$0xf]
        %v1434 = vld [vmem:[%s1432 + $0x4] sm:$0xf]
        %v1446 = vunpack.c.l.b16 %v1421
        %v1447 = vunpack.c.l.b16 %v1422
        %v1448 = vunpack.c.l.b16 %v1423
        %v1449 = vunpack.c.l.b16 %v1424
        %v1450 = vunpack.c.l.b16 %v1425
        %v1451 = vunpack.c.l.b16 %v1426
        %v1452 = vunpack.c.l.b16 %v1427
        %v1453 = vunpack.c.l.b16 %v1428
        %v1454 = vunpack.c.l.b16 %v1429
        %v1455 = vunpack.c.l.b16 %v1430
        %v1456 = vunpack.c.l.b16 %v1431
        %v1457 = vpack.c.b16 %v1447, %v1446
        %v1458 = vpack.c.b16 %v1449, %v1448
        %v1459 = vpack.c.b16 %v1451, %v1450
        %v1460 = vpack.c.b16 %v1453, %v1452
        %v1461 = vpack.c.b16 %v1455, %v1454
        %v1462 = vpack.c.b16 %v1456, %v1456
        %vm1463 = vcmask 1046528
        %v1464 = vrot.slane %v1457, 1
        %v1465 = vrot.slane %v1458, 1
        %v1466 = vsel %vm1463, %v1464, %v1465
        %v1467 = vrot.slane %v1459, 1
        %v1468 = vsel %vm1463, %v1465, %v1467
        %v1469 = vrot.slane %v1460, 1
        %v1470 = vsel %vm1463, %v1467, %v1469
        %v1471 = vrot.slane %v1461, 1
        %v1472 = vsel %vm1463, %v1469, %v1471
        %v1473 = vrot.slane %v1462, 1
        %v1474 = vsel %vm1463, %v1471, %v1473
        %v1477 = vunpack.c.l.b16 %v1433
        %v1478 = vunpack.c.l.b16 %v1434
        %v1479 = vpack.c.b16 %v1478, %v1477
        %v1482 = vsel %vm546, %v1466, 0
        %v1485 = vsel %vm546, %v1468, 0
        %v1488 = vsel %vm546, %v1470, 0
        %v1491 = vsel %vm546, %v1472, 0
        %v1494 = vsel %vm546, %v1474, 0
        %1496 = vmatprep.subr.bf16.mxu0 0
        %1497 = vmatpush1.bf16.msra.mxu0 %v1479
        %1498 = vmatprep.subr.bf16.mxu0 0
        %1499 = vmatpush1.bf16.msra.mxu0 0
        %1500 = vmatprep.subr.bf16.mxu0 0
        %1501 = vmatpush1.bf16.msra.mxu0 0
        %1502 = vmatprep.subr.bf16.mxu0 0
        %1503 = vmatpush1.bf16.msra.mxu0 0
        %1504 = vmatprep.subr.bf16.mxu0 0
        %1505 = vmatpush1.bf16.msra.mxu0 0
        %1506 = vmatprep.subr.bf16.mxu0 0
        %1507 = vmatpush1.bf16.msra.mxu0 0
        %1508 = vmatprep.subr.bf16.mxu0 0
        %1509 = vmatpush1.bf16.msra.mxu0 0
        %1510 = vmatprep.subr.bf16.mxu0 0
        %1511 = vmatpush1.bf16.msra.mxu0 0
        %1512 = vmatprep.subr.bf16.mxu0 0
        %1513 = vmatpush1.bf16.msra.mxu0 0
        %1514 = vmatprep.subr.bf16.mxu0 0
        %1515 = vmatpush1.bf16.msra.mxu0 0
        %1516 = vmatprep.subr.bf16.mxu0 0
        %1517 = vmatpush1.bf16.msra.mxu0 0
        %1518 = vmatprep.subr.bf16.mxu0 0
        %1519 = vmatpush1.bf16.msra.mxu0 0
        %1520 = vmatprep.subr.bf16.mxu0 0
        %1521 = vmatpush1.bf16.msra.mxu0 0
        %1522 = vmatprep.subr.bf16.mxu0 0
        %1523 = vmatpush1.bf16.msra.mxu0 0
        %1524 = vmatprep.subr.bf16.mxu0 0
        %1525 = vmatpush1.bf16.msra.mxu0 0
        %1526 = vmatprep.subr.bf16.mxu0 0
        %1527 = vmatpush1.bf16.msra.mxu0 0
        %1528 = vmatprep.mubr.bf16.mxu0 0
        %1529 = vmatmul.mubr.bf16.gmra.mrb[0].mxu0 %v1482
        %v1530 = vpop.f32.mrb[0].mxu0
        %v1531 = vadd.f32 0.0, %v1530
        %v1532 = vpop.f32.mrb[0].mxu0
        %v1533 = vpop.f32.mrb[0].mxu0
        %v1534 = vadd.f32 0.0, %v1533
        %v1535 = vpop.f32.mrb[0].mxu0
        %1536 = vmatprep.mubr.bf16.mxu0 0
        %1537 = vmatmul.mubr.bf16.gmra.mrb[0].mxu0 %v1485
        %v1538 = vpop.f32.mrb[0].mxu0
        %v1539 = vadd.f32 0.0, %v1538
        %v1540 = vpop.f32.mrb[0].mxu0
        %v1541 = vpop.f32.mrb[0].mxu0
        %v1542 = vadd.f32 0.0, %v1541
        %v1543 = vpop.f32.mrb[0].mxu0
        %1544 = vmatprep.mubr.bf16.mxu0 0
        %1545 = vmatmul.mubr.bf16.gmra.mrb[0].mxu0 %v1488
        %v1546 = vpop.f32.mrb[0].mxu0
        %v1547 = vadd.f32 0.0, %v1546
        %v1548 = vpop.f32.mrb[0].mxu0
        %v1549 = vpop.f32.mrb[0].mxu0
        %v1550 = vadd.f32 0.0, %v1549
        %v1551 = vpop.f32.mrb[0].mxu0
        %1552 = vmatprep.mubr.bf16.mxu0 0
        %1553 = vmatmul.mubr.bf16.gmra.mrb[0].mxu0 %v1491
        %v1554 = vpop.f32.mrb[0].mxu0
        %v1555 = vadd.f32 0.0, %v1554
        %v1556 = vpop.f32.mrb[0].mxu0
        %v1557 = vpop.f32.mrb[0].mxu0
        %v1558 = vadd.f32 0.0, %v1557
        %v1559 = vpop.f32.mrb[0].mxu0
        %1560 = vmatprep.mubr.bf16.mxu0 0
        %1561 = vmatmul.mubr.bf16.gmra.mrb[0].mxu0 %v1494
        %v1562 = vpop.f32.mrb[0].mxu0
        %v1563 = vadd.f32 0.0, %v1562
        %v1564 = vpop.f32.mrb[0].mxu0
        %v1565 = vpop.f32.mrb[0].mxu0
        %v1566 = vadd.f32 0.0, %v1565
        %v1567 = vpop.f32.mrb[0].mxu0
        %1568 = vdwg.mxu0
        %v1569 = vadd.f32 %v1411, %v1531
        %v1570 = vadd.f32 %v1412, %v1534
        %v1571 = vadd.f32 %v1413, %v1539
        %v1572 = vadd.f32 %v1414, %v1542
        %v1573 = vadd.f32 %v1415, %v1547
        %v1574 = vadd.f32 %v1416, %v1550
        %v1575 = vadd.f32 %v1417, %v1555
        %v1576 = vadd.f32 %v1418, %v1558
        %v1577 = vadd.f32 %v1419, %v1563
        %v1578 = vadd.f32 %v1420, %v1566
        %v1579 = vld [vmem:[%s501 + $0x4] sm:$0xe]
        %v1580 = vld [vmem:[%s501 + $0x8] sm:$0xf]
        %v1581 = vld [vmem:[%s501 + $0xc] sm:$0xf]
        %v1582 = vld [vmem:[%s501 + $0x10] sm:$0xf]
        %v1583 = vld [vmem:[%s501 + $0x14] sm:$0xf]
        %v1584 = vld [vmem:[%s501 + $0x18] sm:$0xf]
        %v1585 = vld [vmem:[%s501 + $0x1c] sm:$0xf]
        %v1586 = vld [vmem:[%s501 + $0x20] sm:$0xf]
        %v1587 = vld [vmem:[%s501 + $0x24] sm:$0xf]
        %v1588 = vld [vmem:[%s501 + $0x28] sm:$0xf]
        %v1589 = vld [vmem:[%s501 + $0x2c] sm:$0x1]
        %s1590 = scalar_lea.vmem %s1, 56
        %v1591 = vld [vmem:[%s1590] sm:$0xf]
        %v1592 = vld [vmem:[%s1590 + $0x4] sm:$0xf]
        %v1604 = vunpack.c.l.b16 %v1579
        %v1605 = vunpack.c.l.b16 %v1580
        %v1606 = vunpack.c.l.b16 %v1581
        %v1607 = vunpack.c.l.b16 %v1582
        %v1608 = vunpack.c.l.b16 %v1583
        %v1609 = vunpack.c.l.b16 %v1584
        %v1610 = vunpack.c.l.b16 %v1585
        %v1611 = vunpack.c.l.b16 %v1586
        %v1612 = vunpack.c.l.b16 %v1587
        %v1613 = vunpack.c.l.b16 %v1588
        %v1614 = vunpack.c.l.b16 %v1589
        %v1615 = vpack.c.b16 %v1605, %v1604
        %v1616 = vpack.c.b16 %v1607, %v1606
        %v1617 = vpack.c.b16 %v1609, %v1608
        %v1618 = vpack.c.b16 %v1611, %v1610
        %v1619 = vpack.c.b16 %v1613, %v1612
        %v1620 = vpack.c.b16 %v1614, %v1614
        %v1621 = vrot.slane %v1615, 1
        %v1622 = vrot.slane %v1616, 1
        %v1623 = vsel %vm1463, %v1621, %v1622
        %v1624 = vrot.slane %v1617, 1
        %v1625 = vsel %vm1463, %v1622, %v1624
        %v1626 = vrot.slane %v1618, 1
        %v1627 = vsel %vm1463, %v1624, %v1626
        %v1628 = vrot.slane %v1619, 1
        %v1629 = vsel %vm1463, %v1626, %v1628
        %v1630 = vrot.slane %v1620, 1
        %v1631 = vsel %vm1463, %v1628, %v1630
        %v1634 = vunpack.c.l.b16 %v1591
        %v1635 = vunpack.c.l.b16 %v1592
        %v1636 = vpack.c.b16 %v1635, %v1634
        %v1639 = vsel %vm546, %v1623, 0
        %v1642 = vsel %vm546, %v1625, 0
        %v1645 = vsel %vm546, %v1627, 0
        %v1648 = vsel %vm546, %v1629, 0
        %v1651 = vsel %vm546, %v1631, 0
        %1653 = vmatprep.subr.bf16.mxu0 0
        %1654 = vmatpush1.bf16.msra.mxu0 %v1636
        %1655 = vmatprep.subr.bf16.mxu0 0
        %1656 = vmatpush1.bf16.msra.mxu0 0
        %1657 = vmatprep.subr.bf16.mxu0 0
        %1658 = vmatpush1.bf16.msra.mxu0 0
        %1659 = vmatprep.subr.bf16.mxu0 0
        %1660 = vmatpush1.bf16.msra.mxu0 0
        %1661 = vmatprep.subr.bf16.mxu0 0
        %1662 = vmatpush1.bf16.msra.mxu0 0
        %1663 = vmatprep.subr.bf16.mxu0 0
        %1664 = vmatpush1.bf16.msra.mxu0 0
        %1665 = vmatprep.subr.bf16.mxu0 0
        %1666 = vmatpush1.bf16.msra.mxu0 0
        %1667 = vmatprep.subr.bf16.mxu0 0
        %1668 = vmatpush1.bf16.msra.mxu0 0
        %1669 = vmatprep.subr.bf16.mxu0 0
        %1670 = vmatpush1.bf16.msra.mxu0 0
        %1671 = vmatprep.subr.bf16.mxu0 0
        %1672 = vmatpush1.bf16.msra.mxu0 0
        %1673 = vmatprep.subr.bf16.mxu0 0
        %1674 = vmatpush1.bf16.msra.mxu0 0
        %1675 = vmatprep.subr.bf16.mxu0 0
        %1676 = vmatpush1.bf16.msra.mxu0 0
        %1677 = vmatprep.subr.bf16.mxu0 0
        %1678 = vmatpush1.bf16.msra.mxu0 0
        %1679 = vmatprep.subr.bf16.mxu0 0
        %1680 = vmatpush1.bf16.msra.mxu0 0
        %1681 = vmatprep.subr.bf16.mxu0 0
        %1682 = vmatpush1.bf16.msra.mxu0 0
        %1683 = vmatprep.subr.bf16.mxu0 0
        %1684 = vmatpush1.bf16.msra.mxu0 0
        %1685 = vmatprep.mubr.bf16.mxu0 0
        %1686 = vmatmul.mubr.bf16.gmra.mrb[0].mxu0 %v1639
        %v1687 = vpop.f32.mrb[0].mxu0
        %v1688 = vadd.f32 0.0, %v1687
        %v1689 = vpop.f32.mrb[0].mxu0
        %v1690 = vpop.f32.mrb[0].mxu0
        %v1691 = vadd.f32 0.0, %v1690
        %v1692 = vpop.f32.mrb[0].mxu0
        %1693 = vmatprep.mubr.bf16.mxu0 0
        %1694 = vmatmul.mubr.bf16.gmra.mrb[0].mxu0 %v1642
        %v1695 = vpop.f32.mrb[0].mxu0
        %v1696 = vadd.f32 0.0, %v1695
        %v1697 = vpop.f32.mrb[0].mxu0
        %v1698 = vpop.f32.mrb[0].mxu0
        %v1699 = vadd.f32 0.0, %v1698
        %v1700 = vpop.f32.mrb[0].mxu0
        %1701 = vmatprep.mubr.bf16.mxu0 0
        %1702 = vmatmul.mubr.bf16.gmra.mrb[0].mxu0 %v1645
        %v1703 = vpop.f32.mrb[0].mxu0
        %v1704 = vadd.f32 0.0, %v1703
        %v1705 = vpop.f32.mrb[0].mxu0
        %v1706 = vpop.f32.mrb[0].mxu0
        %v1707 = vadd.f32 0.0, %v1706
        %v1708 = vpop.f32.mrb[0].mxu0
        %1709 = vmatprep.mubr.bf16.mxu0 0
        %1710 = vmatmul.mubr.bf16.gmra.mrb[0].mxu0 %v1648
        %v1711 = vpop.f32.mrb[0].mxu0
        %v1712 = vadd.f32 0.0, %v1711
        %v1713 = vpop.f32.mrb[0].mxu0
        %v1714 = vpop.f32.mrb[0].mxu0
        %v1715 = vadd.f32 0.0, %v1714
        %v1716 = vpop.f32.mrb[0].mxu0
        %1717 = vmatprep.mubr.bf16.mxu0 0
        %1718 = vmatmul.mubr.bf16.gmra.mrb[0].mxu0 %v1651
        %v1719 = vpop.f32.mrb[0].mxu0
        %v1720 = vadd.f32 0.0, %v1719
        %v1721 = vpop.f32.mrb[0].mxu0
        %v1722 = vpop.f32.mrb[0].mxu0
        %v1723 = vadd.f32 0.0, %v1722
        %v1724 = vpop.f32.mrb[0].mxu0
        %1725 = vdwg.mxu0
        %v1726 = vadd.f32 %v1569, %v1688
        %v1727 = vadd.f32 %v1570, %v1691
        %v1728 = vadd.f32 %v1571, %v1696
        %v1729 = vadd.f32 %v1572, %v1699
        %v1730 = vadd.f32 %v1573, %v1704
        %v1731 = vadd.f32 %v1574, %v1707
        %v1732 = vadd.f32 %v1575, %v1712
        %v1733 = vadd.f32 %v1576, %v1715
        %v1734 = vadd.f32 %v1577, %v1720
        %v1735 = vadd.f32 %v1578, %v1723
        %v1736 = vld [vmem:[%s291 + $0x2c] sm:$0x3]
        %s1737 = scalar_lea.vmem %s1, 64
        %v1738 = vld [vmem:[%s1737] sm:$0xf]
        %v1739 = vld [vmem:[%s1737 + $0x4] sm:$0xf]
        %v1741 = vunpack.c.l.b16 %v1736
        %v1742 = vpack.c.b16 %v1741, %v1741
        %vm1743 = vsmask.f32 6400
        %v1745 = vshrl.u32 %v1457, 16
        %v1747 = vrot.slane %v1745, 1
        %v1748 = vshll.u32 %v1457, 16
        %v1750 = vrot.slane %v1748, 2
        %v1751 = vor.u32 %v1747, %v1750
        %v1753 = vshrl.u32 %v1458, 16
        %v1755 = vrot.slane %v1753, 1
        %v1756 = vshll.u32 %v1458, 16
        %v1758 = vrot.slane %v1756, 2
        %v1759 = vor.u32 %v1755, %v1758
        %v1760 = vsel %vm1743, %v1751, %v1759
        %v1762 = vshrl.u32 %v1459, 16
        %v1764 = vrot.slane %v1762, 1
        %v1765 = vshll.u32 %v1459, 16
        %v1767 = vrot.slane %v1765, 2
        %v1768 = vor.u32 %v1764, %v1767
        %v1769 = vsel %vm1743, %v1759, %v1768
        %v1771 = vshrl.u32 %v1460, 16
        %v1773 = vrot.slane %v1771, 1
        %v1774 = vshll.u32 %v1460, 16
        %v1776 = vrot.slane %v1774, 2
        %v1777 = vor.u32 %v1773, %v1776
        %v1778 = vsel %vm1743, %v1768, %v1777
        %v1780 = vshrl.u32 %v1461, 16
        %v1782 = vrot.slane %v1780, 1
        %v1783 = vshll.u32 %v1461, 16
        %v1785 = vrot.slane %v1783, 2
        %v1786 = vor.u32 %v1782, %v1785
        %v1787 = vsel %vm1743, %v1777, %v1786
        %v1789 = vshrl.u32 %v1742, 16
        %v1791 = vrot.slane %v1789, 1
        %v1792 = vshll.u32 %v1742, 16
        %v1794 = vrot.slane %v1792, 2
        %v1795 = vor.u32 %v1791, %v1794
        %v1796 = vsel %vm1743, %v1786, %v1795
        %v1799 = vunpack.c.l.b16 %v1738
        %v1800 = vunpack.c.l.b16 %v1739
        %v1801 = vpack.c.b16 %v1800, %v1799
        %v1804 = vsel %vm546, %v1760, 0
        %v1807 = vsel %vm546, %v1769, 0
        %v1810 = vsel %vm546, %v1778, 0
        %v1813 = vsel %vm546, %v1787, 0
        %v1816 = vsel %vm546, %v1796, 0
        %1818 = vmatprep.subr.bf16.mxu0 0
        %1819 = vmatpush1.bf16.msra.mxu0 %v1801
        %1820 = vmatprep.subr.bf16.mxu0 0
        %1821 = vmatpush1.bf16.msra.mxu0 0
        %1822 = vmatprep.subr.bf16.mxu0 0
        %1823 = vmatpush1.bf16.msra.mxu0 0
        %1824 = vmatprep.subr.bf16.mxu0 0
        %1825 = vmatpush1.bf16.msra.mxu0 0
        %1826 = vmatprep.subr.bf16.mxu0 0
        %1827 = vmatpush1.bf16.msra.mxu0 0
        %1828 = vmatprep.subr.bf16.mxu0 0
        %1829 = vmatpush1.bf16.msra.mxu0 0
        %1830 = vmatprep.subr.bf16.mxu0 0
        %1831 = vmatpush1.bf16.msra.mxu0 0
        %1832 = vmatprep.subr.bf16.mxu0 0
        %1833 = vmatpush1.bf16.msra.mxu0 0
        %1834 = vmatprep.subr.bf16.mxu0 0
        %1835 = vmatpush1.bf16.msra.mxu0 0
        %1836 = vmatprep.subr.bf16.mxu0 0
        %1837 = vmatpush1.bf16.msra.mxu0 0
        %1838 = vmatprep.subr.bf16.mxu0 0
        %1839 = vmatpush1.bf16.msra.mxu0 0
        %1840 = vmatprep.subr.bf16.mxu0 0
        %1841 = vmatpush1.bf16.msra.mxu0 0
        %1842 = vmatprep.subr.bf16.mxu0 0
        %1843 = vmatpush1.bf16.msra.mxu0 0
        %1844 = vmatprep.subr.bf16.mxu0 0
        %1845 = vmatpush1.bf16.msra.mxu0 0
        %1846 = vmatprep.subr.bf16.mxu0 0
        %1847 = vmatpush1.bf16.msra.mxu0 0
        %1848 = vmatprep.subr.bf16.mxu0 0
        %1849 = vmatpush1.bf16.msra.mxu0 0
        %1850 = vmatprep.mubr.bf16.mxu0 0
        %1851 = vmatmul.mubr.bf16.gmra.mrb[0].mxu0 %v1804
        %v1852 = vpop.f32.mrb[0].mxu0
        %v1853 = vadd.f32 0.0, %v1852
        %v1854 = vpop.f32.mrb[0].mxu0
        %v1855 = vpop.f32.mrb[0].mxu0
        %v1856 = vadd.f32 0.0, %v1855
        %v1857 = vpop.f32.mrb[0].mxu0
        %1858 = vmatprep.mubr.bf16.mxu0 0
        %1859 = vmatmul.mubr.bf16.gmra.mrb[0].mxu0 %v1807
        %v1860 = vpop.f32.mrb[0].mxu0
        %v1861 = vadd.f32 0.0, %v1860
        %v1862 = vpop.f32.mrb[0].mxu0
        %v1863 = vpop.f32.mrb[0].mxu0
        %v1864 = vadd.f32 0.0, %v1863
        %v1865 = vpop.f32.mrb[0].mxu0
        %1866 = vmatprep.mubr.bf16.mxu0 0
        %1867 = vmatmul.mubr.bf16.gmra.mrb[0].mxu0 %v1810
        %v1868 = vpop.f32.mrb[0].mxu0
        %v1869 = vadd.f32 0.0, %v1868
        %v1870 = vpop.f32.mrb[0].mxu0
        %v1871 = vpop.f32.mrb[0].mxu0
        %v1872 = vadd.f32 0.0, %v1871
        %v1873 = vpop.f32.mrb[0].mxu0
        %1874 = vmatprep.mubr.bf16.mxu0 0
        %1875 = vmatmul.mubr.bf16.gmra.mrb[0].mxu0 %v1813
        %v1876 = vpop.f32.mrb[0].mxu0
        %v1877 = vadd.f32 0.0, %v1876
        %v1878 = vpop.f32.mrb[0].mxu0
        %v1879 = vpop.f32.mrb[0].mxu0
        %v1880 = vadd.f32 0.0, %v1879
        %v1881 = vpop.f32.mrb[0].mxu0
        %1882 = vmatprep.mubr.bf16.mxu0 0
        %1883 = vmatmul.mubr.bf16.gmra.mrb[0].mxu0 %v1816
        %v1884 = vpop.f32.mrb[0].mxu0
        %v1885 = vadd.f32 0.0, %v1884
        %v1886 = vpop.f32.mrb[0].mxu0
        %v1887 = vpop.f32.mrb[0].mxu0
        %v1888 = vadd.f32 0.0, %v1887
        %v1889 = vpop.f32.mrb[0].mxu0
        %1890 = vdwg.mxu0
        %v1891 = vadd.f32 %v1726, %v1853
        %v1892 = vadd.f32 %v1727, %v1856
        %v1893 = vadd.f32 %v1728, %v1861
        %v1894 = vadd.f32 %v1729, %v1864
        %v1895 = vadd.f32 %v1730, %v1869
        %v1896 = vadd.f32 %v1731, %v1872
        %v1897 = vadd.f32 %v1732, %v1877
        %v1898 = vadd.f32 %v1733, %v1880
        %v1899 = vadd.f32 %v1734, %v1885
        %v1900 = vadd.f32 %v1735, %v1888
        %v1901 = vld [vmem:[%s2] sm:$0x1]
        %v1903 = vlaneseq
        %v1904 = vshrl.u32 %v1903, 7
        %v1905 = vsub.s32 0, %v1904
        %v1906 = vrot.slane %v1901, %v1905
        %v1908 = vadd.f32 %v1891, %v1906
        %v1909 = vadd.f32 %v1892, %v1906
        %v1910 = vadd.f32 %v1893, %v1906
        %v1911 = vadd.f32 %v1894, %v1906
        %v1912 = vadd.f32 %v1895, %v1906
        %v1913 = vadd.f32 %v1896, %v1906
        %v1914 = vadd.f32 %v1897, %v1906
        %v1915 = vadd.f32 %v1898, %v1906
        %v1916 = vadd.f32 %v1899, %v1906
        %v1917 = vadd.f32 %v1900, %v1906
        %v1918 = vmax.f32 %v1908, 0.0
        %v1919 = vmax.f32 %v1909, 0.0
        %v1920 = vmax.f32 %v1910, 0.0
        %v1921 = vmax.f32 %v1911, 0.0
        %v1922 = vmax.f32 %v1912, 0.0
        %v1923 = vmax.f32 %v1913, 0.0
        %v1924 = vmax.f32 %v1914, 0.0
        %v1925 = vmax.f32 %v1915, 0.0
        %v1926 = vmax.f32 %v1916, 0.0
        %v1927 = vmax.f32 %v1917, 0.0
        %v1928 = vsel %vm479, 1, 0
        %v1929 = vsel %vm480, 1, 0
        %v1930 = vsel %vm481, 1, 0
        %v1931 = vsel %vm482, 1, 0
        %v1932 = vsel %vm483, 1, 0
        %v1933 = vsel %vm484, 1, 0
        %v1934 = vsel %vm485, 1, 0
        %v1935 = vsel %vm486, 1, 0
        %v1936 = vsel %vm487, 1, 0
        %v1937 = vsel %vm488, 1, 0
        %vm1938 = vcmp.eq.s32.totalorder %v1928, 1
        %vm1939 = vcmp.eq.s32.totalorder %v1929, 1
        %vm1940 = vcmp.eq.s32.totalorder %v1930, 1
        %vm1941 = vcmp.eq.s32.totalorder %v1931, 1
        %vm1942 = vcmp.eq.s32.totalorder %v1932, 1
        %vm1943 = vcmp.eq.s32.totalorder %v1933, 1
        %vm1944 = vcmp.eq.s32.totalorder %v1934, 1
        %vm1945 = vcmp.eq.s32.totalorder %v1935, 1
        %vm1946 = vcmp.eq.s32.totalorder %v1936, 1
        %vm1947 = vcmp.eq.s32.totalorder %v1937, 1
        %v1948 = vsel %vm1938, %v1918, 0.0
        %v1949 = vsel %vm1939, %v1919, 0.0
        %v1950 = vsel %vm1940, %v1920, 0.0
        %v1951 = vsel %vm1941, %v1921, 0.0
        %v1952 = vsel %vm1942, %v1922, 0.0
        %v1953 = vsel %vm1943, %v1923, 0.0
        %v1954 = vsel %vm1944, %v1924, 0.0
        %v1955 = vsel %vm1945, %v1925, 0.0
        %v1956 = vsel %vm1946, %v1926, 0.0
        %v1957 = vsel %vm1947, %v1927, 0.0
        %v1958 = vpack.c.bf16 %v1949, %v1948
        %v1959 = vpack.c.bf16 %v1951, %v1950
        %v1960 = vpack.c.bf16 %v1953, %v1952
        %v1961 = vpack.c.bf16 %v1955, %v1954
        %v1962 = vpack.c.bf16 %v1957, %v1956
        %v1968 = vunpack.c.l.b16 %v1958
        %v1969 = vunpack.c.h.b16 %v1958
        %v1970 = vunpack.c.l.b16 %v1959
        %v1971 = vunpack.c.h.b16 %v1959
        %v1972 = vunpack.c.l.b16 %v1960
        %v1973 = vunpack.c.h.b16 %v1960
        %v1974 = vunpack.c.l.b16 %v1961
        %v1975 = vunpack.c.h.b16 %v1961
        %v1976 = vunpack.c.l.b16 %v1962
        %v1977 = vunpack.c.h.b16 %v1962
        %v1978 = vpack.c.b16 %v1968, %v1968
        %v1979 = vpack.c.b16 %v1969, %v1969
        %v1980 = vpack.c.b16 %v1970, %v1970
        %v1981 = vpack.c.b16 %v1971, %v1971
        %v1982 = vpack.c.b16 %v1972, %v1972
        %v1983 = vpack.c.b16 %v1973, %v1973
        %v1984 = vpack.c.b16 %v1974, %v1974
        %v1985 = vpack.c.b16 %v1975, %v1975
        %v1986 = vpack.c.b16 %v1976, %v1976
        %v1987 = vpack.c.b16 %v1977, %v1977
        %vm1988 = vsmask.f32 5392
        %vm1989 = vmor %vm295, %vm1988
        %v1991 = vshrl.u32 %v1978, 16
        %v1993 = vrot.slane %v1991, 6
        %v1994 = vshll.u32 %v1978, 16
        %v1996 = vrot.slane %v1994, 7
        %v1997 = vor.u32 %v1993, %v1996
        %v1998 = vrot.slane %v1997, 4
        %v2000 = vshrl.u32 %v1979, 16
        %v2002 = vrot.slane %v2000, 6
        %v2003 = vshll.u32 %v1979, 16
        %v2005 = vrot.slane %v2003, 7
        %v2006 = vor.u32 %v2002, %v2005
        %v2007 = vsel %vm1989, %v1998, %v2006
        %v2008 = vrot.slane %v2006, 4
        %v2010 = vshrl.u32 %v1980, 16
        %v2012 = vrot.slane %v2010, 6
        %v2013 = vshll.u32 %v1980, 16
        %v2015 = vrot.slane %v2013, 7
        %v2016 = vor.u32 %v2012, %v2015
        %v2017 = vsel %vm1989, %v2008, %v2016
        %v2018 = vrot.slane %v2016, 4
        %v2020 = vshrl.u32 %v1981, 16
        %v2022 = vrot.slane %v2020, 6
        %v2023 = vshll.u32 %v1981, 16
        %v2025 = vrot.slane %v2023, 7
        %v2026 = vor.u32 %v2022, %v2025
        %v2027 = vsel %vm1989, %v2018, %v2026
        %v2028 = vrot.slane %v2026, 4
        %v2030 = vshrl.u32 %v1982, 16
        %v2032 = vrot.slane %v2030, 6
        %v2033 = vshll.u32 %v1982, 16
        %v2035 = vrot.slane %v2033, 7
        %v2036 = vor.u32 %v2032, %v2035
        %v2037 = vsel %vm1989, %v2028, %v2036
        %v2038 = vrot.slane %v2036, 4
        %v2040 = vshrl.u32 %v1983, 16
        %v2042 = vrot.slane %v2040, 6
        %v2043 = vshll.u32 %v1983, 16
        %v2045 = vrot.slane %v2043, 7
        %v2046 = vor.u32 %v2042, %v2045
        %v2047 = vsel %vm1989, %v2038, %v2046
        %v2048 = vrot.slane %v2046, 4
        %v2050 = vshrl.u32 %v1984, 16
        %v2052 = vrot.slane %v2050, 6
        %v2053 = vshll.u32 %v1984, 16
        %v2055 = vrot.slane %v2053, 7
        %v2056 = vor.u32 %v2052, %v2055
        %v2057 = vsel %vm1989, %v2048, %v2056
        %v2058 = vrot.slane %v2056, 4
        %v2060 = vshrl.u32 %v1985, 16
        %v2062 = vrot.slane %v2060, 6
        %v2063 = vshll.u32 %v1985, 16
        %v2065 = vrot.slane %v2063, 7
        %v2066 = vor.u32 %v2062, %v2065
        %v2067 = vsel %vm1989, %v2058, %v2066
        %v2068 = vrot.slane %v2066, 4
        %v2070 = vshrl.u32 %v1986, 16
        %v2072 = vrot.slane %v2070, 6
        %v2073 = vshll.u32 %v1986, 16
        %v2075 = vrot.slane %v2073, 7
        %v2076 = vor.u32 %v2072, %v2075
        %v2077 = vsel %vm1989, %v2068, %v2076
        %v2078 = vrot.slane %v2076, 4
        %v2080 = vshrl.u32 %v1987, 16
        %v2082 = vrot.slane %v2080, 6
        %v2083 = vshll.u32 %v1987, 16
        %v2085 = vrot.slane %v2083, 7
        %v2086 = vor.u32 %v2082, %v2085
        %v2087 = vsel %vm1989, %v2078, %v2086
        %v2088 = vrot.slane %v2086, 4
        %v2100 = vld [vmem:[#allocation2 + $0x4] sm:$0xe]
        %v2101 = vsel %vm302, %v1997, %v2100
        %2102 = vst [vmem:[#allocation2 + $0x4] sm:$0xe] %v2101
        %2103 = vst [vmem:[#allocation2 + $0x8] sm:$0xf] %v2007
        %2104 = vst [vmem:[#allocation2 + $0xc] sm:$0xf] %v2017
        %2105 = vst [vmem:[#allocation2 + $0x10] sm:$0xf] %v2027
        %2106 = vst [vmem:[#allocation2 + $0x14] sm:$0xf] %v2037
        %2107 = vst [vmem:[#allocation2 + $0x18] sm:$0xf] %v2047
        %2108 = vst [vmem:[#allocation2 + $0x1c] sm:$0xf] %v2057
        %2109 = vst [vmem:[#allocation2 + $0x20] sm:$0xf] %v2067
        %2110 = vst [vmem:[#allocation2 + $0x24] sm:$0xf] %v2077
        %2111 = vst [vmem:[#allocation2 + $0x28] sm:$0xf] %v2087
        %v2112 = vld [vmem:[#allocation2 + $0x2c] sm:$0x3]
        %v2113 = vsel %vm296, %v2088, %v2112
        %2114 = vst [vmem:[#allocation2 + $0x2c] sm:$0x3] %v2113
        %v2115 = vld [vmem:[%s1088] sm:$0xf]
        %v2116 = vld [vmem:[%s1088 + $0x4] sm:$0xf]
        %v2117 = vld [vmem:[%s1088 + $0x8] sm:$0xf]
        %v2118 = vld [vmem:[%s1088 + $0xc] sm:$0xf]
        %v2119 = vld [vmem:[%s1088 + $0x10] sm:$0xf]
        %v2120 = vld [vmem:[%s1088 + $0x14] sm:$0xf]
        %v2121 = vld [vmem:[%s1088 + $0x18] sm:$0xf]
        %v2122 = vld [vmem:[%s1088 + $0x1c] sm:$0xf]
        %v2123 = vld [vmem:[%s1088 + $0x20] sm:$0xf]
        %v2124 = vld [vmem:[%s1088 + $0x24] sm:$0xf]
        %v2125 = vld [vmem:[%s5] sm:$0xf]
        %v2126 = vld [vmem:[%s5 + $0x4] sm:$0xf]
        %v2127 = vld [vmem:[%s4] sm:$0x1]
        %v2128 = vld [vmem:[%s6] sm:$0x1]
        %v2129 = vadd.f32 %v2127, %v2128
        %v2131 = vlaneseq
        %v2132 = vshrl.u32 %v2131, 7
        %v2133 = vsub.s32 0, %v2132
        %v2134 = vrot.slane %v2129, %v2133
        %v2146 = vunpack.c.l.b16 %v2115
        %v2147 = vunpack.c.l.b16 %v2116
        %v2148 = vunpack.c.l.b16 %v2117
        %v2149 = vunpack.c.l.b16 %v2118
        %v2150 = vunpack.c.l.b16 %v2119
        %v2151 = vunpack.c.l.b16 %v2120
        %v2152 = vunpack.c.l.b16 %v2121
        %v2153 = vunpack.c.l.b16 %v2122
        %v2154 = vunpack.c.l.b16 %v2123
        %v2155 = vunpack.c.l.b16 %v2124
        %v2156 = vpack.c.b16 %v2147, %v2146
        %v2157 = vpack.c.b16 %v2149, %v2148
        %v2158 = vpack.c.b16 %v2151, %v2150
        %v2159 = vpack.c.b16 %v2153, %v2152
        %v2160 = vpack.c.b16 %v2155, %v2154
        %v2163 = vunpack.c.l.b16 %v2125
        %v2164 = vunpack.c.l.b16 %v2126
        %v2165 = vpack.c.b16 %v2164, %v2163
        %v2168 = vsel %vm546, %v2156, 0
        %v2171 = vsel %vm546, %v2157, 0
        %v2174 = vsel %vm546, %v2158, 0
        %v2177 = vsel %vm546, %v2159, 0
        %v2180 = vsel %vm546, %v2160, 0
        %2182 = vmatprep.subr.bf16.mxu0 0
        %2183 = vmatpush1.bf16.msra.mxu0 %v2165
        %2184 = vmatprep.subr.bf16.mxu0 0
        %2185 = vmatpush1.bf16.msra.mxu0 0
        %2186 = vmatprep.subr.bf16.mxu0 0
        %2187 = vmatpush1.bf16.msra.mxu0 0
        %2188 = vmatprep.subr.bf16.mxu0 0
        %2189 = vmatpush1.bf16.msra.mxu0 0
        %2190 = vmatprep.subr.bf16.mxu0 0
        %2191 = vmatpush1.bf16.msra.mxu0 0
        %2192 = vmatprep.subr.bf16.mxu0 0
        %2193 = vmatpush1.bf16.msra.mxu0 0
        %2194 = vmatprep.subr.bf16.mxu0 0
        %2195 = vmatpush1.bf16.msra.mxu0 0
        %2196 = vmatprep.subr.bf16.mxu0 0
        %2197 = vmatpush1.bf16.msra.mxu0 0
        %2198 = vmatprep.subr.bf16.mxu0 0
        %2199 = vmatpush1.bf16.msra.mxu0 0
        %2200 = vmatprep.subr.bf16.mxu0 0
        %2201 = vmatpush1.bf16.msra.mxu0 0
        %2202 = vmatprep.subr.bf16.mxu0 0
        %2203 = vmatpush1.bf16.msra.mxu0 0
        %2204 = vmatprep.subr.bf16.mxu0 0
        %2205 = vmatpush1.bf16.msra.mxu0 0
        %2206 = vmatprep.subr.bf16.mxu0 0
        %2207 = vmatpush1.bf16.msra.mxu0 0
        %2208 = vmatprep.subr.bf16.mxu0 0
        %2209 = vmatpush1.bf16.msra.mxu0 0
        %2210 = vmatprep.subr.bf16.mxu0 0
        %2211 = vmatpush1.bf16.msra.mxu0 0
        %2212 = vmatprep.subr.bf16.mxu0 0
        %2213 = vmatpush1.bf16.msra.mxu0 0
        %2214 = vmatprep.mubr.bf16.mxu0 0
        %2215 = vmatmul.mubr.bf16.gmra.mrb[0].mxu0 %v2168
        %v2216 = vpop.f32.mrb[0].mxu0
        %v2217 = vadd.f32 %v2134, %v2216
        %v2218 = vpop.f32.mrb[0].mxu0
        %v2219 = vpop.f32.mrb[0].mxu0
        %v2220 = vadd.f32 %v2134, %v2219
        %v2221 = vpop.f32.mrb[0].mxu0
        %2222 = vmatprep.mubr.bf16.mxu0 0
        %2223 = vmatmul.mubr.bf16.gmra.mrb[0].mxu0 %v2171
        %v2224 = vpop.f32.mrb[0].mxu0
        %v2225 = vadd.f32 %v2134, %v2224
        %v2226 = vpop.f32.mrb[0].mxu0
        %v2227 = vpop.f32.mrb[0].mxu0
        %v2228 = vadd.f32 %v2134, %v2227
        %v2229 = vpop.f32.mrb[0].mxu0
        %2230 = vmatprep.mubr.bf16.mxu0 0
        %2231 = vmatmul.mubr.bf16.gmra.mrb[0].mxu0 %v2174
        %v2232 = vpop.f32.mrb[0].mxu0
        %v2233 = vadd.f32 %v2134, %v2232
        %v2234 = vpop.f32.mrb[0].mxu0
        %v2235 = vpop.f32.mrb[0].mxu0
        %v2236 = vadd.f32 %v2134, %v2235
        %v2237 = vpop.f32.mrb[0].mxu0
        %2238 = vmatprep.mubr.bf16.mxu0 0
        %2239 = vmatmul.mubr.bf16.gmra.mrb[0].mxu0 %v2177
        %v2240 = vpop.f32.mrb[0].mxu0
        %v2241 = vadd.f32 %v2134, %v2240
        %v2242 = vpop.f32.mrb[0].mxu0
        %v2243 = vpop.f32.mrb[0].mxu0
        %v2244 = vadd.f32 %v2134, %v2243
        %v2245 = vpop.f32.mrb[0].mxu0
        %2246 = vmatprep.mubr.bf16.mxu0 0
        %2247 = vmatmul.mubr.bf16.gmra.mrb[0].mxu0 %v2180
        %v2248 = vpop.f32.mrb[0].mxu0
        %v2249 = vadd.f32 %v2134, %v2248
        %v2250 = vpop.f32.mrb[0].mxu0
        %v2251 = vpop.f32.mrb[0].mxu0
        %v2252 = vadd.f32 %v2134, %v2251
        %v2253 = vpop.f32.mrb[0].mxu0
        %2254 = vdwg.mxu0
        %v2255 = vld [vmem:[#allocation2] sm:$0xf]
        %v2256 = vld [vmem:[#allocation2 + $0x4] sm:$0xf]
        %v2257 = vld [vmem:[#allocation2 + $0x8] sm:$0xf]
        %v2258 = vld [vmem:[#allocation2 + $0xc] sm:$0xf]
        %v2259 = vld [vmem:[#allocation2 + $0x10] sm:$0xf]
        %v2260 = vld [vmem:[#allocation2 + $0x14] sm:$0xf]
        %v2261 = vld [vmem:[#allocation2 + $0x18] sm:$0xf]
        %v2262 = vld [vmem:[#allocation2 + $0x1c] sm:$0xf]
        %v2263 = vld [vmem:[#allocation2 + $0x20] sm:$0xf]
        %v2264 = vld [vmem:[#allocation2 + $0x24] sm:$0xf]
        %v2265 = vld [vmem:[#allocation3] sm:$0xf]
        %v2266 = vld [vmem:[#allocation3 + $0x4] sm:$0xf]
        %v2267 = vld [vmem:[#allocation3 + $0x8] sm:$0xf]
        %v2268 = vld [vmem:[#allocation3 + $0xc] sm:$0xf]
        %v2269 = vld [vmem:[#allocation3 + $0x10] sm:$0xf]
        %v2270 = vld [vmem:[#allocation3 + $0x14] sm:$0xf]
        %v2271 = vld [vmem:[#allocation3 + $0x18] sm:$0xf]
        %v2272 = vld [vmem:[#allocation3 + $0x1c] sm:$0xf]
        %v2273 = vld [vmem:[#allocation3 + $0x20] sm:$0xf]
        %v2274 = vld [vmem:[#allocation3 + $0x24] sm:$0xf]
        %v2275 = vld [vmem:[#allocation3 + $0x28] sm:$0xf]
        %v2276 = vld [vmem:[#allocation3 + $0x2c] sm:$0xf]
        %v2277 = vld [vmem:[#allocation3 + $0x30] sm:$0xf]
        %v2278 = vld [vmem:[#allocation3 + $0x34] sm:$0xf]
        %v2279 = vld [vmem:[#allocation3 + $0x38] sm:$0xf]
        %v2280 = vld [vmem:[#allocation3 + $0x3c] sm:$0xf]
        %v2291 = vunpack.c.l.b16 %v2255
        %v2292 = vunpack.c.l.b16 %v2256
        %v2293 = vunpack.c.l.b16 %v2257
        %v2294 = vunpack.c.l.b16 %v2258
        %v2295 = vunpack.c.l.b16 %v2259
        %v2296 = vunpack.c.l.b16 %v2260
        %v2297 = vunpack.c.l.b16 %v2261
        %v2298 = vunpack.c.l.b16 %v2262
        %v2299 = vunpack.c.l.b16 %v2263
        %v2300 = vunpack.c.l.b16 %v2264
        %v2301 = vpack.c.b16 %v2292, %v2291
        %v2302 = vpack.c.b16 %v2294, %v2293
        %v2303 = vpack.c.b16 %v2296, %v2295
        %v2304 = vpack.c.b16 %v2298, %v2297
        %v2305 = vpack.c.b16 %v2300, %v2299
        %v2327 = vunpack.c.l.b16 %v2265
        %v2328 = vunpack.c.l.b16 %v2266
        %v2329 = vunpack.c.l.b16 %v2267
        %v2330 = vunpack.c.l.b16 %v2268
        %v2331 = vunpack.c.l.b16 %v2269
        %v2332 = vunpack.c.l.b16 %v2270
        %v2333 = vunpack.c.l.b16 %v2271
        %v2334 = vunpack.c.l.b16 %v2272
        %v2335 = vunpack.c.l.b16 %v2273
        %v2336 = vunpack.c.l.b16 %v2274
        %v2337 = vunpack.c.l.b16 %v2275
        %v2338 = vunpack.c.l.b16 %v2276
        %v2339 = vunpack.c.l.b16 %v2277
        %v2340 = vunpack.c.l.b16 %v2278
        %v2341 = vunpack.c.l.b16 %v2279
        %v2342 = vunpack.c.l.b16 %v2280
        %v2343 = vpack.c.b16 %v2328, %v2327
        %v2344 = vpack.c.b16 %v2330, %v2329
        %v2345 = vpack.c.b16 %v2332, %v2331
        %v2346 = vpack.c.b16 %v2334, %v2333
        %v2347 = vpack.c.b16 %v2336, %v2335
        %v2348 = vpack.c.b16 %v2338, %v2337
        %v2349 = vpack.c.b16 %v2340, %v2339
        %v2350 = vpack.c.b16 %v2342, %v2341
        %2359 = vmatprep.subr.bf16.mxu0 0
        %2360 = vmatpush1.bf16.msra.mxu0 %v2343
        %2361 = vmatprep.subr.bf16.mxu0 0
        %2362 = vmatpush1.bf16.msra.mxu0 %v2344
        %2363 = vmatprep.subr.bf16.mxu0 0
        %2364 = vmatpush1.bf16.msra.mxu0 %v2345
        %2365 = vmatprep.subr.bf16.mxu0 0
        %2366 = vmatpush1.bf16.msra.mxu0 %v2346
        %2367 = vmatprep.subr.bf16.mxu0 0
        %2368 = vmatpush1.bf16.msra.mxu0 %v2347
        %2369 = vmatprep.subr.bf16.mxu0 0
        %2370 = vmatpush1.bf16.msra.mxu0 %v2348
        %2371 = vmatprep.subr.bf16.mxu0 0
        %2372 = vmatpush1.bf16.msra.mxu0 %v2349
        %2373 = vmatprep.subr.bf16.mxu0 0
        %2374 = vmatpush1.bf16.msra.mxu0 %v2350
        %2375 = vmatprep.subr.bf16.mxu0 0
        %2376 = vmatpush1.bf16.msra.mxu0 0
        %2377 = vmatprep.subr.bf16.mxu0 0
        %2378 = vmatpush1.bf16.msra.mxu0 0
        %2379 = vmatprep.subr.bf16.mxu0 0
        %2380 = vmatpush1.bf16.msra.mxu0 0
        %2381 = vmatprep.subr.bf16.mxu0 0
        %2382 = vmatpush1.bf16.msra.mxu0 0
        %2383 = vmatprep.subr.bf16.mxu0 0
        %2384 = vmatpush1.bf16.msra.mxu0 0
        %2385 = vmatprep.subr.bf16.mxu0 0
        %2386 = vmatpush1.bf16.msra.mxu0 0
        %2387 = vmatprep.subr.bf16.mxu0 0
        %2388 = vmatpush1.bf16.msra.mxu0 0
        %2389 = vmatprep.subr.bf16.mxu0 0
        %2390 = vmatpush1.bf16.msra.mxu0 0
        %2391 = vmatprep.mubr.bf16.mxu0 0
        %2392 = vmatmul.mubr.bf16.gmra.mrb[0].mxu0 %v2301
        %v2393 = vpop.f32.mrb[0].mxu0
        %v2394 = vadd.f32 0.0, %v2393
        %v2395 = vpop.f32.mrb[0].mxu0
        %v2396 = vpop.f32.mrb[0].mxu0
        %v2397 = vadd.f32 0.0, %v2396
        %v2398 = vpop.f32.mrb[0].mxu0
        %2399 = vmatprep.mubr.bf16.mxu0 0
        %2400 = vmatmul.mubr.bf16.gmra.mrb[0].mxu0 %v2302
        %v2401 = vpop.f32.mrb[0].mxu0
        %v2402 = vadd.f32 0.0, %v2401
        %v2403 = vpop.f32.mrb[0].mxu0
        %v2404 = vpop.f32.mrb[0].mxu0
        %v2405 = vadd.f32 0.0, %v2404
        %v2406 = vpop.f32.mrb[0].mxu0
        %2407 = vmatprep.mubr.bf16.mxu0 0
        %2408 = vmatmul.mubr.bf16.gmra.mrb[0].mxu0 %v2303
        %v2409 = vpop.f32.mrb[0].mxu0
        %v2410 = vadd.f32 0.0, %v2409
        %v2411 = vpop.f32.mrb[0].mxu0
        %v2412 = vpop.f32.mrb[0].mxu0
        %v2413 = vadd.f32 0.0, %v2412
        %v2414 = vpop.f32.mrb[0].mxu0
        %2415 = vmatprep.mubr.bf16.mxu0 0
        %2416 = vmatmul.mubr.bf16.gmra.mrb[0].mxu0 %v2304
        %v2417 = vpop.f32.mrb[0].mxu0
        %v2418 = vadd.f32 0.0, %v2417
        %v2419 = vpop.f32.mrb[0].mxu0
        %v2420 = vpop.f32.mrb[0].mxu0
        %v2421 = vadd.f32 0.0, %v2420
        %v2422 = vpop.f32.mrb[0].mxu0
        %2423 = vmatprep.mubr.bf16.mxu0 0
        %2424 = vmatmul.mubr.bf16.gmra.mrb[0].mxu0 %v2305
        %v2425 = vpop.f32.mrb[0].mxu0
        %v2426 = vadd.f32 0.0, %v2425
        %v2427 = vpop.f32.mrb[0].mxu0
        %v2428 = vpop.f32.mrb[0].mxu0
        %v2429 = vadd.f32 0.0, %v2428
        %v2430 = vpop.f32.mrb[0].mxu0
        %2431 = vdwg.mxu0
        %v2432 = vadd.f32 %v2217, %v2394
        %v2433 = vadd.f32 %v2220, %v2397
        %v2434 = vadd.f32 %v2225, %v2402
        %v2435 = vadd.f32 %v2228, %v2405
        %v2436 = vadd.f32 %v2233, %v2410
        %v2437 = vadd.f32 %v2236, %v2413
        %v2438 = vadd.f32 %v2241, %v2418
        %v2439 = vadd.f32 %v2244, %v2421
        %v2440 = vadd.f32 %v2249, %v2426
        %v2441 = vadd.f32 %v2252, %v2429
        %v2442 = vld [vmem:[#allocation2] sm:$0xf]
        %v2443 = vld [vmem:[#allocation2 + $0x4] sm:$0xf]
        %v2444 = vld [vmem:[#allocation2 + $0x8] sm:$0xf]
        %v2445 = vld [vmem:[#allocation2 + $0xc] sm:$0xf]
        %v2446 = vld [vmem:[#allocation2 + $0x10] sm:$0xf]
        %v2447 = vld [vmem:[#allocation2 + $0x14] sm:$0xf]
        %v2448 = vld [vmem:[#allocation2 + $0x18] sm:$0xf]
        %v2449 = vld [vmem:[#allocation2 + $0x1c] sm:$0xf]
        %v2450 = vld [vmem:[#allocation2 + $0x20] sm:$0xf]
        %v2451 = vld [vmem:[#allocation2 + $0x24] sm:$0xf]
        %v2452 = vld [vmem:[#allocation2 + $0x28] sm:$0x1]
        %s2453 = scalar_lea.vmem [#allocation3], 64
        %v2454 = vld [vmem:[%s2453] sm:$0xf]
        %v2455 = vld [vmem:[%s2453 + $0x4] sm:$0xf]
        %v2456 = vld [vmem:[%s2453 + $0x8] sm:$0xf]
        %v2457 = vld [vmem:[%s2453 + $0xc] sm:$0xf]
        %v2458 = vld [vmem:[%s2453 + $0x10] sm:$0xf]
        %v2459 = vld [vmem:[%s2453 + $0x14] sm:$0xf]
        %v2460 = vld [vmem:[%s2453 + $0x18] sm:$0xf]
        %v2461 = vld [vmem:[%s2453 + $0x1c] sm:$0xf]
        %v2462 = vld [vmem:[%s2453 + $0x20] sm:$0xf]
        %v2463 = vld [vmem:[%s2453 + $0x24] sm:$0xf]
        %v2464 = vld [vmem:[%s2453 + $0x28] sm:$0xf]
        %v2465 = vld [vmem:[%s2453 + $0x2c] sm:$0xf]
        %v2466 = vld [vmem:[%s2453 + $0x30] sm:$0xf]
        %v2467 = vld [vmem:[%s2453 + $0x34] sm:$0xf]
        %v2468 = vld [vmem:[%s2453 + $0x38] sm:$0xf]
        %v2469 = vld [vmem:[%s2453 + $0x3c] sm:$0xf]
        %v2481 = vunpack.c.l.b16 %v2442
        %v2482 = vunpack.c.l.b16 %v2443
        %v2483 = vunpack.c.l.b16 %v2444
        %v2484 = vunpack.c.l.b16 %v2445
        %v2485 = vunpack.c.l.b16 %v2446
        %v2486 = vunpack.c.l.b16 %v2447
        %v2487 = vunpack.c.l.b16 %v2448
        %v2488 = vunpack.c.l.b16 %v2449
        %v2489 = vunpack.c.l.b16 %v2450
        %v2490 = vunpack.c.l.b16 %v2451
        %v2491 = vunpack.c.l.b16 %v2452
        %v2492 = vpack.c.b16 %v2482, %v2481
        %v2493 = vpack.c.b16 %v2484, %v2483
        %v2494 = vpack.c.b16 %v2486, %v2485
        %v2495 = vpack.c.b16 %v2488, %v2487
        %v2496 = vpack.c.b16 %v2490, %v2489
        %v2497 = vpack.c.b16 %v2491, %v2491
        %v2499 = vshrl.u32 %v2492, 16
        %v2501 = vshll.u32 %v2492, 16
        %v2503 = vrot.slane %v2501, 1
        %v2504 = vor.u32 %v2499, %v2503
        %v2506 = vshll.u32 %v2493, 16
        %v2508 = vrot.slane %v2506, 1
        %v2509 = vsel %vm796, %v2504, %v2508
        %v2510 = vshrl.u32 %v2493, 16
        %v2512 = vor.u32 %v2510, %v2508
        %v2514 = vshll.u32 %v2494, 16
        %v2516 = vrot.slane %v2514, 1
        %v2517 = vsel %vm796, %v2512, %v2516
        %v2518 = vshrl.u32 %v2494, 16
        %v2520 = vor.u32 %v2518, %v2516
        %v2522 = vshll.u32 %v2495, 16
        %v2524 = vrot.slane %v2522, 1
        %v2525 = vsel %vm796, %v2520, %v2524
        %v2526 = vshrl.u32 %v2495, 16
        %v2528 = vor.u32 %v2526, %v2524
        %v2530 = vshll.u32 %v2496, 16
        %v2532 = vrot.slane %v2530, 1
        %v2533 = vsel %vm796, %v2528, %v2532
        %v2534 = vshrl.u32 %v2496, 16
        %v2536 = vor.u32 %v2534, %v2532
        %v2538 = vshll.u32 %v2497, 16
        %v2540 = vrot.slane %v2538, 1
        %v2541 = vsel %vm796, %v2536, %v2540
        %v2563 = vunpack.c.l.b16 %v2454
        %v2564 = vunpack.c.l.b16 %v2455
        %v2565 = vunpack.c.l.b16 %v2456
        %v2566 = vunpack.c.l.b16 %v2457
        %v2567 = vunpack.c.l.b16 %v2458
        %v2568 = vunpack.c.l.b16 %v2459
        %v2569 = vunpack.c.l.b16 %v2460
        %v2570 = vunpack.c.l.b16 %v2461
        %v2571 = vunpack.c.l.b16 %v2462
        %v2572 = vunpack.c.l.b16 %v2463
        %v2573 = vunpack.c.l.b16 %v2464
        %v2574 = vunpack.c.l.b16 %v2465
        %v2575 = vunpack.c.l.b16 %v2466
        %v2576 = vunpack.c.l.b16 %v2467
        %v2577 = vunpack.c.l.b16 %v2468
        %v2578 = vunpack.c.l.b16 %v2469
        %v2579 = vpack.c.b16 %v2564, %v2563
        %v2580 = vpack.c.b16 %v2566, %v2565
        %v2581 = vpack.c.b16 %v2568, %v2567
        %v2582 = vpack.c.b16 %v2570, %v2569
        %v2583 = vpack.c.b16 %v2572, %v2571
        %v2584 = vpack.c.b16 %v2574, %v2573
        %v2585 = vpack.c.b16 %v2576, %v2575
        %v2586 = vpack.c.b16 %v2578, %v2577
        %2595 = vmatprep.subr.bf16.mxu0 0
        %2596 = vmatpush1.bf16.msra.mxu0 %v2579
        %2597 = vmatprep.subr.bf16.mxu0 0
        %2598 = vmatpush1.bf16.msra.mxu0 %v2580
        %2599 = vmatprep.subr.bf16.mxu0 0
        %2600 = vmatpush1.bf16.msra.mxu0 %v2581
        %2601 = vmatprep.subr.bf16.mxu0 0
        %2602 = vmatpush1.bf16.msra.mxu0 %v2582
        %2603 = vmatprep.subr.bf16.mxu0 0
        %2604 = vmatpush1.bf16.msra.mxu0 %v2583
        %2605 = vmatprep.subr.bf16.mxu0 0
        %2606 = vmatpush1.bf16.msra.mxu0 %v2584
        %2607 = vmatprep.subr.bf16.mxu0 0
        %2608 = vmatpush1.bf16.msra.mxu0 %v2585
        %2609 = vmatprep.subr.bf16.mxu0 0
        %2610 = vmatpush1.bf16.msra.mxu0 %v2586
        %2611 = vmatprep.subr.bf16.mxu0 0
        %2612 = vmatpush1.bf16.msra.mxu0 0
        %2613 = vmatprep.subr.bf16.mxu0 0
        %2614 = vmatpush1.bf16.msra.mxu0 0
        %2615 = vmatprep.subr.bf16.mxu0 0
        %2616 = vmatpush1.bf16.msra.mxu0 0
        %2617 = vmatprep.subr.bf16.mxu0 0
        %2618 = vmatpush1.bf16.msra.mxu0 0
        %2619 = vmatprep.subr.bf16.mxu0 0
        %2620 = vmatpush1.bf16.msra.mxu0 0
        %2621 = vmatprep.subr.bf16.mxu0 0
        %2622 = vmatpush1.bf16.msra.mxu0 0
        %2623 = vmatprep.subr.bf16.mxu0 0
        %2624 = vmatpush1.bf16.msra.mxu0 0
        %2625 = vmatprep.subr.bf16.mxu0 0
        %2626 = vmatpush1.bf16.msra.mxu0 0
        %2627 = vmatprep.mubr.bf16.mxu0 0
        %2628 = vmatmul.mubr.bf16.gmra.mrb[0].mxu0 %v2509
        %v2629 = vpop.f32.mrb[0].mxu0
        %v2630 = vadd.f32 0.0, %v2629
        %v2631 = vpop.f32.mrb[0].mxu0
        %v2632 = vpop.f32.mrb[0].mxu0
        %v2633 = vadd.f32 0.0, %v2632
        %v2634 = vpop.f32.mrb[0].mxu0
        %2635 = vmatprep.mubr.bf16.mxu0 0
        %2636 = vmatmul.mubr.bf16.gmra.mrb[0].mxu0 %v2517
        %v2637 = vpop.f32.mrb[0].mxu0
        %v2638 = vadd.f32 0.0, %v2637
        %v2639 = vpop.f32.mrb[0].mxu0
        %v2640 = vpop.f32.mrb[0].mxu0
        %v2641 = vadd.f32 0.0, %v2640
        %v2642 = vpop.f32.mrb[0].mxu0
        %2643 = vmatprep.mubr.bf16.mxu0 0
        %2644 = vmatmul.mubr.bf16.gmra.mrb[0].mxu0 %v2525
        %v2645 = vpop.f32.mrb[0].mxu0
        %v2646 = vadd.f32 0.0, %v2645
        %v2647 = vpop.f32.mrb[0].mxu0
        %v2648 = vpop.f32.mrb[0].mxu0
        %v2649 = vadd.f32 0.0, %v2648
        %v2650 = vpop.f32.mrb[0].mxu0
        %2651 = vmatprep.mubr.bf16.mxu0 0
        %2652 = vmatmul.mubr.bf16.gmra.mrb[0].mxu0 %v2533
        %v2653 = vpop.f32.mrb[0].mxu0
        %v2654 = vadd.f32 0.0, %v2653
        %v2655 = vpop.f32.mrb[0].mxu0
        %v2656 = vpop.f32.mrb[0].mxu0
        %v2657 = vadd.f32 0.0, %v2656
        %v2658 = vpop.f32.mrb[0].mxu0
        %2659 = vmatprep.mubr.bf16.mxu0 0
        %2660 = vmatmul.mubr.bf16.gmra.mrb[0].mxu0 %v2541
        %v2661 = vpop.f32.mrb[0].mxu0
        %v2662 = vadd.f32 0.0, %v2661
        %v2663 = vpop.f32.mrb[0].mxu0
        %v2664 = vpop.f32.mrb[0].mxu0
        %v2665 = vadd.f32 0.0, %v2664
        %v2666 = vpop.f32.mrb[0].mxu0
        %2667 = vdwg.mxu0
        %v2668 = vadd.f32 %v2432, %v2630
        %v2669 = vadd.f32 %v2433, %v2633
        %v2670 = vadd.f32 %v2434, %v2638
        %v2671 = vadd.f32 %v2435, %v2641
        %v2672 = vadd.f32 %v2436, %v2646
        %v2673 = vadd.f32 %v2437, %v2649
        %v2674 = vadd.f32 %v2438, %v2654
        %v2675 = vadd.f32 %v2439, %v2657
        %v2676 = vadd.f32 %v2440, %v2662
        %v2677 = vadd.f32 %v2441, %v2665
        %v2678 = vld [vmem:[#allocation2] sm:$0xe]
        %s2679 = scalar_lea.vmem [#allocation3], 128
        %v2680 = vld [vmem:[%s2679] sm:$0xf]
        %v2681 = vld [vmem:[%s2679 + $0x4] sm:$0xf]
        %v2682 = vld [vmem:[%s2679 + $0x8] sm:$0xf]
        %v2683 = vld [vmem:[%s2679 + $0xc] sm:$0xf]
        %v2684 = vld [vmem:[%s2679 + $0x10] sm:$0xf]
        %v2685 = vld [vmem:[%s2679 + $0x14] sm:$0xf]
        %v2686 = vld [vmem:[%s2679 + $0x18] sm:$0xf]
        %v2687 = vld [vmem:[%s2679 + $0x1c] sm:$0xf]
        %v2688 = vld [vmem:[%s2679 + $0x20] sm:$0xf]
        %v2689 = vld [vmem:[%s2679 + $0x24] sm:$0xf]
        %v2690 = vld [vmem:[%s2679 + $0x28] sm:$0xf]
        %v2691 = vld [vmem:[%s2679 + $0x2c] sm:$0xf]
        %v2692 = vld [vmem:[%s2679 + $0x30] sm:$0xf]
        %v2693 = vld [vmem:[%s2679 + $0x34] sm:$0xf]
        %v2694 = vld [vmem:[%s2679 + $0x38] sm:$0xf]
        %v2695 = vld [vmem:[%s2679 + $0x3c] sm:$0xf]
        %v2697 = vunpack.c.l.b16 %v2678
        %v2698 = vpack.c.b16 %v2482, %v2697
        %v2699 = vrot.slane %v2698, 1
        %v2700 = vrot.slane %v2493, 1
        %v2701 = vsel %vm1463, %v2699, %v2700
        %v2702 = vrot.slane %v2494, 1
        %v2703 = vsel %vm1463, %v2700, %v2702
        %v2704 = vrot.slane %v2495, 1
        %v2705 = vsel %vm1463, %v2702, %v2704
        %v2706 = vrot.slane %v2496, 1
        %v2707 = vsel %vm1463, %v2704, %v2706
        %v2708 = vrot.slane %v2497, 1
        %v2709 = vsel %vm1463, %v2706, %v2708
        %v2731 = vunpack.c.l.b16 %v2680
        %v2732 = vunpack.c.l.b16 %v2681
        %v2733 = vunpack.c.l.b16 %v2682
        %v2734 = vunpack.c.l.b16 %v2683
        %v2735 = vunpack.c.l.b16 %v2684
        %v2736 = vunpack.c.l.b16 %v2685
        %v2737 = vunpack.c.l.b16 %v2686
        %v2738 = vunpack.c.l.b16 %v2687
        %v2739 = vunpack.c.l.b16 %v2688
        %v2740 = vunpack.c.l.b16 %v2689
        %v2741 = vunpack.c.l.b16 %v2690
        %v2742 = vunpack.c.l.b16 %v2691
        %v2743 = vunpack.c.l.b16 %v2692
        %v2744 = vunpack.c.l.b16 %v2693
        %v2745 = vunpack.c.l.b16 %v2694
        %v2746 = vunpack.c.l.b16 %v2695
        %v2747 = vpack.c.b16 %v2732, %v2731
        %v2748 = vpack.c.b16 %v2734, %v2733
        %v2749 = vpack.c.b16 %v2736, %v2735
        %v2750 = vpack.c.b16 %v2738, %v2737
        %v2751 = vpack.c.b16 %v2740, %v2739
        %v2752 = vpack.c.b16 %v2742, %v2741
        %v2753 = vpack.c.b16 %v2744, %v2743
        %v2754 = vpack.c.b16 %v2746, %v2745
        %2763 = vmatprep.subr.bf16.mxu0 0
        %2764 = vmatpush1.bf16.msra.mxu0 %v2747
        %2765 = vmatprep.subr.bf16.mxu0 0
        %2766 = vmatpush1.bf16.msra.mxu0 %v2748
        %2767 = vmatprep.subr.bf16.mxu0 0
        %2768 = vmatpush1.bf16.msra.mxu0 %v2749
        %2769 = vmatprep.subr.bf16.mxu0 0
        %2770 = vmatpush1.bf16.msra.mxu0 %v2750
        %2771 = vmatprep.subr.bf16.mxu0 0
        %2772 = vmatpush1.bf16.msra.mxu0 %v2751
        %2773 = vmatprep.subr.bf16.mxu0 0
        %2774 = vmatpush1.bf16.msra.mxu0 %v2752
        %2775 = vmatprep.subr.bf16.mxu0 0
        %2776 = vmatpush1.bf16.msra.mxu0 %v2753
        %2777 = vmatprep.subr.bf16.mxu0 0
        %2778 = vmatpush1.bf16.msra.mxu0 %v2754
        %2779 = vmatprep.subr.bf16.mxu0 0
        %2780 = vmatpush1.bf16.msra.mxu0 0
        %2781 = vmatprep.subr.bf16.mxu0 0
        %2782 = vmatpush1.bf16.msra.mxu0 0
        %2783 = vmatprep.subr.bf16.mxu0 0
        %2784 = vmatpush1.bf16.msra.mxu0 0
        %2785 = vmatprep.subr.bf16.mxu0 0
        %2786 = vmatpush1.bf16.msra.mxu0 0
        %2787 = vmatprep.subr.bf16.mxu0 0
        %2788 = vmatpush1.bf16.msra.mxu0 0
        %2789 = vmatprep.subr.bf16.mxu0 0
        %2790 = vmatpush1.bf16.msra.mxu0 0
        %2791 = vmatprep.subr.bf16.mxu0 0
        %2792 = vmatpush1.bf16.msra.mxu0 0
        %2793 = vmatprep.subr.bf16.mxu0 0
        %2794 = vmatpush1.bf16.msra.mxu0 0
        %2795 = vmatprep.mubr.bf16.mxu0 0
        %2796 = vmatmul.mubr.bf16.gmra.mrb[0].mxu0 %v2701
        %v2797 = vpop.f32.mrb[0].mxu0
        %v2798 = vadd.f32 0.0, %v2797
        %v2799 = vpop.f32.mrb[0].mxu0
        %v2800 = vpop.f32.mrb[0].mxu0
        %v2801 = vadd.f32 0.0, %v2800
        %v2802 = vpop.f32.mrb[0].mxu0
        %2803 = vmatprep.mubr.bf16.mxu0 0
        %2804 = vmatmul.mubr.bf16.gmra.mrb[0].mxu0 %v2703
        %v2805 = vpop.f32.mrb[0].mxu0
        %v2806 = vadd.f32 0.0, %v2805
        %v2807 = vpop.f32.mrb[0].mxu0
        %v2808 = vpop.f32.mrb[0].mxu0
        %v2809 = vadd.f32 0.0, %v2808
        %v2810 = vpop.f32.mrb[0].mxu0
        %2811 = vmatprep.mubr.bf16.mxu0 0
        %2812 = vmatmul.mubr.bf16.gmra.mrb[0].mxu0 %v2705
        %v2813 = vpop.f32.mrb[0].mxu0
        %v2814 = vadd.f32 0.0, %v2813
        %v2815 = vpop.f32.mrb[0].mxu0
        %v2816 = vpop.f32.mrb[0].mxu0
        %v2817 = vadd.f32 0.0, %v2816
        %v2818 = vpop.f32.mrb[0].mxu0
        %2819 = vmatprep.mubr.bf16.mxu0 0
        %2820 = vmatmul.mubr.bf16.gmra.mrb[0].mxu0 %v2707
        %v2821 = vpop.f32.mrb[0].mxu0
        %v2822 = vadd.f32 0.0, %v2821
        %v2823 = vpop.f32.mrb[0].mxu0
        %v2824 = vpop.f32.mrb[0].mxu0
        %v2825 = vadd.f32 0.0, %v2824
        %v2826 = vpop.f32.mrb[0].mxu0
        %2827 = vmatprep.mubr.bf16.mxu0 0
        %2828 = vmatmul.mubr.bf16.gmra.mrb[0].mxu0 %v2709
        %v2829 = vpop.f32.mrb[0].mxu0
        %v2830 = vadd.f32 0.0, %v2829
        %v2831 = vpop.f32.mrb[0].mxu0
        %v2832 = vpop.f32.mrb[0].mxu0
        %v2833 = vadd.f32 0.0, %v2832
        %v2834 = vpop.f32.mrb[0].mxu0
        %2835 = vdwg.mxu0
        %v2836 = vadd.f32 %v2668, %v2798
        %v2837 = vadd.f32 %v2669, %v2801
        %v2838 = vadd.f32 %v2670, %v2806
        %v2839 = vadd.f32 %v2671, %v2809
        %v2840 = vadd.f32 %v2672, %v2814
        %v2841 = vadd.f32 %v2673, %v2817
        %v2842 = vadd.f32 %v2674, %v2822
        %v2843 = vadd.f32 %v2675, %v2825
        %v2844 = vadd.f32 %v2676, %v2830
        %v2845 = vadd.f32 %v2677, %v2833
        %v2846 = vld [vmem:[#allocation2 + $0x4] sm:$0xe]
        %v2847 = vld [vmem:[#allocation2 + $0x8] sm:$0xf]
        %v2848 = vld [vmem:[#allocation2 + $0xc] sm:$0xf]
        %v2849 = vld [vmem:[#allocation2 + $0x10] sm:$0xf]
        %v2850 = vld [vmem:[#allocation2 + $0x14] sm:$0xf]
        %v2851 = vld [vmem:[#allocation2 + $0x18] sm:$0xf]
        %v2852 = vld [vmem:[#allocation2 + $0x1c] sm:$0xf]
        %v2853 = vld [vmem:[#allocation2 + $0x20] sm:$0xf]
        %v2854 = vld [vmem:[#allocation2 + $0x24] sm:$0xf]
        %v2855 = vld [vmem:[#allocation2 + $0x28] sm:$0xf]
        %v2856 = vld [vmem:[#allocation2 + $0x2c] sm:$0x1]
        %s2857 = scalar_lea.vmem [#allocation3], 192
        %v2858 = vld [vmem:[%s2857] sm:$0xf]
        %v2859 = vld [vmem:[%s2857 + $0x4] sm:$0xf]
        %v2860 = vld [vmem:[%s2857 + $0x8] sm:$0xf]
        %v2861 = vld [vmem:[%s2857 + $0xc] sm:$0xf]
        %v2862 = vld [vmem:[%s2857 + $0x10] sm:$0xf]
        %v2863 = vld [vmem:[%s2857 + $0x14] sm:$0xf]
        %v2864 = vld [vmem:[%s2857 + $0x18] sm:$0xf]
        %v2865 = vld [vmem:[%s2857 + $0x1c] sm:$0xf]
        %v2866 = vld [vmem:[%s2857 + $0x20] sm:$0xf]
        %v2867 = vld [vmem:[%s2857 + $0x24] sm:$0xf]
        %v2868 = vld [vmem:[%s2857 + $0x28] sm:$0xf]
        %v2869 = vld [vmem:[%s2857 + $0x2c] sm:$0xf]
        %v2870 = vld [vmem:[%s2857 + $0x30] sm:$0xf]
        %v2871 = vld [vmem:[%s2857 + $0x34] sm:$0xf]
        %v2872 = vld [vmem:[%s2857 + $0x38] sm:$0xf]
        %v2873 = vld [vmem:[%s2857 + $0x3c] sm:$0xf]
        %v2885 = vunpack.c.l.b16 %v2846
        %v2886 = vunpack.c.l.b16 %v2847
        %v2887 = vunpack.c.l.b16 %v2848
        %v2888 = vunpack.c.l.b16 %v2849
        %v2889 = vunpack.c.l.b16 %v2850
        %v2890 = vunpack.c.l.b16 %v2851
        %v2891 = vunpack.c.l.b16 %v2852
        %v2892 = vunpack.c.l.b16 %v2853
        %v2893 = vunpack.c.l.b16 %v2854
        %v2894 = vunpack.c.l.b16 %v2855
        %v2895 = vunpack.c.l.b16 %v2856
        %v2896 = vpack.c.b16 %v2886, %v2885
        %v2897 = vpack.c.b16 %v2888, %v2887
        %v2898 = vpack.c.b16 %v2890, %v2889
        %v2899 = vpack.c.b16 %v2892, %v2891
        %v2900 = vpack.c.b16 %v2894, %v2893
        %v2901 = vpack.c.b16 %v2895, %v2895
        %v2902 = vrot.slane %v2896, 1
        %v2903 = vrot.slane %v2897, 1
        %v2904 = vsel %vm1463, %v2902, %v2903
        %v2905 = vrot.slane %v2898, 1
        %v2906 = vsel %vm1463, %v2903, %v2905
        %v2907 = vrot.slane %v2899, 1
        %v2908 = vsel %vm1463, %v2905, %v2907
        %v2909 = vrot.slane %v2900, 1
        %v2910 = vsel %vm1463, %v2907, %v2909
        %v2911 = vrot.slane %v2901, 1
        %v2912 = vsel %vm1463, %v2909, %v2911
        %v2934 = vunpack.c.l.b16 %v2858
        %v2935 = vunpack.c.l.b16 %v2859
        %v2936 = vunpack.c.l.b16 %v2860
        %v2937 = vunpack.c.l.b16 %v2861
        %v2938 = vunpack.c.l.b16 %v2862
        %v2939 = vunpack.c.l.b16 %v2863
        %v2940 = vunpack.c.l.b16 %v2864
        %v2941 = vunpack.c.l.b16 %v2865
        %v2942 = vunpack.c.l.b16 %v2866
        %v2943 = vunpack.c.l.b16 %v2867
        %v2944 = vunpack.c.l.b16 %v2868
        %v2945 = vunpack.c.l.b16 %v2869
        %v2946 = vunpack.c.l.b16 %v2870
        %v2947 = vunpack.c.l.b16 %v2871
        %v2948 = vunpack.c.l.b16 %v2872
        %v2949 = vunpack.c.l.b16 %v2873
        %v2950 = vpack.c.b16 %v2935, %v2934
        %v2951 = vpack.c.b16 %v2937, %v2936
        %v2952 = vpack.c.b16 %v2939, %v2938
        %v2953 = vpack.c.b16 %v2941, %v2940
        %v2954 = vpack.c.b16 %v2943, %v2942
        %v2955 = vpack.c.b16 %v2945, %v2944
        %v2956 = vpack.c.b16 %v2947, %v2946
        %v2957 = vpack.c.b16 %v2949, %v2948
        %2966 = vmatprep.subr.bf16.mxu0 0
        %2967 = vmatpush1.bf16.msra.mxu0 %v2950
        %2968 = vmatprep.subr.bf16.mxu0 0
        %2969 = vmatpush1.bf16.msra.mxu0 %v2951
        %2970 = vmatprep.subr.bf16.mxu0 0
        %2971 = vmatpush1.bf16.msra.mxu0 %v2952
        %2972 = vmatprep.subr.bf16.mxu0 0
        %2973 = vmatpush1.bf16.msra.mxu0 %v2953
        %2974 = vmatprep.subr.bf16.mxu0 0
        %2975 = vmatpush1.bf16.msra.mxu0 %v2954
        %2976 = vmatprep.subr.bf16.mxu0 0
        %2977 = vmatpush1.bf16.msra.mxu0 %v2955
        %2978 = vmatprep.subr.bf16.mxu0 0
        %2979 = vmatpush1.bf16.msra.mxu0 %v2956
        %2980 = vmatprep.subr.bf16.mxu0 0
        %2981 = vmatpush1.bf16.msra.mxu0 %v2957
        %2982 = vmatprep.subr.bf16.mxu0 0
        %2983 = vmatpush1.bf16.msra.mxu0 0
        %2984 = vmatprep.subr.bf16.mxu0 0
        %2985 = vmatpush1.bf16.msra.mxu0 0
        %2986 = vmatprep.subr.bf16.mxu0 0
        %2987 = vmatpush1.bf16.msra.mxu0 0
        %2988 = vmatprep.subr.bf16.mxu0 0
        %2989 = vmatpush1.bf16.msra.mxu0 0
        %2990 = vmatprep.subr.bf16.mxu0 0
        %2991 = vmatpush1.bf16.msra.mxu0 0
        %2992 = vmatprep.subr.bf16.mxu0 0
        %2993 = vmatpush1.bf16.msra.mxu0 0
        %2994 = vmatprep.subr.bf16.mxu0 0
        %2995 = vmatpush1.bf16.msra.mxu0 0
        %2996 = vmatprep.subr.bf16.mxu0 0
        %2997 = vmatpush1.bf16.msra.mxu0 0
        %2998 = vmatprep.mubr.bf16.mxu0 0
        %2999 = vmatmul.mubr.bf16.gmra.mrb[0].mxu0 %v2904
        %v3000 = vpop.f32.mrb[0].mxu0
        %v3001 = vadd.f32 0.0, %v3000
        %v3002 = vpop.f32.mrb[0].mxu0
        %v3003 = vpop.f32.mrb[0].mxu0
        %v3004 = vadd.f32 0.0, %v3003
        %v3005 = vpop.f32.mrb[0].mxu0
        %3006 = vmatprep.mubr.bf16.mxu0 0
        %3007 = vmatmul.mubr.bf16.gmra.mrb[0].mxu0 %v2906
        %v3008 = vpop.f32.mrb[0].mxu0
        %v3009 = vadd.f32 0.0, %v3008
        %v3010 = vpop.f32.mrb[0].mxu0
        %v3011 = vpop.f32.mrb[0].mxu0
        %v3012 = vadd.f32 0.0, %v3011
        %v3013 = vpop.f32.mrb[0].mxu0
        %3014 = vmatprep.mubr.bf16.mxu0 0
        %3015 = vmatmul.mubr.bf16.gmra.mrb[0].mxu0 %v2908
        %v3016 = vpop.f32.mrb[0].mxu0
        %v3017 = vadd.f32 0.0, %v3016
        %v3018 = vpop.f32.mrb[0].mxu0
        %v3019 = vpop.f32.mrb[0].mxu0
        %v3020 = vadd.f32 0.0, %v3019
        %v3021 = vpop.f32.mrb[0].mxu0
        %3022 = vmatprep.mubr.bf16.mxu0 0
        %3023 = vmatmul.mubr.bf16.gmra.mrb[0].mxu0 %v2910
        %v3024 = vpop.f32.mrb[0].mxu0
        %v3025 = vadd.f32 0.0, %v3024
        %v3026 = vpop.f32.mrb[0].mxu0
        %v3027 = vpop.f32.mrb[0].mxu0
        %v3028 = vadd.f32 0.0, %v3027
        %v3029 = vpop.f32.mrb[0].mxu0
        %3030 = vmatprep.mubr.bf16.mxu0 0
        %3031 = vmatmul.mubr.bf16.gmra.mrb[0].mxu0 %v2912
        %v3032 = vpop.f32.mrb[0].mxu0
        %v3033 = vadd.f32 0.0, %v3032
        %v3034 = vpop.f32.mrb[0].mxu0
        %v3035 = vpop.f32.mrb[0].mxu0
        %v3036 = vadd.f32 0.0, %v3035
        %v3037 = vpop.f32.mrb[0].mxu0
        %3038 = vdwg.mxu0
        %v3039 = vadd.f32 %v2836, %v3001
        %v3040 = vadd.f32 %v2837, %v3004
        %v3041 = vadd.f32 %v2838, %v3009
        %v3042 = vadd.f32 %v2839, %v3012
        %v3043 = vadd.f32 %v2840, %v3017
        %v3044 = vadd.f32 %v2841, %v3020
        %v3045 = vadd.f32 %v2842, %v3025
        %v3046 = vadd.f32 %v2843, %v3028
        %v3047 = vadd.f32 %v2844, %v3033
        %v3048 = vadd.f32 %v2845, %v3036
        %v3049 = vld [vmem:[#allocation2 + $0x2c] sm:$0x3]
        %s3050 = scalar_lea.vmem [#allocation3], 256
        %v3051 = vld [vmem:[%s3050] sm:$0xf]
        %v3052 = vld [vmem:[%s3050 + $0x4] sm:$0xf]
        %v3053 = vld [vmem:[%s3050 + $0x8] sm:$0xf]
        %v3054 = vld [vmem:[%s3050 + $0xc] sm:$0xf]
        %v3055 = vld [vmem:[%s3050 + $0x10] sm:$0xf]
        %v3056 = vld [vmem:[%s3050 + $0x14] sm:$0xf]
        %v3057 = vld [vmem:[%s3050 + $0x18] sm:$0xf]
        %v3058 = vld [vmem:[%s3050 + $0x1c] sm:$0xf]
        %v3059 = vld [vmem:[%s3050 + $0x20] sm:$0xf]
        %v3060 = vld [vmem:[%s3050 + $0x24] sm:$0xf]
        %v3061 = vld [vmem:[%s3050 + $0x28] sm:$0xf]
        %v3062 = vld [vmem:[%s3050 + $0x2c] sm:$0xf]
        %v3063 = vld [vmem:[%s3050 + $0x30] sm:$0xf]
        %v3064 = vld [vmem:[%s3050 + $0x34] sm:$0xf]
        %v3065 = vld [vmem:[%s3050 + $0x38] sm:$0xf]
        %v3066 = vld [vmem:[%s3050 + $0x3c] sm:$0xf]
        %v3068 = vunpack.c.l.b16 %v3049
        %v3069 = vpack.c.b16 %v3068, %v3068
        %v3071 = vshrl.u32 %v2896, 16
        %v3073 = vrot.slane %v3071, 1
        %v3074 = vshll.u32 %v2896, 16
        %v3076 = vrot.slane %v3074, 2
        %v3077 = vor.u32 %v3073, %v3076
        %v3079 = vshrl.u32 %v2897, 16
        %v3081 = vrot.slane %v3079, 1
        %v3082 = vshll.u32 %v2897, 16
        %v3084 = vrot.slane %v3082, 2
        %v3085 = vor.u32 %v3081, %v3084
        %v3086 = vsel %vm1743, %v3077, %v3085
        %v3088 = vshrl.u32 %v2898, 16
        %v3090 = vrot.slane %v3088, 1
        %v3091 = vshll.u32 %v2898, 16
        %v3093 = vrot.slane %v3091, 2
        %v3094 = vor.u32 %v3090, %v3093
        %v3095 = vsel %vm1743, %v3085, %v3094
        %v3097 = vshrl.u32 %v2899, 16
        %v3099 = vrot.slane %v3097, 1
        %v3100 = vshll.u32 %v2899, 16
        %v3102 = vrot.slane %v3100, 2
        %v3103 = vor.u32 %v3099, %v3102
        %v3104 = vsel %vm1743, %v3094, %v3103
        %v3106 = vshrl.u32 %v2900, 16
        %v3108 = vrot.slane %v3106, 1
        %v3109 = vshll.u32 %v2900, 16
        %v3111 = vrot.slane %v3109, 2
        %v3112 = vor.u32 %v3108, %v3111
        %v3113 = vsel %vm1743, %v3103, %v3112
        %v3115 = vshrl.u32 %v3069, 16
        %v3117 = vrot.slane %v3115, 1
        %v3118 = vshll.u32 %v3069, 16
        %v3120 = vrot.slane %v3118, 2
        %v3121 = vor.u32 %v3117, %v3120
        %v3122 = vsel %vm1743, %v3112, %v3121
        %v3144 = vunpack.c.l.b16 %v3051
        %v3145 = vunpack.c.l.b16 %v3052
        %v3146 = vunpack.c.l.b16 %v3053
        %v3147 = vunpack.c.l.b16 %v3054
        %v3148 = vunpack.c.l.b16 %v3055
        %v3149 = vunpack.c.l.b16 %v3056
        %v3150 = vunpack.c.l.b16 %v3057
        %v3151 = vunpack.c.l.b16 %v3058
        %v3152 = vunpack.c.l.b16 %v3059
        %v3153 = vunpack.c.l.b16 %v3060
        %v3154 = vunpack.c.l.b16 %v3061
        %v3155 = vunpack.c.l.b16 %v3062
        %v3156 = vunpack.c.l.b16 %v3063
        %v3157 = vunpack.c.l.b16 %v3064
        %v3158 = vunpack.c.l.b16 %v3065
        %v3159 = vunpack.c.l.b16 %v3066
        %v3160 = vpack.c.b16 %v3145, %v3144
        %v3161 = vpack.c.b16 %v3147, %v3146
        %v3162 = vpack.c.b16 %v3149, %v3148
        %v3163 = vpack.c.b16 %v3151, %v3150
        %v3164 = vpack.c.b16 %v3153, %v3152
        %v3165 = vpack.c.b16 %v3155, %v3154
        %v3166 = vpack.c.b16 %v3157, %v3156
        %v3167 = vpack.c.b16 %v3159, %v3158
        %3176 = vmatprep.subr.bf16.mxu0 0
        %3177 = vmatpush1.bf16.msra.mxu0 %v3160
        %3178 = vmatprep.subr.bf16.mxu0 0
        %3179 = vmatpush1.bf16.msra.mxu0 %v3161
        %3180 = vmatprep.subr.bf16.mxu0 0
        %3181 = vmatpush1.bf16.msra.mxu0 %v3162
        %3182 = vmatprep.subr.bf16.mxu0 0
        %3183 = vmatpush1.bf16.msra.mxu0 %v3163
        %3184 = vmatprep.subr.bf16.mxu0 0
        %3185 = vmatpush1.bf16.msra.mxu0 %v3164
        %3186 = vmatprep.subr.bf16.mxu0 0
        %3187 = vmatpush1.bf16.msra.mxu0 %v3165
        %3188 = vmatprep.subr.bf16.mxu0 0
        %3189 = vmatpush1.bf16.msra.mxu0 %v3166
        %3190 = vmatprep.subr.bf16.mxu0 0
        %3191 = vmatpush1.bf16.msra.mxu0 %v3167
        %3192 = vmatprep.subr.bf16.mxu0 0
        %3193 = vmatpush1.bf16.msra.mxu0 0
        %3194 = vmatprep.subr.bf16.mxu0 0
        %3195 = vmatpush1.bf16.msra.mxu0 0
        %3196 = vmatprep.subr.bf16.mxu0 0
        %3197 = vmatpush1.bf16.msra.mxu0 0
        %3198 = vmatprep.subr.bf16.mxu0 0
        %3199 = vmatpush1.bf16.msra.mxu0 0
        %3200 = vmatprep.subr.bf16.mxu0 0
        %3201 = vmatpush1.bf16.msra.mxu0 0
        %3202 = vmatprep.subr.bf16.mxu0 0
        %3203 = vmatpush1.bf16.msra.mxu0 0
        %3204 = vmatprep.subr.bf16.mxu0 0
        %3205 = vmatpush1.bf16.msra.mxu0 0
        %3206 = vmatprep.subr.bf16.mxu0 0
        %3207 = vmatpush1.bf16.msra.mxu0 0
        %3208 = vmatprep.mubr.bf16.mxu0 0
        %3209 = vmatmul.mubr.bf16.gmra.mrb[0].mxu0 %v3086
        %v3210 = vpop.f32.mrb[0].mxu0
        %v3211 = vadd.f32 0.0, %v3210
        %v3212 = vpop.f32.mrb[0].mxu0
        %v3213 = vpop.f32.mrb[0].mxu0
        %v3214 = vadd.f32 0.0, %v3213
        %v3215 = vpop.f32.mrb[0].mxu0
        %3216 = vmatprep.mubr.bf16.mxu0 0
        %3217 = vmatmul.mubr.bf16.gmra.mrb[0].mxu0 %v3095
        %v3218 = vpop.f32.mrb[0].mxu0
        %v3219 = vadd.f32 0.0, %v3218
        %v3220 = vpop.f32.mrb[0].mxu0
        %v3221 = vpop.f32.mrb[0].mxu0
        %v3222 = vadd.f32 0.0, %v3221
        %v3223 = vpop.f32.mrb[0].mxu0
        %3224 = vmatprep.mubr.bf16.mxu0 0
        %3225 = vmatmul.mubr.bf16.gmra.mrb[0].mxu0 %v3104
        %v3226 = vpop.f32.mrb[0].mxu0
        %v3227 = vadd.f32 0.0, %v3226
        %v3228 = vpop.f32.mrb[0].mxu0
        %v3229 = vpop.f32.mrb[0].mxu0
        %v3230 = vadd.f32 0.0, %v3229
        %v3231 = vpop.f32.mrb[0].mxu0
        %3232 = vmatprep.mubr.bf16.mxu0 0
        %3233 = vmatmul.mubr.bf16.gmra.mrb[0].mxu0 %v3113
        %v3234 = vpop.f32.mrb[0].mxu0
        %v3235 = vadd.f32 0.0, %v3234
        %v3236 = vpop.f32.mrb[0].mxu0
        %v3237 = vpop.f32.mrb[0].mxu0
        %v3238 = vadd.f32 0.0, %v3237
        %v3239 = vpop.f32.mrb[0].mxu0
        %3240 = vmatprep.mubr.bf16.mxu0 0
        %3241 = vmatmul.mubr.bf16.gmra.mrb[0].mxu0 %v3122
        %v3242 = vpop.f32.mrb[0].mxu0
        %v3243 = vadd.f32 0.0, %v3242
        %v3244 = vpop.f32.mrb[0].mxu0
        %v3245 = vpop.f32.mrb[0].mxu0
        %v3246 = vadd.f32 0.0, %v3245
        %v3247 = vpop.f32.mrb[0].mxu0
        %3248 = vdwg.mxu0
        %v3249 = vadd.f32 %v3039, %v3211
        %v3250 = vadd.f32 %v3040, %v3214
        %v3251 = vadd.f32 %v3041, %v3219
        %v3252 = vadd.f32 %v3042, %v3222
        %v3253 = vadd.f32 %v3043, %v3227
        %v3254 = vadd.f32 %v3044, %v3230
        %v3255 = vadd.f32 %v3045, %v3235
        %v3256 = vadd.f32 %v3046, %v3238
        %v3257 = vadd.f32 %v3047, %v3243
        %v3258 = vadd.f32 %v3048, %v3246
        %v3259 = vld [vmem:[#allocation2 + $0x4] sm:$0xc]
        %s3260 = scalar_lea.vmem [#allocation3], 320
        %v3261 = vld [vmem:[%s3260] sm:$0xf]
        %v3262 = vld [vmem:[%s3260 + $0x4] sm:$0xf]
        %v3263 = vld [vmem:[%s3260 + $0x8] sm:$0xf]
        %v3264 = vld [vmem:[%s3260 + $0xc] sm:$0xf]
        %v3265 = vld [vmem:[%s3260 + $0x10] sm:$0xf]
        %v3266 = vld [vmem:[%s3260 + $0x14] sm:$0xf]
        %v3267 = vld [vmem:[%s3260 + $0x18] sm:$0xf]
        %v3268 = vld [vmem:[%s3260 + $0x1c] sm:$0xf]
        %v3269 = vld [vmem:[%s3260 + $0x20] sm:$0xf]
        %v3270 = vld [vmem:[%s3260 + $0x24] sm:$0xf]
        %v3271 = vld [vmem:[%s3260 + $0x28] sm:$0xf]
        %v3272 = vld [vmem:[%s3260 + $0x2c] sm:$0xf]
        %v3273 = vld [vmem:[%s3260 + $0x30] sm:$0xf]
        %v3274 = vld [vmem:[%s3260 + $0x34] sm:$0xf]
        %v3275 = vld [vmem:[%s3260 + $0x38] sm:$0xf]
        %v3276 = vld [vmem:[%s3260 + $0x3c] sm:$0xf]
        %v3278 = vunpack.c.l.b16 %v3259
        %v3279 = vpack.c.b16 %v2886, %v3278
        %vm3280 = vcmask 1045504
        %v3281 = vrot.slane %v3279, 2
        %v3282 = vrot.slane %v2897, 2
        %v3283 = vsel %vm3280, %v3281, %v3282
        %v3284 = vrot.slane %v2898, 2
        %v3285 = vsel %vm3280, %v3282, %v3284
        %v3286 = vrot.slane %v2899, 2
        %v3287 = vsel %vm3280, %v3284, %v3286
        %v3288 = vrot.slane %v2900, 2
        %v3289 = vsel %vm3280, %v3286, %v3288
        %v3290 = vrot.slane %v3069, 2
        %v3291 = vsel %vm3280, %v3288, %v3290
        %v3313 = vunpack.c.l.b16 %v3261
        %v3314 = vunpack.c.l.b16 %v3262
        %v3315 = vunpack.c.l.b16 %v3263
        %v3316 = vunpack.c.l.b16 %v3264
        %v3317 = vunpack.c.l.b16 %v3265
        %v3318 = vunpack.c.l.b16 %v3266
        %v3319 = vunpack.c.l.b16 %v3267
        %v3320 = vunpack.c.l.b16 %v3268
        %v3321 = vunpack.c.l.b16 %v3269
        %v3322 = vunpack.c.l.b16 %v3270
        %v3323 = vunpack.c.l.b16 %v3271
        %v3324 = vunpack.c.l.b16 %v3272
        %v3325 = vunpack.c.l.b16 %v3273
        %v3326 = vunpack.c.l.b16 %v3274
        %v3327 = vunpack.c.l.b16 %v3275
        %v3328 = vunpack.c.l.b16 %v3276
        %v3329 = vpack.c.b16 %v3314, %v3313
        %v3330 = vpack.c.b16 %v3316, %v3315
        %v3331 = vpack.c.b16 %v3318, %v3317
        %v3332 = vpack.c.b16 %v3320, %v3319
        %v3333 = vpack.c.b16 %v3322, %v3321
        %v3334 = vpack.c.b16 %v3324, %v3323
        %v3335 = vpack.c.b16 %v3326, %v3325
        %v3336 = vpack.c.b16 %v3328, %v3327
        %3345 = vmatprep.subr.bf16.mxu0 0
        %3346 = vmatpush1.bf16.msra.mxu0 %v3329
        %3347 = vmatprep.subr.bf16.mxu0 0
        %3348 = vmatpush1.bf16.msra.mxu0 %v3330
        %3349 = vmatprep.subr.bf16.mxu0 0
        %3350 = vmatpush1.bf16.msra.mxu0 %v3331
        %3351 = vmatprep.subr.bf16.mxu0 0
        %3352 = vmatpush1.bf16.msra.mxu0 %v3332
        %3353 = vmatprep.subr.bf16.mxu0 0
        %3354 = vmatpush1.bf16.msra.mxu0 %v3333
        %3355 = vmatprep.subr.bf16.mxu0 0
        %3356 = vmatpush1.bf16.msra.mxu0 %v3334
        %3357 = vmatprep.subr.bf16.mxu0 0
        %3358 = vmatpush1.bf16.msra.mxu0 %v3335
        %3359 = vmatprep.subr.bf16.mxu0 0
        %3360 = vmatpush1.bf16.msra.mxu0 %v3336
        %3361 = vmatprep.subr.bf16.mxu0 0
        %3362 = vmatpush1.bf16.msra.mxu0 0
        %3363 = vmatprep.subr.bf16.mxu0 0
        %3364 = vmatpush1.bf16.msra.mxu0 0
        %3365 = vmatprep.subr.bf16.mxu0 0
        %3366 = vmatpush1.bf16.msra.mxu0 0
        %3367 = vmatprep.subr.bf16.mxu0 0
        %3368 = vmatpush1.bf16.msra.mxu0 0
        %3369 = vmatprep.subr.bf16.mxu0 0
        %3370 = vmatpush1.bf16.msra.mxu0 0
        %3371 = vmatprep.subr.bf16.mxu0 0
        %3372 = vmatpush1.bf16.msra.mxu0 0
        %3373 = vmatprep.subr.bf16.mxu0 0
        %3374 = vmatpush1.bf16.msra.mxu0 0
        %3375 = vmatprep.subr.bf16.mxu0 0
        %3376 = vmatpush1.bf16.msra.mxu0 0
        %3377 = vmatprep.mubr.bf16.mxu0 0
        %3378 = vmatmul.mubr.bf16.gmra.mrb[0].mxu0 %v3283
        %v3379 = vpop.f32.mrb[0].mxu0
        %v3380 = vadd.f32 0.0, %v3379
        %v3381 = vpop.f32.mrb[0].mxu0
        %v3382 = vpop.f32.mrb[0].mxu0
        %v3383 = vadd.f32 0.0, %v3382
        %v3384 = vpop.f32.mrb[0].mxu0
        %3385 = vmatprep.mubr.bf16.mxu0 0
        %3386 = vmatmul.mubr.bf16.gmra.mrb[0].mxu0 %v3285
        %v3387 = vpop.f32.mrb[0].mxu0
        %v3388 = vadd.f32 0.0, %v3387
        %v3389 = vpop.f32.mrb[0].mxu0
        %v3390 = vpop.f32.mrb[0].mxu0
        %v3391 = vadd.f32 0.0, %v3390
        %v3392 = vpop.f32.mrb[0].mxu0
        %3393 = vmatprep.mubr.bf16.mxu0 0
        %3394 = vmatmul.mubr.bf16.gmra.mrb[0].mxu0 %v3287
        %v3395 = vpop.f32.mrb[0].mxu0
        %v3396 = vadd.f32 0.0, %v3395
        %v3397 = vpop.f32.mrb[0].mxu0
        %v3398 = vpop.f32.mrb[0].mxu0
        %v3399 = vadd.f32 0.0, %v3398
        %v3400 = vpop.f32.mrb[0].mxu0
        %3401 = vmatprep.mubr.bf16.mxu0 0
        %3402 = vmatmul.mubr.bf16.gmra.mrb[0].mxu0 %v3289
        %v3403 = vpop.f32.mrb[0].mxu0
        %v3404 = vadd.f32 0.0, %v3403
        %v3405 = vpop.f32.mrb[0].mxu0
        %v3406 = vpop.f32.mrb[0].mxu0
        %v3407 = vadd.f32 0.0, %v3406
        %v3408 = vpop.f32.mrb[0].mxu0
        %3409 = vmatprep.mubr.bf16.mxu0 0
        %3410 = vmatmul.mubr.bf16.gmra.mrb[0].mxu0 %v3291
        %v3411 = vpop.f32.mrb[0].mxu0
        %v3412 = vadd.f32 0.0, %v3411
        %v3413 = vpop.f32.mrb[0].mxu0
        %v3414 = vpop.f32.mrb[0].mxu0
        %v3415 = vadd.f32 0.0, %v3414
        %v3416 = vpop.f32.mrb[0].mxu0
        %3417 = vdwg.mxu0
        %v3418 = vadd.f32 %v3249, %v3380
        %v3419 = vadd.f32 %v3250, %v3383
        %v3420 = vadd.f32 %v3251, %v3388
        %v3421 = vadd.f32 %v3252, %v3391
        %v3422 = vadd.f32 %v3253, %v3396
        %v3423 = vadd.f32 %v3254, %v3399
        %v3424 = vadd.f32 %v3255, %v3404
        %v3425 = vadd.f32 %v3256, %v3407
        %v3426 = vadd.f32 %v3257, %v3412
        %v3427 = vadd.f32 %v3258, %v3415
        %v3428 = vld [vmem:[#allocation2 + $0x8] sm:$0xc]
        %v3429 = vld [vmem:[#allocation2 + $0xc] sm:$0xf]
        %v3430 = vld [vmem:[#allocation2 + $0x10] sm:$0xf]
        %v3431 = vld [vmem:[#allocation2 + $0x14] sm:$0xf]
        %v3432 = vld [vmem:[#allocation2 + $0x18] sm:$0xf]
        %v3433 = vld [vmem:[#allocation2 + $0x1c] sm:$0xf]
        %v3434 = vld [vmem:[#allocation2 + $0x20] sm:$0xf]
        %v3435 = vld [vmem:[#allocation2 + $0x24] sm:$0xf]
        %v3436 = vld [vmem:[#allocation2 + $0x28] sm:$0xf]
        %v3437 = vld [vmem:[#allocation2 + $0x2c] sm:$0xf]
        %v3438 = vld [vmem:[#allocation2 + $0x30] sm:$0x3]
        %s3439 = scalar_lea.vmem [#allocation3], 384
        %v3440 = vld [vmem:[%s3439] sm:$0xf]
        %v3441 = vld [vmem:[%s3439 + $0x4] sm:$0xf]
        %v3442 = vld [vmem:[%s3439 + $0x8] sm:$0xf]
        %v3443 = vld [vmem:[%s3439 + $0xc] sm:$0xf]
        %v3444 = vld [vmem:[%s3439 + $0x10] sm:$0xf]
        %v3445 = vld [vmem:[%s3439 + $0x14] sm:$0xf]
        %v3446 = vld [vmem:[%s3439 + $0x18] sm:$0xf]
        %v3447 = vld [vmem:[%s3439 + $0x1c] sm:$0xf]
        %v3448 = vld [vmem:[%s3439 + $0x20] sm:$0xf]
        %v3449 = vld [vmem:[%s3439 + $0x24] sm:$0xf]
        %v3450 = vld [vmem:[%s3439 + $0x28] sm:$0xf]
        %v3451 = vld [vmem:[%s3439 + $0x2c] sm:$0xf]
        %v3452 = vld [vmem:[%s3439 + $0x30] sm:$0xf]
        %v3453 = vld [vmem:[%s3439 + $0x34] sm:$0xf]
        %v3454 = vld [vmem:[%s3439 + $0x38] sm:$0xf]
        %v3455 = vld [vmem:[%s3439 + $0x3c] sm:$0xf]
        %v3467 = vunpack.c.l.b16 %v3428
        %v3468 = vunpack.c.l.b16 %v3429
        %v3469 = vunpack.c.l.b16 %v3430
        %v3470 = vunpack.c.l.b16 %v3431
        %v3471 = vunpack.c.l.b16 %v3432
        %v3472 = vunpack.c.l.b16 %v3433
        %v3473 = vunpack.c.l.b16 %v3434
        %v3474 = vunpack.c.l.b16 %v3435
        %v3475 = vunpack.c.l.b16 %v3436
        %v3476 = vunpack.c.l.b16 %v3437
        %v3477 = vunpack.c.l.b16 %v3438
        %v3478 = vpack.c.b16 %v3468, %v3467
        %v3479 = vpack.c.b16 %v3470, %v3469
        %v3480 = vpack.c.b16 %v3472, %v3471
        %v3481 = vpack.c.b16 %v3474, %v3473
        %v3482 = vpack.c.b16 %v3476, %v3475
        %v3483 = vpack.c.b16 %v3477, %v3477
        %v3484 = vrot.slane %v3478, 2
        %v3485 = vrot.slane %v3479, 2
        %v3486 = vsel %vm3280, %v3484, %v3485
        %v3487 = vrot.slane %v3480, 2
        %v3488 = vsel %vm3280, %v3485, %v3487
        %v3489 = vrot.slane %v3481, 2
        %v3490 = vsel %vm3280, %v3487, %v3489
        %v3491 = vrot.slane %v3482, 2
        %v3492 = vsel %vm3280, %v3489, %v3491
        %v3493 = vrot.slane %v3483, 2
        %v3494 = vsel %vm3280, %v3491, %v3493
        %v3516 = vunpack.c.l.b16 %v3440
        %v3517 = vunpack.c.l.b16 %v3441
        %v3518 = vunpack.c.l.b16 %v3442
        %v3519 = vunpack.c.l.b16 %v3443
        %v3520 = vunpack.c.l.b16 %v3444
        %v3521 = vunpack.c.l.b16 %v3445
        %v3522 = vunpack.c.l.b16 %v3446
        %v3523 = vunpack.c.l.b16 %v3447
        %v3524 = vunpack.c.l.b16 %v3448
        %v3525 = vunpack.c.l.b16 %v3449
        %v3526 = vunpack.c.l.b16 %v3450
        %v3527 = vunpack.c.l.b16 %v3451
        %v3528 = vunpack.c.l.b16 %v3452
        %v3529 = vunpack.c.l.b16 %v3453
        %v3530 = vunpack.c.l.b16 %v3454
        %v3531 = vunpack.c.l.b16 %v3455
        %v3532 = vpack.c.b16 %v3517, %v3516
        %v3533 = vpack.c.b16 %v3519, %v3518
        %v3534 = vpack.c.b16 %v3521, %v3520
        %v3535 = vpack.c.b16 %v3523, %v3522
        %v3536 = vpack.c.b16 %v3525, %v3524
        %v3537 = vpack.c.b16 %v3527, %v3526
        %v3538 = vpack.c.b16 %v3529, %v3528
        %v3539 = vpack.c.b16 %v3531, %v3530
        %3548 = vmatprep.subr.bf16.mxu0 0
        %3549 = vmatpush1.bf16.msra.mxu0 %v3532
        %3550 = vmatprep.subr.bf16.mxu0 0
        %3551 = vmatpush1.bf16.msra.mxu0 %v3533
        %3552 = vmatprep.subr.bf16.mxu0 0
        %3553 = vmatpush1.bf16.msra.mxu0 %v3534
        %3554 = vmatprep.subr.bf16.mxu0 0
        %3555 = vmatpush1.bf16.msra.mxu0 %v3535
        %3556 = vmatprep.subr.bf16.mxu0 0
        %3557 = vmatpush1.bf16.msra.mxu0 %v3536
        %3558 = vmatprep.subr.bf16.mxu0 0
        %3559 = vmatpush1.bf16.msra.mxu0 %v3537
        %3560 = vmatprep.subr.bf16.mxu0 0
        %3561 = vmatpush1.bf16.msra.mxu0 %v3538
        %3562 = vmatprep.subr.bf16.mxu0 0
        %3563 = vmatpush1.bf16.msra.mxu0 %v3539
        %3564 = vmatprep.subr.bf16.mxu0 0
        %3565 = vmatpush1.bf16.msra.mxu0 0
        %3566 = vmatprep.subr.bf16.mxu0 0
        %3567 = vmatpush1.bf16.msra.mxu0 0
        %3568 = vmatprep.subr.bf16.mxu0 0
        %3569 = vmatpush1.bf16.msra.mxu0 0
        %3570 = vmatprep.subr.bf16.mxu0 0
        %3571 = vmatpush1.bf16.msra.mxu0 0
        %3572 = vmatprep.subr.bf16.mxu0 0
        %3573 = vmatpush1.bf16.msra.mxu0 0
        %3574 = vmatprep.subr.bf16.mxu0 0
        %3575 = vmatpush1.bf16.msra.mxu0 0
        %3576 = vmatprep.subr.bf16.mxu0 0
        %3577 = vmatpush1.bf16.msra.mxu0 0
        %3578 = vmatprep.subr.bf16.mxu0 0
        %3579 = vmatpush1.bf16.msra.mxu0 0
        %3580 = vmatprep.mubr.bf16.mxu0 0
        %3581 = vmatmul.mubr.bf16.gmra.mrb[0].mxu0 %v3486
        %v3582 = vpop.f32.mrb[0].mxu0
        %v3583 = vadd.f32 0.0, %v3582
        %v3584 = vpop.f32.mrb[0].mxu0
        %v3585 = vpop.f32.mrb[0].mxu0
        %v3586 = vadd.f32 0.0, %v3585
        %v3587 = vpop.f32.mrb[0].mxu0
        %3588 = vmatprep.mubr.bf16.mxu0 0
        %3589 = vmatmul.mubr.bf16.gmra.mrb[0].mxu0 %v3488
        %v3590 = vpop.f32.mrb[0].mxu0
        %v3591 = vadd.f32 0.0, %v3590
        %v3592 = vpop.f32.mrb[0].mxu0
        %v3593 = vpop.f32.mrb[0].mxu0
        %v3594 = vadd.f32 0.0, %v3593
        %v3595 = vpop.f32.mrb[0].mxu0
        %3596 = vmatprep.mubr.bf16.mxu0 0
        %3597 = vmatmul.mubr.bf16.gmra.mrb[0].mxu0 %v3490
        %v3598 = vpop.f32.mrb[0].mxu0
        %v3599 = vadd.f32 0.0, %v3598
        %v3600 = vpop.f32.mrb[0].mxu0
        %v3601 = vpop.f32.mrb[0].mxu0
        %v3602 = vadd.f32 0.0, %v3601
        %v3603 = vpop.f32.mrb[0].mxu0
        %3604 = vmatprep.mubr.bf16.mxu0 0
        %3605 = vmatmul.mubr.bf16.gmra.mrb[0].mxu0 %v3492
        %v3606 = vpop.f32.mrb[0].mxu0
        %v3607 = vadd.f32 0.0, %v3606
        %v3608 = vpop.f32.mrb[0].mxu0
        %v3609 = vpop.f32.mrb[0].mxu0
        %v3610 = vadd.f32 0.0, %v3609
        %v3611 = vpop.f32.mrb[0].mxu0
        %3612 = vmatprep.mubr.bf16.mxu0 0
        %3613 = vmatmul.mubr.bf16.gmra.mrb[0].mxu0 %v3494
        %v3614 = vpop.f32.mrb[0].mxu0
        %v3615 = vadd.f32 0.0, %v3614
        %v3616 = vpop.f32.mrb[0].mxu0
        %v3617 = vpop.f32.mrb[0].mxu0
        %v3618 = vadd.f32 0.0, %v3617
        %v3619 = vpop.f32.mrb[0].mxu0
        %3620 = vdwg.mxu0
        %v3621 = vadd.f32 %v3418, %v3583
        %v3622 = vadd.f32 %v3419, %v3586
        %v3623 = vadd.f32 %v3420, %v3591
        %v3624 = vadd.f32 %v3421, %v3594
        %v3625 = vadd.f32 %v3422, %v3599
        %v3626 = vadd.f32 %v3423, %v3602
        %v3627 = vadd.f32 %v3424, %v3607
        %v3628 = vadd.f32 %v3425, %v3610
        %v3629 = vadd.f32 %v3426, %v3615
        %v3630 = vadd.f32 %v3427, %v3618
        %v3631 = vld [vmem:[#allocation2 + $0x30] sm:$0x7]
        %s3632 = scalar_lea.vmem [#allocation3], 448
        %v3633 = vld [vmem:[%s3632] sm:$0xf]
        %v3634 = vld [vmem:[%s3632 + $0x4] sm:$0xf]
        %v3635 = vld [vmem:[%s3632 + $0x8] sm:$0xf]
        %v3636 = vld [vmem:[%s3632 + $0xc] sm:$0xf]
        %v3637 = vld [vmem:[%s3632 + $0x10] sm:$0xf]
        %v3638 = vld [vmem:[%s3632 + $0x14] sm:$0xf]
        %v3639 = vld [vmem:[%s3632 + $0x18] sm:$0xf]
        %v3640 = vld [vmem:[%s3632 + $0x1c] sm:$0xf]
        %v3641 = vld [vmem:[%s3632 + $0x20] sm:$0xf]
        %v3642 = vld [vmem:[%s3632 + $0x24] sm:$0xf]
        %v3643 = vld [vmem:[%s3632 + $0x28] sm:$0xf]
        %v3644 = vld [vmem:[%s3632 + $0x2c] sm:$0xf]
        %v3645 = vld [vmem:[%s3632 + $0x30] sm:$0xf]
        %v3646 = vld [vmem:[%s3632 + $0x34] sm:$0xf]
        %v3647 = vld [vmem:[%s3632 + $0x38] sm:$0xf]
        %v3648 = vld [vmem:[%s3632 + $0x3c] sm:$0xf]
        %v3650 = vunpack.c.l.b16 %v3631
        %v3651 = vpack.c.b16 %v3650, %v3650
        %vm3652 = vsmask.f32 5376
        %v3654 = vshrl.u32 %v3478, 16
        %v3656 = vrot.slane %v3654, 2
        %v3657 = vshll.u32 %v3478, 16
        %v3659 = vrot.slane %v3657, 3
        %v3660 = vor.u32 %v3656, %v3659
        %v3662 = vshrl.u32 %v3479, 16
        %v3664 = vrot.slane %v3662, 2
        %v3665 = vshll.u32 %v3479, 16
        %v3667 = vrot.slane %v3665, 3
        %v3668 = vor.u32 %v3664, %v3667
        %v3669 = vsel %vm3652, %v3660, %v3668
        %v3671 = vshrl.u32 %v3480, 16
        %v3673 = vrot.slane %v3671, 2
        %v3674 = vshll.u32 %v3480, 16
        %v3676 = vrot.slane %v3674, 3
        %v3677 = vor.u32 %v3673, %v3676
        %v3678 = vsel %vm3652, %v3668, %v3677
        %v3680 = vshrl.u32 %v3481, 16
        %v3682 = vrot.slane %v3680, 2
        %v3683 = vshll.u32 %v3481, 16
        %v3685 = vrot.slane %v3683, 3
        %v3686 = vor.u32 %v3682, %v3685
        %v3687 = vsel %vm3652, %v3677, %v3686
        %v3689 = vshrl.u32 %v3482, 16
        %v3691 = vrot.slane %v3689, 2
        %v3692 = vshll.u32 %v3482, 16
        %v3694 = vrot.slane %v3692, 3
        %v3695 = vor.u32 %v3691, %v3694
        %v3696 = vsel %vm3652, %v3686, %v3695
        %v3698 = vshrl.u32 %v3651, 16
        %v3700 = vrot.slane %v3698, 2
        %v3701 = vshll.u32 %v3651, 16
        %v3703 = vrot.slane %v3701, 3
        %v3704 = vor.u32 %v3700, %v3703
        %v3705 = vsel %vm3652, %v3695, %v3704
        %v3727 = vunpack.c.l.b16 %v3633
        %v3728 = vunpack.c.l.b16 %v3634
        %v3729 = vunpack.c.l.b16 %v3635
        %v3730 = vunpack.c.l.b16 %v3636
        %v3731 = vunpack.c.l.b16 %v3637
        %v3732 = vunpack.c.l.b16 %v3638
        %v3733 = vunpack.c.l.b16 %v3639
        %v3734 = vunpack.c.l.b16 %v3640
        %v3735 = vunpack.c.l.b16 %v3641
        %v3736 = vunpack.c.l.b16 %v3642
        %v3737 = vunpack.c.l.b16 %v3643
        %v3738 = vunpack.c.l.b16 %v3644
        %v3739 = vunpack.c.l.b16 %v3645
        %v3740 = vunpack.c.l.b16 %v3646
        %v3741 = vunpack.c.l.b16 %v3647
        %v3742 = vunpack.c.l.b16 %v3648
        %v3743 = vpack.c.b16 %v3728, %v3727
        %v3744 = vpack.c.b16 %v3730, %v3729
        %v3745 = vpack.c.b16 %v3732, %v3731
        %v3746 = vpack.c.b16 %v3734, %v3733
        %v3747 = vpack.c.b16 %v3736, %v3735
        %v3748 = vpack.c.b16 %v3738, %v3737
        %v3749 = vpack.c.b16 %v3740, %v3739
        %v3750 = vpack.c.b16 %v3742, %v3741
        %3759 = vmatprep.subr.bf16.mxu0 0
        %3760 = vmatpush1.bf16.msra.mxu0 %v3743
        %3761 = vmatprep.subr.bf16.mxu0 0
        %3762 = vmatpush1.bf16.msra.mxu0 %v3744
        %3763 = vmatprep.subr.bf16.mxu0 0
        %3764 = vmatpush1.bf16.msra.mxu0 %v3745
        %3765 = vmatprep.subr.bf16.mxu0 0
        %3766 = vmatpush1.bf16.msra.mxu0 %v3746
        %3767 = vmatprep.subr.bf16.mxu0 0
        %3768 = vmatpush1.bf16.msra.mxu0 %v3747
        %3769 = vmatprep.subr.bf16.mxu0 0
        %3770 = vmatpush1.bf16.msra.mxu0 %v3748
        %3771 = vmatprep.subr.bf16.mxu0 0
        %3772 = vmatpush1.bf16.msra.mxu0 %v3749
        %3773 = vmatprep.subr.bf16.mxu0 0
        %3774 = vmatpush1.bf16.msra.mxu0 %v3750
        %3775 = vmatprep.subr.bf16.mxu0 0
        %3776 = vmatpush1.bf16.msra.mxu0 0
        %3777 = vmatprep.subr.bf16.mxu0 0
        %3778 = vmatpush1.bf16.msra.mxu0 0
        %3779 = vmatprep.subr.bf16.mxu0 0
        %3780 = vmatpush1.bf16.msra.mxu0 0
        %3781 = vmatprep.subr.bf16.mxu0 0
        %3782 = vmatpush1.bf16.msra.mxu0 0
        %3783 = vmatprep.subr.bf16.mxu0 0
        %3784 = vmatpush1.bf16.msra.mxu0 0
        %3785 = vmatprep.subr.bf16.mxu0 0
        %3786 = vmatpush1.bf16.msra.mxu0 0
        %3787 = vmatprep.subr.bf16.mxu0 0
        %3788 = vmatpush1.bf16.msra.mxu0 0
        %3789 = vmatprep.subr.bf16.mxu0 0
        %3790 = vmatpush1.bf16.msra.mxu0 0
        %3791 = vmatprep.mubr.bf16.mxu0 0
        %3792 = vmatmul.mubr.bf16.gmra.mrb[0].mxu0 %v3669
        %v3793 = vpop.f32.mrb[0].mxu0
        %v3794 = vadd.f32 0.0, %v3793
        %v3795 = vpop.f32.mrb[0].mxu0
        %v3796 = vpop.f32.mrb[0].mxu0
        %v3797 = vadd.f32 0.0, %v3796
        %v3798 = vpop.f32.mrb[0].mxu0
        %3799 = vmatprep.mubr.bf16.mxu0 0
        %3800 = vmatmul.mubr.bf16.gmra.mrb[0].mxu0 %v3678
        %v3801 = vpop.f32.mrb[0].mxu0
        %v3802 = vadd.f32 0.0, %v3801
        %v3803 = vpop.f32.mrb[0].mxu0
        %v3804 = vpop.f32.mrb[0].mxu0
        %v3805 = vadd.f32 0.0, %v3804
        %v3806 = vpop.f32.mrb[0].mxu0
        %3807 = vmatprep.mubr.bf16.mxu0 0
        %3808 = vmatmul.mubr.bf16.gmra.mrb[0].mxu0 %v3687
        %v3809 = vpop.f32.mrb[0].mxu0
        %v3810 = vadd.f32 0.0, %v3809
        %v3811 = vpop.f32.mrb[0].mxu0
        %v3812 = vpop.f32.mrb[0].mxu0
        %v3813 = vadd.f32 0.0, %v3812
        %v3814 = vpop.f32.mrb[0].mxu0
        %3815 = vmatprep.mubr.bf16.mxu0 0
        %3816 = vmatmul.mubr.bf16.gmra.mrb[0].mxu0 %v3696
        %v3817 = vpop.f32.mrb[0].mxu0
        %v3818 = vadd.f32 0.0, %v3817
        %v3819 = vpop.f32.mrb[0].mxu0
        %v3820 = vpop.f32.mrb[0].mxu0
        %v3821 = vadd.f32 0.0, %v3820
        %v3822 = vpop.f32.mrb[0].mxu0
        %3823 = vmatprep.mubr.bf16.mxu0 0
        %3824 = vmatmul.mubr.bf16.gmra.mrb[0].mxu0 %v3705
        %v3825 = vpop.f32.mrb[0].mxu0
        %v3826 = vadd.f32 0.0, %v3825
        %v3827 = vpop.f32.mrb[0].mxu0
        %v3828 = vpop.f32.mrb[0].mxu0
        %v3829 = vadd.f32 0.0, %v3828
        %v3830 = vpop.f32.mrb[0].mxu0
        %3831 = vdwg.mxu0
        %v3832 = vadd.f32 %v3621, %v3794
        %v3833 = vadd.f32 %v3622, %v3797
        %v3834 = vadd.f32 %v3623, %v3802
        %v3835 = vadd.f32 %v3624, %v3805
        %v3836 = vadd.f32 %v3625, %v3810
        %v3837 = vadd.f32 %v3626, %v3813
        %v3838 = vadd.f32 %v3627, %v3818
        %v3839 = vadd.f32 %v3628, %v3821
        %v3840 = vadd.f32 %v3629, %v3826
        %v3841 = vadd.f32 %v3630, %v3829
        %v3842 = vld [vmem:[#allocation2 + $0x8] sm:$0x8]
        %s3843 = scalar_lea.vmem [#allocation3], 512
        %v3844 = vld [vmem:[%s3843] sm:$0xf]
        %v3845 = vld [vmem:[%s3843 + $0x4] sm:$0xf]
        %v3846 = vld [vmem:[%s3843 + $0x8] sm:$0xf]
        %v3847 = vld [vmem:[%s3843 + $0xc] sm:$0xf]
        %v3848 = vld [vmem:[%s3843 + $0x10] sm:$0xf]
        %v3849 = vld [vmem:[%s3843 + $0x14] sm:$0xf]
        %v3850 = vld [vmem:[%s3843 + $0x18] sm:$0xf]
        %v3851 = vld [vmem:[%s3843 + $0x1c] sm:$0xf]
        %v3852 = vld [vmem:[%s3843 + $0x20] sm:$0xf]
        %v3853 = vld [vmem:[%s3843 + $0x24] sm:$0xf]
        %v3854 = vld [vmem:[%s3843 + $0x28] sm:$0xf]
        %v3855 = vld [vmem:[%s3843 + $0x2c] sm:$0xf]
        %v3856 = vld [vmem:[%s3843 + $0x30] sm:$0xf]
        %v3857 = vld [vmem:[%s3843 + $0x34] sm:$0xf]
        %v3858 = vld [vmem:[%s3843 + $0x38] sm:$0xf]
        %v3859 = vld [vmem:[%s3843 + $0x3c] sm:$0xf]
        %v3861 = vunpack.c.l.b16 %v3842
        %v3862 = vpack.c.b16 %v3468, %v3861
        %vm3863 = vcmask 1044480
        %v3864 = vrot.slane %v3862, 3
        %v3865 = vrot.slane %v3479, 3
        %v3866 = vsel %vm3863, %v3864, %v3865
        %v3867 = vrot.slane %v3480, 3
        %v3868 = vsel %vm3863, %v3865, %v3867
        %v3869 = vrot.slane %v3481, 3
        %v3870 = vsel %vm3863, %v3867, %v3869
        %v3871 = vrot.slane %v3482, 3
        %v3872 = vsel %vm3863, %v3869, %v3871
        %v3873 = vrot.slane %v3651, 3
        %v3874 = vsel %vm3863, %v3871, %v3873
        %v3896 = vunpack.c.l.b16 %v3844
        %v3897 = vunpack.c.l.b16 %v3845
        %v3898 = vunpack.c.l.b16 %v3846
        %v3899 = vunpack.c.l.b16 %v3847
        %v3900 = vunpack.c.l.b16 %v3848
        %v3901 = vunpack.c.l.b16 %v3849
        %v3902 = vunpack.c.l.b16 %v3850
        %v3903 = vunpack.c.l.b16 %v3851
        %v3904 = vunpack.c.l.b16 %v3852
        %v3905 = vunpack.c.l.b16 %v3853
        %v3906 = vunpack.c.l.b16 %v3854
        %v3907 = vunpack.c.l.b16 %v3855
        %v3908 = vunpack.c.l.b16 %v3856
        %v3909 = vunpack.c.l.b16 %v3857
        %v3910 = vunpack.c.l.b16 %v3858
        %v3911 = vunpack.c.l.b16 %v3859
        %v3912 = vpack.c.b16 %v3897, %v3896
        %v3913 = vpack.c.b16 %v3899, %v3898
        %v3914 = vpack.c.b16 %v3901, %v3900
        %v3915 = vpack.c.b16 %v3903, %v3902
        %v3916 = vpack.c.b16 %v3905, %v3904
        %v3917 = vpack.c.b16 %v3907, %v3906
        %v3918 = vpack.c.b16 %v3909, %v3908
        %v3919 = vpack.c.b16 %v3911, %v3910
        %3928 = vmatprep.subr.bf16.mxu0 0
        %3929 = vmatpush1.bf16.msra.mxu0 %v3912
        %3930 = vmatprep.subr.bf16.mxu0 0
        %3931 = vmatpush1.bf16.msra.mxu0 %v3913
        %3932 = vmatprep.subr.bf16.mxu0 0
        %3933 = vmatpush1.bf16.msra.mxu0 %v3914
        %3934 = vmatprep.subr.bf16.mxu0 0
        %3935 = vmatpush1.bf16.msra.mxu0 %v3915
        %3936 = vmatprep.subr.bf16.mxu0 0
        %3937 = vmatpush1.bf16.msra.mxu0 %v3916
        %3938 = vmatprep.subr.bf16.mxu0 0
        %3939 = vmatpush1.bf16.msra.mxu0 %v3917
        %3940 = vmatprep.subr.bf16.mxu0 0
        %3941 = vmatpush1.bf16.msra.mxu0 %v3918
        %3942 = vmatprep.subr.bf16.mxu0 0
        %3943 = vmatpush1.bf16.msra.mxu0 %v3919
        %3944 = vmatprep.subr.bf16.mxu0 0
        %3945 = vmatpush1.bf16.msra.mxu0 0
        %3946 = vmatprep.subr.bf16.mxu0 0
        %3947 = vmatpush1.bf16.msra.mxu0 0
        %3948 = vmatprep.subr.bf16.mxu0 0
        %3949 = vmatpush1.bf16.msra.mxu0 0
        %3950 = vmatprep.subr.bf16.mxu0 0
        %3951 = vmatpush1.bf16.msra.mxu0 0
        %3952 = vmatprep.subr.bf16.mxu0 0
        %3953 = vmatpush1.bf16.msra.mxu0 0
        %3954 = vmatprep.subr.bf16.mxu0 0
        %3955 = vmatpush1.bf16.msra.mxu0 0
        %3956 = vmatprep.subr.bf16.mxu0 0
        %3957 = vmatpush1.bf16.msra.mxu0 0
        %3958 = vmatprep.subr.bf16.mxu0 0
        %3959 = vmatpush1.bf16.msra.mxu0 0
        %3960 = vmatprep.mubr.bf16.mxu0 0
        %3961 = vmatmul.mubr.bf16.gmra.mrb[0].mxu0 %v3866
        %v3962 = vpop.f32.mrb[0].mxu0
        %v3963 = vadd.f32 0.0, %v3962
        %v3964 = vpop.f32.mrb[0].mxu0
        %v3965 = vpop.f32.mrb[0].mxu0
        %v3966 = vadd.f32 0.0, %v3965
        %v3967 = vpop.f32.mrb[0].mxu0
        %3968 = vmatprep.mubr.bf16.mxu0 0
        %3969 = vmatmul.mubr.bf16.gmra.mrb[0].mxu0 %v3868
        %v3970 = vpop.f32.mrb[0].mxu0
        %v3971 = vadd.f32 0.0, %v3970
        %v3972 = vpop.f32.mrb[0].mxu0
        %v3973 = vpop.f32.mrb[0].mxu0
        %v3974 = vadd.f32 0.0, %v3973
        %v3975 = vpop.f32.mrb[0].mxu0
        %3976 = vmatprep.mubr.bf16.mxu0 0
        %3977 = vmatmul.mubr.bf16.gmra.mrb[0].mxu0 %v3870
        %v3978 = vpop.f32.mrb[0].mxu0
        %v3979 = vadd.f32 0.0, %v3978
        %v3980 = vpop.f32.mrb[0].mxu0
        %v3981 = vpop.f32.mrb[0].mxu0
        %v3982 = vadd.f32 0.0, %v3981
        %v3983 = vpop.f32.mrb[0].mxu0
        %3984 = vmatprep.mubr.bf16.mxu0 0
        %3985 = vmatmul.mubr.bf16.gmra.mrb[0].mxu0 %v3872
        %v3986 = vpop.f32.mrb[0].mxu0
        %v3987 = vadd.f32 0.0, %v3986
        %v3988 = vpop.f32.mrb[0].mxu0
        %v3989 = vpop.f32.mrb[0].mxu0
        %v3990 = vadd.f32 0.0, %v3989
        %v3991 = vpop.f32.mrb[0].mxu0
        %3992 = vmatprep.mubr.bf16.mxu0 0
        %3993 = vmatmul.mubr.bf16.gmra.mrb[0].mxu0 %v3874
        %v3994 = vpop.f32.mrb[0].mxu0
        %v3995 = vadd.f32 0.0, %v3994
        %v3996 = vpop.f32.mrb[0].mxu0
        %v3997 = vpop.f32.mrb[0].mxu0
        %v3998 = vadd.f32 0.0, %v3997
        %v3999 = vpop.f32.mrb[0].mxu0
        %4000 = vdwg.mxu0
        %v4001 = vadd.f32 %v3832, %v3963
        %v4002 = vadd.f32 %v3833, %v3966
        %v4003 = vadd.f32 %v3834, %v3971
        %v4004 = vadd.f32 %v3835, %v3974
        %v4005 = vadd.f32 %v3836, %v3979
        %v4006 = vadd.f32 %v3837, %v3982
        %v4007 = vadd.f32 %v3838, %v3987
        %v4008 = vadd.f32 %v3839, %v3990
        %v4009 = vadd.f32 %v3840, %v3995
        %v4010 = vadd.f32 %v3841, %v3998
        %v4011 = vmax.f32 %v4001, 0.0
        %v4012 = vmax.f32 %v4002, 0.0
        %v4013 = vmax.f32 %v4003, 0.0
        %v4014 = vmax.f32 %v4004, 0.0
        %v4015 = vmax.f32 %v4005, 0.0
        %v4016 = vmax.f32 %v4006, 0.0
        %v4017 = vmax.f32 %v4007, 0.0
        %v4018 = vmax.f32 %v4008, 0.0
        %v4019 = vmax.f32 %v4009, 0.0
        %v4020 = vmax.f32 %v4010, 0.0
        %v4021 = vpack.c.bf16 %v4012, %v4011
        %v4022 = vpack.c.bf16 %v4014, %v4013
        %v4023 = vpack.c.bf16 %v4016, %v4015
        %v4024 = vpack.c.bf16 %v4018, %v4017
        %v4025 = vpack.c.bf16 %v4020, %v4019
        %v4031 = vunpack.c.l.b16 %v4021
        %v4032 = vunpack.c.h.b16 %v4021
        %v4033 = vunpack.c.l.b16 %v4022
        %v4034 = vunpack.c.h.b16 %v4022
        %v4035 = vunpack.c.l.b16 %v4023
        %v4036 = vunpack.c.h.b16 %v4023
        %v4037 = vunpack.c.l.b16 %v4024
        %v4038 = vunpack.c.h.b16 %v4024
        %v4039 = vunpack.c.l.b16 %v4025
        %v4040 = vunpack.c.h.b16 %v4025
        %v4041 = vpack.c.b16 %v4031, %v4031
        %v4042 = vpack.c.b16 %v4032, %v4032
        %v4043 = vpack.c.b16 %v4033, %v4033
        %v4044 = vpack.c.b16 %v4034, %v4034
        %v4045 = vpack.c.b16 %v4035, %v4035
        %v4046 = vpack.c.b16 %v4036, %v4036
        %v4047 = vpack.c.b16 %v4037, %v4037
        %v4048 = vpack.c.b16 %v4038, %v4038
        %v4049 = vpack.c.b16 %v4039, %v4039
        %v4050 = vpack.c.b16 %v4040, %v4040
        %4061 = vst [vmem:[%s286] sm:$0xf] %v4041
        %4062 = vst [vmem:[%s286 + $0x4] sm:$0xf] %v4042
        %4063 = vst [vmem:[%s286 + $0x8] sm:$0xf] %v4043
        %4064 = vst [vmem:[%s286 + $0xc] sm:$0xf] %v4044
        %4065 = vst [vmem:[%s286 + $0x10] sm:$0xf] %v4045
        %4066 = vst [vmem:[%s286 + $0x14] sm:$0xf] %v4046
        %4067 = vst [vmem:[%s286 + $0x18] sm:$0xf] %v4047
        %4068 = vst [vmem:[%s286 + $0x1c] sm:$0xf] %v4048
        %4069 = vst [vmem:[%s286 + $0x20] sm:$0xf] %v4049
        %4070 = vst [vmem:[%s286 + $0x24] sm:$0xf] %v4050
        %s4071 = sand.u32 %s182, 1
        %s4072 = scalar_lea.sflag [#allocation5], %s4071
        %s4073 = sand.u32 %s182, 1
        %s4074 = smul.addr %s4073, 40
        %s4075 = scalar_lea.vmem [#allocation6], %s4074
        // Predicated region
        $region53: #{tpu_custom_call.1} parent=47 // pred_check
          %p4076 = pneg %p192
        $region54: #{tpu_custom_call.1} parent=47 // pred_check_branch
          %4078 = sbr.rel (%p4076) target = $region56
        $region55: #{tpu_custom_call.1} parent=47 // pred_region
          %s4080 = ssub.s32 640, 640
          %4081 = vsyncadd %s4072, %s4080
          %s4082 = smul.addr %s22, 10
          %s4083 = smul.addr %s4082, 64
          %s4084 = scalar_lea.hbm %s7, %s4083
          %s4085 = sshll.u32 %s4075, 4
          %s4086 = int_to_ptr.vmem [resolvable:$true] %s4085
          %4091 = dma.vmem_to_hbm [thread:$0]  %s4086, 640, %s4084, %s4072, 64, 64, 4
        $region56: #{tpu_custom_call.1} parent=47 // pred_fallthru
          _
      $region48: #{tpu_custom_call.1} parent=5 // pred_fallthru
        _
      %p4092 = scmp.le.s32.totalorder 2, %s17
      // Predicated region
      $region57: #{tpu_custom_call.1} parent=5 // pred_check
        %p4093 = pneg %p4092
      $region58: #{tpu_custom_call.1} parent=5 // pred_check_branch
        %4095 = sbr.rel (%p4093) target = $region60
      $region59: #{tpu_custom_call.1} parent=5 // pred_region
        %s4096 = ssub.s32 %s17, 2
        // Predicated region
        $region61: #{tpu_custom_call.1} parent=59 // pred_check
          %p4097 = pneg %p198
        $region62: #{tpu_custom_call.1} parent=59 // pred_check_branch
          %4099 = sbr.rel (%p4097) target = $region64
        $region63: #{tpu_custom_call.1} parent=59 // pred_region
          %s4100 = sand.u32 %s183, 1
          %s4101 = scalar_lea.sflag [#allocation5], %s4100
          %s4102 = sand.u32 %s183, 1
          %s4103 = smul.addr %s4102, 40
          %s4104 = scalar_lea.vmem [#allocation6], %s4103
          %4105 = dma.done %s4101, 640
        $region64: #{tpu_custom_call.1} parent=59 // pred_fallthru
          _
      $region60: #{tpu_custom_call.1} parent=5 // pred_fallthru
        _
    $region6: #{tpu_custom_call.1} parent=1 // loop_footer
      %s21 = sadd.s32 1, %s17
    $region7: #{tpu_custom_call.1} parent=1 // loop_footer_branch
      %16 = sbr.rel target = $region3
    $region8: #{tpu_custom_call.1} parent=1 // loop_exit
      _
    %4106 = vsyncpa [#allocation4], 1
    %s4107 = scalar_lea.sflag [#allocation4], 1
    %4108 = vsyncpa %s4107, 1
    %4109 = vsyncpa [#allocation5], 1
    %s4110 = scalar_lea.sflag [#allocation5], 1
    %4111 = vsyncpa %s4110, 1

// kernel: tpu_custom_call.1
$region0: #{tpu_custom_call.1}
  #allocation0 [shape = 'u32[]', space=smem, size = 0x4, offset = 0x4, fixed_abs, tag = 'smem constant byte address 0x4 - core index']
  #allocation1 [shape = 'u32[144,128]{1,0:T(1,128)}', space=vmem, size = 0x12000, scoped, tag = 'internal scratch']
  #allocation2 [shape = 'bf16[110,128]{1,0:T(8,128)(2,1)}', space=vmem, size = 0x7000, scoped, tag = 'scratch operand']
  %s0 = inlined_call_operand.vmem [shape: bf16[2,4,100,16], index: 0, kind: input, shape index: {}]
  %s1 = inlined_call_operand.vmem [shape: bf16[9,16,128], index: 1, kind: input, shape index: {}]
  %s2 = inlined_call_operand.vmem [shape: f32[1,128], index: 2, kind: input, shape index: {}]
  %s3 = inlined_call_operand.hbm [shape: bf16[9,128,128], index: 3, kind: input, shape index: {}]
  %s4 = inlined_call_operand.vmem [shape: f32[1,128], index: 4, kind: input, shape index: {}]
  %s5 = inlined_call_operand.vmem [shape: bf16[16,128], index: 5, kind: input, shape index: {}]
  %s6 = inlined_call_operand.vmem [shape: f32[1,128], index: 6, kind: input, shape index: {}]
  %s7 = inlined_call_operand.hbm [shape: bf16[2,80,128], index: 7, kind: output, shape index: {}]
  %s8 = sld [smem:[#allocation0]]
  $region65: #{tpu_custom_call.1} parent=0
    _
  %s10 = ssub.s32 1, %s8
  %s11 = scalar_select 0, %s10, %s8
  $region1: #{tpu_custom_call.1} parent=0
    #allocation3 [shape = 'u8[294912]{0}', space=vmem, size = 0x48000, scoped, tag = 'input window, operand 3, single buffered']
    #allocation4 [shape = 's32[2]{0}', space=sflag, size = 0x8, scoped, tag = 'scoped memory for tpu_custom_call.1']
    #allocation5 [shape = 's32[2]{0}', space=sflag, size = 0x8, scoped, tag = 'scoped memory for tpu_custom_call.1']
    #allocation6 [shape = 'u8[40960]{0}', space=vmem, size = 0xa000, scoped, tag = 'output window, operand 0']
    %12 = vsyncpa [#allocation4], 0
    %13 = vsyncpa [#allocation5], 0
    %s14 = scalar_lea.sflag [#allocation5], 1
    %15 = vsyncpa %s14, 0
    loop: start=0, step=1, limit=4
    $region2: #{tpu_custom_call.1} parent=1 // loop_pre_header
      _
    $region3: #{tpu_custom_call.1} parent=1 // loop_header
      %s17 = sphi 0, %s21
      %p18 = scmp.ge.s32.totalorder %s17, 4
      %s27 = sphi 0, %s29
      %s30 = sphi 0, %s27
      %s31 = sphi 0, %s30
      %s47 = sphi 0, %s31
      %s51 = sphi 0, %s51
      %s53 = sphi 0, %s51
      %s54 = sphi 0, %s53
      %s68 = sphi 0, %s54
      %s72 = sphi 0, %s72
      %s74 = sphi 0, %s72
      %s75 = sphi 0, %s74
      %s89 = sphi 0, %s75
      %s93 = sphi 0, %s93
      %s95 = sphi 0, %s93
      %s96 = sphi 0, %s95
      %s110 = sphi 0, %s96
      %s114 = sphi 0, %s114
      %s116 = sphi 0, %s114
      %s117 = sphi 0, %s116
      %s131 = sphi 0, %s117
      %s135 = sphi 0, %s135
      %s137 = sphi 0, %s135
      %s138 = sphi 0, %s137
      %s152 = sphi 0, %s138
      %s156 = sphi 0, %s156
      %s158 = sphi 0, %s156
      %s159 = sphi 0, %s158
      %s173 = sphi 0, %s159
      %s179 = sphi 0, %s181
      %s182 = sphi 0, %s179
      %s183 = sphi 0, %s182
      %s199 = sphi 0, %s183
    $region4: #{tpu_custom_call.1} parent=1 // loop_header_branch
      %20 = sbr.rel (%p18) target = $region8
    $region5: #{tpu_custom_call.1} parent=1 // loop_body
      %s22 = ssub.s32 %s17, 1
      %s23 = ssub.s32 %s17, 2
      %s24 = sadd.s32 %s17, 1
      %s25 = ssub.s32 %s17, %s24
      %p26 = scmp.eq.s32.totalorder %s25, 0
      %s28 = sadd.s32 %s27, 1
      %s29 = scalar_select %p26, %s27, %s28
      %p32 = pneg %p26
      %p33 = scmp.eq.s32.totalorder %s17, 1
      %p34 = por %p32, %p33
      %p35 = scmp.ne.s32.totalorder %s27, %s30
      %p36 = scmp.eq.s32.totalorder %s17, 0
      %p37 = por %p35, %p36
      %p38 = scmp.ne.s32.totalorder %s27, %s30
      %p39 = scmp.eq.s32.totalorder %s22, 1
      %p40 = por %p38, %p39
      %p41 = scmp.ne.s32.totalorder %s30, %s31
      %p42 = scmp.eq.s32.totalorder %s22, 0
      %p43 = por %p41, %p42
      %p44 = scmp.ne.s32.totalorder %s30, %s31
      %p45 = scmp.eq.s32.totalorder %s23, 1
      %p46 = por %p44, %p45
      %p48 = scmp.ne.s32.totalorder %s31, %s47
      %p49 = scmp.eq.s32.totalorder %s23, 0
      %p50 = por %p48, %p49
      %s52 = sadd.s32 %s51, 1
      %p55 = scmp.eq.s32.totalorder %s17, 1
      %p56 = scmp.ne.s32.totalorder %s51, %s53
      %p57 = scmp.eq.s32.totalorder %s17, 0
      %p58 = por %p56, %p57
      %p59 = scmp.ne.s32.totalorder %s51, %s53
      %p60 = scmp.eq.s32.totalorder %s22, 1
      %p61 = por %p59, %p60
      %p62 = scmp.ne.s32.totalorder %s53, %s54
      %p63 = scmp.eq.s32.totalorder %s22, 0
      %p64 = por %p62, %p63
      %p65 = scmp.ne.s32.totalorder %s53, %s54
      %p66 = scmp.eq.s32.totalorder %s23, 1
      %p67 = por %p65, %p66
      %p69 = scmp.ne.s32.totalorder %s54, %s68
      %p70 = scmp.eq.s32.totalorder %s23, 0
      %p71 = por %p69, %p70
      %s73 = sadd.s32 %s72, 1
      %p76 = scmp.eq.s32.totalorder %s17, 1
      %p77 = scmp.ne.s32.totalorder %s72, %s74
      %p78 = scmp.eq.s32.totalorder %s17, 0
      %p79 = por %p77, %p78
      %p80 = scmp.ne.s32.totalorder %s72, %s74
      %p81 = scmp.eq.s32.totalorder %s22, 1
      %p82 = por %p80, %p81
      %p83 = scmp.ne.s32.totalorder %s74, %s75
      %p84 = scmp.eq.s32.totalorder %s22, 0
      %p85 = por %p83, %p84
      %p86 = scmp.ne.s32.totalorder %s74, %s75
      %p87 = scmp.eq.s32.totalorder %s23, 1
      %p88 = por %p86, %p87
      %p90 = scmp.ne.s32.totalorder %s75, %s89
      %p91 = scmp.eq.s32.totalorder %s23, 0
      %p92 = por %p90, %p91
      %s94 = sadd.s32 %s93, 1
      %p97 = scmp.eq.s32.totalorder %s17, 1
      %p98 = scmp.ne.s32.totalorder %s93, %s95
      %p99 = scmp.eq.s32.totalorder %s17, 0
      %p100 = por %p98, %p99
      %p101 = scmp.ne.s32.totalorder %s93, %s95
      %p102 = scmp.eq.s32.totalorder %s22, 1
      %p103 = por %p101, %p102
      %p104 = scmp.ne.s32.totalorder %s95, %s96
      %p105 = scmp.eq.s32.totalorder %s22, 0
      %p106 = por %p104, %p105
      %p107 = scmp.ne.s32.totalorder %s95, %s96
      %p108 = scmp.eq.s32.totalorder %s23, 1
      %p109 = por %p107, %p108
      %p111 = scmp.ne.s32.totalorder %s96, %s110
      %p112 = scmp.eq.s32.totalorder %s23, 0
      %p113 = por %p111, %p112
      %s115 = sadd.s32 %s114, 1
      %p118 = scmp.eq.s32.totalorder %s17, 1
      %p119 = scmp.ne.s32.totalorder %s114, %s116
      %p120 = scmp.eq.s32.totalorder %s17, 0
      %p121 = por %p119, %p120
      %p122 = scmp.ne.s32.totalorder %s114, %s116
      %p123 = scmp.eq.s32.totalorder %s22, 1
      %p124 = por %p122, %p123
      %p125 = scmp.ne.s32.totalorder %s116, %s117
      %p126 = scmp.eq.s32.totalorder %s22, 0
      %p127 = por %p125, %p126
      %p128 = scmp.ne.s32.totalorder %s116, %s117
      %p129 = scmp.eq.s32.totalorder %s23, 1
      %p130 = por %p128, %p129
      %p132 = scmp.ne.s32.totalorder %s117, %s131
      %p133 = scmp.eq.s32.totalorder %s23, 0
      %p134 = por %p132, %p133
      %s136 = sadd.s32 %s135, 1
      %p139 = scmp.eq.s32.totalorder %s17, 1
      %p140 = scmp.ne.s32.totalorder %s135, %s137
      %p141 = scmp.eq.s32.totalorder %s17, 0
      %p142 = por %p140, %p141
      %p143 = scmp.ne.s32.totalorder %s135, %s137
      %p144 = scmp.eq.s32.totalorder %s22, 1
      %p145 = por %p143, %p144
      %p146 = scmp.ne.s32.totalorder %s137, %s138
      %p147 = scmp.eq.s32.totalorder %s22, 0
      %p148 = por %p146, %p147
      %p149 = scmp.ne.s32.totalorder %s137, %s138
      %p150 = scmp.eq.s32.totalorder %s23, 1
      %p151 = por %p149, %p150
      %p153 = scmp.ne.s32.totalorder %s138, %s152
      %p154 = scmp.eq.s32.totalorder %s23, 0
      %p155 = por %p153, %p154
      %s157 = sadd.s32 %s156, 1
      %p160 = scmp.eq.s32.totalorder %s17, 1
      %p161 = scmp.ne.s32.totalorder %s156, %s158
      %p162 = scmp.eq.s32.totalorder %s17, 0
      %p163 = por %p161, %p162
      %p164 = scmp.ne.s32.totalorder %s156, %s158
      %p165 = scmp.eq.s32.totalorder %s22, 1
      %p166 = por %p164, %p165
      %p167 = scmp.ne.s32.totalorder %s158, %s159
      %p168 = scmp.eq.s32.totalorder %s22, 0
      %p169 = por %p167, %p168
      %p170 = scmp.ne.s32.totalorder %s158, %s159
      %p171 = scmp.eq.s32.totalorder %s23, 1
      %p172 = por %p170, %p171
      %p174 = scmp.ne.s32.totalorder %s159, %s173
      %p175 = scmp.eq.s32.totalorder %s23, 0
      %p176 = por %p174, %p175
      %s177 = ssub.s32 %s17, %s24
      %p178 = scmp.eq.s32.totalorder %s177, 0
      %s180 = sadd.s32 %s179, 1
      %s181 = scalar_select %p178, %s179, %s180
      %p184 = pneg %p178
      %p185 = scmp.eq.s32.totalorder %s17, 1
      %p186 = por %p184, %p185
      %p187 = scmp.ne.s32.totalorder %s179, %s182
      %p188 = scmp.eq.s32.totalorder %s17, 0
      %p189 = por %p187, %p188
      %p190 = scmp.ne.s32.totalorder %s179, %s182
      %p191 = scmp.eq.s32.totalorder %s22, 1
      %p192 = por %p190, %p191
      %p193 = scmp.ne.s32.totalorder %s182, %s183
      %p194 = scmp.eq.s32.totalorder %s22, 0
      %p195 = por %p193, %p194
      %p196 = scmp.ne.s32.totalorder %s182, %s183
      %p197 = scmp.eq.s32.totalorder %s23, 1
      %p198 = por %p196, %p197
      %p200 = scmp.ne.s32.totalorder %s183, %s199
      %p201 = scmp.eq.s32.totalorder %s23, 0
      %p202 = por %p200, %p201
      %p203 = scmp.le.s32.totalorder 1, %s17
      %p204 = scmp.lt.s32.totalorder %s17, 3
      %p205 = pnand %p203, %p204
      %p206 = pneg %p205
      // Predicated region
      $region9: #{tpu_custom_call.1} parent=5 // pred_check
        _
      $region10: #{tpu_custom_call.1} parent=5 // pred_check_branch
        %208 = sbr.rel (%p205) target = $region12
      $region11: #{tpu_custom_call.1} parent=5 // pred_region
        %s209 = ssub.s32 %s17, 1
        // Predicated region
        $region13: #{tpu_custom_call.1} parent=11 // pred_check
          %p210 = pneg %p64
        $region14: #{tpu_custom_call.1} parent=11 // pred_check_branch
          %212 = sbr.rel (%p210) target = $region16
        $region15: #{tpu_custom_call.1} parent=11 // pred_region
          _
        $region16: #{tpu_custom_call.1} parent=11 // pred_fallthru
          _
        // Predicated region
        $region17: #{tpu_custom_call.1} parent=11 // pred_check
          %p213 = pneg %p85
        $region18: #{tpu_custom_call.1} parent=11 // pred_check_branch
          %215 = sbr.rel (%p213) target = $region20
        $region19: #{tpu_custom_call.1} parent=11 // pred_region
          _
        $region20: #{tpu_custom_call.1} parent=11 // pred_fallthru
          _
        // Predicated region
        $region21: #{tpu_custom_call.1} parent=11 // pred_check
          %p216 = pneg %p106
        $region22: #{tpu_custom_call.1} parent=11 // pred_check_branch
          %218 = sbr.rel (%p216) target = $region24
        $region23: #{tpu_custom_call.1} parent=11 // pred_region
          %s220 = ssub.s32 9216, 9216
          %221 = vsyncadd [#allocation4], %s220
          %s222 = sshll.u32 [#allocation3], 4
          %s223 = int_to_ptr.vmem [resolvable:$true] %s222
          %228 = dma.hbm_to_vmem [thread:$0]  %s3, 9216, %s223, [#allocation4], 64, 64, 4
        $region24: #{tpu_custom_call.1} parent=11 // pred_fallthru
          _
        // Predicated region
        $region25: #{tpu_custom_call.1} parent=11 // pred_check
          %p229 = pneg %p127
        $region26: #{tpu_custom_call.1} parent=11 // pred_check_branch
          %231 = sbr.rel (%p229) target = $region28
        $region27: #{tpu_custom_call.1} parent=11 // pred_region
          _
        $region28: #{tpu_custom_call.1} parent=11 // pred_fallthru
          _
        // Predicated region
        $region29: #{tpu_custom_call.1} parent=11 // pred_check
          %p232 = pneg %p148
        $region30: #{tpu_custom_call.1} parent=11 // pred_check_branch
          %234 = sbr.rel (%p232) target = $region32
        $region31: #{tpu_custom_call.1} parent=11 // pred_region
          _
        $region32: #{tpu_custom_call.1} parent=11 // pred_fallthru
          _
        // Predicated region
        $region33: #{tpu_custom_call.1} parent=11 // pred_check
          %p235 = pneg %p169
        $region34: #{tpu_custom_call.1} parent=11 // pred_check_branch
          %237 = sbr.rel (%p235) target = $region36
        $region35: #{tpu_custom_call.1} parent=11 // pred_region
          _
        $region36: #{tpu_custom_call.1} parent=11 // pred_fallthru
          _
      $region12: #{tpu_custom_call.1} parent=5 // pred_fallthru
        _
      %p238 = scmp.lt.s32.totalorder %s17, 2
      // Predicated region
      $region37: #{tpu_custom_call.1} parent=5 // pred_check
        %p239 = pneg %p238
      $region38: #{tpu_custom_call.1} parent=5 // pred_check_branch
        %241 = sbr.rel (%p239) target = $region40
      $region39: #{tpu_custom_call.1} parent=5 // pred_region
        // Predicated region
        $region41: #{tpu_custom_call.1} parent=39 // pred_check
          %p242 = pneg %p37
        $region42: #{tpu_custom_call.1} parent=39 // pred_check_branch
          %244 = sbr.rel (%p242) target = $region44
        $region43: #{tpu_custom_call.1} parent=39 // pred_region
          %p245 = scmp.lt.s32.totalorder %s17, 1
          %s246 = scalar_select %p245, %s17, 1
          %s247 = smul.addr %s246, 52
          %s248 = smul.addr %s247, 4
          %s249 = scalar_lea.vmem %s0, %s248
        $region44: #{tpu_custom_call.1} parent=39 // pred_fallthru
          _
      $region40: #{tpu_custom_call.1} parent=5 // pred_fallthru
        _
      %p250 = scmp.le.s32.totalorder 1, %s17
      %p251 = scmp.lt.s32.totalorder %s17, 3
      %p252 = pnand %p250, %p251
      %p253 = pneg %p252
      // Predicated region
      $region45: #{tpu_custom_call.1} parent=5 // pred_check
        _
      $region46: #{tpu_custom_call.1} parent=5 // pred_check_branch
        %255 = sbr.rel (%p252) target = $region48
      $region47: #{tpu_custom_call.1} parent=5 // pred_region
        %s256 = ssub.s32 %s17, 1
        // Predicated region
        $region49: #{tpu_custom_call.1} parent=47 // pred_check
          %p257 = pneg %p106
        $region50: #{tpu_custom_call.1} parent=47 // pred_check_branch
          %259 = sbr.rel (%p257) target = $region52
        $region51: #{tpu_custom_call.1} parent=47 // pred_region
          %260 = dma.done [#allocation4], 9216
        $region52: #{tpu_custom_call.1} parent=47 // pred_fallthru
          _
        %p261 = scmp.lt.s32.totalorder %s22, 1
        %s262 = scalar_select %p261, %s22, 1
        %s263 = smul.addr %s262, 52
        %s264 = smul.addr %s263, 4
        %s265 = scalar_lea.vmem %s0, %s264
        %p266 = pneg %p43
        %p267 = pneg %p40
        %p268 = pneg %p64
        %p269 = pneg %p61
        %p270 = pneg %p85
        %p271 = pneg %p82
        %p272 = pneg %p106
        %p273 = pneg %p103
        %p274 = pneg %p127
        %p275 = pneg %p124
        %p276 = pneg %p148
        %p277 = pneg %p145
        %p278 = pneg %p169
        %p279 = pneg %p166
        %p280 = pneg %p195
        %p281 = pneg %p192
        %s282 = sand.u32 %s182, 1
        %s283 = scalar_lea.sflag [#allocation5], %s282
        %s284 = sand.u32 %s182, 1
        %s285 = smul.addr %s284, 40
        %s286 = scalar_lea.vmem [#allocation6], %s285
        %p287 = scmp.lt.s32.totalorder %s22, 1
        %s288 = scalar_select %p287, %s22, 1
        %s289 = smul.addr %s288, 52
        %s290 = smul.addr %s289, 4
        %s291 = scalar_lea.vmem %s0, %s290
        %293 = vst [vmem:[#allocation2] sm:$0xf] 0
        %vm294 = vcmask 1041408
        %vm295 = vsmask.f32 1280
        %vm296 = vmand %vm294, %vm295
        %v297 = vld [vmem:[#allocation2 + $0x4] sm:$0x3]
        %v298 = vsel %vm296, 0, %v297
        %299 = vst [vmem:[#allocation2 + $0x4] sm:$0x3] %v298
        %vm300 = vcmask 1043457
        %vm301 = vsmask.f32 7942
        %vm302 = vmand %vm300, %vm301
        %v303 = vld [vmem:[#allocation2 + $0x2c] sm:$0xe]
        %v304 = vsel %vm302, 0, %v303
        %305 = vst [vmem:[#allocation2 + $0x2c] sm:$0xe] %v304
        %306 = vst [vmem:[#allocation2 + $0x30] sm:$0xf] 0
        %307 = vst [vmem:[#allocation2 + $0x34] sm:$0x7] 0
        %v308 = vlaneseq
        %v309 = vshrl.u32 %v308, 7
        %v310 = vadd.s32 %v309, 8
        %v311 = vadd.s32 %v309, 16
        %v312 = vadd.s32 %v309, 24
        %v313 = vadd.s32 %v309, 32
        %v314 = vadd.s32 %v309, 40
        %v315 = vadd.s32 %v309, 48
        %v316 = vadd.s32 %v309, 56
        %v317 = vadd.s32 %v309, 64
        %v318 = vadd.s32 %v309, 72
        %vm319 = vcmp.lt.s32.totalorder %v309, 0
        %v320 = vsub.s32 0, %v309
        %v321 = vsel %vm319, %v320, %v309
        %v322 = vmul.u32.u64.compose %v321, 3435973837
        %v323 = vextract.low.u32 %v322
        %v324 = vextract.high.u32 %v322
        %v325 = vshrl.u32 %v324, 3
        %v326 = vmul.u32 %v325, 10
        %v327 = vsub.s32 %v321, %v326
        %v328 = vsub.s32 0, %v327
        %v329 = vsel %vm319, %v328, %v327
        %vm330 = vcmp.lt.s32.totalorder %v310, 0
        %v331 = vsub.s32 0, %v310
        %v332 = vsel %vm330, %v331, %v310
        %v333 = vmul.u32.u64.compose %v332, 3435973837
        %v334 = vextract.low.u32 %v333
        %v335 = vextract.high.u32 %v333
        %v336 = vshrl.u32 %v335, 3
        %v337 = vmul.u32 %v336, 10
        %v338 = vsub.s32 %v332, %v337
        %v339 = vsub.s32 0, %v338
        %v340 = vsel %vm330, %v339, %v338
        %vm341 = vcmp.lt.s32.totalorder %v311, 0
        %v342 = vsub.s32 0, %v311
        %v343 = vsel %vm341, %v342, %v311
        %v344 = vmul.u32.u64.compose %v343, 3435973837
        %v345 = vextract.low.u32 %v344
        %v346 = vextract.high.u32 %v344
        %v347 = vshrl.u32 %v346, 3
        %v348 = vmul.u32 %v347, 10
        %v349 = vsub.s32 %v343, %v348
        %v350 = vsub.s32 0, %v349
        %v351 = vsel %vm341, %v350, %v349
        %vm352 = vcmp.lt.s32.totalorder %v312, 0
        %v353 = vsub.s32 0, %v312
        %v354 = vsel %vm352, %v353, %v312
        %v355 = vmul.u32.u64.compose %v354, 3435973837
        %v356 = vextract.low.u32 %v355
        %v357 = vextract.high.u32 %v355
        %v358 = vshrl.u32 %v357, 3
        %v359 = vmul.u32 %v358, 10
        %v360 = vsub.s32 %v354, %v359
        %v361 = vsub.s32 0, %v360
        %v362 = vsel %vm352, %v361, %v360
        %vm363 = vcmp.lt.s32.totalorder %v313, 0
        %v364 = vsub.s32 0, %v313
        %v365 = vsel %vm363, %v364, %v313
        %v366 = vmul.u32.u64.compose %v365, 3435973837
        %v367 = vextract.low.u32 %v366
        %v368 = vextract.high.u32 %v366
        %v369 = vshrl.u32 %v368, 3
        %v370 = vmul.u32 %v369, 10
        %v371 = vsub.s32 %v365, %v370
        %v372 = vsub.s32 0, %v371
        %v373 = vsel %vm363, %v372, %v371
        %vm374 = vcmp.lt.s32.totalorder %v314, 0
        %v375 = vsub.s32 0, %v314
        %v376 = vsel %vm374, %v375, %v314
        %v377 = vmul.u32.u64.compose %v376, 3435973837
        %v378 = vextract.low.u32 %v377
        %v379 = vextract.high.u32 %v377
        %v380 = vshrl.u32 %v379, 3
        %v381 = vmul.u32 %v380, 10
        %v382 = vsub.s32 %v376, %v381
        %v383 = vsub.s32 0, %v382
        %v384 = vsel %vm374, %v383, %v382
        %vm385 = vcmp.lt.s32.totalorder %v315, 0
        %v386 = vsub.s32 0, %v315
        %v387 = vsel %vm385, %v386, %v315
        %v388 = vmul.u32.u64.compose %v387, 3435973837
        %v389 = vextract.low.u32 %v388
        %v390 = vextract.high.u32 %v388
        %v391 = vshrl.u32 %v390, 3
        %v392 = vmul.u32 %v391, 10
        %v393 = vsub.s32 %v387, %v392
        %v394 = vsub.s32 0, %v393
        %v395 = vsel %vm385, %v394, %v393
        %vm396 = vcmp.lt.s32.totalorder %v316, 0
        %v397 = vsub.s32 0, %v316
        %v398 = vsel %vm396, %v397, %v316
        %v399 = vmul.u32.u64.compose %v398, 3435973837
        %v400 = vextract.low.u32 %v399
        %v401 = vextract.high.u32 %v399
        %v402 = vshrl.u32 %v401, 3
        %v403 = vmul.u32 %v402, 10
        %v404 = vsub.s32 %v398, %v403
        %v405 = vsub.s32 0, %v404
        %v406 = vsel %vm396, %v405, %v404
        %vm407 = vcmp.lt.s32.totalorder %v317, 0
        %v408 = vsub.s32 0, %v317
        %v409 = vsel %vm407, %v408, %v317
        %v410 = vmul.u32.u64.compose %v409, 3435973837
        %v411 = vextract.low.u32 %v410
        %v412 = vextract.high.u32 %v410
        %v413 = vshrl.u32 %v412, 3
        %v414 = vmul.u32 %v413, 10
        %v415 = vsub.s32 %v409, %v414
        %v416 = vsub.s32 0, %v415
        %v417 = vsel %vm407, %v416, %v415
        %vm418 = vcmp.lt.s32.totalorder %v318, 0
        %v419 = vsub.s32 0, %v318
        %v420 = vsel %vm418, %v419, %v318
        %v421 = vmul.u32.u64.compose %v420, 3435973837
        %v422 = vextract.low.u32 %v421
        %v423 = vextract.high.u32 %v421
        %v424 = vshrl.u32 %v423, 3
        %v425 = vmul.u32 %v424, 10
        %v426 = vsub.s32 %v420, %v425
        %v427 = vsub.s32 0, %v426
        %v428 = vsel %vm418, %v427, %v426
        %vm429 = vcmp.ne.s32.totalorder %v329, 0
        %vm430 = vcmp.ne.s32.totalorder %v340, 0
        %vm431 = vcmp.ne.s32.totalorder %v351, 0
        %vm432 = vcmp.ne.s32.totalorder %v362, 0
        %vm433 = vcmp.ne.s32.totalorder %v373, 0
        %vm434 = vcmp.ne.s32.totalorder %v384, 0
        %vm435 = vcmp.ne.s32.totalorder %v395, 0
        %vm436 = vcmp.ne.s32.totalorder %v406, 0
        %vm437 = vcmp.ne.s32.totalorder %v417, 0
        %vm438 = vcmp.ne.s32.totalorder %v428, 0
        %vm439 = vcmp.lt.s32.totalorder %v329, 0
        %vm440 = vcmp.lt.s32.totalorder %v340, 0
        %vm441 = vcmp.lt.s32.totalorder %v351, 0
        %vm442 = vcmp.lt.s32.totalorder %v362, 0
        %vm443 = vcmp.lt.s32.totalorder %v373, 0
        %vm444 = vcmp.lt.s32.totalorder %v384, 0
        %vm445 = vcmp.lt.s32.totalorder %v395, 0
        %vm446 = vcmp.lt.s32.totalorder %v406, 0
        %vm447 = vcmp.lt.s32.totalorder %v417, 0
        %vm448 = vcmp.lt.s32.totalorder %v428, 0
        %vm449 = vmand %vm439, %vm429
        %vm450 = vmand %vm440, %vm430
        %vm451 = vmand %vm441, %vm431
        %vm452 = vmand %vm442, %vm432
        %vm453 = vmand %vm443, %vm433
        %vm454 = vmand %vm444, %vm434
        %vm455 = vmand %vm445, %vm435
        %vm456 = vmand %vm446, %vm436
        %vm457 = vmand %vm447, %vm437
        %vm458 = vmand %vm448, %vm438
        %v459 = vadd.s32 %v329, 10
        %v460 = vadd.s32 %v340, 10
        %v461 = vadd.s32 %v351, 10
        %v462 = vadd.s32 %v362, 10
        %v463 = vadd.s32 %v373, 10
        %v464 = vadd.s32 %v384, 10
        %v465 = vadd.s32 %v395, 10
        %v466 = vadd.s32 %v406, 10
        %v467 = vadd.s32 %v417, 10
        %v468 = vadd.s32 %v428, 10
        %v469 = vsel %vm449, %v459, %v329
        %v470 = vsel %vm450, %v460, %v340
        %v471 = vsel %vm451, %v461, %v351
        %v472 = vsel %vm452, %v462, %v362
        %v473 = vsel %vm453, %v463, %v373
        %v474 = vsel %vm454, %v464, %v384
        %v475 = vsel %vm455, %v465, %v395
        %v476 = vsel %vm456, %v466, %v406
        %v477 = vsel %vm457, %v467, %v417
        %v478 = vsel %vm458, %v468, %v428
        %vm479 = vcmp.lt.s32.totalorder %v469, 8
        %vm480 = vcmp.lt.s32.totalorder %v470, 8
        %vm481 = vcmp.lt.s32.totalorder %v471, 8
        %vm482 = vcmp.lt.s32.totalorder %v472, 8
        %vm483 = vcmp.lt.s32.totalorder %v473, 8
        %vm484 = vcmp.lt.s32.totalorder %v474, 8
        %vm485 = vcmp.lt.s32.totalorder %v475, 8
        %vm486 = vcmp.lt.s32.totalorder %v476, 8
        %vm487 = vcmp.lt.s32.totalorder %v477, 8
        %vm488 = vcmp.lt.s32.totalorder %v478, 8
        %v489 = vld [vmem:[%s291] sm:$0xf]
        %v490 = vld [vmem:[%s291 + $0x4] sm:$0xf]
        %v491 = vld [vmem:[%s291 + $0x8] sm:$0xf]
        %v492 = vld [vmem:[%s291 + $0xc] sm:$0xf]
        %v493 = vld [vmem:[%s291 + $0x10] sm:$0xf]
        %v494 = vld [vmem:[%s291 + $0x14] sm:$0xf]
        %v495 = vld [vmem:[%s291 + $0x18] sm:$0xf]
        %v496 = vld [vmem:[%s291 + $0x1c] sm:$0xf]
        %v497 = vld [vmem:[%s291 + $0x20] sm:$0xf]
        %v498 = vld [vmem:[%s291 + $0x24] sm:$0xf]
        %v499 = vld [vmem:[%s1] sm:$0xf]
        %v500 = vld [vmem:[%s1 + $0x4] sm:$0xf]
        %s501 = scalar_lea.vmem %s291, 52
        %v502 = vld [vmem:[%s501] sm:$0xf]
        %v503 = vld [vmem:[%s501 + $0x4] sm:$0xf]
        %v504 = vld [vmem:[%s501 + $0x8] sm:$0xf]
        %v505 = vld [vmem:[%s501 + $0xc] sm:$0xf]
        %v506 = vld [vmem:[%s501 + $0x10] sm:$0xf]
        %v507 = vld [vmem:[%s501 + $0x14] sm:$0xf]
        %v508 = vld [vmem:[%s501 + $0x18] sm:$0xf]
        %v509 = vld [vmem:[%s501 + $0x1c] sm:$0xf]
        %v510 = vld [vmem:[%s501 + $0x20] sm:$0xf]
        %v511 = vld [vmem:[%s501 + $0x24] sm:$0xf]
        %s512 = scalar_lea.vmem %s1, 8
        %v513 = vld [vmem:[%s512] sm:$0xf]
        %v514 = vld [vmem:[%s512 + $0x4] sm:$0xf]
        %v525 = vunpack.c.l.b16 %v502
        %v526 = vunpack.c.l.b16 %v503
        %v527 = vunpack.c.l.b16 %v504
        %v528 = vunpack.c.l.b16 %v505
        %v529 = vunpack.c.l.b16 %v506
        %v530 = vunpack.c.l.b16 %v507
        %v531 = vunpack.c.l.b16 %v508
        %v532 = vunpack.c.l.b16 %v509
        %v533 = vunpack.c.l.b16 %v510
        %v534 = vunpack.c.l.b16 %v511
        %v535 = vpack.c.b16 %v526, %v525
        %v536 = vpack.c.b16 %v528, %v527
        %v537 = vpack.c.b16 %v530, %v529
        %v538 = vpack.c.b16 %v532, %v531
        %v539 = vpack.c.b16 %v534, %v533
        %v542 = vunpack.c.l.b16 %v513
        %v543 = vunpack.c.l.b16 %v514
        %v544 = vpack.c.b16 %v543, %v542
        %vm546 = vcmask 130048
        %v548 = vsel %vm546, %v535, 0
        %v551 = vsel %vm546, %v536, 0
        %v554 = vsel %vm546, %v537, 0
        %v557 = vsel %vm546, %v538, 0
        %v560 = vsel %vm546, %v539, 0
        %562 = vmatprep.subr.bf16.mxu0 0
        %563 = vmatpush1.bf16.msra.mxu0 %v544
        %564 = vmatprep.subr.bf16.mxu0 0
        %565 = vmatpush1.bf16.msra.mxu0 0
        %566 = vmatprep.subr.bf16.mxu0 0
        %567 = vmatpush1.bf16.msra.mxu0 0
        %568 = vmatprep.subr.bf16.mxu0 0
        %569 = vmatpush1.bf16.msra.mxu0 0
        %570 = vmatprep.subr.bf16.mxu0 0
        %571 = vmatpush1.bf16.msra.mxu0 0
        %572 = vmatprep.subr.bf16.mxu0 0
        %573 = vmatpush1.bf16.msra.mxu0 0
        %574 = vmatprep.subr.bf16.mxu0 0
        %575 = vmatpush1.bf16.msra.mxu0 0
        %576 = vmatprep.subr.bf16.mxu0 0
        %577 = vmatpush1.bf16.msra.mxu0 0
        %578 = vmatprep.subr.bf16.mxu0 0
        %579 = vmatpush1.bf16.msra.mxu0 0
        %580 = vmatprep.subr.bf16.mxu0 0
        %581 = vmatpush1.bf16.msra.mxu0 0
        %582 = vmatprep.subr.bf16.mxu0 0
        %583 = vmatpush1.bf16.msra.mxu0 0
        %584 = vmatprep.subr.bf16.mxu0 0
        %585 = vmatpush1.bf16.msra.mxu0 0
        %586 = vmatprep.subr.bf16.mxu0 0
        %587 = vmatpush1.bf16.msra.mxu0 0
        %588 = vmatprep.subr.bf16.mxu0 0
        %589 = vmatpush1.bf16.msra.mxu0 0
        %590 = vmatprep.subr.bf16.mxu0 0
        %591 = vmatpush1.bf16.msra.mxu0 0
        %592 = vmatprep.subr.bf16.mxu0 0
        %593 = vmatpush1.bf16.msra.mxu0 0
        %594 = vmatprep.mubr.bf16.mxu0 0
        %595 = vmatmul.mubr.bf16.gmra.mrb[0].mxu0 %v548
        %v596 = vpop.f32.mrb[0].mxu0
        %v597 = vadd.f32 0.0, %v596
        %v598 = vpop.f32.mrb[0].mxu0
        %v599 = vpop.f32.mrb[0].mxu0
        %v600 = vadd.f32 0.0, %v599
        %v601 = vpop.f32.mrb[0].mxu0
        %602 = vmatprep.mubr.bf16.mxu0 0
        %603 = vmatmul.mubr.bf16.gmra.mrb[0].mxu0 %v551
        %v604 = vpop.f32.mrb[0].mxu0
        %v605 = vadd.f32 0.0, %v604
        %v606 = vpop.f32.mrb[0].mxu0
        %v607 = vpop.f32.mrb[0].mxu0
        %v608 = vadd.f32 0.0, %v607
        %v609 = vpop.f32.mrb[0].mxu0
        %610 = vmatprep.mubr.bf16.mxu0 0
        %611 = vmatmul.mubr.bf16.gmra.mrb[0].mxu0 %v554
        %v612 = vpop.f32.mrb[0].mxu0
        %v613 = vadd.f32 0.0, %v612
        %v614 = vpop.f32.mrb[0].mxu0
        %v615 = vpop.f32.mrb[0].mxu0
        %v616 = vadd.f32 0.0, %v615
        %v617 = vpop.f32.mrb[0].mxu0
        %618 = vmatprep.mubr.bf16.mxu0 0
        %619 = vmatmul.mubr.bf16.gmra.mrb[0].mxu0 %v557
        %v620 = vpop.f32.mrb[0].mxu0
        %v621 = vadd.f32 0.0, %v620
        %v622 = vpop.f32.mrb[0].mxu0
        %v623 = vpop.f32.mrb[0].mxu0
        %v624 = vadd.f32 0.0, %v623
        %v625 = vpop.f32.mrb[0].mxu0
        %626 = vmatprep.mubr.bf16.mxu0 0
        %627 = vmatmul.mubr.bf16.gmra.mrb[0].mxu0 %v560
        %v628 = vpop.f32.mrb[0].mxu0
        %v629 = vadd.f32 0.0, %v628
        %v630 = vpop.f32.mrb[0].mxu0
        %v631 = vpop.f32.mrb[0].mxu0
        %v632 = vadd.f32 0.0, %v631
        %v633 = vpop.f32.mrb[0].mxu0
        %634 = vdwg.mxu0
        %v645 = vunpack.c.l.b16 %v489
        %v646 = vunpack.c.l.b16 %v490
        %v647 = vunpack.c.l.b16 %v491
        %v648 = vunpack.c.l.b16 %v492
        %v649 = vunpack.c.l.b16 %v493
        %v650 = vunpack.c.l.b16 %v494
        %v651 = vunpack.c.l.b16 %v495
        %v652 = vunpack.c.l.b16 %v496
        %v653 = vunpack.c.l.b16 %v497
        %v654 = vunpack.c.l.b16 %v498
        %v655 = vpack.c.b16 %v646, %v645
        %v656 = vpack.c.b16 %v648, %v647
        %v657 = vpack.c.b16 %v650, %v649
        %v658 = vpack.c.b16 %v652, %v651
        %v659 = vpack.c.b16 %v654, %v653
        %v662 = vunpack.c.l.b16 %v499
        %v663 = vunpack.c.l.b16 %v500
        %v664 = vpack.c.b16 %v663, %v662
        %v667 = vsel %vm546, %v655, 0
        %v670 = vsel %vm546, %v656, 0
        %v673 = vsel %vm546, %v657, 0
        %v676 = vsel %vm546, %v658, 0
        %v679 = vsel %vm546, %v659, 0
        %681 = vmatprep.subr.bf16.mxu0 0
        %682 = vmatpush1.bf16.msra.mxu0 %v664
        %683 = vmatprep.subr.bf16.mxu0 0
        %684 = vmatpush1.bf16.msra.mxu0 0
        %685 = vmatprep.subr.bf16.mxu0 0
        %686 = vmatpush1.bf16.msra.mxu0 0
        %687 = vmatprep.subr.bf16.mxu0 0
        %688 = vmatpush1.bf16.msra.mxu0 0
        %689 = vmatprep.subr.bf16.mxu0 0
        %690 = vmatpush1.bf16.msra.mxu0 0
        %691 = vmatprep.subr.bf16.mxu0 0
        %692 = vmatpush1.bf16.msra.mxu0 0
        %693 = vmatprep.subr.bf16.mxu0 0
        %694 = vmatpush1.bf16.msra.mxu0 0
        %695 = vmatprep.subr.bf16.mxu0 0
        %696 = vmatpush1.bf16.msra.mxu0 0
        %697 = vmatprep.subr.bf16.mxu0 0
        %698 = vmatpush1.bf16.msra.mxu0 0
        %699 = vmatprep.subr.bf16.mxu0 0
        %700 = vmatpush1.bf16.msra.mxu0 0
        %701 = vmatprep.subr.bf16.mxu0 0
        %702 = vmatpush1.bf16.msra.mxu0 0
        %703 = vmatprep.subr.bf16.mxu0 0
        %704 = vmatpush1.bf16.msra.mxu0 0
        %705 = vmatprep.subr.bf16.mxu0 0
        %706 = vmatpush1.bf16.msra.mxu0 0
        %707 = vmatprep.subr.bf16.mxu0 0
        %708 = vmatpush1.bf16.msra.mxu0 0
        %709 = vmatprep.subr.bf16.mxu0 0
        %710 = vmatpush1.bf16.msra.mxu0 0
        %711 = vmatprep.subr.bf16.mxu0 0
        %712 = vmatpush1.bf16.msra.mxu0 0
        %713 = vmatprep.mubr.bf16.mxu0 0
        %714 = vmatmul.mubr.bf16.gmra.mrb[0].mxu0 %v667
        %v715 = vpop.f32.mrb[0].mxu0
        %v716 = vadd.f32 %v597, %v715
        %v717 = vpop.f32.mrb[0].mxu0
        %v718 = vpop.f32.mrb[0].mxu0
        %v719 = vadd.f32 %v600, %v718
        %v720 = vpop.f32.mrb[0].mxu0
        %721 = vmatprep.mubr.bf16.mxu0 0
        %722 = vmatmul.mubr.bf16.gmra.mrb[0].mxu0 %v670
        %v723 = vpop.f32.mrb[0].mxu0
        %v724 = vadd.f32 %v605, %v723
        %v725 = vpop.f32.mrb[0].mxu0
        %v726 = vpop.f32.mrb[0].mxu0
        %v727 = vadd.f32 %v608, %v726
        %v728 = vpop.f32.mrb[0].mxu0
        %729 = vmatprep.mubr.bf16.mxu0 0
        %730 = vmatmul.mubr.bf16.gmra.mrb[0].mxu0 %v673
        %v731 = vpop.f32.mrb[0].mxu0
        %v732 = vadd.f32 %v613, %v731
        %v733 = vpop.f32.mrb[0].mxu0
        %v734 = vpop.f32.mrb[0].mxu0
        %v735 = vadd.f32 %v616, %v734
        %v736 = vpop.f32.mrb[0].mxu0
        %737 = vmatprep.mubr.bf16.mxu0 0
        %738 = vmatmul.mubr.bf16.gmra.mrb[0].mxu0 %v676
        %v739 = vpop.f32.mrb[0].mxu0
        %v740 = vadd.f32 %v621, %v739
        %v741 = vpop.f32.mrb[0].mxu0
        %v742 = vpop.f32.mrb[0].mxu0
        %v743 = vadd.f32 %v624, %v742
        %v744 = vpop.f32.mrb[0].mxu0
        %745 = vmatprep.mubr.bf16.mxu0 0
        %746 = vmatmul.mubr.bf16.gmra.mrb[0].mxu0 %v679
        %v747 = vpop.f32.mrb[0].mxu0
        %v748 = vadd.f32 %v629, %v747
        %v749 = vpop.f32.mrb[0].mxu0
        %v750 = vpop.f32.mrb[0].mxu0
        %v751 = vadd.f32 %v632, %v750
        %v752 = vpop.f32.mrb[0].mxu0
        %753 = vdwg.mxu0
        %v754 = vld [vmem:[%s291] sm:$0xf]
        %v755 = vld [vmem:[%s291 + $0x4] sm:$0xf]
        %v756 = vld [vmem:[%s291 + $0x8] sm:$0xf]
        %v757 = vld [vmem:[%s291 + $0xc] sm:$0xf]
        %v758 = vld [vmem:[%s291 + $0x10] sm:$0xf]
        %v759 = vld [vmem:[%s291 + $0x14] sm:$0xf]
        %v760 = vld [vmem:[%s291 + $0x18] sm:$0xf]
        %v761 = vld [vmem:[%s291 + $0x1c] sm:$0xf]
        %v762 = vld [vmem:[%s291 + $0x20] sm:$0xf]
        %v763 = vld [vmem:[%s291 + $0x24] sm:$0xf]
        %v764 = vld [vmem:[%s291 + $0x28] sm:$0x1]
        %s765 = scalar_lea.vmem %s1, 16
        %v766 = vld [vmem:[%s765] sm:$0xf]
        %v767 = vld [vmem:[%s765 + $0x4] sm:$0xf]
        %v779 = vunpack.c.l.b16 %v754
        %v780 = vunpack.c.l.b16 %v755
        %v781 = vunpack.c.l.b16 %v756
        %v782 = vunpack.c.l.b16 %v757
        %v783 = vunpack.c.l.b16 %v758
        %v784 = vunpack.c.l.b16 %v759
        %v785 = vunpack.c.l.b16 %v760
        %v786 = vunpack.c.l.b16 %v761
        %v787 = vunpack.c.l.b16 %v762
        %v788 = vunpack.c.l.b16 %v763
        %v789 = vunpack.c.l.b16 %v764
        %v790 = vpack.c.b16 %v780, %v779
        %v791 = vpack.c.b16 %v782, %v781
        %v792 = vpack.c.b16 %v784, %v783
        %v793 = vpack.c.b16 %v786, %v785
        %v794 = vpack.c.b16 %v788, %v787
        %v795 = vpack.c.b16 %v789, %v789
        %vm796 = vsmask.f32 7424
        %v798 = vshrl.u32 %v790, 16
        %v800 = vshll.u32 %v790, 16
        %v802 = vrot.slane %v800, 1
        %v803 = vor.u32 %v798, %v802
        %v805 = vshll.u32 %v791, 16
        %v807 = vrot.slane %v805, 1
        %v808 = vsel %vm796, %v803, %v807
        %v809 = vshrl.u32 %v791, 16
        %v811 = vor.u32 %v809, %v807
        %v813 = vshll.u32 %v792, 16
        %v815 = vrot.slane %v813, 1
        %v816 = vsel %vm796, %v811, %v815
        %v817 = vshrl.u32 %v792, 16
        %v819 = vor.u32 %v817, %v815
        %v821 = vshll.u32 %v793, 16
        %v823 = vrot.slane %v821, 1
        %v824 = vsel %vm796, %v819, %v823
        %v825 = vshrl.u32 %v793, 16
        %v827 = vor.u32 %v825, %v823
        %v829 = vshll.u32 %v794, 16
        %v831 = vrot.slane %v829, 1
        %v832 = vsel %vm796, %v827, %v831
        %v833 = vshrl.u32 %v794, 16
        %v835 = vor.u32 %v833, %v831
        %v837 = vshll.u32 %v795, 16
        %v839 = vrot.slane %v837, 1
        %v840 = vsel %vm796, %v835, %v839
        %v843 = vunpack.c.l.b16 %v766
        %v844 = vunpack.c.l.b16 %v767
        %v845 = vpack.c.b16 %v844, %v843
        %v848 = vsel %vm546, %v808, 0
        %v851 = vsel %vm546, %v816, 0
        %v854 = vsel %vm546, %v824, 0
        %v857 = vsel %vm546, %v832, 0
        %v860 = vsel %vm546, %v840, 0
        %862 = vmatprep.subr.bf16.mxu0 0
        %863 = vmatpush1.bf16.msra.mxu0 %v845
        %864 = vmatprep.subr.bf16.mxu0 0
        %865 = vmatpush1.bf16.msra.mxu0 0
        %866 = vmatprep.subr.bf16.mxu0 0
        %867 = vmatpush1.bf16.msra.mxu0 0
        %868 = vmatprep.subr.bf16.mxu0 0
        %869 = vmatpush1.bf16.msra.mxu0 0
        %870 = vmatprep.subr.bf16.mxu0 0
        %871 = vmatpush1.bf16.msra.mxu0 0
        %872 = vmatprep.subr.bf16.mxu0 0
        %873 = vmatpush1.bf16.msra.mxu0 0
        %874 = vmatprep.subr.bf16.mxu0 0
        %875 = vmatpush1.bf16.msra.mxu0 0
        %876 = vmatprep.subr.bf16.mxu0 0
        %877 = vmatpush1.bf16.msra.mxu0 0
        %878 = vmatprep.subr.bf16.mxu0 0
        %879 = vmatpush1.bf16.msra.mxu0 0
        %880 = vmatprep.subr.bf16.mxu0 0
        %881 = vmatpush1.bf16.msra.mxu0 0
        %882 = vmatprep.subr.bf16.mxu0 0
        %883 = vmatpush1.bf16.msra.mxu0 0
        %884 = vmatprep.subr.bf16.mxu0 0
        %885 = vmatpush1.bf16.msra.mxu0 0
        %886 = vmatprep.subr.bf16.mxu0 0
        %887 = vmatpush1.bf16.msra.mxu0 0
        %888 = vmatprep.subr.bf16.mxu0 0
        %889 = vmatpush1.bf16.msra.mxu0 0
        %890 = vmatprep.subr.bf16.mxu0 0
        %891 = vmatpush1.bf16.msra.mxu0 0
        %892 = vmatprep.subr.bf16.mxu0 0
        %893 = vmatpush1.bf16.msra.mxu0 0
        %894 = vmatprep.mubr.bf16.mxu0 0
        %895 = vmatmul.mubr.bf16.gmra.mrb[0].mxu0 %v848
        %v896 = vpop.f32.mrb[0].mxu0
        %v897 = vadd.f32 0.0, %v896
        %v898 = vpop.f32.mrb[0].mxu0
        %v899 = vpop.f32.mrb[0].mxu0
        %v900 = vadd.f32 0.0, %v899
        %v901 = vpop.f32.mrb[0].mxu0
        %902 = vmatprep.mubr.bf16.mxu0 0
        %903 = vmatmul.mubr.bf16.gmra.mrb[0].mxu0 %v851
        %v904 = vpop.f32.mrb[0].mxu0
        %v905 = vadd.f32 0.0, %v904
        %v906 = vpop.f32.mrb[0].mxu0
        %v907 = vpop.f32.mrb[0].mxu0
        %v908 = vadd.f32 0.0, %v907
        %v909 = vpop.f32.mrb[0].mxu0
        %910 = vmatprep.mubr.bf16.mxu0 0
        %911 = vmatmul.mubr.bf16.gmra.mrb[0].mxu0 %v854
        %v912 = vpop.f32.mrb[0].mxu0
        %v913 = vadd.f32 0.0, %v912
        %v914 = vpop.f32.mrb[0].mxu0
        %v915 = vpop.f32.mrb[0].mxu0
        %v916 = vadd.f32 0.0, %v915
        %v917 = vpop.f32.mrb[0].mxu0
        %918 = vmatprep.mubr.bf16.mxu0 0
        %919 = vmatmul.mubr.bf16.gmra.mrb[0].mxu0 %v857
        %v920 = vpop.f32.mrb[0].mxu0
        %v921 = vadd.f32 0.0, %v920
        %v922 = vpop.f32.mrb[0].mxu0
        %v923 = vpop.f32.mrb[0].mxu0
        %v924 = vadd.f32 0.0, %v923
        %v925 = vpop.f32.mrb[0].mxu0
        %926 = vmatprep.mubr.bf16.mxu0 0
        %927 = vmatmul.mubr.bf16.gmra.mrb[0].mxu0 %v860
        %v928 = vpop.f32.mrb[0].mxu0
        %v929 = vadd.f32 0.0, %v928
        %v930 = vpop.f32.mrb[0].mxu0
        %v931 = vpop.f32.mrb[0].mxu0
        %v932 = vadd.f32 0.0, %v931
        %v933 = vpop.f32.mrb[0].mxu0
        %934 = vdwg.mxu0
        %v935 = vadd.f32 %v716, %v897
        %v936 = vadd.f32 %v719, %v900
        %v937 = vadd.f32 %v724, %v905
        %v938 = vadd.f32 %v727, %v908
        %v939 = vadd.f32 %v732, %v913
        %v940 = vadd.f32 %v735, %v916
        %v941 = vadd.f32 %v740, %v921
        %v942 = vadd.f32 %v743, %v924
        %v943 = vadd.f32 %v748, %v929
        %v944 = vadd.f32 %v751, %v932
        %s945 = scalar_lea.vmem %s291, 104
        %v946 = vld [vmem:[%s945] sm:$0xf]
        %v947 = vld [vmem:[%s945 + $0x4] sm:$0xf]
        %v948 = vld [vmem:[%s945 + $0x8] sm:$0xf]
        %v949 = vld [vmem:[%s945 + $0xc] sm:$0xf]
        %v950 = vld [vmem:[%s945 + $0x10] sm:$0xf]
        %v951 = vld [vmem:[%s945 + $0x14] sm:$0xf]
        %v952 = vld [vmem:[%s945 + $0x18] sm:$0xf]
        %v953 = vld [vmem:[%s945 + $0x1c] sm:$0xf]
        %v954 = vld [vmem:[%s945 + $0x20] sm:$0xf]
        %v955 = vld [vmem:[%s945 + $0x24] sm:$0xf]
        %s956 = scalar_lea.vmem %s1, 24
        %v957 = vld [vmem:[%s956] sm:$0xf]
        %v958 = vld [vmem:[%s956 + $0x4] sm:$0xf]
        %v969 = vunpack.c.l.b16 %v946
        %v970 = vunpack.c.l.b16 %v947
        %v971 = vunpack.c.l.b16 %v948
        %v972 = vunpack.c.l.b16 %v949
        %v973 = vunpack.c.l.b16 %v950
        %v974 = vunpack.c.l.b16 %v951
        %v975 = vunpack.c.l.b16 %v952
        %v976 = vunpack.c.l.b16 %v953
        %v977 = vunpack.c.l.b16 %v954
        %v978 = vunpack.c.l.b16 %v955
        %v979 = vpack.c.b16 %v970, %v969
        %v980 = vpack.c.b16 %v972, %v971
        %v981 = vpack.c.b16 %v974, %v973
        %v982 = vpack.c.b16 %v976, %v975
        %v983 = vpack.c.b16 %v978, %v977
        %v986 = vunpack.c.l.b16 %v957
        %v987 = vunpack.c.l.b16 %v958
        %v988 = vpack.c.b16 %v987, %v986
        %v991 = vsel %vm546, %v979, 0
        %v994 = vsel %vm546, %v980, 0
        %v997 = vsel %vm546, %v981, 0
        %v1000 = vsel %vm546, %v982, 0
        %v1003 = vsel %vm546, %v983, 0
        %1005 = vmatprep.subr.bf16.mxu0 0
        %1006 = vmatpush1.bf16.msra.mxu0 %v988
        %1007 = vmatprep.subr.bf16.mxu0 0
        %1008 = vmatpush1.bf16.msra.mxu0 0
        %1009 = vmatprep.subr.bf16.mxu0 0
        %1010 = vmatpush1.bf16.msra.mxu0 0
        %1011 = vmatprep.subr.bf16.mxu0 0
        %1012 = vmatpush1.bf16.msra.mxu0 0
        %1013 = vmatprep.subr.bf16.mxu0 0
        %1014 = vmatpush1.bf16.msra.mxu0 0
        %1015 = vmatprep.subr.bf16.mxu0 0
        %1016 = vmatpush1.bf16.msra.mxu0 0
        %1017 = vmatprep.subr.bf16.mxu0 0
        %1018 = vmatpush1.bf16.msra.mxu0 0
        %1019 = vmatprep.subr.bf16.mxu0 0
        %1020 = vmatpush1.bf16.msra.mxu0 0
        %1021 = vmatprep.subr.bf16.mxu0 0
        %1022 = vmatpush1.bf16.msra.mxu0 0
        %1023 = vmatprep.subr.bf16.mxu0 0
        %1024 = vmatpush1.bf16.msra.mxu0 0
        %1025 = vmatprep.subr.bf16.mxu0 0
        %1026 = vmatpush1.bf16.msra.mxu0 0
        %1027 = vmatprep.subr.bf16.mxu0 0
        %1028 = vmatpush1.bf16.msra.mxu0 0
        %1029 = vmatprep.subr.bf16.mxu0 0
        %1030 = vmatpush1.bf16.msra.mxu0 0
        %1031 = vmatprep.subr.bf16.mxu0 0
        %1032 = vmatpush1.bf16.msra.mxu0 0
        %1033 = vmatprep.subr.bf16.mxu0 0
        %1034 = vmatpush1.bf16.msra.mxu0 0
        %1035 = vmatprep.subr.bf16.mxu0 0
        %1036 = vmatpush1.bf16.msra.mxu0 0
        %1037 = vmatprep.mubr.bf16.mxu0 0
        %1038 = vmatmul.mubr.bf16.gmra.mrb[0].mxu0 %v991
        %v1039 = vpop.f32.mrb[0].mxu0
        %v1040 = vadd.f32 0.0, %v1039
        %v1041 = vpop.f32.mrb[0].mxu0
        %v1042 = vpop.f32.mrb[0].mxu0
        %v1043 = vadd.f32 0.0, %v1042
        %v1044 = vpop.f32.mrb[0].mxu0
        %1045 = vmatprep.mubr.bf16.mxu0 0
        %1046 = vmatmul.mubr.bf16.gmra.mrb[0].mxu0 %v994
        %v1047 = vpop.f32.mrb[0].mxu0
        %v1048 = vadd.f32 0.0, %v1047
        %v1049 = vpop.f32.mrb[0].mxu0
        %v1050 = vpop.f32.mrb[0].mxu0
        %v1051 = vadd.f32 0.0, %v1050
        %v1052 = vpop.f32.mrb[0].mxu0
        %1053 = vmatprep.mubr.bf16.mxu0 0
        %1054 = vmatmul.mubr.bf16.gmra.mrb[0].mxu0 %v997
        %v1055 = vpop.f32.mrb[0].mxu0
        %v1056 = vadd.f32 0.0, %v1055
        %v1057 = vpop.f32.mrb[0].mxu0
        %v1058 = vpop.f32.mrb[0].mxu0
        %v1059 = vadd.f32 0.0, %v1058
        %v1060 = vpop.f32.mrb[0].mxu0
        %1061 = vmatprep.mubr.bf16.mxu0 0
        %1062 = vmatmul.mubr.bf16.gmra.mrb[0].mxu0 %v1000
        %v1063 = vpop.f32.mrb[0].mxu0
        %v1064 = vadd.f32 0.0, %v1063
        %v1065 = vpop.f32.mrb[0].mxu0
        %v1066 = vpop.f32.mrb[0].mxu0
        %v1067 = vadd.f32 0.0, %v1066
        %v1068 = vpop.f32.mrb[0].mxu0
        %1069 = vmatprep.mubr.bf16.mxu0 0
        %1070 = vmatmul.mubr.bf16.gmra.mrb[0].mxu0 %v1003
        %v1071 = vpop.f32.mrb[0].mxu0
        %v1072 = vadd.f32 0.0, %v1071
        %v1073 = vpop.f32.mrb[0].mxu0
        %v1074 = vpop.f32.mrb[0].mxu0
        %v1075 = vadd.f32 0.0, %v1074
        %v1076 = vpop.f32.mrb[0].mxu0
        %1077 = vdwg.mxu0
        %v1078 = vadd.f32 %v935, %v1040
        %v1079 = vadd.f32 %v936, %v1043
        %v1080 = vadd.f32 %v937, %v1048
        %v1081 = vadd.f32 %v938, %v1051
        %v1082 = vadd.f32 %v939, %v1056
        %v1083 = vadd.f32 %v940, %v1059
        %v1084 = vadd.f32 %v941, %v1064
        %v1085 = vadd.f32 %v942, %v1067
        %v1086 = vadd.f32 %v943, %v1072
        %v1087 = vadd.f32 %v944, %v1075
        %s1088 = scalar_lea.vmem %s291, 156
        %v1089 = vld [vmem:[%s1088] sm:$0xf]
        %v1090 = vld [vmem:[%s1088 + $0x4] sm:$0xf]
        %v1091 = vld [vmem:[%s1088 + $0x8] sm:$0xf]
        %v1092 = vld [vmem:[%s1088 + $0xc] sm:$0xf]
        %v1093 = vld [vmem:[%s1088 + $0x10] sm:$0xf]
        %v1094 = vld [vmem:[%s1088 + $0x14] sm:$0xf]
        %v1095 = vld [vmem:[%s1088 + $0x18] sm:$0xf]
        %v1096 = vld [vmem:[%s1088 + $0x1c] sm:$0xf]
        %v1097 = vld [vmem:[%s1088 + $0x20] sm:$0xf]
        %v1098 = vld [vmem:[%s1088 + $0x24] sm:$0xf]
        %s1099 = scalar_lea.vmem %s1, 32
        %v1100 = vld [vmem:[%s1099] sm:$0xf]
        %v1101 = vld [vmem:[%s1099 + $0x4] sm:$0xf]
        %v1112 = vunpack.c.l.b16 %v1089
        %v1113 = vunpack.c.l.b16 %v1090
        %v1114 = vunpack.c.l.b16 %v1091
        %v1115 = vunpack.c.l.b16 %v1092
        %v1116 = vunpack.c.l.b16 %v1093
        %v1117 = vunpack.c.l.b16 %v1094
        %v1118 = vunpack.c.l.b16 %v1095
        %v1119 = vunpack.c.l.b16 %v1096
        %v1120 = vunpack.c.l.b16 %v1097
        %v1121 = vunpack.c.l.b16 %v1098
        %v1122 = vpack.c.b16 %v1113, %v1112
        %v1123 = vpack.c.b16 %v1115, %v1114
        %v1124 = vpack.c.b16 %v1117, %v1116
        %v1125 = vpack.c.b16 %v1119, %v1118
        %v1126 = vpack.c.b16 %v1121, %v1120
        %v1129 = vunpack.c.l.b16 %v1100
        %v1130 = vunpack.c.l.b16 %v1101
        %v1131 = vpack.c.b16 %v1130, %v1129
        %v1134 = vsel %vm546, %v1122, 0
        %v1137 = vsel %vm546, %v1123, 0
        %v1140 = vsel %vm546, %v1124, 0
        %v1143 = vsel %vm546, %v1125, 0
        %v1146 = vsel %vm546, %v1126, 0
        %1148 = vmatprep.subr.bf16.mxu0 0
        %1149 = vmatpush1.bf16.msra.mxu0 %v1131
        %1150 = vmatprep.subr.bf16.mxu0 0
        %1151 = vmatpush1.bf16.msra.mxu0 0
        %1152 = vmatprep.subr.bf16.mxu0 0
        %1153 = vmatpush1.bf16.msra.mxu0 0
        %1154 = vmatprep.subr.bf16.mxu0 0
        %1155 = vmatpush1.bf16.msra.mxu0 0
        %1156 = vmatprep.subr.bf16.mxu0 0
        %1157 = vmatpush1.bf16.msra.mxu0 0
        %1158 = vmatprep.subr.bf16.mxu0 0
        %1159 = vmatpush1.bf16.msra.mxu0 0
        %1160 = vmatprep.subr.bf16.mxu0 0
        %1161 = vmatpush1.bf16.msra.mxu0 0
        %1162 = vmatprep.subr.bf16.mxu0 0
        %1163 = vmatpush1.bf16.msra.mxu0 0
        %1164 = vmatprep.subr.bf16.mxu0 0
        %1165 = vmatpush1.bf16.msra.mxu0 0
        %1166 = vmatprep.subr.bf16.mxu0 0
        %1167 = vmatpush1.bf16.msra.mxu0 0
        %1168 = vmatprep.subr.bf16.mxu0 0
        %1169 = vmatpush1.bf16.msra.mxu0 0
        %1170 = vmatprep.subr.bf16.mxu0 0
        %1171 = vmatpush1.bf16.msra.mxu0 0
        %1172 = vmatprep.subr.bf16.mxu0 0
        %1173 = vmatpush1.bf16.msra.mxu0 0
        %1174 = vmatprep.subr.bf16.mxu0 0
        %1175 = vmatpush1.bf16.msra.mxu0 0
        %1176 = vmatprep.subr.bf16.mxu0 0
        %1177 = vmatpush1.bf16.msra.mxu0 0
        %1178 = vmatprep.subr.bf16.mxu0 0
        %1179 = vmatpush1.bf16.msra.mxu0 0
        %1180 = vmatprep.mubr.bf16.mxu0 0
        %1181 = vmatmul.mubr.bf16.gmra.mrb[0].mxu0 %v1134
        %v1182 = vpop.f32.mrb[0].mxu0
        %v1183 = vadd.f32 0.0, %v1182
        %v1184 = vpop.f32.mrb[0].mxu0
        %v1185 = vpop.f32.mrb[0].mxu0
        %v1186 = vadd.f32 0.0, %v1185
        %v1187 = vpop.f32.mrb[0].mxu0
        %1188 = vmatprep.mubr.bf16.mxu0 0
        %1189 = vmatmul.mubr.bf16.gmra.mrb[0].mxu0 %v1137
        %v1190 = vpop.f32.mrb[0].mxu0
        %v1191 = vadd.f32 0.0, %v1190
        %v1192 = vpop.f32.mrb[0].mxu0
        %v1193 = vpop.f32.mrb[0].mxu0
        %v1194 = vadd.f32 0.0, %v1193
        %v1195 = vpop.f32.mrb[0].mxu0
        %1196 = vmatprep.mubr.bf16.mxu0 0
        %1197 = vmatmul.mubr.bf16.gmra.mrb[0].mxu0 %v1140
        %v1198 = vpop.f32.mrb[0].mxu0
        %v1199 = vadd.f32 0.0, %v1198
        %v1200 = vpop.f32.mrb[0].mxu0
        %v1201 = vpop.f32.mrb[0].mxu0
        %v1202 = vadd.f32 0.0, %v1201
        %v1203 = vpop.f32.mrb[0].mxu0
        %1204 = vmatprep.mubr.bf16.mxu0 0
        %1205 = vmatmul.mubr.bf16.gmra.mrb[0].mxu0 %v1143
        %v1206 = vpop.f32.mrb[0].mxu0
        %v1207 = vadd.f32 0.0, %v1206
        %v1208 = vpop.f32.mrb[0].mxu0
        %v1209 = vpop.f32.mrb[0].mxu0
        %v1210 = vadd.f32 0.0, %v1209
        %v1211 = vpop.f32.mrb[0].mxu0
        %1212 = vmatprep.mubr.bf16.mxu0 0
        %1213 = vmatmul.mubr.bf16.gmra.mrb[0].mxu0 %v1146
        %v1214 = vpop.f32.mrb[0].mxu0
        %v1215 = vadd.f32 0.0, %v1214
        %v1216 = vpop.f32.mrb[0].mxu0
        %v1217 = vpop.f32.mrb[0].mxu0
        %v1218 = vadd.f32 0.0, %v1217
        %v1219 = vpop.f32.mrb[0].mxu0
        %1220 = vdwg.mxu0
        %v1221 = vadd.f32 %v1078, %v1183
        %v1222 = vadd.f32 %v1079, %v1186
        %v1223 = vadd.f32 %v1080, %v1191
        %v1224 = vadd.f32 %v1081, %v1194
        %v1225 = vadd.f32 %v1082, %v1199
        %v1226 = vadd.f32 %v1083, %v1202
        %v1227 = vadd.f32 %v1084, %v1207
        %v1228 = vadd.f32 %v1085, %v1210
        %v1229 = vadd.f32 %v1086, %v1215
        %v1230 = vadd.f32 %v1087, %v1218
        %v1231 = vld [vmem:[%s945] sm:$0xf]
        %v1232 = vld [vmem:[%s945 + $0x4] sm:$0xf]
        %v1233 = vld [vmem:[%s945 + $0x8] sm:$0xf]
        %v1234 = vld [vmem:[%s945 + $0xc] sm:$0xf]
        %v1235 = vld [vmem:[%s945 + $0x10] sm:$0xf]
        %v1236 = vld [vmem:[%s945 + $0x14] sm:$0xf]
        %v1237 = vld [vmem:[%s945 + $0x18] sm:$0xf]
        %v1238 = vld [vmem:[%s945 + $0x1c] sm:$0xf]
        %v1239 = vld [vmem:[%s945 + $0x20] sm:$0xf]
        %v1240 = vld [vmem:[%s945 + $0x24] sm:$0xf]
        %v1241 = vld [vmem:[%s945 + $0x28] sm:$0x1]
        %s1242 = scalar_lea.vmem %s1, 40
        %v1243 = vld [vmem:[%s1242] sm:$0xf]
        %v1244 = vld [vmem:[%s1242 + $0x4] sm:$0xf]
        %v1256 = vunpack.c.l.b16 %v1231
        %v1257 = vunpack.c.l.b16 %v1232
        %v1258 = vunpack.c.l.b16 %v1233
        %v1259 = vunpack.c.l.b16 %v1234
        %v1260 = vunpack.c.l.b16 %v1235
        %v1261 = vunpack.c.l.b16 %v1236
        %v1262 = vunpack.c.l.b16 %v1237
        %v1263 = vunpack.c.l.b16 %v1238
        %v1264 = vunpack.c.l.b16 %v1239
        %v1265 = vunpack.c.l.b16 %v1240
        %v1266 = vunpack.c.l.b16 %v1241
        %v1267 = vpack.c.b16 %v1257, %v1256
        %v1268 = vpack.c.b16 %v1259, %v1258
        %v1269 = vpack.c.b16 %v1261, %v1260
        %v1270 = vpack.c.b16 %v1263, %v1262
        %v1271 = vpack.c.b16 %v1265, %v1264
        %v1272 = vpack.c.b16 %v1266, %v1266
        %v1274 = vshrl.u32 %v1267, 16
        %v1276 = vshll.u32 %v1267, 16
        %v1278 = vrot.slane %v1276, 1
        %v1279 = vor.u32 %v1274, %v1278
        %v1281 = vshll.u32 %v1268, 16
        %v1283 = vrot.slane %v1281, 1
        %v1284 = vsel %vm796, %v1279, %v1283
        %v1285 = vshrl.u32 %v1268, 16
        %v1287 = vor.u32 %v1285, %v1283
        %v1289 = vshll.u32 %v1269, 16
        %v1291 = vrot.slane %v1289, 1
        %v1292 = vsel %vm796, %v1287, %v1291
        %v1293 = vshrl.u32 %v1269, 16
        %v1295 = vor.u32 %v1293, %v1291
        %v1297 = vshll.u32 %v1270, 16
        %v1299 = vrot.slane %v1297, 1
        %v1300 = vsel %vm796, %v1295, %v1299
        %v1301 = vshrl.u32 %v1270, 16
        %v1303 = vor.u32 %v1301, %v1299
        %v1305 = vshll.u32 %v1271, 16
        %v1307 = vrot.slane %v1305, 1
        %v1308 = vsel %vm796, %v1303, %v1307
        %v1309 = vshrl.u32 %v1271, 16
        %v1311 = vor.u32 %v1309, %v1307
        %v1313 = vshll.u32 %v1272, 16
        %v1315 = vrot.slane %v1313, 1
        %v1316 = vsel %vm796, %v1311, %v1315
        %v1319 = vunpack.c.l.b16 %v1243
        %v1320 = vunpack.c.l.b16 %v1244
        %v1321 = vpack.c.b16 %v1320, %v1319
        %v1324 = vsel %vm546, %v1284, 0
        %v1327 = vsel %vm546, %v1292, 0
        %v1330 = vsel %vm546, %v1300, 0
        %v1333 = vsel %vm546, %v1308, 0
        %v1336 = vsel %vm546, %v1316, 0
        %1338 = vmatprep.subr.bf16.mxu0 0
        %1339 = vmatpush1.bf16.msra.mxu0 %v1321
        %1340 = vmatprep.subr.bf16.mxu0 0
        %1341 = vmatpush1.bf16.msra.mxu0 0
        %1342 = vmatprep.subr.bf16.mxu0 0
        %1343 = vmatpush1.bf16.msra.mxu0 0
        %1344 = vmatprep.subr.bf16.mxu0 0
        %1345 = vmatpush1.bf16.msra.mxu0 0
        %1346 = vmatprep.subr.bf16.mxu0 0
        %1347 = vmatpush1.bf16.msra.mxu0 0
        %1348 = vmatprep.subr.bf16.mxu0 0
        %1349 = vmatpush1.bf16.msra.mxu0 0
        %1350 = vmatprep.subr.bf16.mxu0 0
        %1351 = vmatpush1.bf16.msra.mxu0 0
        %1352 = vmatprep.subr.bf16.mxu0 0
        %1353 = vmatpush1.bf16.msra.mxu0 0
        %1354 = vmatprep.subr.bf16.mxu0 0
        %1355 = vmatpush1.bf16.msra.mxu0 0
        %1356 = vmatprep.subr.bf16.mxu0 0
        %1357 = vmatpush1.bf16.msra.mxu0 0
        %1358 = vmatprep.subr.bf16.mxu0 0
        %1359 = vmatpush1.bf16.msra.mxu0 0
        %1360 = vmatprep.subr.bf16.mxu0 0
        %1361 = vmatpush1.bf16.msra.mxu0 0
        %1362 = vmatprep.subr.bf16.mxu0 0
        %1363 = vmatpush1.bf16.msra.mxu0 0
        %1364 = vmatprep.subr.bf16.mxu0 0
        %1365 = vmatpush1.bf16.msra.mxu0 0
        %1366 = vmatprep.subr.bf16.mxu0 0
        %1367 = vmatpush1.bf16.msra.mxu0 0
        %1368 = vmatprep.subr.bf16.mxu0 0
        %1369 = vmatpush1.bf16.msra.mxu0 0
        %1370 = vmatprep.mubr.bf16.mxu0 0
        %1371 = vmatmul.mubr.bf16.gmra.mrb[0].mxu0 %v1324
        %v1372 = vpop.f32.mrb[0].mxu0
        %v1373 = vadd.f32 0.0, %v1372
        %v1374 = vpop.f32.mrb[0].mxu0
        %v1375 = vpop.f32.mrb[0].mxu0
        %v1376 = vadd.f32 0.0, %v1375
        %v1377 = vpop.f32.mrb[0].mxu0
        %1378 = vmatprep.mubr.bf16.mxu0 0
        %1379 = vmatmul.mubr.bf16.gmra.mrb[0].mxu0 %v1327
        %v1380 = vpop.f32.mrb[0].mxu0
        %v1381 = vadd.f32 0.0, %v1380
        %v1382 = vpop.f32.mrb[0].mxu0
        %v1383 = vpop.f32.mrb[0].mxu0
        %v1384 = vadd.f32 0.0, %v1383
        %v1385 = vpop.f32.mrb[0].mxu0
        %1386 = vmatprep.mubr.bf16.mxu0 0
        %1387 = vmatmul.mubr.bf16.gmra.mrb[0].mxu0 %v1330
        %v1388 = vpop.f32.mrb[0].mxu0
        %v1389 = vadd.f32 0.0, %v1388
        %v1390 = vpop.f32.mrb[0].mxu0
        %v1391 = vpop.f32.mrb[0].mxu0
        %v1392 = vadd.f32 0.0, %v1391
        %v1393 = vpop.f32.mrb[0].mxu0
        %1394 = vmatprep.mubr.bf16.mxu0 0
        %1395 = vmatmul.mubr.bf16.gmra.mrb[0].mxu0 %v1333
        %v1396 = vpop.f32.mrb[0].mxu0
        %v1397 = vadd.f32 0.0, %v1396
        %v1398 = vpop.f32.mrb[0].mxu0
        %v1399 = vpop.f32.mrb[0].mxu0
        %v1400 = vadd.f32 0.0, %v1399
        %v1401 = vpop.f32.mrb[0].mxu0
        %1402 = vmatprep.mubr.bf16.mxu0 0
        %1403 = vmatmul.mubr.bf16.gmra.mrb[0].mxu0 %v1336
        %v1404 = vpop.f32.mrb[0].mxu0
        %v1405 = vadd.f32 0.0, %v1404
        %v1406 = vpop.f32.mrb[0].mxu0
        %v1407 = vpop.f32.mrb[0].mxu0
        %v1408 = vadd.f32 0.0, %v1407
        %v1409 = vpop.f32.mrb[0].mxu0
        %1410 = vdwg.mxu0
        %v1411 = vadd.f32 %v1221, %v1373
        %v1412 = vadd.f32 %v1222, %v1376
        %v1413 = vadd.f32 %v1223, %v1381
        %v1414 = vadd.f32 %v1224, %v1384
        %v1415 = vadd.f32 %v1225, %v1389
        %v1416 = vadd.f32 %v1226, %v1392
        %v1417 = vadd.f32 %v1227, %v1397
        %v1418 = vadd.f32 %v1228, %v1400
        %v1419 = vadd.f32 %v1229, %v1405
        %v1420 = vadd.f32 %v1230, %v1408
        %v1421 = vld [vmem:[%s291 + $0x4] sm:$0xe]
        %v1422 = vld [vmem:[%s291 + $0x8] sm:$0xf]
        %v1423 = vld [vmem:[%s291 + $0xc] sm:$0xf]
        %v1424 = vld [vmem:[%s291 + $0x10] sm:$0xf]
        %v1425 = vld [vmem:[%s291 + $0x14] sm:$0xf]
        %v1426 = vld [vmem:[%s291 + $0x18] sm:$0xf]
        %v1427 = vld [vmem:[%s291 + $0x1c] sm:$0xf]
        %v1428 = vld [vmem:[%s291 + $0x20] sm:$0xf]
        %v1429 = vld [vmem:[%s291 + $0x24] sm:$0xf]
        %v1430 = vld [vmem:[%s291 + $0x28] sm:$0xf]
        %v1431 = vld [vmem:[%s291 + $0x2c] sm:$0x1]
        %s1432 = scalar_lea.vmem %s1, 48
        %v1433 = vld [vmem:[%s1432] sm:$0xf]
        %v1434 = vld [vmem:[%s1432 + $0x4] sm:$0xf]
        %v1446 = vunpack.c.l.b16 %v1421
        %v1447 = vunpack.c.l.b16 %v1422
        %v1448 = vunpack.c.l.b16 %v1423
        %v1449 = vunpack.c.l.b16 %v1424
        %v1450 = vunpack.c.l.b16 %v1425
        %v1451 = vunpack.c.l.b16 %v1426
        %v1452 = vunpack.c.l.b16 %v1427
        %v1453 = vunpack.c.l.b16 %v1428
        %v1454 = vunpack.c.l.b16 %v1429
        %v1455 = vunpack.c.l.b16 %v1430
        %v1456 = vunpack.c.l.b16 %v1431
        %v1457 = vpack.c.b16 %v1447, %v1446
        %v1458 = vpack.c.b16 %v1449, %v1448
        %v1459 = vpack.c.b16 %v1451, %v1450
        %v1460 = vpack.c.b16 %v1453, %v1452
        %v1461 = vpack.c.b16 %v1455, %v1454
        %v1462 = vpack.c.b16 %v1456, %v1456
        %vm1463 = vcmask 1046528
        %v1464 = vrot.slane %v1457, 1
        %v1465 = vrot.slane %v1458, 1
        %v1466 = vsel %vm1463, %v1464, %v1465
        %v1467 = vrot.slane %v1459, 1
        %v1468 = vsel %vm1463, %v1465, %v1467
        %v1469 = vrot.slane %v1460, 1
        %v1470 = vsel %vm1463, %v1467, %v1469
        %v1471 = vrot.slane %v1461, 1
        %v1472 = vsel %vm1463, %v1469, %v1471
        %v1473 = vrot.slane %v1462, 1
        %v1474 = vsel %vm1463, %v1471, %v1473
        %v1477 = vunpack.c.l.b16 %v1433
        %v1478 = vunpack.c.l.b16 %v1434
        %v1479 = vpack.c.b16 %v1478, %v1477
        %v1482 = vsel %vm546, %v1466, 0
        %v1485 = vsel %vm546, %v1468, 0
        %v1488 = vsel %vm546, %v1470, 0
        %v1491 = vsel %vm546, %v1472, 0
        %v1494 = vsel %vm546, %v1474, 0
        %1496 = vmatprep.subr.bf16.mxu0 0
        %1497 = vmatpush1.bf16.msra.mxu0 %v1479
        %1498 = vmatprep.subr.bf16.mxu0 0
        %1499 = vmatpush1.bf16.msra.mxu0 0
        %1500 = vmatprep.subr.bf16.mxu0 0
        %1501 = vmatpush1.bf16.msra.mxu0 0
        %1502 = vmatprep.subr.bf16.mxu0 0
        %1503 = vmatpush1.bf16.msra.mxu0 0
        %1504 = vmatprep.subr.bf16.mxu0 0
        %1505 = vmatpush1.bf16.msra.mxu0 0
        %1506 = vmatprep.subr.bf16.mxu0 0
        %1507 = vmatpush1.bf16.msra.mxu0 0
        %1508 = vmatprep.subr.bf16.mxu0 0
        %1509 = vmatpush1.bf16.msra.mxu0 0
        %1510 = vmatprep.subr.bf16.mxu0 0
        %1511 = vmatpush1.bf16.msra.mxu0 0
        %1512 = vmatprep.subr.bf16.mxu0 0
        %1513 = vmatpush1.bf16.msra.mxu0 0
        %1514 = vmatprep.subr.bf16.mxu0 0
        %1515 = vmatpush1.bf16.msra.mxu0 0
        %1516 = vmatprep.subr.bf16.mxu0 0
        %1517 = vmatpush1.bf16.msra.mxu0 0
        %1518 = vmatprep.subr.bf16.mxu0 0
        %1519 = vmatpush1.bf16.msra.mxu0 0
        %1520 = vmatprep.subr.bf16.mxu0 0
        %1521 = vmatpush1.bf16.msra.mxu0 0
        %1522 = vmatprep.subr.bf16.mxu0 0
        %1523 = vmatpush1.bf16.msra.mxu0 0
        %1524 = vmatprep.subr.bf16.mxu0 0
        %1525 = vmatpush1.bf16.msra.mxu0 0
        %1526 = vmatprep.subr.bf16.mxu0 0
        %1527 = vmatpush1.bf16.msra.mxu0 0
        %1528 = vmatprep.mubr.bf16.mxu0 0
        %1529 = vmatmul.mubr.bf16.gmra.mrb[0].mxu0 %v1482
        %v1530 = vpop.f32.mrb[0].mxu0
        %v1531 = vadd.f32 0.0, %v1530
        %v1532 = vpop.f32.mrb[0].mxu0
        %v1533 = vpop.f32.mrb[0].mxu0
        %v1534 = vadd.f32 0.0, %v1533
        %v1535 = vpop.f32.mrb[0].mxu0
        %1536 = vmatprep.mubr.bf16.mxu0 0
        %1537 = vmatmul.mubr.bf16.gmra.mrb[0].mxu0 %v1485
        %v1538 = vpop.f32.mrb[0].mxu0
        %v1539 = vadd.f32 0.0, %v1538
        %v1540 = vpop.f32.mrb[0].mxu0
        %v1541 = vpop.f32.mrb[0].mxu0
        %v1542 = vadd.f32 0.0, %v1541
        %v1543 = vpop.f32.mrb[0].mxu0
        %1544 = vmatprep.mubr.bf16.mxu0 0
        %1545 = vmatmul.mubr.bf16.gmra.mrb[0].mxu0 %v1488
        %v1546 = vpop.f32.mrb[0].mxu0
        %v1547 = vadd.f32 0.0, %v1546
        %v1548 = vpop.f32.mrb[0].mxu0
        %v1549 = vpop.f32.mrb[0].mxu0
        %v1550 = vadd.f32 0.0, %v1549
        %v1551 = vpop.f32.mrb[0].mxu0
        %1552 = vmatprep.mubr.bf16.mxu0 0
        %1553 = vmatmul.mubr.bf16.gmra.mrb[0].mxu0 %v1491
        %v1554 = vpop.f32.mrb[0].mxu0
        %v1555 = vadd.f32 0.0, %v1554
        %v1556 = vpop.f32.mrb[0].mxu0
        %v1557 = vpop.f32.mrb[0].mxu0
        %v1558 = vadd.f32 0.0, %v1557
        %v1559 = vpop.f32.mrb[0].mxu0
        %1560 = vmatprep.mubr.bf16.mxu0 0
        %1561 = vmatmul.mubr.bf16.gmra.mrb[0].mxu0 %v1494
        %v1562 = vpop.f32.mrb[0].mxu0
        %v1563 = vadd.f32 0.0, %v1562
        %v1564 = vpop.f32.mrb[0].mxu0
        %v1565 = vpop.f32.mrb[0].mxu0
        %v1566 = vadd.f32 0.0, %v1565
        %v1567 = vpop.f32.mrb[0].mxu0
        %1568 = vdwg.mxu0
        %v1569 = vadd.f32 %v1411, %v1531
        %v1570 = vadd.f32 %v1412, %v1534
        %v1571 = vadd.f32 %v1413, %v1539
        %v1572 = vadd.f32 %v1414, %v1542
        %v1573 = vadd.f32 %v1415, %v1547
        %v1574 = vadd.f32 %v1416, %v1550
        %v1575 = vadd.f32 %v1417, %v1555
        %v1576 = vadd.f32 %v1418, %v1558
        %v1577 = vadd.f32 %v1419, %v1563
        %v1578 = vadd.f32 %v1420, %v1566
        %v1579 = vld [vmem:[%s501 + $0x4] sm:$0xe]
        %v1580 = vld [vmem:[%s501 + $0x8] sm:$0xf]
        %v1581 = vld [vmem:[%s501 + $0xc] sm:$0xf]
        %v1582 = vld [vmem:[%s501 + $0x10] sm:$0xf]
        %v1583 = vld [vmem:[%s501 + $0x14] sm:$0xf]
        %v1584 = vld [vmem:[%s501 + $0x18] sm:$0xf]
        %v1585 = vld [vmem:[%s501 + $0x1c] sm:$0xf]
        %v1586 = vld [vmem:[%s501 + $0x20] sm:$0xf]
        %v1587 = vld [vmem:[%s501 + $0x24] sm:$0xf]
        %v1588 = vld [vmem:[%s501 + $0x28] sm:$0xf]
        %v1589 = vld [vmem:[%s501 + $0x2c] sm:$0x1]
        %s1590 = scalar_lea.vmem %s1, 56
        %v1591 = vld [vmem:[%s1590] sm:$0xf]
        %v1592 = vld [vmem:[%s1590 + $0x4] sm:$0xf]
        %v1604 = vunpack.c.l.b16 %v1579
        %v1605 = vunpack.c.l.b16 %v1580
        %v1606 = vunpack.c.l.b16 %v1581
        %v1607 = vunpack.c.l.b16 %v1582
        %v1608 = vunpack.c.l.b16 %v1583
        %v1609 = vunpack.c.l.b16 %v1584
        %v1610 = vunpack.c.l.b16 %v1585
        %v1611 = vunpack.c.l.b16 %v1586
        %v1612 = vunpack.c.l.b16 %v1587
        %v1613 = vunpack.c.l.b16 %v1588
        %v1614 = vunpack.c.l.b16 %v1589
        %v1615 = vpack.c.b16 %v1605, %v1604
        %v1616 = vpack.c.b16 %v1607, %v1606
        %v1617 = vpack.c.b16 %v1609, %v1608
        %v1618 = vpack.c.b16 %v1611, %v1610
        %v1619 = vpack.c.b16 %v1613, %v1612
        %v1620 = vpack.c.b16 %v1614, %v1614
        %v1621 = vrot.slane %v1615, 1
        %v1622 = vrot.slane %v1616, 1
        %v1623 = vsel %vm1463, %v1621, %v1622
        %v1624 = vrot.slane %v1617, 1
        %v1625 = vsel %vm1463, %v1622, %v1624
        %v1626 = vrot.slane %v1618, 1
        %v1627 = vsel %vm1463, %v1624, %v1626
        %v1628 = vrot.slane %v1619, 1
        %v1629 = vsel %vm1463, %v1626, %v1628
        %v1630 = vrot.slane %v1620, 1
        %v1631 = vsel %vm1463, %v1628, %v1630
        %v1634 = vunpack.c.l.b16 %v1591
        %v1635 = vunpack.c.l.b16 %v1592
        %v1636 = vpack.c.b16 %v1635, %v1634
        %v1639 = vsel %vm546, %v1623, 0
        %v1642 = vsel %vm546, %v1625, 0
        %v1645 = vsel %vm546, %v1627, 0
        %v1648 = vsel %vm546, %v1629, 0
        %v1651 = vsel %vm546, %v1631, 0
        %1653 = vmatprep.subr.bf16.mxu0 0
        %1654 = vmatpush1.bf16.msra.mxu0 %v1636
        %1655 = vmatprep.subr.bf16.mxu0 0
        %1656 = vmatpush1.bf16.msra.mxu0 0
        %1657 = vmatprep.subr.bf16.mxu0 0
        %1658 = vmatpush1.bf16.msra.mxu0 0
        %1659 = vmatprep.subr.bf16.mxu0 0
        %1660 = vmatpush1.bf16.msra.mxu0 0
        %1661 = vmatprep.subr.bf16.mxu0 0
        %1662 = vmatpush1.bf16.msra.mxu0 0
        %1663 = vmatprep.subr.bf16.mxu0 0
        %1664 = vmatpush1.bf16.msra.mxu0 0
        %1665 = vmatprep.subr.bf16.mxu0 0
        %1666 = vmatpush1.bf16.msra.mxu0 0
        %1667 = vmatprep.subr.bf16.mxu0 0
        %1668 = vmatpush1.bf16.msra.mxu0 0
        %1669 = vmatprep.subr.bf16.mxu0 0
        %1670 = vmatpush1.bf16.msra.mxu0 0
        %1671 = vmatprep.subr.bf16.mxu0 0
        %1672 = vmatpush1.bf16.msra.mxu0 0
        %1673 = vmatprep.subr.bf16.mxu0 0
        %1674 = vmatpush1.bf16.msra.mxu0 0
        %1675 = vmatprep.subr.bf16.mxu0 0
        %1676 = vmatpush1.bf16.msra.mxu0 0
        %1677 = vmatprep.subr.bf16.mxu0 0
        %1678 = vmatpush1.bf16.msra.mxu0 0
        %1679 = vmatprep.subr.bf16.mxu0 0
        %1680 = vmatpush1.bf16.msra.mxu0 0
        %1681 = vmatprep.subr.bf16.mxu0 0
        %1682 = vmatpush1.bf16.msra.mxu0 0
        %1683 = vmatprep.subr.bf16.mxu0 0
        %1684 = vmatpush1.bf16.msra.mxu0 0
        %1685 = vmatprep.mubr.bf16.mxu0 0
        %1686 = vmatmul.mubr.bf16.gmra.mrb[0].mxu0 %v1639
        %v1687 = vpop.f32.mrb[0].mxu0
        %v1688 = vadd.f32 0.0, %v1687
        %v1689 = vpop.f32.mrb[0].mxu0
        %v1690 = vpop.f32.mrb[0].mxu0
        %v1691 = vadd.f32 0.0, %v1690
        %v1692 = vpop.f32.mrb[0].mxu0
        %1693 = vmatprep.mubr.bf16.mxu0 0
        %1694 = vmatmul.mubr.bf16.gmra.mrb[0].mxu0 %v1642
        %v1695 = vpop.f32.mrb[0].mxu0
        %v1696 = vadd.f32 0.0, %v1695
        %v1697 = vpop.f32.mrb[0].mxu0
        %v1698 = vpop.f32.mrb[0].mxu0
        %v1699 = vadd.f32 0.0, %v1698
        %v1700 = vpop.f32.mrb[0].mxu0
        %1701 = vmatprep.mubr.bf16.mxu0 0
        %1702 = vmatmul.mubr.bf16.gmra.mrb[0].mxu0 %v1645
        %v1703 = vpop.f32.mrb[0].mxu0
        %v1704 = vadd.f32 0.0, %v1703
        %v1705 = vpop.f32.mrb[0].mxu0
        %v1706 = vpop.f32.mrb[0].mxu0
        %v1707 = vadd.f32 0.0, %v1706
        %v1708 = vpop.f32.mrb[0].mxu0
        %1709 = vmatprep.mubr.bf16.mxu0 0
        %1710 = vmatmul.mubr.bf16.gmra.mrb[0].mxu0 %v1648
        %v1711 = vpop.f32.mrb[0].mxu0
        %v1712 = vadd.f32 0.0, %v1711
        %v1713 = vpop.f32.mrb[0].mxu0
        %v1714 = vpop.f32.mrb[0].mxu0
        %v1715 = vadd.f32 0.0, %v1714
        %v1716 = vpop.f32.mrb[0].mxu0
        %1717 = vmatprep.mubr.bf16.mxu0 0
        %1718 = vmatmul.mubr.bf16.gmra.mrb[0].mxu0 %v1651
        %v1719 = vpop.f32.mrb[0].mxu0
        %v1720 = vadd.f32 0.0, %v1719
        %v1721 = vpop.f32.mrb[0].mxu0
        %v1722 = vpop.f32.mrb[0].mxu0
        %v1723 = vadd.f32 0.0, %v1722
        %v1724 = vpop.f32.mrb[0].mxu0
        %1725 = vdwg.mxu0
        %v1726 = vadd.f32 %v1569, %v1688
        %v1727 = vadd.f32 %v1570, %v1691
        %v1728 = vadd.f32 %v1571, %v1696
        %v1729 = vadd.f32 %v1572, %v1699
        %v1730 = vadd.f32 %v1573, %v1704
        %v1731 = vadd.f32 %v1574, %v1707
        %v1732 = vadd.f32 %v1575, %v1712
        %v1733 = vadd.f32 %v1576, %v1715
        %v1734 = vadd.f32 %v1577, %v1720
        %v1735 = vadd.f32 %v1578, %v1723
        %v1736 = vld [vmem:[%s291 + $0x2c] sm:$0x3]
        %s1737 = scalar_lea.vmem %s1, 64
        %v1738 = vld [vmem:[%s1737] sm:$0xf]
        %v1739 = vld [vmem:[%s1737 + $0x4] sm:$0xf]
        %v1741 = vunpack.c.l.b16 %v1736
        %v1742 = vpack.c.b16 %v1741, %v1741
        %vm1743 = vsmask.f32 6400
        %v1745 = vshrl.u32 %v1457, 16
        %v1747 = vrot.slane %v1745, 1
        %v1748 = vshll.u32 %v1457, 16
        %v1750 = vrot.slane %v1748, 2
        %v1751 = vor.u32 %v1747, %v1750
        %v1753 = vshrl.u32 %v1458, 16
        %v1755 = vrot.slane %v1753, 1
        %v1756 = vshll.u32 %v1458, 16
        %v1758 = vrot.slane %v1756, 2
        %v1759 = vor.u32 %v1755, %v1758
        %v1760 = vsel %vm1743, %v1751, %v1759
        %v1762 = vshrl.u32 %v1459, 16
        %v1764 = vrot.slane %v1762, 1
        %v1765 = vshll.u32 %v1459, 16
        %v1767 = vrot.slane %v1765, 2
        %v1768 = vor.u32 %v1764, %v1767
        %v1769 = vsel %vm1743, %v1759, %v1768
        %v1771 = vshrl.u32 %v1460, 16
        %v1773 = vrot.slane %v1771, 1
        %v1774 = vshll.u32 %v1460, 16
        %v1776 = vrot.slane %v1774, 2
        %v1777 = vor.u32 %v1773, %v1776
        %v1778 = vsel %vm1743, %v1768, %v1777
        %v1780 = vshrl.u32 %v1461, 16
        %v1782 = vrot.slane %v1780, 1
        %v1783 = vshll.u32 %v1461, 16
        %v1785 = vrot.slane %v1783, 2
        %v1786 = vor.u32 %v1782, %v1785
        %v1787 = vsel %vm1743, %v1777, %v1786
        %v1789 = vshrl.u32 %v1742, 16
        %v1791 = vrot.slane %v1789, 1
        %v1792 = vshll.u32 %v1742, 16
        %v1794 = vrot.slane %v1792, 2
        %v1795 = vor.u32 %v1791, %v1794
        %v1796 = vsel %vm1743, %v1786, %v1795
        %v1799 = vunpack.c.l.b16 %v1738
        %v1800 = vunpack.c.l.b16 %v1739
        %v1801 = vpack.c.b16 %v1800, %v1799
        %v1804 = vsel %vm546, %v1760, 0
        %v1807 = vsel %vm546, %v1769, 0
        %v1810 = vsel %vm546, %v1778, 0
        %v1813 = vsel %vm546, %v1787, 0
        %v1816 = vsel %vm546, %v1796, 0
        %1818 = vmatprep.subr.bf16.mxu0 0
        %1819 = vmatpush1.bf16.msra.mxu0 %v1801
        %1820 = vmatprep.subr.bf16.mxu0 0
        %1821 = vmatpush1.bf16.msra.mxu0 0
        %1822 = vmatprep.subr.bf16.mxu0 0
        %1823 = vmatpush1.bf16.msra.mxu0 0
        %1824 = vmatprep.subr.bf16.mxu0 0
        %1825 = vmatpush1.bf16.msra.mxu0 0
        %1826 = vmatprep.subr.bf16.mxu0 0
        %1827 = vmatpush1.bf16.msra.mxu0 0
        %1828 = vmatprep.subr.bf16.mxu0 0
        %1829 = vmatpush1.bf16.msra.mxu0 0
        %1830 = vmatprep.subr.bf16.mxu0 0
        %1831 = vmatpush1.bf16.msra.mxu0 0
        %1832 = vmatprep.subr.bf16.mxu0 0
        %1833 = vmatpush1.bf16.msra.mxu0 0
        %1834 = vmatprep.subr.bf16.mxu0 0
        %1835 = vmatpush1.bf16.msra.mxu0 0
        %1836 = vmatprep.subr.bf16.mxu0 0
        %1837 = vmatpush1.bf16.msra.mxu0 0
        %1838 = vmatprep.subr.bf16.mxu0 0
        %1839 = vmatpush1.bf16.msra.mxu0 0
        %1840 = vmatprep.subr.bf16.mxu0 0
        %1841 = vmatpush1.bf16.msra.mxu0 0
        %1842 = vmatprep.subr.bf16.mxu0 0
        %1843 = vmatpush1.bf16.msra.mxu0 0
        %1844 = vmatprep.subr.bf16.mxu0 0
        %1845 = vmatpush1.bf16.msra.mxu0 0
        %1846 = vmatprep.subr.bf16.mxu0 0
        %1847 = vmatpush1.bf16.msra.mxu0 0
        %1848 = vmatprep.subr.bf16.mxu0 0
        %1849 = vmatpush1.bf16.msra.mxu0 0
        %1850 = vmatprep.mubr.bf16.mxu0 0
        %1851 = vmatmul.mubr.bf16.gmra.mrb[0].mxu0 %v1804
        %v1852 = vpop.f32.mrb[0].mxu0
        %v1853 = vadd.f32 0.0, %v1852
        %v1854 = vpop.f32.mrb[0].mxu0
        %v1855 = vpop.f32.mrb[0].mxu0
        %v1856 = vadd.f32 0.0, %v1855
        %v1857 = vpop.f32.mrb[0].mxu0
        %1858 = vmatprep.mubr.bf16.mxu0 0
        %1859 = vmatmul.mubr.bf16.gmra.mrb[0].mxu0 %v1807
        %v1860 = vpop.f32.mrb[0].mxu0
        %v1861 = vadd.f32 0.0, %v1860
        %v1862 = vpop.f32.mrb[0].mxu0
        %v1863 = vpop.f32.mrb[0].mxu0
        %v1864 = vadd.f32 0.0, %v1863
        %v1865 = vpop.f32.mrb[0].mxu0
        %1866 = vmatprep.mubr.bf16.mxu0 0
        %1867 = vmatmul.mubr.bf16.gmra.mrb[0].mxu0 %v1810
        %v1868 = vpop.f32.mrb[0].mxu0
        %v1869 = vadd.f32 0.0, %v1868
        %v1870 = vpop.f32.mrb[0].mxu0
        %v1871 = vpop.f32.mrb[0].mxu0
        %v1872 = vadd.f32 0.0, %v1871
        %v1873 = vpop.f32.mrb[0].mxu0
        %1874 = vmatprep.mubr.bf16.mxu0 0
        %1875 = vmatmul.mubr.bf16.gmra.mrb[0].mxu0 %v1813
        %v1876 = vpop.f32.mrb[0].mxu0
        %v1877 = vadd.f32 0.0, %v1876
        %v1878 = vpop.f32.mrb[0].mxu0
        %v1879 = vpop.f32.mrb[0].mxu0
        %v1880 = vadd.f32 0.0, %v1879
        %v1881 = vpop.f32.mrb[0].mxu0
        %1882 = vmatprep.mubr.bf16.mxu0 0
        %1883 = vmatmul.mubr.bf16.gmra.mrb[0].mxu0 %v1816
        %v1884 = vpop.f32.mrb[0].mxu0
        %v1885 = vadd.f32 0.0, %v1884
        %v1886 = vpop.f32.mrb[0].mxu0
        %v1887 = vpop.f32.mrb[0].mxu0
        %v1888 = vadd.f32 0.0, %v1887
        %v1889 = vpop.f32.mrb[0].mxu0
        %1890 = vdwg.mxu0
        %v1891 = vadd.f32 %v1726, %v1853
        %v1892 = vadd.f32 %v1727, %v1856
        %v1893 = vadd.f32 %v1728, %v1861
        %v1894 = vadd.f32 %v1729, %v1864
        %v1895 = vadd.f32 %v1730, %v1869
        %v1896 = vadd.f32 %v1731, %v1872
        %v1897 = vadd.f32 %v1732, %v1877
        %v1898 = vadd.f32 %v1733, %v1880
        %v1899 = vadd.f32 %v1734, %v1885
        %v1900 = vadd.f32 %v1735, %v1888
        %v1901 = vld [vmem:[%s2] sm:$0x1]
        %v1903 = vlaneseq
        %v1904 = vshrl.u32 %v1903, 7
        %v1905 = vsub.s32 0, %v1904
        %v1906 = vrot.slane %v1901, %v1905
        %v1908 = vadd.f32 %v1891, %v1906
        %v1909 = vadd.f32 %v1892, %v1906
        %v1910 = vadd.f32 %v1893, %v1906
        %v1911 = vadd.f32 %v1894, %v1906
        %v1912 = vadd.f32 %v1895, %v1906
        %v1913 = vadd.f32 %v1896, %v1906
        %v1914 = vadd.f32 %v1897, %v1906
        %v1915 = vadd.f32 %v1898, %v1906
        %v1916 = vadd.f32 %v1899, %v1906
        %v1917 = vadd.f32 %v1900, %v1906
        %v1918 = vmax.f32 %v1908, 0.0
        %v1919 = vmax.f32 %v1909, 0.0
        %v1920 = vmax.f32 %v1910, 0.0
        %v1921 = vmax.f32 %v1911, 0.0
        %v1922 = vmax.f32 %v1912, 0.0
        %v1923 = vmax.f32 %v1913, 0.0
        %v1924 = vmax.f32 %v1914, 0.0
        %v1925 = vmax.f32 %v1915, 0.0
        %v1926 = vmax.f32 %v1916, 0.0
        %v1927 = vmax.f32 %v1917, 0.0
        %v1928 = vsel %vm479, 1, 0
        %v1929 = vsel %vm480, 1, 0
        %v1930 = vsel %vm481, 1, 0
        %v1931 = vsel %vm482, 1, 0
        %v1932 = vsel %vm483, 1, 0
        %v1933 = vsel %vm484, 1, 0
        %v1934 = vsel %vm485, 1, 0
        %v1935 = vsel %vm486, 1, 0
        %v1936 = vsel %vm487, 1, 0
        %v1937 = vsel %vm488, 1, 0
        %vm1938 = vcmp.eq.s32.totalorder %v1928, 1
        %vm1939 = vcmp.eq.s32.totalorder %v1929, 1
        %vm1940 = vcmp.eq.s32.totalorder %v1930, 1
        %vm1941 = vcmp.eq.s32.totalorder %v1931, 1
        %vm1942 = vcmp.eq.s32.totalorder %v1932, 1
        %vm1943 = vcmp.eq.s32.totalorder %v1933, 1
        %vm1944 = vcmp.eq.s32.totalorder %v1934, 1
        %vm1945 = vcmp.eq.s32.totalorder %v1935, 1
        %vm1946 = vcmp.eq.s32.totalorder %v1936, 1
        %vm1947 = vcmp.eq.s32.totalorder %v1937, 1
        %v1948 = vsel %vm1938, %v1918, 0.0
        %v1949 = vsel %vm1939, %v1919, 0.0
        %v1950 = vsel %vm1940, %v1920, 0.0
        %v1951 = vsel %vm1941, %v1921, 0.0
        %v1952 = vsel %vm1942, %v1922, 0.0
        %v1953 = vsel %vm1943, %v1923, 0.0
        %v1954 = vsel %vm1944, %v1924, 0.0
        %v1955 = vsel %vm1945, %v1925, 0.0
        %v1956 = vsel %vm1946, %v1926, 0.0
        %v1957 = vsel %vm1947, %v1927, 0.0
        %v1958 = vpack.c.bf16 %v1949, %v1948
        %v1959 = vpack.c.bf16 %v1951, %v1950
        %v1960 = vpack.c.bf16 %v1953, %v1952
        %v1961 = vpack.c.bf16 %v1955, %v1954
        %v1962 = vpack.c.bf16 %v1957, %v1956
        %v1968 = vunpack.c.l.b16 %v1958
        %v1969 = vunpack.c.h.b16 %v1958
        %v1970 = vunpack.c.l.b16 %v1959
        %v1971 = vunpack.c.h.b16 %v1959
        %v1972 = vunpack.c.l.b16 %v1960
        %v1973 = vunpack.c.h.b16 %v1960
        %v1974 = vunpack.c.l.b16 %v1961
        %v1975 = vunpack.c.h.b16 %v1961
        %v1976 = vunpack.c.l.b16 %v1962
        %v1977 = vunpack.c.h.b16 %v1962
        %v1978 = vpack.c.b16 %v1968, %v1968
        %v1979 = vpack.c.b16 %v1969, %v1969
        %v1980 = vpack.c.b16 %v1970, %v1970
        %v1981 = vpack.c.b16 %v1971, %v1971
        %v1982 = vpack.c.b16 %v1972, %v1972
        %v1983 = vpack.c.b16 %v1973, %v1973
        %v1984 = vpack.c.b16 %v1974, %v1974
        %v1985 = vpack.c.b16 %v1975, %v1975
        %v1986 = vpack.c.b16 %v1976, %v1976
        %v1987 = vpack.c.b16 %v1977, %v1977
        %vm1988 = vsmask.f32 5392
        %vm1989 = vmor %vm295, %vm1988
        %v1991 = vshrl.u32 %v1978, 16
        %v1993 = vrot.slane %v1991, 6
        %v1994 = vshll.u32 %v1978, 16
        %v1996 = vrot.slane %v1994, 7
        %v1997 = vor.u32 %v1993, %v1996
        %v1998 = vrot.slane %v1997, 4
        %v2000 = vshrl.u32 %v1979, 16
        %v2002 = vrot.slane %v2000, 6
        %v2003 = vshll.u32 %v1979, 16
        %v2005 = vrot.slane %v2003, 7
        %v2006 = vor.u32 %v2002, %v2005
        %v2007 = vsel %vm1989, %v1998, %v2006
        %v2008 = vrot.slane %v2006, 4
        %v2010 = vshrl.u32 %v1980, 16
        %v2012 = vrot.slane %v2010, 6
        %v2013 = vshll.u32 %v1980, 16
        %v2015 = vrot.slane %v2013, 7
        %v2016 = vor.u32 %v2012, %v2015
        %v2017 = vsel %vm1989, %v2008, %v2016
        %v2018 = vrot.slane %v2016, 4
        %v2020 = vshrl.u32 %v1981, 16
        %v2022 = vrot.slane %v2020, 6
        %v2023 = vshll.u32 %v1981, 16
        %v2025 = vrot.slane %v2023, 7
        %v2026 = vor.u32 %v2022, %v2025
        %v2027 = vsel %vm1989, %v2018, %v2026
        %v2028 = vrot.slane %v2026, 4
        %v2030 = vshrl.u32 %v1982, 16
        %v2032 = vrot.slane %v2030, 6
        %v2033 = vshll.u32 %v1982, 16
        %v2035 = vrot.slane %v2033, 7
        %v2036 = vor.u32 %v2032, %v2035
        %v2037 = vsel %vm1989, %v2028, %v2036
        %v2038 = vrot.slane %v2036, 4
        %v2040 = vshrl.u32 %v1983, 16
        %v2042 = vrot.slane %v2040, 6
        %v2043 = vshll.u32 %v1983, 16
        %v2045 = vrot.slane %v2043, 7
        %v2046 = vor.u32 %v2042, %v2045
        %v2047 = vsel %vm1989, %v2038, %v2046
        %v2048 = vrot.slane %v2046, 4
        %v2050 = vshrl.u32 %v1984, 16
        %v2052 = vrot.slane %v2050, 6
        %v2053 = vshll.u32 %v1984, 16
        %v2055 = vrot.slane %v2053, 7
        %v2056 = vor.u32 %v2052, %v2055
        %v2057 = vsel %vm1989, %v2048, %v2056
        %v2058 = vrot.slane %v2056, 4
        %v2060 = vshrl.u32 %v1985, 16
        %v2062 = vrot.slane %v2060, 6
        %v2063 = vshll.u32 %v1985, 16
        %v2065 = vrot.slane %v2063, 7
        %v2066 = vor.u32 %v2062, %v2065
        %v2067 = vsel %vm1989, %v2058, %v2066
        %v2068 = vrot.slane %v2066, 4
        %v2070 = vshrl.u32 %v1986, 16
        %v2072 = vrot.slane %v2070, 6
        %v2073 = vshll.u32 %v1986, 16
        %v2075 = vrot.slane %v2073, 7
        %v2076 = vor.u32 %v2072, %v2075
        %v2077 = vsel %vm1989, %v2068, %v2076
        %v2078 = vrot.slane %v2076, 4
        %v2080 = vshrl.u32 %v1987, 16
        %v2082 = vrot.slane %v2080, 6
        %v2083 = vshll.u32 %v1987, 16
        %v2085 = vrot.slane %v2083, 7
        %v2086 = vor.u32 %v2082, %v2085
        %v2087 = vsel %vm1989, %v2078, %v2086
        %v2088 = vrot.slane %v2086, 4
        %v2100 = vld [vmem:[#allocation2 + $0x4] sm:$0xe]
        %v2101 = vsel %vm302, %v1997, %v2100
        %2102 = vst [vmem:[#allocation2 + $0x4] sm:$0xe] %v2101
        %2103 = vst [vmem:[#allocation2 + $0x8] sm:$0xf] %v2007
        %2104 = vst [vmem:[#allocation2 + $0xc] sm:$0xf] %v2017
        %2105 = vst [vmem:[#allocation2 + $0x10] sm:$0xf] %v2027
        %2106 = vst [vmem:[#allocation2 + $0x14] sm:$0xf] %v2037
        %2107 = vst [vmem:[#allocation2 + $0x18] sm:$0xf] %v2047
        %2108 = vst [vmem:[#allocation2 + $0x1c] sm:$0xf] %v2057
        %2109 = vst [vmem:[#allocation2 + $0x20] sm:$0xf] %v2067
        %2110 = vst [vmem:[#allocation2 + $0x24] sm:$0xf] %v2077
        %2111 = vst [vmem:[#allocation2 + $0x28] sm:$0xf] %v2087
        %v2112 = vld [vmem:[#allocation2 + $0x2c] sm:$0x3]
        %v2113 = vsel %vm296, %v2088, %v2112
        %2114 = vst [vmem:[#allocation2 + $0x2c] sm:$0x3] %v2113
        %v2115 = vld [vmem:[%s1088] sm:$0xf]
        %v2116 = vld [vmem:[%s1088 + $0x4] sm:$0xf]
        %v2117 = vld [vmem:[%s1088 + $0x8] sm:$0xf]
        %v2118 = vld [vmem:[%s1088 + $0xc] sm:$0xf]
        %v2119 = vld [vmem:[%s1088 + $0x10] sm:$0xf]
        %v2120 = vld [vmem:[%s1088 + $0x14] sm:$0xf]
        %v2121 = vld [vmem:[%s1088 + $0x18] sm:$0xf]
        %v2122 = vld [vmem:[%s1088 + $0x1c] sm:$0xf]
        %v2123 = vld [vmem:[%s1088 + $0x20] sm:$0xf]
        %v2124 = vld [vmem:[%s1088 + $0x24] sm:$0xf]
        %v2125 = vld [vmem:[%s5] sm:$0xf]
        %v2126 = vld [vmem:[%s5 + $0x4] sm:$0xf]
        %v2127 = vld [vmem:[%s4] sm:$0x1]
        %v2128 = vld [vmem:[%s6] sm:$0x1]
        %v2129 = vadd.f32 %v2127, %v2128
        %v2131 = vlaneseq
        %v2132 = vshrl.u32 %v2131, 7
        %v2133 = vsub.s32 0, %v2132
        %v2134 = vrot.slane %v2129, %v2133
        %v2146 = vunpack.c.l.b16 %v2115
        %v2147 = vunpack.c.l.b16 %v2116
        %v2148 = vunpack.c.l.b16 %v2117
        %v2149 = vunpack.c.l.b16 %v2118
        %v2150 = vunpack.c.l.b16 %v2119
        %v2151 = vunpack.c.l.b16 %v2120
        %v2152 = vunpack.c.l.b16 %v2121
        %v2153 = vunpack.c.l.b16 %v2122
        %v2154 = vunpack.c.l.b16 %v2123
        %v2155 = vunpack.c.l.b16 %v2124
        %v2156 = vpack.c.b16 %v2147, %v2146
        %v2157 = vpack.c.b16 %v2149, %v2148
        %v2158 = vpack.c.b16 %v2151, %v2150
        %v2159 = vpack.c.b16 %v2153, %v2152
        %v2160 = vpack.c.b16 %v2155, %v2154
        %v2163 = vunpack.c.l.b16 %v2125
        %v2164 = vunpack.c.l.b16 %v2126
        %v2165 = vpack.c.b16 %v2164, %v2163
        %v2168 = vsel %vm546, %v2156, 0
        %v2171 = vsel %vm546, %v2157, 0
        %v2174 = vsel %vm546, %v2158, 0
        %v2177 = vsel %vm546, %v2159, 0
        %v2180 = vsel %vm546, %v2160, 0
        %2182 = vmatprep.subr.bf16.mxu0 0
        %2183 = vmatpush1.bf16.msra.mxu0 %v2165
        %2184 = vmatprep.subr.bf16.mxu0 0
        %2185 = vmatpush1.bf16.msra.mxu0 0
        %2186 = vmatprep.subr.bf16.mxu0 0
        %2187 = vmatpush1.bf16.msra.mxu0 0
        %2188 = vmatprep.subr.bf16.mxu0 0
        %2189 = vmatpush1.bf16.msra.mxu0 0
        %2190 = vmatprep.subr.bf16.mxu0 0
        %2191 = vmatpush1.bf16.msra.mxu0 0
        %2192 = vmatprep.subr.bf16.mxu0 0
        %2193 = vmatpush1.bf16.msra.mxu0 0
        %2194 = vmatprep.subr.bf16.mxu0 0
        %2195 = vmatpush1.bf16.msra.mxu0 0
        %2196 = vmatprep.subr.bf16.mxu0 0
        %2197 = vmatpush1.bf16.msra.mxu0 0
        %2198 = vmatprep.subr.bf16.mxu0 0
        %2199 = vmatpush1.bf16.msra.mxu0 0
        %2200 = vmatprep.subr.bf16.mxu0 0
        %2201 = vmatpush1.bf16.msra.mxu0 0
        %2202 = vmatprep.subr.bf16.mxu0 0
        %2203 = vmatpush1.bf16.msra.mxu0 0
        %2204 = vmatprep.subr.bf16.mxu0 0
        %2205 = vmatpush1.bf16.msra.mxu0 0
        %2206 = vmatprep.subr.bf16.mxu0 0
        %2207 = vmatpush1.bf16.msra.mxu0 0
        %2208 = vmatprep.subr.bf16.mxu0 0
        %2209 = vmatpush1.bf16.msra.mxu0 0
        %2210 = vmatprep.subr.bf16.mxu0 0
        %2211 = vmatpush1.bf16.msra.mxu0 0
        %2212 = vmatprep.subr.bf16.mxu0 0
        %2213 = vmatpush1.bf16.msra.mxu0 0
        %2214 = vmatprep.mubr.bf16.mxu0 0
        %2215 = vmatmul.mubr.bf16.gmra.mrb[0].mxu0 %v2168
        %v2216 = vpop.f32.mrb[0].mxu0
        %v2217 = vadd.f32 %v2134, %v2216
        %v2218 = vpop.f32.mrb[0].mxu0
        %v2219 = vpop.f32.mrb[0].mxu0
        %v2220 = vadd.f32 %v2134, %v2219
        %v2221 = vpop.f32.mrb[0].mxu0
        %2222 = vmatprep.mubr.bf16.mxu0 0
        %2223 = vmatmul.mubr.bf16.gmra.mrb[0].mxu0 %v2171
        %v2224 = vpop.f32.mrb[0].mxu0
        %v2225 = vadd.f32 %v2134, %v2224
        %v2226 = vpop.f32.mrb[0].mxu0
        %v2227 = vpop.f32.mrb[0].mxu0
        %v2228 = vadd.f32 %v2134, %v2227
        %v2229 = vpop.f32.mrb[0].mxu0
        %2230 = vmatprep.mubr.bf16.mxu0 0
        %2231 = vmatmul.mubr.bf16.gmra.mrb[0].mxu0 %v2174
        %v2232 = vpop.f32.mrb[0].mxu0
        %v2233 = vadd.f32 %v2134, %v2232
        %v2234 = vpop.f32.mrb[0].mxu0
        %v2235 = vpop.f32.mrb[0].mxu0
        %v2236 = vadd.f32 %v2134, %v2235
        %v2237 = vpop.f32.mrb[0].mxu0
        %2238 = vmatprep.mubr.bf16.mxu0 0
        %2239 = vmatmul.mubr.bf16.gmra.mrb[0].mxu0 %v2177
        %v2240 = vpop.f32.mrb[0].mxu0
        %v2241 = vadd.f32 %v2134, %v2240
        %v2242 = vpop.f32.mrb[0].mxu0
        %v2243 = vpop.f32.mrb[0].mxu0
        %v2244 = vadd.f32 %v2134, %v2243
        %v2245 = vpop.f32.mrb[0].mxu0
        %2246 = vmatprep.mubr.bf16.mxu0 0
        %2247 = vmatmul.mubr.bf16.gmra.mrb[0].mxu0 %v2180
        %v2248 = vpop.f32.mrb[0].mxu0
        %v2249 = vadd.f32 %v2134, %v2248
        %v2250 = vpop.f32.mrb[0].mxu0
        %v2251 = vpop.f32.mrb[0].mxu0
        %v2252 = vadd.f32 %v2134, %v2251
        %v2253 = vpop.f32.mrb[0].mxu0
        %2254 = vdwg.mxu0
        %v2255 = vld [vmem:[#allocation2] sm:$0xf]
        %v2256 = vld [vmem:[#allocation2 + $0x4] sm:$0xf]
        %v2257 = vld [vmem:[#allocation2 + $0x8] sm:$0xf]
        %v2258 = vld [vmem:[#allocation2 + $0xc] sm:$0xf]
        %v2259 = vld [vmem:[#allocation2 + $0x10] sm:$0xf]
        %v2260 = vld [vmem:[#allocation2 + $0x14] sm:$0xf]
        %v2261 = vld [vmem:[#allocation2 + $0x18] sm:$0xf]
        %v2262 = vld [vmem:[#allocation2 + $0x1c] sm:$0xf]
        %v2263 = vld [vmem:[#allocation2 + $0x20] sm:$0xf]
        %v2264 = vld [vmem:[#allocation2 + $0x24] sm:$0xf]
        %v2265 = vld [vmem:[#allocation3] sm:$0xf]
        %v2266 = vld [vmem:[#allocation3 + $0x4] sm:$0xf]
        %v2267 = vld [vmem:[#allocation3 + $0x8] sm:$0xf]
        %v2268 = vld [vmem:[#allocation3 + $0xc] sm:$0xf]
        %v2269 = vld [vmem:[#allocation3 + $0x10] sm:$0xf]
        %v2270 = vld [vmem:[#allocation3 + $0x14] sm:$0xf]
        %v2271 = vld [vmem:[#allocation3 + $0x18] sm:$0xf]
        %v2272 = vld [vmem:[#allocation3 + $0x1c] sm:$0xf]
        %v2273 = vld [vmem:[#allocation3 + $0x20] sm:$0xf]
        %v2274 = vld [vmem:[#allocation3 + $0x24] sm:$0xf]
        %v2275 = vld [vmem:[#allocation3 + $0x28] sm:$0xf]
        %v2276 = vld [vmem:[#allocation3 + $0x2c] sm:$0xf]
        %v2277 = vld [vmem:[#allocation3 + $0x30] sm:$0xf]
        %v2278 = vld [vmem:[#allocation3 + $0x34] sm:$0xf]
        %v2279 = vld [vmem:[#allocation3 + $0x38] sm:$0xf]
        %v2280 = vld [vmem:[#allocation3 + $0x3c] sm:$0xf]
        %v2291 = vunpack.c.l.b16 %v2255
        %v2292 = vunpack.c.l.b16 %v2256
        %v2293 = vunpack.c.l.b16 %v2257
        %v2294 = vunpack.c.l.b16 %v2258
        %v2295 = vunpack.c.l.b16 %v2259
        %v2296 = vunpack.c.l.b16 %v2260
        %v2297 = vunpack.c.l.b16 %v2261
        %v2298 = vunpack.c.l.b16 %v2262
        %v2299 = vunpack.c.l.b16 %v2263
        %v2300 = vunpack.c.l.b16 %v2264
        %v2301 = vpack.c.b16 %v2292, %v2291
        %v2302 = vpack.c.b16 %v2294, %v2293
        %v2303 = vpack.c.b16 %v2296, %v2295
        %v2304 = vpack.c.b16 %v2298, %v2297
        %v2305 = vpack.c.b16 %v2300, %v2299
        %v2327 = vunpack.c.l.b16 %v2265
        %v2328 = vunpack.c.l.b16 %v2266
        %v2329 = vunpack.c.l.b16 %v2267
        %v2330 = vunpack.c.l.b16 %v2268
        %v2331 = vunpack.c.l.b16 %v2269
        %v2332 = vunpack.c.l.b16 %v2270
        %v2333 = vunpack.c.l.b16 %v2271
        %v2334 = vunpack.c.l.b16 %v2272
        %v2335 = vunpack.c.l.b16 %v2273
        %v2336 = vunpack.c.l.b16 %v2274
        %v2337 = vunpack.c.l.b16 %v2275
        %v2338 = vunpack.c.l.b16 %v2276
        %v2339 = vunpack.c.l.b16 %v2277
        %v2340 = vunpack.c.l.b16 %v2278
        %v2341 = vunpack.c.l.b16 %v2279
        %v2342 = vunpack.c.l.b16 %v2280
        %v2343 = vpack.c.b16 %v2328, %v2327
        %v2344 = vpack.c.b16 %v2330, %v2329
        %v2345 = vpack.c.b16 %v2332, %v2331
        %v2346 = vpack.c.b16 %v2334, %v2333
        %v2347 = vpack.c.b16 %v2336, %v2335
        %v2348 = vpack.c.b16 %v2338, %v2337
        %v2349 = vpack.c.b16 %v2340, %v2339
        %v2350 = vpack.c.b16 %v2342, %v2341
        %2359 = vmatprep.subr.bf16.mxu0 0
        %2360 = vmatpush1.bf16.msra.mxu0 %v2343
        %2361 = vmatprep.subr.bf16.mxu0 0
        %2362 = vmatpush1.bf16.msra.mxu0 %v2344
        %2363 = vmatprep.subr.bf16.mxu0 0
        %2364 = vmatpush1.bf16.msra.mxu0 %v2345
        %2365 = vmatprep.subr.bf16.mxu0 0
        %2366 = vmatpush1.bf16.msra.mxu0 %v2346
        %2367 = vmatprep.subr.bf16.mxu0 0
        %2368 = vmatpush1.bf16.msra.mxu0 %v2347
        %2369 = vmatprep.subr.bf16.mxu0 0
        %2370 = vmatpush1.bf16.msra.mxu0 %v2348
        %2371 = vmatprep.subr.bf16.mxu0 0
        %2372 = vmatpush1.bf16.msra.mxu0 %v2349
        %2373 = vmatprep.subr.bf16.mxu0 0
        %2374 = vmatpush1.bf16.msra.mxu0 %v2350
        %2375 = vmatprep.subr.bf16.mxu0 0
        %2376 = vmatpush1.bf16.msra.mxu0 0
        %2377 = vmatprep.subr.bf16.mxu0 0
        %2378 = vmatpush1.bf16.msra.mxu0 0
        %2379 = vmatprep.subr.bf16.mxu0 0
        %2380 = vmatpush1.bf16.msra.mxu0 0
        %2381 = vmatprep.subr.bf16.mxu0 0
        %2382 = vmatpush1.bf16.msra.mxu0 0
        %2383 = vmatprep.subr.bf16.mxu0 0
        %2384 = vmatpush1.bf16.msra.mxu0 0
        %2385 = vmatprep.subr.bf16.mxu0 0
        %2386 = vmatpush1.bf16.msra.mxu0 0
        %2387 = vmatprep.subr.bf16.mxu0 0
        %2388 = vmatpush1.bf16.msra.mxu0 0
        %2389 = vmatprep.subr.bf16.mxu0 0
        %2390 = vmatpush1.bf16.msra.mxu0 0
        %2391 = vmatprep.mubr.bf16.mxu0 0
        %2392 = vmatmul.mubr.bf16.gmra.mrb[0].mxu0 %v2301
        %v2393 = vpop.f32.mrb[0].mxu0
        %v2394 = vadd.f32 0.0, %v2393
        %v2395 = vpop.f32.mrb[0].mxu0
        %v2396 = vpop.f32.mrb[0].mxu0
        %v2397 = vadd.f32 0.0, %v2396
        %v2398 = vpop.f32.mrb[0].mxu0
        %2399 = vmatprep.mubr.bf16.mxu0 0
        %2400 = vmatmul.mubr.bf16.gmra.mrb[0].mxu0 %v2302
        %v2401 = vpop.f32.mrb[0].mxu0
        %v2402 = vadd.f32 0.0, %v2401
        %v2403 = vpop.f32.mrb[0].mxu0
        %v2404 = vpop.f32.mrb[0].mxu0
        %v2405 = vadd.f32 0.0, %v2404
        %v2406 = vpop.f32.mrb[0].mxu0
        %2407 = vmatprep.mubr.bf16.mxu0 0
        %2408 = vmatmul.mubr.bf16.gmra.mrb[0].mxu0 %v2303
        %v2409 = vpop.f32.mrb[0].mxu0
        %v2410 = vadd.f32 0.0, %v2409
        %v2411 = vpop.f32.mrb[0].mxu0
        %v2412 = vpop.f32.mrb[0].mxu0
        %v2413 = vadd.f32 0.0, %v2412
        %v2414 = vpop.f32.mrb[0].mxu0
        %2415 = vmatprep.mubr.bf16.mxu0 0
        %2416 = vmatmul.mubr.bf16.gmra.mrb[0].mxu0 %v2304
        %v2417 = vpop.f32.mrb[0].mxu0
        %v2418 = vadd.f32 0.0, %v2417
        %v2419 = vpop.f32.mrb[0].mxu0
        %v2420 = vpop.f32.mrb[0].mxu0
        %v2421 = vadd.f32 0.0, %v2420
        %v2422 = vpop.f32.mrb[0].mxu0
        %2423 = vmatprep.mubr.bf16.mxu0 0
        %2424 = vmatmul.mubr.bf16.gmra.mrb[0].mxu0 %v2305
        %v2425 = vpop.f32.mrb[0].mxu0
        %v2426 = vadd.f32 0.0, %v2425
        %v2427 = vpop.f32.mrb[0].mxu0
        %v2428 = vpop.f32.mrb[0].mxu0
        %v2429 = vadd.f32 0.0, %v2428
        %v2430 = vpop.f32.mrb[0].mxu0
        %2431 = vdwg.mxu0
        %v2432 = vadd.f32 %v2217, %v2394
        %v2433 = vadd.f32 %v2220, %v2397
        %v2434 = vadd.f32 %v2225, %v2402
        %v2435 = vadd.f32 %v2228, %v2405
        %v2436 = vadd.f32 %v2233, %v2410
        %v2437 = vadd.f32 %v2236, %v2413
        %v2438 = vadd.f32 %v2241, %v2418
        %v2439 = vadd.f32 %v2244, %v2421
        %v2440 = vadd.f32 %v2249, %v2426
        %v2441 = vadd.f32 %v2252, %v2429
        %v2442 = vld [vmem:[#allocation2] sm:$0xf]
        %v2443 = vld [vmem:[#allocation2 + $0x4] sm:$0xf]
        %v2444 = vld [vmem:[#allocation2 + $0x8] sm:$0xf]
        %v2445 = vld [vmem:[#allocation2 + $0xc] sm:$0xf]
        %v2446 = vld [vmem:[#allocation2 + $0x10] sm:$0xf]
        %v2447 = vld [vmem:[#allocation2 + $0x14] sm:$0xf]
        %v2448 = vld [vmem:[#allocation2 + $0x18] sm:$0xf]
        %v2449 = vld [vmem:[#allocation2 + $0x1c] sm:$0xf]
        %v2450 = vld [vmem:[#allocation2 + $0x20] sm:$0xf]
        %v2451 = vld [vmem:[#allocation2 + $0x24] sm:$0xf]
        %v2452 = vld [vmem:[#allocation2 + $0x28] sm:$0x1]
        %s2453 = scalar_lea.vmem [#allocation3], 64
        %v2454 = vld [vmem:[%s2453] sm:$0xf]
        %v2455 = vld [vmem:[%s2453 + $0x4] sm:$0xf]
        %v2456 = vld [vmem:[%s2453 + $0x8] sm:$0xf]
        %v2457 = vld [vmem:[%s2453 + $0xc] sm:$0xf]
        %v2458 = vld [vmem:[%s2453 + $0x10] sm:$0xf]
        %v2459 = vld [vmem:[%s2453 + $0x14] sm:$0xf]
        %v2460 = vld [vmem:[%s2453 + $0x18] sm:$0xf]
        %v2461 = vld [vmem:[%s2453 + $0x1c] sm:$0xf]
        %v2462 = vld [vmem:[%s2453 + $0x20] sm:$0xf]
        %v2463 = vld [vmem:[%s2453 + $0x24] sm:$0xf]
        %v2464 = vld [vmem:[%s2453 + $0x28] sm:$0xf]
        %v2465 = vld [vmem:[%s2453 + $0x2c] sm:$0xf]
        %v2466 = vld [vmem:[%s2453 + $0x30] sm:$0xf]
        %v2467 = vld [vmem:[%s2453 + $0x34] sm:$0xf]
        %v2468 = vld [vmem:[%s2453 + $0x38] sm:$0xf]
        %v2469 = vld [vmem:[%s2453 + $0x3c] sm:$0xf]
        %v2481 = vunpack.c.l.b16 %v2442
        %v2482 = vunpack.c.l.b16 %v2443
        %v2483 = vunpack.c.l.b16 %v2444
        %v2484 = vunpack.c.l.b16 %v2445
        %v2485 = vunpack.c.l.b16 %v2446
        %v2486 = vunpack.c.l.b16 %v2447
        %v2487 = vunpack.c.l.b16 %v2448
        %v2488 = vunpack.c.l.b16 %v2449
        %v2489 = vunpack.c.l.b16 %v2450
        %v2490 = vunpack.c.l.b16 %v2451
        %v2491 = vunpack.c.l.b16 %v2452
        %v2492 = vpack.c.b16 %v2482, %v2481
        %v2493 = vpack.c.b16 %v2484, %v2483
        %v2494 = vpack.c.b16 %v2486, %v2485
        %v2495 = vpack.c.b16 %v2488, %v2487
        %v2496 = vpack.c.b16 %v2490, %v2489
        %v2497 = vpack.c.b16 %v2491, %v2491
        %v2499 = vshrl.u32 %v2492, 16
        %v2501 = vshll.u32 %v2492, 16
        %v2503 = vrot.slane %v2501, 1
        %v2504 = vor.u32 %v2499, %v2503
        %v2506 = vshll.u32 %v2493, 16
        %v2508 = vrot.slane %v2506, 1
        %v2509 = vsel %vm796, %v2504, %v2508
        %v2510 = vshrl.u32 %v2493, 16
        %v2512 = vor.u32 %v2510, %v2508
        %v2514 = vshll.u32 %v2494, 16
        %v2516 = vrot.slane %v2514, 1
        %v2517 = vsel %vm796, %v2512, %v2516
        %v2518 = vshrl.u32 %v2494, 16
        %v2520 = vor.u32 %v2518, %v2516
        %v2522 = vshll.u32 %v2495, 16
        %v2524 = vrot.slane %v2522, 1
        %v2525 = vsel %vm796, %v2520, %v2524
        %v2526 = vshrl.u32 %v2495, 16
        %v2528 = vor.u32 %v2526, %v2524
        %v2530 = vshll.u32 %v2496, 16
        %v2532 = vrot.slane %v2530, 1
        %v2533 = vsel %vm796, %v2528, %v2532
        %v2534 = vshrl.u32 %v2496, 16
        %v2536 = vor.u32 %v2534, %v2532
        %v2538 = vshll.u32 %v2497, 16
        %v2540 = vrot.slane %v2538, 1
        %v2541 = vsel %vm796, %v2536, %v2540
        %v2563 = vunpack.c.l.b16 %v2454
        %v2564 = vunpack.c.l.b16 %v2455
        %v2565 = vunpack.c.l.b16 %v2456
        %v2566 = vunpack.c.l.b16 %v2457
        %v2567 = vunpack.c.l.b16 %v2458
        %v2568 = vunpack.c.l.b16 %v2459
        %v2569 = vunpack.c.l.b16 %v2460
        %v2570 = vunpack.c.l.b16 %v2461
        %v2571 = vunpack.c.l.b16 %v2462
        %v2572 = vunpack.c.l.b16 %v2463
        %v2573 = vunpack.c.l.b16 %v2464
        %v2574 = vunpack.c.l.b16 %v2465
        %v2575 = vunpack.c.l.b16 %v2466
        %v2576 = vunpack.c.l.b16 %v2467
        %v2577 = vunpack.c.l.b16 %v2468
        %v2578 = vunpack.c.l.b16 %v2469
        %v2579 = vpack.c.b16 %v2564, %v2563
        %v2580 = vpack.c.b16 %v2566, %v2565
        %v2581 = vpack.c.b16 %v2568, %v2567
        %v2582 = vpack.c.b16 %v2570, %v2569
        %v2583 = vpack.c.b16 %v2572, %v2571
        %v2584 = vpack.c.b16 %v2574, %v2573
        %v2585 = vpack.c.b16 %v2576, %v2575
        %v2586 = vpack.c.b16 %v2578, %v2577
        %2595 = vmatprep.subr.bf16.mxu0 0
        %2596 = vmatpush1.bf16.msra.mxu0 %v2579
        %2597 = vmatprep.subr.bf16.mxu0 0
        %2598 = vmatpush1.bf16.msra.mxu0 %v2580
        %2599 = vmatprep.subr.bf16.mxu0 0
        %2600 = vmatpush1.bf16.msra.mxu0 %v2581
        %2601 = vmatprep.subr.bf16.mxu0 0
        %2602 = vmatpush1.bf16.msra.mxu0 %v2582
        %2603 = vmatprep.subr.bf16.mxu0 0
        %2604 = vmatpush1.bf16.msra.mxu0 %v2583
        %2605 = vmatprep.subr.bf16.mxu0 0
        %2606 = vmatpush1.bf16.msra.mxu0 %v2584
        %2607 = vmatprep.subr.bf16.mxu0 0
        %2608 = vmatpush1.bf16.msra.mxu0 %v2585
        %2609 = vmatprep.subr.bf16.mxu0 0
        %2610 = vmatpush1.bf16.msra.mxu0 %v2586
        %2611 = vmatprep.subr.bf16.mxu0 0
        %2612 = vmatpush1.bf16.msra.mxu0 0
        %2613 = vmatprep.subr.bf16.mxu0 0
        %2614 = vmatpush1.bf16.msra.mxu0 0
        %2615 = vmatprep.subr.bf16.mxu0 0
        %2616 = vmatpush1.bf16.msra.mxu0 0
        %2617 = vmatprep.subr.bf16.mxu0 0
        %2618 = vmatpush1.bf16.msra.mxu0 0
        %2619 = vmatprep.subr.bf16.mxu0 0
        %2620 = vmatpush1.bf16.msra.mxu0 0
        %2621 = vmatprep.subr.bf16.mxu0 0
        %2622 = vmatpush1.bf16.msra.mxu0 0
        %2623 = vmatprep.subr.bf16.mxu0 0
        %2624 = vmatpush1.bf16.msra.mxu0 0
        %2625 = vmatprep.subr.bf16.mxu0 0
        %2626 = vmatpush1.bf16.msra.mxu0 0
        %2627 = vmatprep.mubr.bf16.mxu0 0
        %2628 = vmatmul.mubr.bf16.gmra.mrb[0].mxu0 %v2509
        %v2629 = vpop.f32.mrb[0].mxu0
        %v2630 = vadd.f32 0.0, %v2629
        %v2631 = vpop.f32.mrb[0].mxu0
        %v2632 = vpop.f32.mrb[0].mxu0
        %v2633 = vadd.f32 0.0, %v2632
        %v2634 = vpop.f32.mrb[0].mxu0
        %2635 = vmatprep.mubr.bf16.mxu0 0
        %2636 = vmatmul.mubr.bf16.gmra.mrb[0].mxu0 %v2517
        %v2637 = vpop.f32.mrb[0].mxu0
        %v2638 = vadd.f32 0.0, %v2637
        %v2639 = vpop.f32.mrb[0].mxu0
        %v2640 = vpop.f32.mrb[0].mxu0
        %v2641 = vadd.f32 0.0, %v2640
        %v2642 = vpop.f32.mrb[0].mxu0
        %2643 = vmatprep.mubr.bf16.mxu0 0
        %2644 = vmatmul.mubr.bf16.gmra.mrb[0].mxu0 %v2525
        %v2645 = vpop.f32.mrb[0].mxu0
        %v2646 = vadd.f32 0.0, %v2645
        %v2647 = vpop.f32.mrb[0].mxu0
        %v2648 = vpop.f32.mrb[0].mxu0
        %v2649 = vadd.f32 0.0, %v2648
        %v2650 = vpop.f32.mrb[0].mxu0
        %2651 = vmatprep.mubr.bf16.mxu0 0
        %2652 = vmatmul.mubr.bf16.gmra.mrb[0].mxu0 %v2533
        %v2653 = vpop.f32.mrb[0].mxu0
        %v2654 = vadd.f32 0.0, %v2653
        %v2655 = vpop.f32.mrb[0].mxu0
        %v2656 = vpop.f32.mrb[0].mxu0
        %v2657 = vadd.f32 0.0, %v2656
        %v2658 = vpop.f32.mrb[0].mxu0
        %2659 = vmatprep.mubr.bf16.mxu0 0
        %2660 = vmatmul.mubr.bf16.gmra.mrb[0].mxu0 %v2541
        %v2661 = vpop.f32.mrb[0].mxu0
        %v2662 = vadd.f32 0.0, %v2661
        %v2663 = vpop.f32.mrb[0].mxu0
        %v2664 = vpop.f32.mrb[0].mxu0
        %v2665 = vadd.f32 0.0, %v2664
        %v2666 = vpop.f32.mrb[0].mxu0
        %2667 = vdwg.mxu0
        %v2668 = vadd.f32 %v2432, %v2630
        %v2669 = vadd.f32 %v2433, %v2633
        %v2670 = vadd.f32 %v2434, %v2638
        %v2671 = vadd.f32 %v2435, %v2641
        %v2672 = vadd.f32 %v2436, %v2646
        %v2673 = vadd.f32 %v2437, %v2649
        %v2674 = vadd.f32 %v2438, %v2654
        %v2675 = vadd.f32 %v2439, %v2657
        %v2676 = vadd.f32 %v2440, %v2662
        %v2677 = vadd.f32 %v2441, %v2665
        %v2678 = vld [vmem:[#allocation2] sm:$0xe]
        %s2679 = scalar_lea.vmem [#allocation3], 128
        %v2680 = vld [vmem:[%s2679] sm:$0xf]
        %v2681 = vld [vmem:[%s2679 + $0x4] sm:$0xf]
        %v2682 = vld [vmem:[%s2679 + $0x8] sm:$0xf]
        %v2683 = vld [vmem:[%s2679 + $0xc] sm:$0xf]
        %v2684 = vld [vmem:[%s2679 + $0x10] sm:$0xf]
        %v2685 = vld [vmem:[%s2679 + $0x14] sm:$0xf]
        %v2686 = vld [vmem:[%s2679 + $0x18] sm:$0xf]
        %v2687 = vld [vmem:[%s2679 + $0x1c] sm:$0xf]
        %v2688 = vld [vmem:[%s2679 + $0x20] sm:$0xf]
        %v2689 = vld [vmem:[%s2679 + $0x24] sm:$0xf]
        %v2690 = vld [vmem:[%s2679 + $0x28] sm:$0xf]
        %v2691 = vld [vmem:[%s2679 + $0x2c] sm:$0xf]
        %v2692 = vld [vmem:[%s2679 + $0x30] sm:$0xf]
        %v2693 = vld [vmem:[%s2679 + $0x34] sm:$0xf]
        %v2694 = vld [vmem:[%s2679 + $0x38] sm:$0xf]
        %v2695 = vld [vmem:[%s2679 + $0x3c] sm:$0xf]
        %v2697 = vunpack.c.l.b16 %v2678
        %v2698 = vpack.c.b16 %v2482, %v2697
        %v2699 = vrot.slane %v2698, 1
        %v2700 = vrot.slane %v2493, 1
        %v2701 = vsel %vm1463, %v2699, %v2700
        %v2702 = vrot.slane %v2494, 1
        %v2703 = vsel %vm1463, %v2700, %v2702
        %v2704 = vrot.slane %v2495, 1
        %v2705 = vsel %vm1463, %v2702, %v2704
        %v2706 = vrot.slane %v2496, 1
        %v2707 = vsel %vm1463, %v2704, %v2706
        %v2708 = vrot.slane %v2497, 1
        %v2709 = vsel %vm1463, %v2706, %v2708
        %v2731 = vunpack.c.l.b16 %v2680
        %v2732 = vunpack.c.l.b16 %v2681
        %v2733 = vunpack.c.l.b16 %v2682
        %v2734 = vunpack.c.l.b16 %v2683
        %v2735 = vunpack.c.l.b16 %v2684
        %v2736 = vunpack.c.l.b16 %v2685
        %v2737 = vunpack.c.l.b16 %v2686
        %v2738 = vunpack.c.l.b16 %v2687
        %v2739 = vunpack.c.l.b16 %v2688
        %v2740 = vunpack.c.l.b16 %v2689
        %v2741 = vunpack.c.l.b16 %v2690
        %v2742 = vunpack.c.l.b16 %v2691
        %v2743 = vunpack.c.l.b16 %v2692
        %v2744 = vunpack.c.l.b16 %v2693
        %v2745 = vunpack.c.l.b16 %v2694
        %v2746 = vunpack.c.l.b16 %v2695
        %v2747 = vpack.c.b16 %v2732, %v2731
        %v2748 = vpack.c.b16 %v2734, %v2733
        %v2749 = vpack.c.b16 %v2736, %v2735
        %v2750 = vpack.c.b16 %v2738, %v2737
        %v2751 = vpack.c.b16 %v2740, %v2739
        %v2752 = vpack.c.b16 %v2742, %v2741
        %v2753 = vpack.c.b16 %v2744, %v2743
        %v2754 = vpack.c.b16 %v2746, %v2745
        %2763 = vmatprep.subr.bf16.mxu0 0
        %2764 = vmatpush1.bf16.msra.mxu0 %v2747
        %2765 = vmatprep.subr.bf16.mxu0 0
        %2766 = vmatpush1.bf16.msra.mxu0 %v2748
        %2767 = vmatprep.subr.bf16.mxu0 0
        %2768 = vmatpush1.bf16.msra.mxu0 %v2749
        %2769 = vmatprep.subr.bf16.mxu0 0
        %2770 = vmatpush1.bf16.msra.mxu0 %v2750
        %2771 = vmatprep.subr.bf16.mxu0 0
        %2772 = vmatpush1.bf16.msra.mxu0 %v2751
        %2773 = vmatprep.subr.bf16.mxu0 0
        %2774 = vmatpush1.bf16.msra.mxu0 %v2752
        %2775 = vmatprep.subr.bf16.mxu0 0
        %2776 = vmatpush1.bf16.msra.mxu0 %v2753
        %2777 = vmatprep.subr.bf16.mxu0 0
        %2778 = vmatpush1.bf16.msra.mxu0 %v2754
        %2779 = vmatprep.subr.bf16.mxu0 0
        %2780 = vmatpush1.bf16.msra.mxu0 0
        %2781 = vmatprep.subr.bf16.mxu0 0
        %2782 = vmatpush1.bf16.msra.mxu0 0
        %2783 = vmatprep.subr.bf16.mxu0 0
        %2784 = vmatpush1.bf16.msra.mxu0 0
        %2785 = vmatprep.subr.bf16.mxu0 0
        %2786 = vmatpush1.bf16.msra.mxu0 0
        %2787 = vmatprep.subr.bf16.mxu0 0
        %2788 = vmatpush1.bf16.msra.mxu0 0
        %2789 = vmatprep.subr.bf16.mxu0 0
        %2790 = vmatpush1.bf16.msra.mxu0 0
        %2791 = vmatprep.subr.bf16.mxu0 0
        %2792 = vmatpush1.bf16.msra.mxu0 0
        %2793 = vmatprep.subr.bf16.mxu0 0
        %2794 = vmatpush1.bf16.msra.mxu0 0
        %2795 = vmatprep.mubr.bf16.mxu0 0
        %2796 = vmatmul.mubr.bf16.gmra.mrb[0].mxu0 %v2701
        %v2797 = vpop.f32.mrb[0].mxu0
        %v2798 = vadd.f32 0.0, %v2797
        %v2799 = vpop.f32.mrb[0].mxu0
        %v2800 = vpop.f32.mrb[0].mxu0
        %v2801 = vadd.f32 0.0, %v2800
        %v2802 = vpop.f32.mrb[0].mxu0
        %2803 = vmatprep.mubr.bf16.mxu0 0
        %2804 = vmatmul.mubr.bf16.gmra.mrb[0].mxu0 %v2703
        %v2805 = vpop.f32.mrb[0].mxu0
        %v2806 = vadd.f32 0.0, %v2805
        %v2807 = vpop.f32.mrb[0].mxu0
        %v2808 = vpop.f32.mrb[0].mxu0
        %v2809 = vadd.f32 0.0, %v2808
        %v2810 = vpop.f32.mrb[0].mxu0
        %2811 = vmatprep.mubr.bf16.mxu0 0
        %2812 = vmatmul.mubr.bf16.gmra.mrb[0].mxu0 %v2705
        %v2813 = vpop.f32.mrb[0].mxu0
        %v2814 = vadd.f32 0.0, %v2813
        %v2815 = vpop.f32.mrb[0].mxu0
        %v2816 = vpop.f32.mrb[0].mxu0
        %v2817 = vadd.f32 0.0, %v2816
        %v2818 = vpop.f32.mrb[0].mxu0
        %2819 = vmatprep.mubr.bf16.mxu0 0
        %2820 = vmatmul.mubr.bf16.gmra.mrb[0].mxu0 %v2707
        %v2821 = vpop.f32.mrb[0].mxu0
        %v2822 = vadd.f32 0.0, %v2821
        %v2823 = vpop.f32.mrb[0].mxu0
        %v2824 = vpop.f32.mrb[0].mxu0
        %v2825 = vadd.f32 0.0, %v2824
        %v2826 = vpop.f32.mrb[0].mxu0
        %2827 = vmatprep.mubr.bf16.mxu0 0
        %2828 = vmatmul.mubr.bf16.gmra.mrb[0].mxu0 %v2709
        %v2829 = vpop.f32.mrb[0].mxu0
        %v2830 = vadd.f32 0.0, %v2829
        %v2831 = vpop.f32.mrb[0].mxu0
        %v2832 = vpop.f32.mrb[0].mxu0
        %v2833 = vadd.f32 0.0, %v2832
        %v2834 = vpop.f32.mrb[0].mxu0
        %2835 = vdwg.mxu0
        %v2836 = vadd.f32 %v2668, %v2798
        %v2837 = vadd.f32 %v2669, %v2801
        %v2838 = vadd.f32 %v2670, %v2806
        %v2839 = vadd.f32 %v2671, %v2809
        %v2840 = vadd.f32 %v2672, %v2814
        %v2841 = vadd.f32 %v2673, %v2817
        %v2842 = vadd.f32 %v2674, %v2822
        %v2843 = vadd.f32 %v2675, %v2825
        %v2844 = vadd.f32 %v2676, %v2830
        %v2845 = vadd.f32 %v2677, %v2833
        %v2846 = vld [vmem:[#allocation2 + $0x4] sm:$0xe]
        %v2847 = vld [vmem:[#allocation2 + $0x8] sm:$0xf]
        %v2848 = vld [vmem:[#allocation2 + $0xc] sm:$0xf]
        %v2849 = vld [vmem:[#allocation2 + $0x10] sm:$0xf]
        %v2850 = vld [vmem:[#allocation2 + $0x14] sm:$0xf]
        %v2851 = vld [vmem:[#allocation2 + $0x18] sm:$0xf]
        %v2852 = vld [vmem:[#allocation2 + $0x1c] sm:$0xf]
        %v2853 = vld [vmem:[#allocation2 + $0x20] sm:$0xf]
        %v2854 = vld [vmem:[#allocation2 + $0x24] sm:$0xf]
        %v2855 = vld [vmem:[#allocation2 + $0x28] sm:$0xf]
        %v2856 = vld [vmem:[#allocation2 + $0x2c] sm:$0x1]
        %s2857 = scalar_lea.vmem [#allocation3], 192
        %v2858 = vld [vmem:[%s2857] sm:$0xf]
        %v2859 = vld [vmem:[%s2857 + $0x4] sm:$0xf]
        %v2860 = vld [vmem:[%s2857 + $0x8] sm:$0xf]
        %v2861 = vld [vmem:[%s2857 + $0xc] sm:$0xf]
        %v2862 = vld [vmem:[%s2857 + $0x10] sm:$0xf]
        %v2863 = vld [vmem:[%s2857 + $0x14] sm:$0xf]
        %v2864 = vld [vmem:[%s2857 + $0x18] sm:$0xf]
        %v2865 = vld [vmem:[%s2857 + $0x1c] sm:$0xf]
        %v2866 = vld [vmem:[%s2857 + $0x20] sm:$0xf]
        %v2867 = vld [vmem:[%s2857 + $0x24] sm:$0xf]
        %v2868 = vld [vmem:[%s2857 + $0x28] sm:$0xf]
        %v2869 = vld [vmem:[%s2857 + $0x2c] sm:$0xf]
        %v2870 = vld [vmem:[%s2857 + $0x30] sm:$0xf]
        %v2871 = vld [vmem:[%s2857 + $0x34] sm:$0xf]
        %v2872 = vld [vmem:[%s2857 + $0x38] sm:$0xf]
        %v2873 = vld [vmem:[%s2857 + $0x3c] sm:$0xf]
        %v2885 = vunpack.c.l.b16 %v2846
        %v2886 = vunpack.c.l.b16 %v2847
        %v2887 = vunpack.c.l.b16 %v2848
        %v2888 = vunpack.c.l.b16 %v2849
        %v2889 = vunpack.c.l.b16 %v2850
        %v2890 = vunpack.c.l.b16 %v2851
        %v2891 = vunpack.c.l.b16 %v2852
        %v2892 = vunpack.c.l.b16 %v2853
        %v2893 = vunpack.c.l.b16 %v2854
        %v2894 = vunpack.c.l.b16 %v2855
        %v2895 = vunpack.c.l.b16 %v2856
        %v2896 = vpack.c.b16 %v2886, %v2885
        %v2897 = vpack.c.b16 %v2888, %v2887
        %v2898 = vpack.c.b16 %v2890, %v2889
        %v2899 = vpack.c.b16 %v2892, %v2891
        %v2900 = vpack.c.b16 %v2894, %v2893
        %v2901 = vpack.c.b16 %v2895, %v2895
        %v2902 = vrot.slane %v2896, 1
        %v2903 = vrot.slane %v2897, 1
        %v2904 = vsel %vm1463, %v2902, %v2903
        %v2905 = vrot.slane %v2898, 1
        %v2906 = vsel %vm1463, %v2903, %v2905
        %v2907 = vrot.slane %v2899, 1
        %v2908 = vsel %vm1463, %v2905, %v2907
        %v2909 = vrot.slane %v2900, 1
        %v2910 = vsel %vm1463, %v2907, %v2909
        %v2911 = vrot.slane %v2901, 1
        %v2912 = vsel %vm1463, %v2909, %v2911
        %v2934 = vunpack.c.l.b16 %v2858
        %v2935 = vunpack.c.l.b16 %v2859
        %v2936 = vunpack.c.l.b16 %v2860
        %v2937 = vunpack.c.l.b16 %v2861
        %v2938 = vunpack.c.l.b16 %v2862
        %v2939 = vunpack.c.l.b16 %v2863
        %v2940 = vunpack.c.l.b16 %v2864
        %v2941 = vunpack.c.l.b16 %v2865
        %v2942 = vunpack.c.l.b16 %v2866
        %v2943 = vunpack.c.l.b16 %v2867
        %v2944 = vunpack.c.l.b16 %v2868
        %v2945 = vunpack.c.l.b16 %v2869
        %v2946 = vunpack.c.l.b16 %v2870
        %v2947 = vunpack.c.l.b16 %v2871
        %v2948 = vunpack.c.l.b16 %v2872
        %v2949 = vunpack.c.l.b16 %v2873
        %v2950 = vpack.c.b16 %v2935, %v2934
        %v2951 = vpack.c.b16 %v2937, %v2936
        %v2952 = vpack.c.b16 %v2939, %v2938
        %v2953 = vpack.c.b16 %v2941, %v2940
        %v2954 = vpack.c.b16 %v2943, %v2942
        %v2955 = vpack.c.b16 %v2945, %v2944
        %v2956 = vpack.c.b16 %v2947, %v2946
        %v2957 = vpack.c.b16 %v2949, %v2948
        %2966 = vmatprep.subr.bf16.mxu0 0
        %2967 = vmatpush1.bf16.msra.mxu0 %v2950
        %2968 = vmatprep.subr.bf16.mxu0 0
        %2969 = vmatpush1.bf16.msra.mxu0 %v2951
        %2970 = vmatprep.subr.bf16.mxu0 0
        %2971 = vmatpush1.bf16.msra.mxu0 %v2952
        %2972 = vmatprep.subr.bf16.mxu0 0
        %2973 = vmatpush1.bf16.msra.mxu0 %v2953
        %2974 = vmatprep.subr.bf16.mxu0 0
        %2975 = vmatpush1.bf16.msra.mxu0 %v2954
        %2976 = vmatprep.subr.bf16.mxu0 0
        %2977 = vmatpush1.bf16.msra.mxu0 %v2955
        %2978 = vmatprep.subr.bf16.mxu0 0
        %2979 = vmatpush1.bf16.msra.mxu0 %v2956
        %2980 = vmatprep.subr.bf16.mxu0 0
        %2981 = vmatpush1.bf16.msra.mxu0 %v2957
        %2982 = vmatprep.subr.bf16.mxu0 0
        %2983 = vmatpush1.bf16.msra.mxu0 0
        %2984 = vmatprep.subr.bf16.mxu0 0
        %2985 = vmatpush1.bf16.msra.mxu0 0
        %2986 = vmatprep.subr.bf16.mxu0 0
        %2987 = vmatpush1.bf16.msra.mxu0 0
        %2988 = vmatprep.subr.bf16.mxu0 0
        %2989 = vmatpush1.bf16.msra.mxu0 0
        %2990 = vmatprep.subr.bf16.mxu0 0
        %2991 = vmatpush1.bf16.msra.mxu0 0
        %2992 = vmatprep.subr.bf16.mxu0 0
        %2993 = vmatpush1.bf16.msra.mxu0 0
        %2994 = vmatprep.subr.bf16.mxu0 0
        %2995 = vmatpush1.bf16.msra.mxu0 0
        %2996 = vmatprep.subr.bf16.mxu0 0
        %2997 = vmatpush1.bf16.msra.mxu0 0
        %2998 = vmatprep.mubr.bf16.mxu0 0
        %2999 = vmatmul.mubr.bf16.gmra.mrb[0].mxu0 %v2904
        %v3000 = vpop.f32.mrb[0].mxu0
        %v3001 = vadd.f32 0.0, %v3000
        %v3002 = vpop.f32.mrb[0].mxu0
        %v3003 = vpop.f32.mrb[0].mxu0
        %v3004 = vadd.f32 0.0, %v3003
        %v3005 = vpop.f32.mrb[0].mxu0
        %3006 = vmatprep.mubr.bf16.mxu0 0
        %3007 = vmatmul.mubr.bf16.gmra.mrb[0].mxu0 %v2906
        %v3008 = vpop.f32.mrb[0].mxu0
        %v3009 = vadd.f32 0.0, %v3008
        %v3010 = vpop.f32.mrb[0].mxu0
        %v3011 = vpop.f32.mrb[0].mxu0
        %v3012 = vadd.f32 0.0, %v3011
        %v3013 = vpop.f32.mrb[0].mxu0
        %3014 = vmatprep.mubr.bf16.mxu0 0
        %3015 = vmatmul.mubr.bf16.gmra.mrb[0].mxu0 %v2908
        %v3016 = vpop.f32.mrb[0].mxu0
        %v3017 = vadd.f32 0.0, %v3016
        %v3018 = vpop.f32.mrb[0].mxu0
        %v3019 = vpop.f32.mrb[0].mxu0
        %v3020 = vadd.f32 0.0, %v3019
        %v3021 = vpop.f32.mrb[0].mxu0
        %3022 = vmatprep.mubr.bf16.mxu0 0
        %3023 = vmatmul.mubr.bf16.gmra.mrb[0].mxu0 %v2910
        %v3024 = vpop.f32.mrb[0].mxu0
        %v3025 = vadd.f32 0.0, %v3024
        %v3026 = vpop.f32.mrb[0].mxu0
        %v3027 = vpop.f32.mrb[0].mxu0
        %v3028 = vadd.f32 0.0, %v3027
        %v3029 = vpop.f32.mrb[0].mxu0
        %3030 = vmatprep.mubr.bf16.mxu0 0
        %3031 = vmatmul.mubr.bf16.gmra.mrb[0].mxu0 %v2912
        %v3032 = vpop.f32.mrb[0].mxu0
        %v3033 = vadd.f32 0.0, %v3032
        %v3034 = vpop.f32.mrb[0].mxu0
        %v3035 = vpop.f32.mrb[0].mxu0
        %v3036 = vadd.f32 0.0, %v3035
        %v3037 = vpop.f32.mrb[0].mxu0
        %3038 = vdwg.mxu0
        %v3039 = vadd.f32 %v2836, %v3001
        %v3040 = vadd.f32 %v2837, %v3004
        %v3041 = vadd.f32 %v2838, %v3009
        %v3042 = vadd.f32 %v2839, %v3012
        %v3043 = vadd.f32 %v2840, %v3017
        %v3044 = vadd.f32 %v2841, %v3020
        %v3045 = vadd.f32 %v2842, %v3025
        %v3046 = vadd.f32 %v2843, %v3028
        %v3047 = vadd.f32 %v2844, %v3033
        %v3048 = vadd.f32 %v2845, %v3036
        %v3049 = vld [vmem:[#allocation2 + $0x2c] sm:$0x3]
        %s3050 = scalar_lea.vmem [#allocation3], 256
        %v3051 = vld [vmem:[%s3050] sm:$0xf]
        %v3052 = vld [vmem:[%s3050 + $0x4] sm:$0xf]
        %v3053 = vld [vmem:[%s3050 + $0x8] sm:$0xf]
        %v3054 = vld [vmem:[%s3050 + $0xc] sm:$0xf]
        %v3055 = vld [vmem:[%s3050 + $0x10] sm:$0xf]
        %v3056 = vld [vmem:[%s3050 + $0x14] sm:$0xf]
        %v3057 = vld [vmem:[%s3050 + $0x18] sm:$0xf]
        %v3058 = vld [vmem:[%s3050 + $0x1c] sm:$0xf]
        %v3059 = vld [vmem:[%s3050 + $0x20] sm:$0xf]
        %v3060 = vld [vmem:[%s3050 + $0x24] sm:$0xf]
        %v3061 = vld [vmem:[%s3050 + $0x28] sm:$0xf]
        %v3062 = vld [vmem:[%s3050 + $0x2c] sm:$0xf]
        %v3063 = vld [vmem:[%s3050 + $0x30] sm:$0xf]
        %v3064 = vld [vmem:[%s3050 + $0x34] sm:$0xf]
        %v3065 = vld [vmem:[%s3050 + $0x38] sm:$0xf]
        %v3066 = vld [vmem:[%s3050 + $0x3c] sm:$0xf]
        %v3068 = vunpack.c.l.b16 %v3049
        %v3069 = vpack.c.b16 %v3068, %v3068
        %v3071 = vshrl.u32 %v2896, 16
        %v3073 = vrot.slane %v3071, 1
        %v3074 = vshll.u32 %v2896, 16
        %v3076 = vrot.slane %v3074, 2
        %v3077 = vor.u32 %v3073, %v3076
        %v3079 = vshrl.u32 %v2897, 16
        %v3081 = vrot.slane %v3079, 1
        %v3082 = vshll.u32 %v2897, 16
        %v3084 = vrot.slane %v3082, 2
        %v3085 = vor.u32 %v3081, %v3084
        %v3086 = vsel %vm1743, %v3077, %v3085
        %v3088 = vshrl.u32 %v2898, 16
        %v3090 = vrot.slane %v3088, 1
        %v3091 = vshll.u32 %v2898, 16
        %v3093 = vrot.slane %v3091, 2
        %v3094 = vor.u32 %v3090, %v3093
        %v3095 = vsel %vm1743, %v3085, %v3094
        %v3097 = vshrl.u32 %v2899, 16
        %v3099 = vrot.slane %v3097, 1
        %v3100 = vshll.u32 %v2899, 16
        %v3102 = vrot.slane %v3100, 2
        %v3103 = vor.u32 %v3099, %v3102
        %v3104 = vsel %vm1743, %v3094, %v3103
        %v3106 = vshrl.u32 %v2900, 16
        %v3108 = vrot.slane %v3106, 1
        %v3109 = vshll.u32 %v2900, 16
        %v3111 = vrot.slane %v3109, 2
        %v3112 = vor.u32 %v3108, %v3111
        %v3113 = vsel %vm1743, %v3103, %v3112
        %v3115 = vshrl.u32 %v3069, 16
        %v3117 = vrot.slane %v3115, 1
        %v3118 = vshll.u32 %v3069, 16
        %v3120 = vrot.slane %v3118, 2
        %v3121 = vor.u32 %v3117, %v3120
        %v3122 = vsel %vm1743, %v3112, %v3121
        %v3144 = vunpack.c.l.b16 %v3051
        %v3145 = vunpack.c.l.b16 %v3052
        %v3146 = vunpack.c.l.b16 %v3053
        %v3147 = vunpack.c.l.b16 %v3054
        %v3148 = vunpack.c.l.b16 %v3055
        %v3149 = vunpack.c.l.b16 %v3056
        %v3150 = vunpack.c.l.b16 %v3057
        %v3151 = vunpack.c.l.b16 %v3058
        %v3152 = vunpack.c.l.b16 %v3059
        %v3153 = vunpack.c.l.b16 %v3060
        %v3154 = vunpack.c.l.b16 %v3061
        %v3155 = vunpack.c.l.b16 %v3062
        %v3156 = vunpack.c.l.b16 %v3063
        %v3157 = vunpack.c.l.b16 %v3064
        %v3158 = vunpack.c.l.b16 %v3065
        %v3159 = vunpack.c.l.b16 %v3066
        %v3160 = vpack.c.b16 %v3145, %v3144
        %v3161 = vpack.c.b16 %v3147, %v3146
        %v3162 = vpack.c.b16 %v3149, %v3148
        %v3163 = vpack.c.b16 %v3151, %v3150
        %v3164 = vpack.c.b16 %v3153, %v3152
        %v3165 = vpack.c.b16 %v3155, %v3154
        %v3166 = vpack.c.b16 %v3157, %v3156
        %v3167 = vpack.c.b16 %v3159, %v3158
        %3176 = vmatprep.subr.bf16.mxu0 0
        %3177 = vmatpush1.bf16.msra.mxu0 %v3160
        %3178 = vmatprep.subr.bf16.mxu0 0
        %3179 = vmatpush1.bf16.msra.mxu0 %v3161
        %3180 = vmatprep.subr.bf16.mxu0 0
        %3181 = vmatpush1.bf16.msra.mxu0 %v3162
        %3182 = vmatprep.subr.bf16.mxu0 0
        %3183 = vmatpush1.bf16.msra.mxu0 %v3163
        %3184 = vmatprep.subr.bf16.mxu0 0
        %3185 = vmatpush1.bf16.msra.mxu0 %v3164
        %3186 = vmatprep.subr.bf16.mxu0 0
        %3187 = vmatpush1.bf16.msra.mxu0 %v3165
        %3188 = vmatprep.subr.bf16.mxu0 0
        %3189 = vmatpush1.bf16.msra.mxu0 %v3166
        %3190 = vmatprep.subr.bf16.mxu0 0
        %3191 = vmatpush1.bf16.msra.mxu0 %v3167
        %3192 = vmatprep.subr.bf16.mxu0 0
        %3193 = vmatpush1.bf16.msra.mxu0 0
        %3194 = vmatprep.subr.bf16.mxu0 0
        %3195 = vmatpush1.bf16.msra.mxu0 0
        %3196 = vmatprep.subr.bf16.mxu0 0
        %3197 = vmatpush1.bf16.msra.mxu0 0
        %3198 = vmatprep.subr.bf16.mxu0 0
        %3199 = vmatpush1.bf16.msra.mxu0 0
        %3200 = vmatprep.subr.bf16.mxu0 0
        %3201 = vmatpush1.bf16.msra.mxu0 0
        %3202 = vmatprep.subr.bf16.mxu0 0
        %3203 = vmatpush1.bf16.msra.mxu0 0
        %3204 = vmatprep.subr.bf16.mxu0 0
        %3205 = vmatpush1.bf16.msra.mxu0 0
        %3206 = vmatprep.subr.bf16.mxu0 0
        %3207 = vmatpush1.bf16.msra.mxu0 0
        %3208 = vmatprep.mubr.bf16.mxu0 0
        %3209 = vmatmul.mubr.bf16.gmra.mrb[0].mxu0 %v3086
        %v3210 = vpop.f32.mrb[0].mxu0
        %v3211 = vadd.f32 0.0, %v3210
        %v3212 = vpop.f32.mrb[0].mxu0
        %v3213 = vpop.f32.mrb[0].mxu0
        %v3214 = vadd.f32 0.0, %v3213
        %v3215 = vpop.f32.mrb[0].mxu0
        %3216 = vmatprep.mubr.bf16.mxu0 0
        %3217 = vmatmul.mubr.bf16.gmra.mrb[0].mxu0 %v3095
        %v3218 = vpop.f32.mrb[0].mxu0
        %v3219 = vadd.f32 0.0, %v3218
        %v3220 = vpop.f32.mrb[0].mxu0
        %v3221 = vpop.f32.mrb[0].mxu0
        %v3222 = vadd.f32 0.0, %v3221
        %v3223 = vpop.f32.mrb[0].mxu0
        %3224 = vmatprep.mubr.bf16.mxu0 0
        %3225 = vmatmul.mubr.bf16.gmra.mrb[0].mxu0 %v3104
        %v3226 = vpop.f32.mrb[0].mxu0
        %v3227 = vadd.f32 0.0, %v3226
        %v3228 = vpop.f32.mrb[0].mxu0
        %v3229 = vpop.f32.mrb[0].mxu0
        %v3230 = vadd.f32 0.0, %v3229
        %v3231 = vpop.f32.mrb[0].mxu0
        %3232 = vmatprep.mubr.bf16.mxu0 0
        %3233 = vmatmul.mubr.bf16.gmra.mrb[0].mxu0 %v3113
        %v3234 = vpop.f32.mrb[0].mxu0
        %v3235 = vadd.f32 0.0, %v3234
        %v3236 = vpop.f32.mrb[0].mxu0
        %v3237 = vpop.f32.mrb[0].mxu0
        %v3238 = vadd.f32 0.0, %v3237
        %v3239 = vpop.f32.mrb[0].mxu0
        %3240 = vmatprep.mubr.bf16.mxu0 0
        %3241 = vmatmul.mubr.bf16.gmra.mrb[0].mxu0 %v3122
        %v3242 = vpop.f32.mrb[0].mxu0
        %v3243 = vadd.f32 0.0, %v3242
        %v3244 = vpop.f32.mrb[0].mxu0
        %v3245 = vpop.f32.mrb[0].mxu0
        %v3246 = vadd.f32 0.0, %v3245
        %v3247 = vpop.f32.mrb[0].mxu0
        %3248 = vdwg.mxu0
        %v3249 = vadd.f32 %v3039, %v3211
        %v3250 = vadd.f32 %v3040, %v3214
        %v3251 = vadd.f32 %v3041, %v3219
        %v3252 = vadd.f32 %v3042, %v3222
        %v3253 = vadd.f32 %v3043, %v3227
        %v3254 = vadd.f32 %v3044, %v3230
        %v3255 = vadd.f32 %v3045, %v3235
        %v3256 = vadd.f32 %v3046, %v3238
        %v3257 = vadd.f32 %v3047, %v3243
        %v3258 = vadd.f32 %v3048, %v3246
        %v3259 = vld [vmem:[#allocation2 + $0x4] sm:$0xc]
        %s3260 = scalar_lea.vmem [#allocation3], 320
        %v3261 = vld [vmem:[%s3260] sm:$0xf]
        %v3262 = vld [vmem:[%s3260 + $0x4] sm:$0xf]
        %v3263 = vld [vmem:[%s3260 + $0x8] sm:$0xf]
        %v3264 = vld [vmem:[%s3260 + $0xc] sm:$0xf]
        %v3265 = vld [vmem:[%s3260 + $0x10] sm:$0xf]
        %v3266 = vld [vmem:[%s3260 + $0x14] sm:$0xf]
        %v3267 = vld [vmem:[%s3260 + $0x18] sm:$0xf]
        %v3268 = vld [vmem:[%s3260 + $0x1c] sm:$0xf]
        %v3269 = vld [vmem:[%s3260 + $0x20] sm:$0xf]
        %v3270 = vld [vmem:[%s3260 + $0x24] sm:$0xf]
        %v3271 = vld [vmem:[%s3260 + $0x28] sm:$0xf]
        %v3272 = vld [vmem:[%s3260 + $0x2c] sm:$0xf]
        %v3273 = vld [vmem:[%s3260 + $0x30] sm:$0xf]
        %v3274 = vld [vmem:[%s3260 + $0x34] sm:$0xf]
        %v3275 = vld [vmem:[%s3260 + $0x38] sm:$0xf]
        %v3276 = vld [vmem:[%s3260 + $0x3c] sm:$0xf]
        %v3278 = vunpack.c.l.b16 %v3259
        %v3279 = vpack.c.b16 %v2886, %v3278
        %vm3280 = vcmask 1045504
        %v3281 = vrot.slane %v3279, 2
        %v3282 = vrot.slane %v2897, 2
        %v3283 = vsel %vm3280, %v3281, %v3282
        %v3284 = vrot.slane %v2898, 2
        %v3285 = vsel %vm3280, %v3282, %v3284
        %v3286 = vrot.slane %v2899, 2
        %v3287 = vsel %vm3280, %v3284, %v3286
        %v3288 = vrot.slane %v2900, 2
        %v3289 = vsel %vm3280, %v3286, %v3288
        %v3290 = vrot.slane %v3069, 2
        %v3291 = vsel %vm3280, %v3288, %v3290
        %v3313 = vunpack.c.l.b16 %v3261
        %v3314 = vunpack.c.l.b16 %v3262
        %v3315 = vunpack.c.l.b16 %v3263
        %v3316 = vunpack.c.l.b16 %v3264
        %v3317 = vunpack.c.l.b16 %v3265
        %v3318 = vunpack.c.l.b16 %v3266
        %v3319 = vunpack.c.l.b16 %v3267
        %v3320 = vunpack.c.l.b16 %v3268
        %v3321 = vunpack.c.l.b16 %v3269
        %v3322 = vunpack.c.l.b16 %v3270
        %v3323 = vunpack.c.l.b16 %v3271
        %v3324 = vunpack.c.l.b16 %v3272
        %v3325 = vunpack.c.l.b16 %v3273
        %v3326 = vunpack.c.l.b16 %v3274
        %v3327 = vunpack.c.l.b16 %v3275
        %v3328 = vunpack.c.l.b16 %v3276
        %v3329 = vpack.c.b16 %v3314, %v3313
        %v3330 = vpack.c.b16 %v3316, %v3315
        %v3331 = vpack.c.b16 %v3318, %v3317
        %v3332 = vpack.c.b16 %v3320, %v3319
        %v3333 = vpack.c.b16 %v3322, %v3321
        %v3334 = vpack.c.b16 %v3324, %v3323
        %v3335 = vpack.c.b16 %v3326, %v3325
        %v3336 = vpack.c.b16 %v3328, %v3327
        %3345 = vmatprep.subr.bf16.mxu0 0
        %3346 = vmatpush1.bf16.msra.mxu0 %v3329
        %3347 = vmatprep.subr.bf16.mxu0 0
        %3348 = vmatpush1.bf16.msra.mxu0 %v3330
        %3349 = vmatprep.subr.bf16.mxu0 0
        %3350 = vmatpush1.bf16.msra.mxu0 %v3331
        %3351 = vmatprep.subr.bf16.mxu0 0
        %3352 = vmatpush1.bf16.msra.mxu0 %v3332
        %3353 = vmatprep.subr.bf16.mxu0 0
        %3354 = vmatpush1.bf16.msra.mxu0 %v3333
        %3355 = vmatprep.subr.bf16.mxu0 0
        %3356 = vmatpush1.bf16.msra.mxu0 %v3334
        %3357 = vmatprep.subr.bf16.mxu0 0
        %3358 = vmatpush1.bf16.msra.mxu0 %v3335
        %3359 = vmatprep.subr.bf16.mxu0 0
        %3360 = vmatpush1.bf16.msra.mxu0 %v3336
        %3361 = vmatprep.subr.bf16.mxu0 0
        %3362 = vmatpush1.bf16.msra.mxu0 0
        %3363 = vmatprep.subr.bf16.mxu0 0
        %3364 = vmatpush1.bf16.msra.mxu0 0
        %3365 = vmatprep.subr.bf16.mxu0 0
        %3366 = vmatpush1.bf16.msra.mxu0 0
        %3367 = vmatprep.subr.bf16.mxu0 0
        %3368 = vmatpush1.bf16.msra.mxu0 0
        %3369 = vmatprep.subr.bf16.mxu0 0
        %3370 = vmatpush1.bf16.msra.mxu0 0
        %3371 = vmatprep.subr.bf16.mxu0 0
        %3372 = vmatpush1.bf16.msra.mxu0 0
        %3373 = vmatprep.subr.bf16.mxu0 0
        %3374 = vmatpush1.bf16.msra.mxu0 0
        %3375 = vmatprep.subr.bf16.mxu0 0
        %3376 = vmatpush1.bf16.msra.mxu0 0
        %3377 = vmatprep.mubr.bf16.mxu0 0
        %3378 = vmatmul.mubr.bf16.gmra.mrb[0].mxu0 %v3283
        %v3379 = vpop.f32.mrb[0].mxu0
        %v3380 = vadd.f32 0.0, %v3379
        %v3381 = vpop.f32.mrb[0].mxu0
        %v3382 = vpop.f32.mrb[0].mxu0
        %v3383 = vadd.f32 0.0, %v3382
        %v3384 = vpop.f32.mrb[0].mxu0
        %3385 = vmatprep.mubr.bf16.mxu0 0
        %3386 = vmatmul.mubr.bf16.gmra.mrb[0].mxu0 %v3285
        %v3387 = vpop.f32.mrb[0].mxu0
        %v3388 = vadd.f32 0.0, %v3387
        %v3389 = vpop.f32.mrb[0].mxu0
        %v3390 = vpop.f32.mrb[0].mxu0
        %v3391 = vadd.f32 0.0, %v3390
        %v3392 = vpop.f32.mrb[0].mxu0
        %3393 = vmatprep.mubr.bf16.mxu0 0
        %3394 = vmatmul.mubr.bf16.gmra.mrb[0].mxu0 %v3287
        %v3395 = vpop.f32.mrb[0].mxu0
        %v3396 = vadd.f32 0.0, %v3395
        %v3397 = vpop.f32.mrb[0].mxu0
        %v3398 = vpop.f32.mrb[0].mxu0
        %v3399 = vadd.f32 0.0, %v3398
        %v3400 = vpop.f32.mrb[0].mxu0
        %3401 = vmatprep.mubr.bf16.mxu0 0
        %3402 = vmatmul.mubr.bf16.gmra.mrb[0].mxu0 %v3289
        %v3403 = vpop.f32.mrb[0].mxu0
        %v3404 = vadd.f32 0.0, %v3403
        %v3405 = vpop.f32.mrb[0].mxu0
        %v3406 = vpop.f32.mrb[0].mxu0
        %v3407 = vadd.f32 0.0, %v3406
        %v3408 = vpop.f32.mrb[0].mxu0
        %3409 = vmatprep.mubr.bf16.mxu0 0
        %3410 = vmatmul.mubr.bf16.gmra.mrb[0].mxu0 %v3291
        %v3411 = vpop.f32.mrb[0].mxu0
        %v3412 = vadd.f32 0.0, %v3411
        %v3413 = vpop.f32.mrb[0].mxu0
        %v3414 = vpop.f32.mrb[0].mxu0
        %v3415 = vadd.f32 0.0, %v3414
        %v3416 = vpop.f32.mrb[0].mxu0
        %3417 = vdwg.mxu0
        %v3418 = vadd.f32 %v3249, %v3380
        %v3419 = vadd.f32 %v3250, %v3383
        %v3420 = vadd.f32 %v3251, %v3388
        %v3421 = vadd.f32 %v3252, %v3391
        %v3422 = vadd.f32 %v3253, %v3396
        %v3423 = vadd.f32 %v3254, %v3399
        %v3424 = vadd.f32 %v3255, %v3404
        %v3425 = vadd.f32 %v3256, %v3407
        %v3426 = vadd.f32 %v3257, %v3412
        %v3427 = vadd.f32 %v3258, %v3415
        %v3428 = vld [vmem:[#allocation2 + $0x8] sm:$0xc]
        %v3429 = vld [vmem:[#allocation2 + $0xc] sm:$0xf]
        %v3430 = vld [vmem:[#allocation2 + $0x10] sm:$0xf]
        %v3431 = vld [vmem:[#allocation2 + $0x14] sm:$0xf]
        %v3432 = vld [vmem:[#allocation2 + $0x18] sm:$0xf]
        %v3433 = vld [vmem:[#allocation2 + $0x1c] sm:$0xf]
        %v3434 = vld [vmem:[#allocation2 + $0x20] sm:$0xf]
        %v3435 = vld [vmem:[#allocation2 + $0x24] sm:$0xf]
        %v3436 = vld [vmem:[#allocation2 + $0x28] sm:$0xf]
        %v3437 = vld [vmem:[#allocation2 + $0x2c] sm:$0xf]
        %v3438 = vld [vmem:[#allocation2 + $0x30] sm:$0x3]
        %s3439 = scalar_lea.vmem [#allocation3], 384
        %v3440 = vld [vmem:[%s3439] sm:$0xf]
        %v3441 = vld [vmem:[%s3439 + $0x4] sm:$0xf]
        %v3442 = vld [vmem:[%s3439 + $0x8] sm:$0xf]
        %v3443 = vld [vmem:[%s3439 + $0xc] sm:$0xf]
        %v3444 = vld [vmem:[%s3439 + $0x10] sm:$0xf]
        %v3445 = vld [vmem:[%s3439 + $0x14] sm:$0xf]
        %v3446 = vld [vmem:[%s3439 + $0x18] sm:$0xf]
        %v3447 = vld [vmem:[%s3439 + $0x1c] sm:$0xf]
        %v3448 = vld [vmem:[%s3439 + $0x20] sm:$0xf]
        %v3449 = vld [vmem:[%s3439 + $0x24] sm:$0xf]
        %v3450 = vld [vmem:[%s3439 + $0x28] sm:$0xf]
        %v3451 = vld [vmem:[%s3439 + $0x2c] sm:$0xf]
        %v3452 = vld [vmem:[%s3439 + $0x30] sm:$0xf]
        %v3453 = vld [vmem:[%s3439 + $0x34] sm:$0xf]
        %v3454 = vld [vmem:[%s3439 + $0x38] sm:$0xf]
        %v3455 = vld [vmem:[%s3439 + $0x3c] sm:$0xf]
        %v3467 = vunpack.c.l.b16 %v3428
        %v3468 = vunpack.c.l.b16 %v3429
        %v3469 = vunpack.c.l.b16 %v3430
        %v3470 = vunpack.c.l.b16 %v3431
        %v3471 = vunpack.c.l.b16 %v3432
        %v3472 = vunpack.c.l.b16 %v3433
        %v3473 = vunpack.c.l.b16 %v3434
        %v3474 = vunpack.c.l.b16 %v3435
        %v3475 = vunpack.c.l.b16 %v3436
        %v3476 = vunpack.c.l.b16 %v3437
        %v3477 = vunpack.c.l.b16 %v3438
        %v3478 = vpack.c.b16 %v3468, %v3467
        %v3479 = vpack.c.b16 %v3470, %v3469
        %v3480 = vpack.c.b16 %v3472, %v3471
        %v3481 = vpack.c.b16 %v3474, %v3473
        %v3482 = vpack.c.b16 %v3476, %v3475
        %v3483 = vpack.c.b16 %v3477, %v3477
        %v3484 = vrot.slane %v3478, 2
        %v3485 = vrot.slane %v3479, 2
        %v3486 = vsel %vm3280, %v3484, %v3485
        %v3487 = vrot.slane %v3480, 2
        %v3488 = vsel %vm3280, %v3485, %v3487
        %v3489 = vrot.slane %v3481, 2
        %v3490 = vsel %vm3280, %v3487, %v3489
        %v3491 = vrot.slane %v3482, 2
        %v3492 = vsel %vm3280, %v3489, %v3491
        %v3493 = vrot.slane %v3483, 2
        %v3494 = vsel %vm3280, %v3491, %v3493
        %v3516 = vunpack.c.l.b16 %v3440
        %v3517 = vunpack.c.l.b16 %v3441
        %v3518 = vunpack.c.l.b16 %v3442
        %v3519 = vunpack.c.l.b16 %v3443
        %v3520 = vunpack.c.l.b16 %v3444
        %v3521 = vunpack.c.l.b16 %v3445
        %v3522 = vunpack.c.l.b16 %v3446
        %v3523 = vunpack.c.l.b16 %v3447
        %v3524 = vunpack.c.l.b16 %v3448
        %v3525 = vunpack.c.l.b16 %v3449
        %v3526 = vunpack.c.l.b16 %v3450
        %v3527 = vunpack.c.l.b16 %v3451
        %v3528 = vunpack.c.l.b16 %v3452
        %v3529 = vunpack.c.l.b16 %v3453
        %v3530 = vunpack.c.l.b16 %v3454
        %v3531 = vunpack.c.l.b16 %v3455
        %v3532 = vpack.c.b16 %v3517, %v3516
        %v3533 = vpack.c.b16 %v3519, %v3518
        %v3534 = vpack.c.b16 %v3521, %v3520
        %v3535 = vpack.c.b16 %v3523, %v3522
        %v3536 = vpack.c.b16 %v3525, %v3524
        %v3537 = vpack.c.b16 %v3527, %v3526
        %v3538 = vpack.c.b16 %v3529, %v3528
        %v3539 = vpack.c.b16 %v3531, %v3530
        %3548 = vmatprep.subr.bf16.mxu0 0
        %3549 = vmatpush1.bf16.msra.mxu0 %v3532
        %3550 = vmatprep.subr.bf16.mxu0 0
        %3551 = vmatpush1.bf16.msra.mxu0 %v3533
        %3552 = vmatprep.subr.bf16.mxu0 0
        %3553 = vmatpush1.bf16.msra.mxu0 %v3534
        %3554 = vmatprep.subr.bf16.mxu0 0
        %3555 = vmatpush1.bf16.msra.mxu0 %v3535
        %3556 = vmatprep.subr.bf16.mxu0 0
        %3557 = vmatpush1.bf16.msra.mxu0 %v3536
        %3558 = vmatprep.subr.bf16.mxu0 0
        %3559 = vmatpush1.bf16.msra.mxu0 %v3537
        %3560 = vmatprep.subr.bf16.mxu0 0
        %3561 = vmatpush1.bf16.msra.mxu0 %v3538
        %3562 = vmatprep.subr.bf16.mxu0 0
        %3563 = vmatpush1.bf16.msra.mxu0 %v3539
        %3564 = vmatprep.subr.bf16.mxu0 0
        %3565 = vmatpush1.bf16.msra.mxu0 0
        %3566 = vmatprep.subr.bf16.mxu0 0
        %3567 = vmatpush1.bf16.msra.mxu0 0
        %3568 = vmatprep.subr.bf16.mxu0 0
        %3569 = vmatpush1.bf16.msra.mxu0 0
        %3570 = vmatprep.subr.bf16.mxu0 0
        %3571 = vmatpush1.bf16.msra.mxu0 0
        %3572 = vmatprep.subr.bf16.mxu0 0
        %3573 = vmatpush1.bf16.msra.mxu0 0
        %3574 = vmatprep.subr.bf16.mxu0 0
        %3575 = vmatpush1.bf16.msra.mxu0 0
        %3576 = vmatprep.subr.bf16.mxu0 0
        %3577 = vmatpush1.bf16.msra.mxu0 0
        %3578 = vmatprep.subr.bf16.mxu0 0
        %3579 = vmatpush1.bf16.msra.mxu0 0
        %3580 = vmatprep.mubr.bf16.mxu0 0
        %3581 = vmatmul.mubr.bf16.gmra.mrb[0].mxu0 %v3486
        %v3582 = vpop.f32.mrb[0].mxu0
        %v3583 = vadd.f32 0.0, %v3582
        %v3584 = vpop.f32.mrb[0].mxu0
        %v3585 = vpop.f32.mrb[0].mxu0
        %v3586 = vadd.f32 0.0, %v3585
        %v3587 = vpop.f32.mrb[0].mxu0
        %3588 = vmatprep.mubr.bf16.mxu0 0
        %3589 = vmatmul.mubr.bf16.gmra.mrb[0].mxu0 %v3488
        %v3590 = vpop.f32.mrb[0].mxu0
        %v3591 = vadd.f32 0.0, %v3590
        %v3592 = vpop.f32.mrb[0].mxu0
        %v3593 = vpop.f32.mrb[0].mxu0
        %v3594 = vadd.f32 0.0, %v3593
        %v3595 = vpop.f32.mrb[0].mxu0
        %3596 = vmatprep.mubr.bf16.mxu0 0
        %3597 = vmatmul.mubr.bf16.gmra.mrb[0].mxu0 %v3490
        %v3598 = vpop.f32.mrb[0].mxu0
        %v3599 = vadd.f32 0.0, %v3598
        %v3600 = vpop.f32.mrb[0].mxu0
        %v3601 = vpop.f32.mrb[0].mxu0
        %v3602 = vadd.f32 0.0, %v3601
        %v3603 = vpop.f32.mrb[0].mxu0
        %3604 = vmatprep.mubr.bf16.mxu0 0
        %3605 = vmatmul.mubr.bf16.gmra.mrb[0].mxu0 %v3492
        %v3606 = vpop.f32.mrb[0].mxu0
        %v3607 = vadd.f32 0.0, %v3606
        %v3608 = vpop.f32.mrb[0].mxu0
        %v3609 = vpop.f32.mrb[0].mxu0
        %v3610 = vadd.f32 0.0, %v3609
        %v3611 = vpop.f32.mrb[0].mxu0
        %3612 = vmatprep.mubr.bf16.mxu0 0
        %3613 = vmatmul.mubr.bf16.gmra.mrb[0].mxu0 %v3494
        %v3614 = vpop.f32.mrb[0].mxu0
        %v3615 = vadd.f32 0.0, %v3614
        %v3616 = vpop.f32.mrb[0].mxu0
        %v3617 = vpop.f32.mrb[0].mxu0
        %v3618 = vadd.f32 0.0, %v3617
        %v3619 = vpop.f32.mrb[0].mxu0
        %3620 = vdwg.mxu0
        %v3621 = vadd.f32 %v3418, %v3583
        %v3622 = vadd.f32 %v3419, %v3586
        %v3623 = vadd.f32 %v3420, %v3591
        %v3624 = vadd.f32 %v3421, %v3594
        %v3625 = vadd.f32 %v3422, %v3599
        %v3626 = vadd.f32 %v3423, %v3602
        %v3627 = vadd.f32 %v3424, %v3607
        %v3628 = vadd.f32 %v3425, %v3610
        %v3629 = vadd.f32 %v3426, %v3615
        %v3630 = vadd.f32 %v3427, %v3618
        %v3631 = vld [vmem:[#allocation2 + $0x30] sm:$0x7]
        %s3632 = scalar_lea.vmem [#allocation3], 448
        %v3633 = vld [vmem:[%s3632] sm:$0xf]
        %v3634 = vld [vmem:[%s3632 + $0x4] sm:$0xf]
        %v3635 = vld [vmem:[%s3632 + $0x8] sm:$0xf]
        %v3636 = vld [vmem:[%s3632 + $0xc] sm:$0xf]
        %v3637 = vld [vmem:[%s3632 + $0x10] sm:$0xf]
        %v3638 = vld [vmem:[%s3632 + $0x14] sm:$0xf]
        %v3639 = vld [vmem:[%s3632 + $0x18] sm:$0xf]
        %v3640 = vld [vmem:[%s3632 + $0x1c] sm:$0xf]
        %v3641 = vld [vmem:[%s3632 + $0x20] sm:$0xf]
        %v3642 = vld [vmem:[%s3632 + $0x24] sm:$0xf]
        %v3643 = vld [vmem:[%s3632 + $0x28] sm:$0xf]
        %v3644 = vld [vmem:[%s3632 + $0x2c] sm:$0xf]
        %v3645 = vld [vmem:[%s3632 + $0x30] sm:$0xf]
        %v3646 = vld [vmem:[%s3632 + $0x34] sm:$0xf]
        %v3647 = vld [vmem:[%s3632 + $0x38] sm:$0xf]
        %v3648 = vld [vmem:[%s3632 + $0x3c] sm:$0xf]
        %v3650 = vunpack.c.l.b16 %v3631
        %v3651 = vpack.c.b16 %v3650, %v3650
        %vm3652 = vsmask.f32 5376
        %v3654 = vshrl.u32 %v3478, 16
        %v3656 = vrot.slane %v3654, 2
        %v3657 = vshll.u32 %v3478, 16
        %v3659 = vrot.slane %v3657, 3
        %v3660 = vor.u32 %v3656, %v3659
        %v3662 = vshrl.u32 %v3479, 16
        %v3664 = vrot.slane %v3662, 2
        %v3665 = vshll.u32 %v3479, 16
        %v3667 = vrot.slane %v3665, 3
        %v3668 = vor.u32 %v3664, %v3667
        %v3669 = vsel %vm3652, %v3660, %v3668
        %v3671 = vshrl.u32 %v3480, 16
        %v3673 = vrot.slane %v3671, 2
        %v3674 = vshll.u32 %v3480, 16
        %v3676 = vrot.slane %v3674, 3
        %v3677 = vor.u32 %v3673, %v3676
        %v3678 = vsel %vm3652, %v3668, %v3677
        %v3680 = vshrl.u32 %v3481, 16
        %v3682 = vrot.slane %v3680, 2
        %v3683 = vshll.u32 %v3481, 16
        %v3685 = vrot.slane %v3683, 3
        %v3686 = vor.u32 %v3682, %v3685
        %v3687 = vsel %vm3652, %v3677, %v3686
        %v3689 = vshrl.u32 %v3482, 16
        %v3691 = vrot.slane %v3689, 2
        %v3692 = vshll.u32 %v3482, 16
        %v3694 = vrot.slane %v3692, 3
        %v3695 = vor.u32 %v3691, %v3694
        %v3696 = vsel %vm3652, %v3686, %v3695
        %v3698 = vshrl.u32 %v3651, 16
        %v3700 = vrot.slane %v3698, 2
        %v3701 = vshll.u32 %v3651, 16
        %v3703 = vrot.slane %v3701, 3
        %v3704 = vor.u32 %v3700, %v3703
        %v3705 = vsel %vm3652, %v3695, %v3704
        %v3727 = vunpack.c.l.b16 %v3633
        %v3728 = vunpack.c.l.b16 %v3634
        %v3729 = vunpack.c.l.b16 %v3635
        %v3730 = vunpack.c.l.b16 %v3636
        %v3731 = vunpack.c.l.b16 %v3637
        %v3732 = vunpack.c.l.b16 %v3638
        %v3733 = vunpack.c.l.b16 %v3639
        %v3734 = vunpack.c.l.b16 %v3640
        %v3735 = vunpack.c.l.b16 %v3641
        %v3736 = vunpack.c.l.b16 %v3642
        %v3737 = vunpack.c.l.b16 %v3643
        %v3738 = vunpack.c.l.b16 %v3644
        %v3739 = vunpack.c.l.b16 %v3645
        %v3740 = vunpack.c.l.b16 %v3646
        %v3741 = vunpack.c.l.b16 %v3647
        %v3742 = vunpack.c.l.b16 %v3648
        %v3743 = vpack.c.b16 %v3728, %v3727
        %v3744 = vpack.c.b16 %v3730, %v3729
        %v3745 = vpack.c.b16 %v3732, %v3731
        %v3746 = vpack.c.b16 %v3734, %v3733
        %v3747 = vpack.c.b16 %v3736, %v3735
        %v3748 = vpack.c.b16 %v3738, %v3737
        %v3749 = vpack.c.b16 %v3740, %v3739
        %v3750 = vpack.c.b16 %v3742, %v3741
        %3759 = vmatprep.subr.bf16.mxu0 0
        %3760 = vmatpush1.bf16.msra.mxu0 %v3743
        %3761 = vmatprep.subr.bf16.mxu0 0
        %3762 = vmatpush1.bf16.msra.mxu0 %v3744
        %3763 = vmatprep.subr.bf16.mxu0 0
        %3764 = vmatpush1.bf16.msra.mxu0 %v3745
        %3765 = vmatprep.subr.bf16.mxu0 0
        %3766 = vmatpush1.bf16.msra.mxu0 %v3746
        %3767 = vmatprep.subr.bf16.mxu0 0
        %3768 = vmatpush1.bf16.msra.mxu0 %v3747
        %3769 = vmatprep.subr.bf16.mxu0 0
        %3770 = vmatpush1.bf16.msra.mxu0 %v3748
        %3771 = vmatprep.subr.bf16.mxu0 0
        %3772 = vmatpush1.bf16.msra.mxu0 %v3749
        %3773 = vmatprep.subr.bf16.mxu0 0
        %3774 = vmatpush1.bf16.msra.mxu0 %v3750
        %3775 = vmatprep.subr.bf16.mxu0 0
        %3776 = vmatpush1.bf16.msra.mxu0 0
        %3777 = vmatprep.subr.bf16.mxu0 0
        %3778 = vmatpush1.bf16.msra.mxu0 0
        %3779 = vmatprep.subr.bf16.mxu0 0
        %3780 = vmatpush1.bf16.msra.mxu0 0
        %3781 = vmatprep.subr.bf16.mxu0 0
        %3782 = vmatpush1.bf16.msra.mxu0 0
        %3783 = vmatprep.subr.bf16.mxu0 0
        %3784 = vmatpush1.bf16.msra.mxu0 0
        %3785 = vmatprep.subr.bf16.mxu0 0
        %3786 = vmatpush1.bf16.msra.mxu0 0
        %3787 = vmatprep.subr.bf16.mxu0 0
        %3788 = vmatpush1.bf16.msra.mxu0 0
        %3789 = vmatprep.subr.bf16.mxu0 0
        %3790 = vmatpush1.bf16.msra.mxu0 0
        %3791 = vmatprep.mubr.bf16.mxu0 0
        %3792 = vmatmul.mubr.bf16.gmra.mrb[0].mxu0 %v3669
        %v3793 = vpop.f32.mrb[0].mxu0
        %v3794 = vadd.f32 0.0, %v3793
        %v3795 = vpop.f32.mrb[0].mxu0
        %v3796 = vpop.f32.mrb[0].mxu0
        %v3797 = vadd.f32 0.0, %v3796
        %v3798 = vpop.f32.mrb[0].mxu0
        %3799 = vmatprep.mubr.bf16.mxu0 0
        %3800 = vmatmul.mubr.bf16.gmra.mrb[0].mxu0 %v3678
        %v3801 = vpop.f32.mrb[0].mxu0
        %v3802 = vadd.f32 0.0, %v3801
        %v3803 = vpop.f32.mrb[0].mxu0
        %v3804 = vpop.f32.mrb[0].mxu0
        %v3805 = vadd.f32 0.0, %v3804
        %v3806 = vpop.f32.mrb[0].mxu0
        %3807 = vmatprep.mubr.bf16.mxu0 0
        %3808 = vmatmul.mubr.bf16.gmra.mrb[0].mxu0 %v3687
        %v3809 = vpop.f32.mrb[0].mxu0
        %v3810 = vadd.f32 0.0, %v3809
        %v3811 = vpop.f32.mrb[0].mxu0
        %v3812 = vpop.f32.mrb[0].mxu0
        %v3813 = vadd.f32 0.0, %v3812
        %v3814 = vpop.f32.mrb[0].mxu0
        %3815 = vmatprep.mubr.bf16.mxu0 0
        %3816 = vmatmul.mubr.bf16.gmra.mrb[0].mxu0 %v3696
        %v3817 = vpop.f32.mrb[0].mxu0
        %v3818 = vadd.f32 0.0, %v3817
        %v3819 = vpop.f32.mrb[0].mxu0
        %v3820 = vpop.f32.mrb[0].mxu0
        %v3821 = vadd.f32 0.0, %v3820
        %v3822 = vpop.f32.mrb[0].mxu0
        %3823 = vmatprep.mubr.bf16.mxu0 0
        %3824 = vmatmul.mubr.bf16.gmra.mrb[0].mxu0 %v3705
        %v3825 = vpop.f32.mrb[0].mxu0
        %v3826 = vadd.f32 0.0, %v3825
        %v3827 = vpop.f32.mrb[0].mxu0
        %v3828 = vpop.f32.mrb[0].mxu0
        %v3829 = vadd.f32 0.0, %v3828
        %v3830 = vpop.f32.mrb[0].mxu0
        %3831 = vdwg.mxu0
        %v3832 = vadd.f32 %v3621, %v3794
        %v3833 = vadd.f32 %v3622, %v3797
        %v3834 = vadd.f32 %v3623, %v3802
        %v3835 = vadd.f32 %v3624, %v3805
        %v3836 = vadd.f32 %v3625, %v3810
        %v3837 = vadd.f32 %v3626, %v3813
        %v3838 = vadd.f32 %v3627, %v3818
        %v3839 = vadd.f32 %v3628, %v3821
        %v3840 = vadd.f32 %v3629, %v3826
        %v3841 = vadd.f32 %v3630, %v3829
        %v3842 = vld [vmem:[#allocation2 + $0x8] sm:$0x8]
        %s3843 = scalar_lea.vmem [#allocation3], 512
        %v3844 = vld [vmem:[%s3843] sm:$0xf]
        %v3845 = vld [vmem:[%s3843 + $0x4] sm:$0xf]
        %v3846 = vld [vmem:[%s3843 + $0x8] sm:$0xf]
        %v3847 = vld [vmem:[%s3843 + $0xc] sm:$0xf]
        %v3848 = vld [vmem:[%s3843 + $0x10] sm:$0xf]
        %v3849 = vld [vmem:[%s3843 + $0x14] sm:$0xf]
        %v3850 = vld [vmem:[%s3843 + $0x18] sm:$0xf]
        %v3851 = vld [vmem:[%s3843 + $0x1c] sm:$0xf]
        %v3852 = vld [vmem:[%s3843 + $0x20] sm:$0xf]
        %v3853 = vld [vmem:[%s3843 + $0x24] sm:$0xf]
        %v3854 = vld [vmem:[%s3843 + $0x28] sm:$0xf]
        %v3855 = vld [vmem:[%s3843 + $0x2c] sm:$0xf]
        %v3856 = vld [vmem:[%s3843 + $0x30] sm:$0xf]
        %v3857 = vld [vmem:[%s3843 + $0x34] sm:$0xf]
        %v3858 = vld [vmem:[%s3843 + $0x38] sm:$0xf]
        %v3859 = vld [vmem:[%s3843 + $0x3c] sm:$0xf]
        %v3861 = vunpack.c.l.b16 %v3842
        %v3862 = vpack.c.b16 %v3468, %v3861
        %vm3863 = vcmask 1044480
        %v3864 = vrot.slane %v3862, 3
        %v3865 = vrot.slane %v3479, 3
        %v3866 = vsel %vm3863, %v3864, %v3865
        %v3867 = vrot.slane %v3480, 3
        %v3868 = vsel %vm3863, %v3865, %v3867
        %v3869 = vrot.slane %v3481, 3
        %v3870 = vsel %vm3863, %v3867, %v3869
        %v3871 = vrot.slane %v3482, 3
        %v3872 = vsel %vm3863, %v3869, %v3871
        %v3873 = vrot.slane %v3651, 3
        %v3874 = vsel %vm3863, %v3871, %v3873
        %v3896 = vunpack.c.l.b16 %v3844
        %v3897 = vunpack.c.l.b16 %v3845
        %v3898 = vunpack.c.l.b16 %v3846
        %v3899 = vunpack.c.l.b16 %v3847
        %v3900 = vunpack.c.l.b16 %v3848
        %v3901 = vunpack.c.l.b16 %v3849
        %v3902 = vunpack.c.l.b16 %v3850
        %v3903 = vunpack.c.l.b16 %v3851
        %v3904 = vunpack.c.l.b16 %v3852
        %v3905 = vunpack.c.l.b16 %v3853
        %v3906 = vunpack.c.l.b16 %v3854
        %v3907 = vunpack.c.l.b16 %v3855
        %v3908 = vunpack.c.l.b16 %v3856
        %v3909 = vunpack.c.l.b16 %v3857
        %v3910 = vunpack.c.l.b16 %v3858
        %v3911 = vunpack.c.l.b16 %v3859
        %v3912 = vpack.c.b16 %v3897, %v3896
        %v3913 = vpack.c.b16 %v3899, %v3898
        %v3914 = vpack.c.b16 %v3901, %v3900
        %v3915 = vpack.c.b16 %v3903, %v3902
        %v3916 = vpack.c.b16 %v3905, %v3904
        %v3917 = vpack.c.b16 %v3907, %v3906
        %v3918 = vpack.c.b16 %v3909, %v3908
        %v3919 = vpack.c.b16 %v3911, %v3910
        %3928 = vmatprep.subr.bf16.mxu0 0
        %3929 = vmatpush1.bf16.msra.mxu0 %v3912
        %3930 = vmatprep.subr.bf16.mxu0 0
        %3931 = vmatpush1.bf16.msra.mxu0 %v3913
        %3932 = vmatprep.subr.bf16.mxu0 0
        %3933 = vmatpush1.bf16.msra.mxu0 %v3914
        %3934 = vmatprep.subr.bf16.mxu0 0
        %3935 = vmatpush1.bf16.msra.mxu0 %v3915
        %3936 = vmatprep.subr.bf16.mxu0 0
        %3937 = vmatpush1.bf16.msra.mxu0 %v3916
        %3938 = vmatprep.subr.bf16.mxu0 0
        %3939 = vmatpush1.bf16.msra.mxu0 %v3917
        %3940 = vmatprep.subr.bf16.mxu0 0
        %3941 = vmatpush1.bf16.msra.mxu0 %v3918
        %3942 = vmatprep.subr.bf16.mxu0 0
        %3943 = vmatpush1.bf16.msra.mxu0 %v3919
        %3944 = vmatprep.subr.bf16.mxu0 0
        %3945 = vmatpush1.bf16.msra.mxu0 0
        %3946 = vmatprep.subr.bf16.mxu0 0
        %3947 = vmatpush1.bf16.msra.mxu0 0
        %3948 = vmatprep.subr.bf16.mxu0 0
        %3949 = vmatpush1.bf16.msra.mxu0 0
        %3950 = vmatprep.subr.bf16.mxu0 0
        %3951 = vmatpush1.bf16.msra.mxu0 0
        %3952 = vmatprep.subr.bf16.mxu0 0
        %3953 = vmatpush1.bf16.msra.mxu0 0
        %3954 = vmatprep.subr.bf16.mxu0 0
        %3955 = vmatpush1.bf16.msra.mxu0 0
        %3956 = vmatprep.subr.bf16.mxu0 0
        %3957 = vmatpush1.bf16.msra.mxu0 0
        %3958 = vmatprep.subr.bf16.mxu0 0
        %3959 = vmatpush1.bf16.msra.mxu0 0
        %3960 = vmatprep.mubr.bf16.mxu0 0
        %3961 = vmatmul.mubr.bf16.gmra.mrb[0].mxu0 %v3866
        %v3962 = vpop.f32.mrb[0].mxu0
        %v3963 = vadd.f32 0.0, %v3962
        %v3964 = vpop.f32.mrb[0].mxu0
        %v3965 = vpop.f32.mrb[0].mxu0
        %v3966 = vadd.f32 0.0, %v3965
        %v3967 = vpop.f32.mrb[0].mxu0
        %3968 = vmatprep.mubr.bf16.mxu0 0
        %3969 = vmatmul.mubr.bf16.gmra.mrb[0].mxu0 %v3868
        %v3970 = vpop.f32.mrb[0].mxu0
        %v3971 = vadd.f32 0.0, %v3970
        %v3972 = vpop.f32.mrb[0].mxu0
        %v3973 = vpop.f32.mrb[0].mxu0
        %v3974 = vadd.f32 0.0, %v3973
        %v3975 = vpop.f32.mrb[0].mxu0
        %3976 = vmatprep.mubr.bf16.mxu0 0
        %3977 = vmatmul.mubr.bf16.gmra.mrb[0].mxu0 %v3870
        %v3978 = vpop.f32.mrb[0].mxu0
        %v3979 = vadd.f32 0.0, %v3978
        %v3980 = vpop.f32.mrb[0].mxu0
        %v3981 = vpop.f32.mrb[0].mxu0
        %v3982 = vadd.f32 0.0, %v3981
        %v3983 = vpop.f32.mrb[0].mxu0
        %3984 = vmatprep.mubr.bf16.mxu0 0
        %3985 = vmatmul.mubr.bf16.gmra.mrb[0].mxu0 %v3872
        %v3986 = vpop.f32.mrb[0].mxu0
        %v3987 = vadd.f32 0.0, %v3986
        %v3988 = vpop.f32.mrb[0].mxu0
        %v3989 = vpop.f32.mrb[0].mxu0
        %v3990 = vadd.f32 0.0, %v3989
        %v3991 = vpop.f32.mrb[0].mxu0
        %3992 = vmatprep.mubr.bf16.mxu0 0
        %3993 = vmatmul.mubr.bf16.gmra.mrb[0].mxu0 %v3874
        %v3994 = vpop.f32.mrb[0].mxu0
        %v3995 = vadd.f32 0.0, %v3994
        %v3996 = vpop.f32.mrb[0].mxu0
        %v3997 = vpop.f32.mrb[0].mxu0
        %v3998 = vadd.f32 0.0, %v3997
        %v3999 = vpop.f32.mrb[0].mxu0
        %4000 = vdwg.mxu0
        %v4001 = vadd.f32 %v3832, %v3963
        %v4002 = vadd.f32 %v3833, %v3966
        %v4003 = vadd.f32 %v3834, %v3971
        %v4004 = vadd.f32 %v3835, %v3974
        %v4005 = vadd.f32 %v3836, %v3979
        %v4006 = vadd.f32 %v3837, %v3982
        %v4007 = vadd.f32 %v3838, %v3987
        %v4008 = vadd.f32 %v3839, %v3990
        %v4009 = vadd.f32 %v3840, %v3995
        %v4010 = vadd.f32 %v3841, %v3998
        %v4011 = vmax.f32 %v4001, 0.0
        %v4012 = vmax.f32 %v4002, 0.0
        %v4013 = vmax.f32 %v4003, 0.0
        %v4014 = vmax.f32 %v4004, 0.0
        %v4015 = vmax.f32 %v4005, 0.0
        %v4016 = vmax.f32 %v4006, 0.0
        %v4017 = vmax.f32 %v4007, 0.0
        %v4018 = vmax.f32 %v4008, 0.0
        %v4019 = vmax.f32 %v4009, 0.0
        %v4020 = vmax.f32 %v4010, 0.0
        %v4021 = vpack.c.bf16 %v4012, %v4011
        %v4022 = vpack.c.bf16 %v4014, %v4013
        %v4023 = vpack.c.bf16 %v4016, %v4015
        %v4024 = vpack.c.bf16 %v4018, %v4017
        %v4025 = vpack.c.bf16 %v4020, %v4019
        %v4031 = vunpack.c.l.b16 %v4021
        %v4032 = vunpack.c.h.b16 %v4021
        %v4033 = vunpack.c.l.b16 %v4022
        %v4034 = vunpack.c.h.b16 %v4022
        %v4035 = vunpack.c.l.b16 %v4023
        %v4036 = vunpack.c.h.b16 %v4023
        %v4037 = vunpack.c.l.b16 %v4024
        %v4038 = vunpack.c.h.b16 %v4024
        %v4039 = vunpack.c.l.b16 %v4025
        %v4040 = vunpack.c.h.b16 %v4025
        %v4041 = vpack.c.b16 %v4031, %v4031
        %v4042 = vpack.c.b16 %v4032, %v4032
        %v4043 = vpack.c.b16 %v4033, %v4033
        %v4044 = vpack.c.b16 %v4034, %v4034
        %v4045 = vpack.c.b16 %v4035, %v4035
        %v4046 = vpack.c.b16 %v4036, %v4036
        %v4047 = vpack.c.b16 %v4037, %v4037
        %v4048 = vpack.c.b16 %v4038, %v4038
        %v4049 = vpack.c.b16 %v4039, %v4039
        %v4050 = vpack.c.b16 %v4040, %v4040
        %4061 = vst [vmem:[%s286] sm:$0xf] %v4041
        %4062 = vst [vmem:[%s286 + $0x4] sm:$0xf] %v4042
        %4063 = vst [vmem:[%s286 + $0x8] sm:$0xf] %v4043
        %4064 = vst [vmem:[%s286 + $0xc] sm:$0xf] %v4044
        %4065 = vst [vmem:[%s286 + $0x10] sm:$0xf] %v4045
        %4066 = vst [vmem:[%s286 + $0x14] sm:$0xf] %v4046
        %4067 = vst [vmem:[%s286 + $0x18] sm:$0xf] %v4047
        %4068 = vst [vmem:[%s286 + $0x1c] sm:$0xf] %v4048
        %4069 = vst [vmem:[%s286 + $0x20] sm:$0xf] %v4049
        %4070 = vst [vmem:[%s286 + $0x24] sm:$0xf] %v4050
        %s4071 = sand.u32 %s182, 1
        %s4072 = scalar_lea.sflag [#allocation5], %s4071
        %s4073 = sand.u32 %s182, 1
        %s4074 = smul.addr %s4073, 40
        %s4075 = scalar_lea.vmem [#allocation6], %s4074
        // Predicated region
        $region53: #{tpu_custom_call.1} parent=47 // pred_check
          %p4076 = pneg %p192
        $region54: #{tpu_custom_call.1} parent=47 // pred_check_branch
          %4078 = sbr.rel (%p4076) target = $region56
        $region55: #{tpu_custom_call.1} parent=47 // pred_region
          %s4080 = ssub.s32 640, 640
          %4081 = vsyncadd %s4072, %s4080
          %s4082 = smul.addr %s22, 10
          %s4083 = smul.addr %s4082, 64
          %s4084 = scalar_lea.hbm %s7, %s4083
          %s4085 = sshll.u32 %s4075, 4
          %s4086 = int_to_ptr.vmem [resolvable:$true] %s4085
          %4091 = dma.vmem_to_hbm [thread:$0]  %s4086, 640, %s4084, %s4072, 64, 64, 4
        $region56: #{tpu_custom_call.1} parent=47 // pred_fallthru
          _
      $region48: #{tpu_custom_call.1} parent=5 // pred_fallthru
        _
      %p4092 = scmp.le.s32.totalorder 2, %s17
      // Predicated region
      $region57: #{tpu_custom_call.1} parent=5 // pred_check
        %p4093 = pneg %p4092
      $region58: #{tpu_custom_call.1} parent=5 // pred_check_branch
        %4095 = sbr.rel (%p4093) target = $region60
      $region59: #{tpu_custom_call.1} parent=5 // pred_region
        %s4096 = ssub.s32 %s17, 2
        // Predicated region
        $region61: #{tpu_custom_call.1} parent=59 // pred_check
          %p4097 = pneg %p198
        $region62: #{tpu_custom_call.1} parent=59 // pred_check_branch
          %4099 = sbr.rel (%p4097) target = $region64
        $region63: #{tpu_custom_call.1} parent=59 // pred_region
          %s4100 = sand.u32 %s183, 1
          %s4101 = scalar_lea.sflag [#allocation5], %s4100
          %s4102 = sand.u32 %s183, 1
          %s4103 = smul.addr %s4102, 40
          %s4104 = scalar_lea.vmem [#allocation6], %s4103
          %4105 = dma.done %s4101, 640
        $region64: #{tpu_custom_call.1} parent=59 // pred_fallthru
          _
      $region60: #{tpu_custom_call.1} parent=5 // pred_fallthru
        _
    $region6: #{tpu_custom_call.1} parent=1 // loop_footer
      %s21 = sadd.s32 1, %s17
    $region7: #{tpu_custom_call.1} parent=1 // loop_footer_branch
      %16 = sbr.rel target = $region3
    $region8: #{tpu_custom_call.1} parent=1 // loop_exit
      _
    %4106 = vsyncpa [#allocation4], 1
    %s4107 = scalar_lea.sflag [#allocation4], 1
    %4108 = vsyncpa %s4107, 1
    %4109 = vsyncpa [#allocation5], 1
    %s4110 = scalar_lea.sflag [#allocation5], 1
    %4111 = vsyncpa %s4110, 1

</llo_original>
